<compile_context>
chip_gen: v7x
topology: tpu7x:2x2x1
jax: 0.10.0
libtpu: 0.0.40
codegen_flags: <defaults>
</compile_context>

<pallas_src>
import functools

import jax
import jax.numpy as jnp
from jax.experimental import pallas as pl
from jax.experimental.pallas import tpu as pltpu


# ----------------------------------------------------------------------------
# Pallas kernels
# ----------------------------------------------------------------------------
def _conv_gemm_kernel(x_ref, w_ref, scale_ref, bias_ref, o_ref, acc_ref,
                      *, relu, nsteps):
    t = pl.program_id(1)  # tap / reduction axis (innermost)

    @pl.when(t == 0)
    def _():
        acc_ref[...] = jnp.zeros_like(acc_ref)

    acc_ref[...] += jnp.dot(x_ref[...], w_ref[...],
                            preferred_element_type=jnp.float32)

    @pl.when(t == nsteps - 1)
    def _():
        # Epilogue in f32 on the accumulator (cheap path on v5e too).
        y = acc_ref[...] * scale_ref[...] + bias_ref[...]
        if relu:
            y = jnp.maximum(y, 0.0)
        o_ref[...] = y.astype(o_ref.dtype)


def _conv_gemm_res_kernel(x_ref, w_ref, scale_ref, bias_ref, res_ref, o_ref,
                          acc_ref, *, relu, nsteps):
    t = pl.program_id(1)

    @pl.when(t == 0)
    def _():
        acc_ref[...] = jnp.zeros_like(acc_ref)

    acc_ref[...] += jnp.dot(x_ref[...], w_ref[...],
                            preferred_element_type=jnp.float32)

    @pl.when(t == nsteps - 1)
    def _():
        y = acc_ref[...] * scale_ref[...] + bias_ref[...]
        y = y + res_ref[...].astype(jnp.float32)   # add residual BEFORE ReLU
        if relu:
            y = jnp.maximum(y, 0.0)
        o_ref[...] = y.astype(o_ref.dtype)


def _pool_fc_kernel(x_ref, w_ref, b_ref, o_ref):
    # AdaptiveAvgPool2d((1,1)) + flatten + Linear, all in one kernel.
    # x: (N, H*W, C) bf16 ; w: (C, num_classes) f32 ; b: (1, num_classes) f32
    pooled = jnp.mean(x_ref[...].astype(jnp.float32), axis=1)       # (N, C)
    logits = jnp.dot(pooled, w_ref[...], preferred_element_type=jnp.float32)
    o_ref[...] = logits + b_ref[...]


# ----------------------------------------------------------------------------
# Pallas wrappers
# ----------------------------------------------------------------------------
_VMEM = pl.BlockSpec(memory_space=pltpu.MemorySpace.VMEM)
_VMEM_LIMIT = 32 * 1024 * 1024  # safe on v5e/v6e/v7x; tiles below use < 3 MiB


def _round_up(x, m):
    return ((x + m - 1) // m) * m


def _extract_taps(x, ksize, stride, pad):
    """x: (N, H, W, C) -> (T, N*Ho*Wo, C) shifted/strided views, plus Ho, Wo."""
    n, h, w, c = x.shape
    if pad:
        x = jnp.pad(x, ((0, 0), (pad, pad), (pad, pad), (0, 0)))
    ho = (h + 2 * pad - ksize) // stride + 1
    wo = (w + 2 * pad - ksize) // stride + 1
    taps = []
    for i in range(ksize):
        for j in range(ksize):
            taps.append(
                x[:, i:i + stride * ho:stride, j:j + stride * wo:stride, :]
                .reshape(n * ho * wo, c))
    return jnp.stack(taps, axis=0), ho, wo


def conv_bn(x, w_taps, bn_scale, bn_bias, stride, relu=True, residual=None):
    """Fused conv (no bias) + folded BatchNorm + optional residual + ReLU.

    x:        (N, H, W, Cin)      activations (any float dtype; cast to bf16)
    w_taps:   (T, Cin, Cout) bf16 pre-reshaped conv weights (T = kh*kw)
    bn_scale: (1, Cout) f32       folded gamma / sqrt(var + eps)
    bn_bias:  (1, Cout) f32       folded beta - mean * scale
    residual: (N, Ho, Wo, Cout) or None
    """
    x = x.astype(jnp.bfloat16)
    n = x.shape[0]
    T, cin, cout = w_taps.shape
    ksize = 3 if T == 9 else 1
    pad = (ksize - 1) // 2

    taps, ho, wo = _extract_taps(x, ksize, stride, pad)   # (T, M, Cin)
    M = n * ho * wo
    tm = min(256, _round_up(M, 8))
    Mp = _round_up(M, tm)
    if Mp != M:
        taps = jnp.pad(taps, ((0, 0), (0, Mp - M), (0, 0)))

    args = [taps, w_taps, bn_scale, bn_bias]
    in_specs = [
        pl.BlockSpec((None, tm, cin), lambda i, t: (t, i, 0)),
        pl.BlockSpec((None, cin, cout), lambda i, t: (t, 0, 0)),
        pl.BlockSpec((1, cout), lambda i, t: (0, 0)),
        pl.BlockSpec((1, cout), lambda i, t: (0, 0)),
    ]
    if residual is not None:
        res = residual.astype(jnp.bfloat16).reshape(M, cout)
        if Mp != M:
            res = jnp.pad(res, ((0, Mp - M), (0, 0)))
        args.append(res)
        in_specs.append(pl.BlockSpec((tm, cout), lambda i, t: (i, 0)))
        kernel = functools.partial(_conv_gemm_res_kernel, relu=relu, nsteps=T)
    else:
        kernel = functools.partial(_conv_gemm_kernel, relu=relu, nsteps=T)

    out = pl.pallas_call(
        kernel,
        out_shape=jax.ShapeDtypeStruct((Mp, cout), jnp.bfloat16),
        grid=(Mp // tm, T),
        in_specs=in_specs,
        out_specs=pl.BlockSpec((tm, cout), lambda i, t: (i, 0)),
        scratch_shapes=[pltpu.VMEM((tm, cout), jnp.float32)],
        compiler_params=pltpu.CompilerParams(
            dimension_semantics=("parallel", "arbitrary"),
            vmem_limit_bytes=_VMEM_LIMIT),
    )(*args)

    if Mp != M:
        out = out[:M]
    return out.reshape(n, ho, wo, cout)


def pool_fc(x, fc_w, fc_b):
    """x: (N, H, W, C) -> logits (N, num_classes).  Pool + Linear fused."""
    n, h, w, c = x.shape
    xr = x.reshape(n, h * w, c)
    nc = fc_w.shape[1]
    return pl.pallas_call(
        _pool_fc_kernel,
        out_shape=jax.ShapeDtypeStruct((n, nc), jnp.float32),
        in_specs=[_VMEM, _VMEM, _VMEM],
        out_specs=_VMEM,
        compiler_params=pltpu.CompilerParams(vmem_limit_bytes=_VMEM_LIMIT),
    )(xr, fc_w, fc_b)


# ----------------------------------------------------------------------------
# Parameter initialization (deterministic, matching the PyTorch __init__)
# ----------------------------------------------------------------------------
def _kaiming_conv(key, kh, kw, cin, cout):
    fan_out = cout * kh * kw                       # mode='fan_out', relu gain
    std = (2.0 / fan_out) ** 0.5
    w = jax.random.normal(key, (kh, kw, cin, cout), jnp.float32) * std
    # Pre-reshape to (T, Cin, Cout) and pre-cast to bf16 once (MXU dtype).
    return w.reshape(kh * kw, cin, cout).astype(jnp.bfloat16)


def _bn_params(c, eps=1e-5):
    gamma = jnp.ones((c,), jnp.float32)            # nn.init.constant_(weight, 1)
    beta = jnp.zeros((c,), jnp.float32)            # nn.init.constant_(bias, 0)
    running_mean = jnp.zeros((c,), jnp.float32)
    running_var = jnp.ones((c,), jnp.float32)
    scale = gamma / jnp.sqrt(running_var + eps)
    bias = beta - running_mean * scale
    return scale.reshape(1, c), bias.reshape(1, c)


def init_resnet_params(key, num_blocks=(1, 1, 1, 1), num_classes=10):
    keys = iter(jax.random.split(key, 128))
    params = {}
    params["stem_w"] = _kaiming_conv(next(keys), 3, 3, 3, 64)
    params["stem_bn"] = _bn_params(64)

    in_c = 64
    layers = []
    for out_c, nb, first_stride in zip((64, 128, 256, 512), num_blocks,
                                       (1, 2, 2, 2)):
        blocks = []
        for s in [first_stride] + [1] * (nb - 1):
            blk = {
                "conv1_w": _kaiming_conv(next(keys), 3, 3, in_c, out_c),
                "bn1": _bn_params(out_c),
                "conv2_w": _kaiming_conv(next(keys), 3, 3, out_c, out_c),
                "bn2": _bn_params(out_c),
            }
            if s != 1 or in_c != out_c:
                blk["down_w"] = _kaiming_conv(next(keys), 1, 1, in_c, out_c)
                blk["down_bn"] = _bn_params(out_c)
            blocks.append(blk)
            in_c = out_c
        layers.append(blocks)
    params["layers"] = layers

    # nn.Linear(512, num_classes): weight ~ N(0, 0.01), bias = 0
    params["fc_w"] = jax.random.normal(
        next(keys), (512, num_classes), jnp.float32) * 0.01
    params["fc_b"] = jnp.zeros((1, num_classes), jnp.float32)
    return params


# ----------------------------------------------------------------------------
# Forward pass (default path: threshold=1e9 -> no clip, need_penultimate=0)
# ----------------------------------------------------------------------------
def _basic_block(x, blk, stride):
    if "down_w" in blk:
        shortcut = conv_bn(x, blk["down_w"], *blk["down_bn"], stride=stride,
                           relu=False)
    else:
        shortcut = x
    out = conv_bn(x, blk["conv1_w"], *blk["bn1"], stride=stride, relu=True)
    out = conv_bn(out, blk["conv2_w"], *blk["bn2"], stride=1, relu=True,
                  residual=shortcut)
    return out


def resnet_forward(params, x_nchw):
    x = jnp.transpose(x_nchw, (0, 2, 3, 1))        # NCHW -> NHWC
    out = conv_bn(x, params["stem_w"], *params["stem_bn"], stride=1, relu=True)
    for li, blocks in enumerate(params["layers"]):
        for bi, blk in enumerate(blocks):
            stride = 2 if (li > 0 and bi == 0) else 1
            out = _basic_block(out, blk, stride)
    logits = pool_fc(out, params["fc_w"], params["fc_b"])
    return logits                                  # (N, num_classes)


# ----------------------------------------------------------------------------
if __name__ == "__main__":
    key = jax.random.PRNGKey(0)
    k_param, k_input = jax.random.split(key)

    params = init_resnet_params(k_param, num_blocks=(1, 1, 1, 1),
                                num_classes=10)
    # PyTorch-style NCHW input: batch=2, channels=3, spatial=16x16
    x = jax.random.normal(k_input, (2, 3, 16, 16), jnp.float32)

    logits = jax.jit(resnet_forward)(params, x)
    logits = jax.block_until_ready(logits)
    assert logits.shape == (2, 10)
    assert bool(jnp.all(jnp.isfinite(logits)))
    print("KERNEL_OK")
</pallas_src>

<mosaic_0001>
module attributes {stable_mosaic.version = 11 : i64} {
  func.func @_conv_gemm_kernel(%arg0: i32, %arg1: i32, %arg2: memref<1x256x3xbf16, #tpu.memory_space<vmem>>, %arg3: memref<1x3x64xbf16, #tpu.memory_space<vmem>>, %arg4: memref<1x64xf32, #tpu.memory_space<vmem>>, %arg5: memref<1x64xf32, #tpu.memory_space<vmem>>, %arg6: memref<256x64xbf16, #tpu.memory_space<vmem>>, %arg7: memref<256x64xf32, #tpu.memory_space<vmem>>) attributes {dimension_semantics = [#tpu.dimension_semantics<parallel>, #tpu.dimension_semantics<arbitrary>], iteration_bounds = array<i64: 2, 9>, scalar_prefetch = 0 : i64, scratch_operands = 1 : i64, tpu.core_type = #tpu.core_type<tc>, window_params = [{transform_indices = @transform_0, window_bounds = array<i64: 1, 256, 3>}, {transform_indices = @transform_1, window_bounds = array<i64: 1, 3, 64>}, {pipeline_mode = #tpu.pipeline_mode<synchronous>, transform_indices = @transform_2, window_bounds = array<i64: 1, 64>}, {pipeline_mode = #tpu.pipeline_mode<synchronous>, transform_indices = @transform_3, window_bounds = array<i64: 1, 64>}, {transform_indices = @transform_4, window_bounds = array<i64: 256, 64>}]} {
    %c0_i32 = arith.constant 0 : i32
    %0 = arith.cmpi eq, %arg1, %c0_i32 : i32
    %1 = arith.extui %0 : i1 to i32
    %c0_i32_0 = arith.constant 0 : i32
    %2 = arith.cmpi ne, %1, %c0_i32_0 : i32
    scf.if %2 {
      %cst_11 = arith.constant 0.000000e+00 : f32
      %14 = vector.broadcast %cst_11 : f32 to vector<256x64xf32>
      %c0_12 = arith.constant 0 : index
      %c0_13 = arith.constant 0 : index
      %15 = vector.load %arg7[%c0_12, %c0_13] : memref<256x64xf32, #tpu.memory_space<vmem>>, vector<256x64xf32>
      tpu.vector_store %arg7[%c0_12, %c0_13], %14 {strides = array<i32>} : memref<256x64xf32, #tpu.memory_space<vmem>>, vector<256x64xf32>,
    } else {
    }
    %c0 = arith.constant 0 : index
    %c0_1 = arith.constant 0 : index
    %3 = vector.load %arg7[%c0, %c0_1] : memref<256x64xf32, #tpu.memory_space<vmem>>, vector<256x64xf32>
    %c0_2 = arith.constant 0 : index
    %c0_3 = arith.constant 0 : index
    %c0_4 = arith.constant 0 : index
    %4 = vector.load %arg2[%c0_2, %c0_3, %c0_4] : memref<1x256x3xbf16, #tpu.memory_space<vmem>>, vector<1x256x3xbf16>
    %5 = vector.shape_cast %4 : vector<1x256x3xbf16> to vector<256x3xbf16>
    %c0_5 = arith.constant 0 : index
    %c0_6 = arith.constant 0 : index
    %c0_7 = arith.constant 0 : index
    %6 = vector.load %arg3[%c0_5, %c0_6, %c0_7] : memref<1x3x64xbf16, #tpu.memory_space<vmem>>, vector<1x3x64xbf16>
    %7 = vector.shape_cast %6 : vector<1x3x64xbf16> to vector<3x64xbf16>
    %cst = arith.constant dense<0.000000e+00> : vector<256x64xf32>
    %8 = tpu.matmul %5, %7, %cst {dimension_numbers = #tpu.dot_dimension_numbers<[1], [0], [0], [1], [0, 0, 1, 1], [], []>} : vector<256x3xbf16>, vector<3x64xbf16>, vector<256x64xf32> -> vector<256x64xf32>
    %9 = arith.addf %3, %8 : vector<256x64xf32>
    %c0_8 = arith.constant 0 : index
    %c0_9 = arith.constant 0 : index
    %10 = vector.load %arg7[%c0_8, %c0_9] : memref<256x64xf32, #tpu.memory_space<vmem>>, vector<256x64xf32>
    tpu.vector_store %arg7[%c0_8, %c0_9], %9 {strides = array<i32>} : memref<256x64xf32, #tpu.memory_space<vmem>>, vector<256x64xf32>,
    %c8_i32 = arith.constant 8 : i32
    %11 = arith.cmpi eq, %arg1, %c8_i32 : i32
    %12 = arith.extui %11 : i1 to i32
    %c0_i32_10 = arith.constant 0 : i32
    %13 = arith.cmpi ne, %12, %c0_i32_10 : i32
    scf.if %13 {
      %c0_11 = arith.constant 0 : index
      %c0_12 = arith.constant 0 : index
      %14 = vector.load %arg7[%c0_11, %c0_12] : memref<256x64xf32, #tpu.memory_space<vmem>>, vector<256x64xf32>
      %c0_13 = arith.constant 0 : index
      %c0_14 = arith.constant 0 : index
      %15 = vector.load %arg4[%c0_13, %c0_14] : memref<1x64xf32, #tpu.memory_space<vmem>>, vector<1x64xf32>
      %16 = vector.broadcast %15 : vector<1x64xf32> to vector<256x64xf32>
      %17 = arith.mulf %14, %16 : vector<256x64xf32>
      %c0_15 = arith.constant 0 : index
      %c0_16 = arith.constant 0 : index
      %18 = vector.load %arg5[%c0_15, %c0_16] : memref<1x64xf32, #tpu.memory_space<vmem>>, vector<1x64xf32>
      %19 = vector.broadcast %18 : vector<1x64xf32> to vector<256x64xf32>
      %20 = arith.addf %17, %19 : vector<256x64xf32>
      %cst_17 = arith.constant 0.000000e+00 : f32
      %21 = vector.broadcast %cst_17 : f32 to vector<256x64xf32>
      %22 = arith.maximumf %20, %21 : vector<256x64xf32>
      %23 = arith.truncf %22 : vector<256x64xf32> to vector<256x64xbf16>
      %c0_18 = arith.constant 0 : index
      %c0_19 = arith.constant 0 : index
      %24 = vector.load %arg6[%c0_18, %c0_19] : memref<256x64xbf16, #tpu.memory_space<vmem>>, vector<256x64xbf16>
      tpu.vector_store %arg6[%c0_18, %c0_19], %23 {strides = array<i32>} : memref<256x64xbf16, #tpu.memory_space<vmem>>, vector<256x64xbf16>,
    } else {
    }
    return
  }
  func.func @transform_0(%arg0: i32, %arg1: i32) -> (i32, i32, i32) {
    %c0_i32 = arith.constant 0 : i32
    %c0_i32_0 = arith.constant 0 : i32
    return %arg1, %arg0, %c0_i32 : i32, i32, i32
  }
  func.func @transform_1(%arg0: i32, %arg1: i32) -> (i32, i32, i32) {
    %c0_i32 = arith.constant 0 : i32
    %c0_i32_0 = arith.constant 0 : i32
    %c0_i32_1 = arith.constant 0 : i32
    return %arg1, %c0_i32, %c0_i32_0 : i32, i32, i32
  }
  func.func @transform_2(%arg0: i32, %arg1: i32) -> (i32, i32) {
    %c0_i32 = arith.constant 0 : i32
    %c0_i32_0 = arith.constant 0 : i32
    %c0_i32_1 = arith.constant 0 : i32
    return %c0_i32, %c0_i32_0 : i32, i32
  }
  func.func @transform_3(%arg0: i32, %arg1: i32) -> (i32, i32) {
    %c0_i32 = arith.constant 0 : i32
    %c0_i32_0 = arith.constant 0 : i32
    %c0_i32_1 = arith.constant 0 : i32
    return %c0_i32, %c0_i32_0 : i32, i32
  }
  func.func @transform_4(%arg0: i32, %arg1: i32) -> (i32, i32) {
    %c0_i32 = arith.constant 0 : i32
    %c0_i32_0 = arith.constant 0 : i32
    return %arg0, %c0_i32 : i32, i32
  }
}

module attributes {stable_mosaic.version = 11 : i64} {
  func.func @_conv_gemm_res_kernel(%arg0: i32, %arg1: i32, %arg2: memref<1x256x64xbf16, #tpu.memory_space<vmem>>, %arg3: memref<1x64x64xbf16, #tpu.memory_space<vmem>>, %arg4: memref<1x64xf32, #tpu.memory_space<vmem>>, %arg5: memref<1x64xf32, #tpu.memory_space<vmem>>, %arg6: memref<256x64xbf16, #tpu.memory_space<vmem>>, %arg7: memref<256x64xbf16, #tpu.memory_space<vmem>>, %arg8: memref<256x64xf32, #tpu.memory_space<vmem>>) attributes {dimension_semantics = [#tpu.dimension_semantics<parallel>, #tpu.dimension_semantics<arbitrary>], iteration_bounds = array<i64: 2, 9>, scalar_prefetch = 0 : i64, scratch_operands = 1 : i64, tpu.core_type = #tpu.core_type<tc>, window_params = [{transform_indices = @transform_0, window_bounds = array<i64: 1, 256, 64>}, {transform_indices = @transform_1, window_bounds = array<i64: 1, 64, 64>}, {pipeline_mode = #tpu.pipeline_mode<synchronous>, transform_indices = @transform_2, window_bounds = array<i64: 1, 64>}, {pipeline_mode = #tpu.pipeline_mode<synchronous>, transform_indices = @transform_3, window_bounds = array<i64: 1, 64>}, {transform_indices = @transform_4, window_bounds = array<i64: 256, 64>}, {transform_indices = @transform_5, window_bounds = array<i64: 256, 64>}]} {
    %c0_i32 = arith.constant 0 : i32
    %0 = arith.cmpi eq, %arg1, %c0_i32 : i32
    %1 = arith.extui %0 : i1 to i32
    %c0_i32_0 = arith.constant 0 : i32
    %2 = arith.cmpi ne, %1, %c0_i32_0 : i32
    scf.if %2 {
      %cst_11 = arith.constant 0.000000e+00 : f32
      %14 = vector.broadcast %cst_11 : f32 to vector<256x64xf32>
      %c0_12 = arith.constant 0 : index
      %c0_13 = arith.constant 0 : index
      %15 = vector.load %arg8[%c0_12, %c0_13] : memref<256x64xf32, #tpu.memory_space<vmem>>, vector<256x64xf32>
      tpu.vector_store %arg8[%c0_12, %c0_13], %14 {strides = array<i32>} : memref<256x64xf32, #tpu.memory_space<vmem>>, vector<256x64xf32>,
    } else {
    }
    %c0 = arith.constant 0 : index
    %c0_1 = arith.constant 0 : index
    %3 = vector.load %arg8[%c0, %c0_1] : memref<256x64xf32, #tpu.memory_space<vmem>>, vector<256x64xf32>
    %c0_2 = arith.constant 0 : index
    %c0_3 = arith.constant 0 : index
    %c0_4 = arith.constant 0 : index
    %4 = vector.load %arg2[%c0_2, %c0_3, %c0_4] : memref<1x256x64xbf16, #tpu.memory_space<vmem>>, vector<1x256x64xbf16>
    %5 = vector.shape_cast %4 : vector<1x256x64xbf16> to vector<256x64xbf16>
    %c0_5 = arith.constant 0 : index
    %c0_6 = arith.constant 0 : index
    %c0_7 = arith.constant 0 : index
    %6 = vector.load %arg3[%c0_5, %c0_6, %c0_7] : memref<1x64x64xbf16, #tpu.memory_space<vmem>>, vector<1x64x64xbf16>
    %7 = vector.shape_cast %6 : vector<1x64x64xbf16> to vector<64x64xbf16>
    %cst = arith.constant dense<0.000000e+00> : vector<256x64xf32>
    %8 = tpu.matmul %5, %7, %cst {dimension_numbers = #tpu.dot_dimension_numbers<[1], [0], [0], [1], [0, 0, 1, 1], [], []>} : vector<256x64xbf16>, vector<64x64xbf16>, vector<256x64xf32> -> vector<256x64xf32>
    %9 = arith.addf %3, %8 : vector<256x64xf32>
    %c0_8 = arith.constant 0 : index
    %c0_9 = arith.constant 0 : index
    %10 = vector.load %arg8[%c0_8, %c0_9] : memref<256x64xf32, #tpu.memory_space<vmem>>, vector<256x64xf32>
    tpu.vector_store %arg8[%c0_8, %c0_9], %9 {strides = array<i32>} : memref<256x64xf32, #tpu.memory_space<vmem>>, vector<256x64xf32>,
    %c8_i32 = arith.constant 8 : i32
    %11 = arith.cmpi eq, %arg1, %c8_i32 : i32
    %12 = arith.extui %11 : i1 to i32
    %c0_i32_10 = arith.constant 0 : i32
    %13 = arith.cmpi ne, %12, %c0_i32_10 : i32
    scf.if %13 {
      %c0_11 = arith.constant 0 : index
      %c0_12 = arith.constant 0 : index
      %14 = vector.load %arg8[%c0_11, %c0_12] : memref<256x64xf32, #tpu.memory_space<vmem>>, vector<256x64xf32>
      %c0_13 = arith.constant 0 : index
      %c0_14 = arith.constant 0 : index
      %15 = vector.load %arg4[%c0_13, %c0_14] : memref<1x64xf32, #tpu.memory_space<vmem>>, vector<1x64xf32>
      %16 = vector.broadcast %15 : vector<1x64xf32> to vector<256x64xf32>
      %17 = arith.mulf %14, %16 : vector<256x64xf32>
      %c0_15 = arith.constant 0 : index
      %c0_16 = arith.constant 0 : index
      %18 = vector.load %arg5[%c0_15, %c0_16] : memref<1x64xf32, #tpu.memory_space<vmem>>, vector<1x64xf32>
      %19 = vector.broadcast %18 : vector<1x64xf32> to vector<256x64xf32>
      %20 = arith.addf %17, %19 : vector<256x64xf32>
      %c0_17 = arith.constant 0 : index
      %c0_18 = arith.constant 0 : index
      %21 = vector.load %arg6[%c0_17, %c0_18] : memref<256x64xbf16, #tpu.memory_space<vmem>>, vector<256x64xbf16>
      %22 = arith.extf %21 : vector<256x64xbf16> to vector<256x64xf32>
      %23 = arith.addf %20, %22 : vector<256x64xf32>
      %cst_19 = arith.constant 0.000000e+00 : f32
      %24 = vector.broadcast %cst_19 : f32 to vector<256x64xf32>
      %25 = arith.maximumf %23, %24 : vector<256x64xf32>
      %26 = arith.truncf %25 : vector<256x64xf32> to vector<256x64xbf16>
      %c0_20 = arith.constant 0 : index
      %c0_21 = arith.constant 0 : index
      %27 = vector.load %arg7[%c0_20, %c0_21] : memref<256x64xbf16, #tpu.memory_space<vmem>>, vector<256x64xbf16>
      tpu.vector_store %arg7[%c0_20, %c0_21], %26 {strides = array<i32>} : memref<256x64xbf16, #tpu.memory_space<vmem>>, vector<256x64xbf16>,
    } else {
    }
    return
  }
  func.func @transform_0(%arg0: i32, %arg1: i32) -> (i32, i32, i32) {
    %c0_i32 = arith.constant 0 : i32
    %c0_i32_0 = arith.constant 0 : i32
    return %arg1, %arg0, %c0_i32 : i32, i32, i32
  }
  func.func @transform_1(%arg0: i32, %arg1: i32) -> (i32, i32, i32) {
    %c0_i32 = arith.constant 0 : i32
    %c0_i32_0 = arith.constant 0 : i32
    %c0_i32_1 = arith.constant 0 : i32
    return %arg1, %c0_i32, %c0_i32_0 : i32, i32, i32
  }
  func.func @transform_2(%arg0: i32, %arg1: i32) -> (i32, i32) {
    %c0_i32 = arith.constant 0 : i32
    %c0_i32_0 = arith.constant 0 : i32
    %c0_i32_1 = arith.constant 0 : i32
    return %c0_i32, %c0_i32_0 : i32, i32
  }
  func.func @transform_3(%arg0: i32, %arg1: i32) -> (i32, i32) {
    %c0_i32 = arith.constant 0 : i32
    %c0_i32_0 = arith.constant 0 : i32
    %c0_i32_1 = arith.constant 0 : i32
    return %c0_i32, %c0_i32_0 : i32, i32
  }
  func.func @transform_4(%arg0: i32, %arg1: i32) -> (i32, i32) {
    %c0_i32 = arith.constant 0 : i32
    %c0_i32_0 = arith.constant 0 : i32
    return %arg0, %c0_i32 : i32, i32
  }
  func.func @transform_5(%arg0: i32, %arg1: i32) -> (i32, i32) {
    %c0_i32 = arith.constant 0 : i32
    %c0_i32_0 = arith.constant 0 : i32
    return %arg0, %c0_i32 : i32, i32
  }
}

module attributes {stable_mosaic.version = 11 : i64} {
  func.func @_conv_gemm_kernel(%arg0: i32, %arg1: i32, %arg2: memref<1x256x64xbf16, #tpu.memory_space<vmem>>, %arg3: memref<1x64x64xbf16, #tpu.memory_space<vmem>>, %arg4: memref<1x64xf32, #tpu.memory_space<vmem>>, %arg5: memref<1x64xf32, #tpu.memory_space<vmem>>, %arg6: memref<256x64xbf16, #tpu.memory_space<vmem>>, %arg7: memref<256x64xf32, #tpu.memory_space<vmem>>) attributes {dimension_semantics = [#tpu.dimension_semantics<parallel>, #tpu.dimension_semantics<arbitrary>], iteration_bounds = array<i64: 2, 9>, scalar_prefetch = 0 : i64, scratch_operands = 1 : i64, tpu.core_type = #tpu.core_type<tc>, window_params = [{transform_indices = @transform_0, window_bounds = array<i64: 1, 256, 64>}, {transform_indices = @transform_1, window_bounds = array<i64: 1, 64, 64>}, {pipeline_mode = #tpu.pipeline_mode<synchronous>, transform_indices = @transform_2, window_bounds = array<i64: 1, 64>}, {pipeline_mode = #tpu.pipeline_mode<synchronous>, transform_indices = @transform_3, window_bounds = array<i64: 1, 64>}, {transform_indices = @transform_4, window_bounds = array<i64: 256, 64>}]} {
    %c0_i32 = arith.constant 0 : i32
    %0 = arith.cmpi eq, %arg1, %c0_i32 : i32
    %1 = arith.extui %0 : i1 to i32
    %c0_i32_0 = arith.constant 0 : i32
    %2 = arith.cmpi ne, %1, %c0_i32_0 : i32
    scf.if %2 {
      %cst_11 = arith.constant 0.000000e+00 : f32
      %14 = vector.broadcast %cst_11 : f32 to vector<256x64xf32>
      %c0_12 = arith.constant 0 : index
      %c0_13 = arith.constant 0 : index
      %15 = vector.load %arg7[%c0_12, %c0_13] : memref<256x64xf32, #tpu.memory_space<vmem>>, vector<256x64xf32>
      tpu.vector_store %arg7[%c0_12, %c0_13], %14 {strides = array<i32>} : memref<256x64xf32, #tpu.memory_space<vmem>>, vector<256x64xf32>,
    } else {
    }
    %c0 = arith.constant 0 : index
    %c0_1 = arith.constant 0 : index
    %3 = vector.load %arg7[%c0, %c0_1] : memref<256x64xf32, #tpu.memory_space<vmem>>, vector<256x64xf32>
    %c0_2 = arith.constant 0 : index
    %c0_3 = arith.constant 0 : index
    %c0_4 = arith.constant 0 : index
    %4 = vector.load %arg2[%c0_2, %c0_3, %c0_4] : memref<1x256x64xbf16, #tpu.memory_space<vmem>>, vector<1x256x64xbf16>
    %5 = vector.shape_cast %4 : vector<1x256x64xbf16> to vector<256x64xbf16>
    %c0_5 = arith.constant 0 : index
    %c0_6 = arith.constant 0 : index
    %c0_7 = arith.constant 0 : index
    %6 = vector.load %arg3[%c0_5, %c0_6, %c0_7] : memref<1x64x64xbf16, #tpu.memory_space<vmem>>, vector<1x64x64xbf16>
    %7 = vector.shape_cast %6 : vector<1x64x64xbf16> to vector<64x64xbf16>
    %cst = arith.constant dense<0.000000e+00> : vector<256x64xf32>
    %8 = tpu.matmul %5, %7, %cst {dimension_numbers = #tpu.dot_dimension_numbers<[1], [0], [0], [1], [0, 0, 1, 1], [], []>} : vector<256x64xbf16>, vector<64x64xbf16>, vector<256x64xf32> -> vector<256x64xf32>
    %9 = arith.addf %3, %8 : vector<256x64xf32>
    %c0_8 = arith.constant 0 : index
    %c0_9 = arith.constant 0 : index
    %10 = vector.load %arg7[%c0_8, %c0_9] : memref<256x64xf32, #tpu.memory_space<vmem>>, vector<256x64xf32>
    tpu.vector_store %arg7[%c0_8, %c0_9], %9 {strides = array<i32>} : memref<256x64xf32, #tpu.memory_space<vmem>>, vector<256x64xf32>,
    %c8_i32 = arith.constant 8 : i32
    %11 = arith.cmpi eq, %arg1, %c8_i32 : i32
    %12 = arith.extui %11 : i1 to i32
    %c0_i32_10 = arith.constant 0 : i32
    %13 = arith.cmpi ne, %12, %c0_i32_10 : i32
    scf.if %13 {
      %c0_11 = arith.constant 0 : index
      %c0_12 = arith.constant 0 : index
      %14 = vector.load %arg7[%c0_11, %c0_12] : memref<256x64xf32, #tpu.memory_space<vmem>>, vector<256x64xf32>
      %c0_13 = arith.constant 0 : index
      %c0_14 = arith.constant 0 : index
      %15 = vector.load %arg4[%c0_13, %c0_14] : memref<1x64xf32, #tpu.memory_space<vmem>>, vector<1x64xf32>
      %16 = vector.broadcast %15 : vector<1x64xf32> to vector<256x64xf32>
      %17 = arith.mulf %14, %16 : vector<256x64xf32>
      %c0_15 = arith.constant 0 : index
      %c0_16 = arith.constant 0 : index
      %18 = vector.load %arg5[%c0_15, %c0_16] : memref<1x64xf32, #tpu.memory_space<vmem>>, vector<1x64xf32>
      %19 = vector.broadcast %18 : vector<1x64xf32> to vector<256x64xf32>
      %20 = arith.addf %17, %19 : vector<256x64xf32>
      %cst_17 = arith.constant 0.000000e+00 : f32
      %21 = vector.broadcast %cst_17 : f32 to vector<256x64xf32>
      %22 = arith.maximumf %20, %21 : vector<256x64xf32>
      %23 = arith.truncf %22 : vector<256x64xf32> to vector<256x64xbf16>
      %c0_18 = arith.constant 0 : index
      %c0_19 = arith.constant 0 : index
      %24 = vector.load %arg6[%c0_18, %c0_19] : memref<256x64xbf16, #tpu.memory_space<vmem>>, vector<256x64xbf16>
      tpu.vector_store %arg6[%c0_18, %c0_19], %23 {strides = array<i32>} : memref<256x64xbf16, #tpu.memory_space<vmem>>, vector<256x64xbf16>,
    } else {
    }
    return
  }
  func.func @transform_0(%arg0: i32, %arg1: i32) -> (i32, i32, i32) {
    %c0_i32 = arith.constant 0 : i32
    %c0_i32_0 = arith.constant 0 : i32
    return %arg1, %arg0, %c0_i32 : i32, i32, i32
  }
  func.func @transform_1(%arg0: i32, %arg1: i32) -> (i32, i32, i32) {
    %c0_i32 = arith.constant 0 : i32
    %c0_i32_0 = arith.constant 0 : i32
    %c0_i32_1 = arith.constant 0 : i32
    return %arg1, %c0_i32, %c0_i32_0 : i32, i32, i32
  }
  func.func @transform_2(%arg0: i32, %arg1: i32) -> (i32, i32) {
    %c0_i32 = arith.constant 0 : i32
    %c0_i32_0 = arith.constant 0 : i32
    %c0_i32_1 = arith.constant 0 : i32
    return %c0_i32, %c0_i32_0 : i32, i32
  }
  func.func @transform_3(%arg0: i32, %arg1: i32) -> (i32, i32) {
    %c0_i32 = arith.constant 0 : i32
    %c0_i32_0 = arith.constant 0 : i32
    %c0_i32_1 = arith.constant 0 : i32
    return %c0_i32, %c0_i32_0 : i32, i32
  }
  func.func @transform_4(%arg0: i32, %arg1: i32) -> (i32, i32) {
    %c0_i32 = arith.constant 0 : i32
    %c0_i32_0 = arith.constant 0 : i32
    return %arg0, %c0_i32 : i32, i32
  }
}

module attributes {stable_mosaic.version = 11 : i64} {
  func.func @_conv_gemm_kernel(%arg0: i32, %arg1: i32, %arg2: memref<1x128x64xbf16, #tpu.memory_space<vmem>>, %arg3: memref<1x64x128xbf16, #tpu.memory_space<vmem>>, %arg4: memref<1x128xf32, #tpu.memory_space<vmem>>, %arg5: memref<1x128xf32, #tpu.memory_space<vmem>>, %arg6: memref<128x128xbf16, #tpu.memory_space<vmem>>, %arg7: memref<128x128xf32, #tpu.memory_space<vmem>>) attributes {dimension_semantics = [#tpu.dimension_semantics<parallel>, #tpu.dimension_semantics<arbitrary>], iteration_bounds = array<i64: 1, 9>, scalar_prefetch = 0 : i64, scratch_operands = 1 : i64, tpu.core_type = #tpu.core_type<tc>, window_params = [{transform_indices = @transform_0, window_bounds = array<i64: 1, 128, 64>}, {transform_indices = @transform_1, window_bounds = array<i64: 1, 64, 128>}, {pipeline_mode = #tpu.pipeline_mode<synchronous>, transform_indices = @transform_2, window_bounds = array<i64: 1, 128>}, {pipeline_mode = #tpu.pipeline_mode<synchronous>, transform_indices = @transform_3, window_bounds = array<i64: 1, 128>}, {transform_indices = @transform_4, window_bounds = array<i64: 128, 128>}]} {
    %c0_i32 = arith.constant 0 : i32
    %0 = arith.cmpi eq, %arg1, %c0_i32 : i32
    %1 = arith.extui %0 : i1 to i32
    %c0_i32_0 = arith.constant 0 : i32
    %2 = arith.cmpi ne, %1, %c0_i32_0 : i32
    scf.if %2 {
      %cst_11 = arith.constant 0.000000e+00 : f32
      %14 = vector.broadcast %cst_11 : f32 to vector<128x128xf32>
      %c0_12 = arith.constant 0 : index
      %c0_13 = arith.constant 0 : index
      %15 = vector.load %arg7[%c0_12, %c0_13] : memref<128x128xf32, #tpu.memory_space<vmem>>, vector<128x128xf32>
      tpu.vector_store %arg7[%c0_12, %c0_13], %14 {strides = array<i32>} : memref<128x128xf32, #tpu.memory_space<vmem>>, vector<128x128xf32>,
    } else {
    }
    %c0 = arith.constant 0 : index
    %c0_1 = arith.constant 0 : index
    %3 = vector.load %arg7[%c0, %c0_1] : memref<128x128xf32, #tpu.memory_space<vmem>>, vector<128x128xf32>
    %c0_2 = arith.constant 0 : index
    %c0_3 = arith.constant 0 : index
    %c0_4 = arith.constant 0 : index
    %4 = vector.load %arg2[%c0_2, %c0_3, %c0_4] : memref<1x128x64xbf16, #tpu.memory_space<vmem>>, vector<1x128x64xbf16>
    %5 = vector.shape_cast %4 : vector<1x128x64xbf16> to vector<128x64xbf16>
    %c0_5 = arith.constant 0 : index
    %c0_6 = arith.constant 0 : index
    %c0_7 = arith.constant 0 : index
    %6 = vector.load %arg3[%c0_5, %c0_6, %c0_7] : memref<1x64x128xbf16, #tpu.memory_space<vmem>>, vector<1x64x128xbf16>
    %7 = vector.shape_cast %6 : vector<1x64x128xbf16> to vector<64x128xbf16>
    %cst = arith.constant dense<0.000000e+00> : vector<128x128xf32>
    %8 = tpu.matmul %5, %7, %cst {dimension_numbers = #tpu.dot_dimension_numbers<[1], [0], [0], [1], [0, 0, 1, 1], [], []>} : vector<128x64xbf16>, vector<64x128xbf16>, vector<128x128xf32> -> vector<128x128xf32>
    %9 = arith.addf %3, %8 : vector<128x128xf32>
    %c0_8 = arith.constant 0 : index
    %c0_9 = arith.constant 0 : index
    %10 = vector.load %arg7[%c0_8, %c0_9] : memref<128x128xf32, #tpu.memory_space<vmem>>, vector<128x128xf32>
    tpu.vector_store %arg7[%c0_8, %c0_9], %9 {strides = array<i32>} : memref<128x128xf32, #tpu.memory_space<vmem>>, vector<128x128xf32>,
    %c8_i32 = arith.constant 8 : i32
    %11 = arith.cmpi eq, %arg1, %c8_i32 : i32
    %12 = arith.extui %11 : i1 to i32
    %c0_i32_10 = arith.constant 0 : i32
    %13 = arith.cmpi ne, %12, %c0_i32_10 : i32
    scf.if %13 {
      %c0_11 = arith.constant 0 : index
      %c0_12 = arith.constant 0 : index
      %14 = vector.load %arg7[%c0_11, %c0_12] : memref<128x128xf32, #tpu.memory_space<vmem>>, vector<128x128xf32>
      %c0_13 = arith.constant 0 : index
      %c0_14 = arith.constant 0 : index
      %15 = vector.load %arg4[%c0_13, %c0_14] : memref<1x128xf32, #tpu.memory_space<vmem>>, vector<1x128xf32>
      %16 = vector.broadcast %15 : vector<1x128xf32> to vector<128x128xf32>
      %17 = arith.mulf %14, %16 : vector<128x128xf32>
      %c0_15 = arith.constant 0 : index
      %c0_16 = arith.constant 0 : index
      %18 = vector.load %arg5[%c0_15, %c0_16] : memref<1x128xf32, #tpu.memory_space<vmem>>, vector<1x128xf32>
      %19 = vector.broadcast %18 : vector<1x128xf32> to vector<128x128xf32>
      %20 = arith.addf %17, %19 : vector<128x128xf32>
      %cst_17 = arith.constant 0.000000e+00 : f32
      %21 = vector.broadcast %cst_17 : f32 to vector<128x128xf32>
      %22 = arith.maximumf %20, %21 : vector<128x128xf32>
      %23 = arith.truncf %22 : vector<128x128xf32> to vector<128x128xbf16>
      %c0_18 = arith.constant 0 : index
      %c0_19 = arith.constant 0 : index
      %24 = vector.load %arg6[%c0_18, %c0_19] : memref<128x128xbf16, #tpu.memory_space<vmem>>, vector<128x128xbf16>
      tpu.vector_store %arg6[%c0_18, %c0_19], %23 {strides = array<i32>} : memref<128x128xbf16, #tpu.memory_space<vmem>>, vector<128x128xbf16>,
    } else {
    }
    return
  }
  func.func @transform_0(%arg0: i32, %arg1: i32) -> (i32, i32, i32) {
    %c0_i32 = arith.constant 0 : i32
    %c0_i32_0 = arith.constant 0 : i32
    return %arg1, %arg0, %c0_i32 : i32, i32, i32
  }
  func.func @transform_1(%arg0: i32, %arg1: i32) -> (i32, i32, i32) {
    %c0_i32 = arith.constant 0 : i32
    %c0_i32_0 = arith.constant 0 : i32
    %c0_i32_1 = arith.constant 0 : i32
    return %arg1, %c0_i32, %c0_i32_0 : i32, i32, i32
  }
  func.func @transform_2(%arg0: i32, %arg1: i32) -> (i32, i32) {
    %c0_i32 = arith.constant 0 : i32
    %c0_i32_0 = arith.constant 0 : i32
    %c0_i32_1 = arith.constant 0 : i32
    return %c0_i32, %c0_i32_0 : i32, i32
  }
  func.func @transform_3(%arg0: i32, %arg1: i32) -> (i32, i32) {
    %c0_i32 = arith.constant 0 : i32
    %c0_i32_0 = arith.constant 0 : i32
    %c0_i32_1 = arith.constant 0 : i32
    return %c0_i32, %c0_i32_0 : i32, i32
  }
  func.func @transform_4(%arg0: i32, %arg1: i32) -> (i32, i32) {
    %c0_i32 = arith.constant 0 : i32
    %c0_i32_0 = arith.constant 0 : i32
    return %arg0, %c0_i32 : i32, i32
  }
}

module attributes {stable_mosaic.version = 11 : i64} {
  func.func @_conv_gemm_res_kernel(%arg0: i32, %arg1: i32, %arg2: memref<1x128x128xbf16, #tpu.memory_space<vmem>>, %arg3: memref<1x128x128xbf16, #tpu.memory_space<vmem>>, %arg4: memref<1x128xf32, #tpu.memory_space<vmem>>, %arg5: memref<1x128xf32, #tpu.memory_space<vmem>>, %arg6: memref<128x128xbf16, #tpu.memory_space<vmem>>, %arg7: memref<128x128xbf16, #tpu.memory_space<vmem>>, %arg8: memref<128x128xf32, #tpu.memory_space<vmem>>) attributes {dimension_semantics = [#tpu.dimension_semantics<parallel>, #tpu.dimension_semantics<arbitrary>], iteration_bounds = array<i64: 1, 9>, scalar_prefetch = 0 : i64, scratch_operands = 1 : i64, tpu.core_type = #tpu.core_type<tc>, window_params = [{transform_indices = @transform_0, window_bounds = array<i64: 1, 128, 128>}, {transform_indices = @transform_1, window_bounds = array<i64: 1, 128, 128>}, {pipeline_mode = #tpu.pipeline_mode<synchronous>, transform_indices = @transform_2, window_bounds = array<i64: 1, 128>}, {pipeline_mode = #tpu.pipeline_mode<synchronous>, transform_indices = @transform_3, window_bounds = array<i64: 1, 128>}, {transform_indices = @transform_4, window_bounds = array<i64: 128, 128>}, {transform_indices = @transform_5, window_bounds = array<i64: 128, 128>}]} {
    %c0_i32 = arith.constant 0 : i32
    %0 = arith.cmpi eq, %arg1, %c0_i32 : i32
    %1 = arith.extui %0 : i1 to i32
    %c0_i32_0 = arith.constant 0 : i32
    %2 = arith.cmpi ne, %1, %c0_i32_0 : i32
    scf.if %2 {
      %cst_11 = arith.constant 0.000000e+00 : f32
      %14 = vector.broadcast %cst_11 : f32 to vector<128x128xf32>
      %c0_12 = arith.constant 0 : index
      %c0_13 = arith.constant 0 : index
      %15 = vector.load %arg8[%c0_12, %c0_13] : memref<128x128xf32, #tpu.memory_space<vmem>>, vector<128x128xf32>
      tpu.vector_store %arg8[%c0_12, %c0_13], %14 {strides = array<i32>} : memref<128x128xf32, #tpu.memory_space<vmem>>, vector<128x128xf32>,
    } else {
    }
    %c0 = arith.constant 0 : index
    %c0_1 = arith.constant 0 : index
    %3 = vector.load %arg8[%c0, %c0_1] : memref<128x128xf32, #tpu.memory_space<vmem>>, vector<128x128xf32>
    %c0_2 = arith.constant 0 : index
    %c0_3 = arith.constant 0 : index
    %c0_4 = arith.constant 0 : index
    %4 = vector.load %arg2[%c0_2, %c0_3, %c0_4] : memref<1x128x128xbf16, #tpu.memory_space<vmem>>, vector<1x128x128xbf16>
    %5 = vector.shape_cast %4 : vector<1x128x128xbf16> to vector<128x128xbf16>
    %c0_5 = arith.constant 0 : index
    %c0_6 = arith.constant 0 : index
    %c0_7 = arith.constant 0 : index
    %6 = vector.load %arg3[%c0_5, %c0_6, %c0_7] : memref<1x128x128xbf16, #tpu.memory_space<vmem>>, vector<1x128x128xbf16>
    %7 = vector.shape_cast %6 : vector<1x128x128xbf16> to vector<128x128xbf16>
    %cst = arith.constant dense<0.000000e+00> : vector<128x128xf32>
    %8 = tpu.matmul %5, %7, %cst {dimension_numbers = #tpu.dot_dimension_numbers<[1], [0], [0], [1], [0, 0, 1, 1], [], []>} : vector<128x128xbf16>, vector<128x128xbf16>, vector<128x128xf32> -> vector<128x128xf32>
    %9 = arith.addf %3, %8 : vector<128x128xf32>
    %c0_8 = arith.constant 0 : index
    %c0_9 = arith.constant 0 : index
    %10 = vector.load %arg8[%c0_8, %c0_9] : memref<128x128xf32, #tpu.memory_space<vmem>>, vector<128x128xf32>
    tpu.vector_store %arg8[%c0_8, %c0_9], %9 {strides = array<i32>} : memref<128x128xf32, #tpu.memory_space<vmem>>, vector<128x128xf32>,
    %c8_i32 = arith.constant 8 : i32
    %11 = arith.cmpi eq, %arg1, %c8_i32 : i32
    %12 = arith.extui %11 : i1 to i32
    %c0_i32_10 = arith.constant 0 : i32
    %13 = arith.cmpi ne, %12, %c0_i32_10 : i32
    scf.if %13 {
      %c0_11 = arith.constant 0 : index
      %c0_12 = arith.constant 0 : index
      %14 = vector.load %arg8[%c0_11, %c0_12] : memref<128x128xf32, #tpu.memory_space<vmem>>, vector<128x128xf32>
      %c0_13 = arith.constant 0 : index
      %c0_14 = arith.constant 0 : index
      %15 = vector.load %arg4[%c0_13, %c0_14] : memref<1x128xf32, #tpu.memory_space<vmem>>, vector<1x128xf32>
      %16 = vector.broadcast %15 : vector<1x128xf32> to vector<128x128xf32>
      %17 = arith.mulf %14, %16 : vector<128x128xf32>
      %c0_15 = arith.constant 0 : index
      %c0_16 = arith.constant 0 : index
      %18 = vector.load %arg5[%c0_15, %c0_16] : memref<1x128xf32, #tpu.memory_space<vmem>>, vector<1x128xf32>
      %19 = vector.broadcast %18 : vector<1x128xf32> to vector<128x128xf32>
      %20 = arith.addf %17, %19 : vector<128x128xf32>
      %c0_17 = arith.constant 0 : index
      %c0_18 = arith.constant 0 : index
      %21 = vector.load %arg6[%c0_17, %c0_18] : memref<128x128xbf16, #tpu.memory_space<vmem>>, vector<128x128xbf16>
      %22 = arith.extf %21 : vector<128x128xbf16> to vector<128x128xf32>
      %23 = arith.addf %20, %22 : vector<128x128xf32>
      %cst_19 = arith.constant 0.000000e+00 : f32
      %24 = vector.broadcast %cst_19 : f32 to vector<128x128xf32>
      %25 = arith.maximumf %23, %24 : vector<128x128xf32>
      %26 = arith.truncf %25 : vector<128x128xf32> to vector<128x128xbf16>
      %c0_20 = arith.constant 0 : index
      %c0_21 = arith.constant 0 : index
      %27 = vector.load %arg7[%c0_20, %c0_21] : memref<128x128xbf16, #tpu.memory_space<vmem>>, vector<128x128xbf16>
      tpu.vector_store %arg7[%c0_20, %c0_21], %26 {strides = array<i32>} : memref<128x128xbf16, #tpu.memory_space<vmem>>, vector<128x128xbf16>,
    } else {
    }
    return
  }
  func.func @transform_0(%arg0: i32, %arg1: i32) -> (i32, i32, i32) {
    %c0_i32 = arith.constant 0 : i32
    %c0_i32_0 = arith.constant 0 : i32
    return %arg1, %arg0, %c0_i32 : i32, i32, i32
  }
  func.func @transform_1(%arg0: i32, %arg1: i32) -> (i32, i32, i32) {
    %c0_i32 = arith.constant 0 : i32
    %c0_i32_0 = arith.constant 0 : i32
    %c0_i32_1 = arith.constant 0 : i32
    return %arg1, %c0_i32, %c0_i32_0 : i32, i32, i32
  }
  func.func @transform_2(%arg0: i32, %arg1: i32) -> (i32, i32) {
    %c0_i32 = arith.constant 0 : i32
    %c0_i32_0 = arith.constant 0 : i32
    %c0_i32_1 = arith.constant 0 : i32
    return %c0_i32, %c0_i32_0 : i32, i32
  }
  func.func @transform_3(%arg0: i32, %arg1: i32) -> (i32, i32) {
    %c0_i32 = arith.constant 0 : i32
    %c0_i32_0 = arith.constant 0 : i32
    %c0_i32_1 = arith.constant 0 : i32
    return %c0_i32, %c0_i32_0 : i32, i32
  }
  func.func @transform_4(%arg0: i32, %arg1: i32) -> (i32, i32) {
    %c0_i32 = arith.constant 0 : i32
    %c0_i32_0 = arith.constant 0 : i32
    return %arg0, %c0_i32 : i32, i32
  }
  func.func @transform_5(%arg0: i32, %arg1: i32) -> (i32, i32) {
    %c0_i32 = arith.constant 0 : i32
    %c0_i32_0 = arith.constant 0 : i32
    return %arg0, %c0_i32 : i32, i32
  }
}

module attributes {stable_mosaic.version = 11 : i64} {
  func.func @_conv_gemm_kernel(%arg0: i32, %arg1: i32, %arg2: memref<1x128x64xbf16, #tpu.memory_space<vmem>>, %arg3: memref<1x64x128xbf16, #tpu.memory_space<vmem>>, %arg4: memref<1x128xf32, #tpu.memory_space<vmem>>, %arg5: memref<1x128xf32, #tpu.memory_space<vmem>>, %arg6: memref<128x128xbf16, #tpu.memory_space<vmem>>, %arg7: memref<128x128xf32, #tpu.memory_space<vmem>>) attributes {dimension_semantics = [#tpu.dimension_semantics<parallel>, #tpu.dimension_semantics<arbitrary>], iteration_bounds = array<i64: 1, 1>, scalar_prefetch = 0 : i64, scratch_operands = 1 : i64, tpu.core_type = #tpu.core_type<tc>, window_params = [{transform_indices = @transform_0, window_bounds = array<i64: 1, 128, 64>}, {transform_indices = @transform_1, window_bounds = array<i64: 1, 64, 128>}, {pipeline_mode = #tpu.pipeline_mode<synchronous>, transform_indices = @transform_2, window_bounds = array<i64: 1, 128>}, {pipeline_mode = #tpu.pipeline_mode<synchronous>, transform_indices = @transform_3, window_bounds = array<i64: 1, 128>}, {transform_indices = @transform_4, window_bounds = array<i64: 128, 128>}]} {
    %c0_i32 = arith.constant 0 : i32
    %0 = arith.cmpi eq, %arg1, %c0_i32 : i32
    %1 = arith.extui %0 : i1 to i32
    %c0_i32_0 = arith.constant 0 : i32
    %2 = arith.cmpi ne, %1, %c0_i32_0 : i32
    scf.if %2 {
      %cst_12 = arith.constant 0.000000e+00 : f32
      %14 = vector.broadcast %cst_12 : f32 to vector<128x128xf32>
      %c0_13 = arith.constant 0 : index
      %c0_14 = arith.constant 0 : index
      %15 = vector.load %arg7[%c0_13, %c0_14] : memref<128x128xf32, #tpu.memory_space<vmem>>, vector<128x128xf32>
      tpu.vector_store %arg7[%c0_13, %c0_14], %14 {strides = array<i32>} : memref<128x128xf32, #tpu.memory_space<vmem>>, vector<128x128xf32>,
    } else {
    }
    %c0 = arith.constant 0 : index
    %c0_1 = arith.constant 0 : index
    %3 = vector.load %arg7[%c0, %c0_1] : memref<128x128xf32, #tpu.memory_space<vmem>>, vector<128x128xf32>
    %c0_2 = arith.constant 0 : index
    %c0_3 = arith.constant 0 : index
    %c0_4 = arith.constant 0 : index
    %4 = vector.load %arg2[%c0_2, %c0_3, %c0_4] : memref<1x128x64xbf16, #tpu.memory_space<vmem>>, vector<1x128x64xbf16>
    %5 = vector.shape_cast %4 : vector<1x128x64xbf16> to vector<128x64xbf16>
    %c0_5 = arith.constant 0 : index
    %c0_6 = arith.constant 0 : index
    %c0_7 = arith.constant 0 : index
    %6 = vector.load %arg3[%c0_5, %c0_6, %c0_7] : memref<1x64x128xbf16, #tpu.memory_space<vmem>>, vector<1x64x128xbf16>
    %7 = vector.shape_cast %6 : vector<1x64x128xbf16> to vector<64x128xbf16>
    %cst = arith.constant dense<0.000000e+00> : vector<128x128xf32>
    %8 = tpu.matmul %5, %7, %cst {dimension_numbers = #tpu.dot_dimension_numbers<[1], [0], [0], [1], [0, 0, 1, 1], [], []>} : vector<128x64xbf16>, vector<64x128xbf16>, vector<128x128xf32> -> vector<128x128xf32>
    %9 = arith.addf %3, %8 : vector<128x128xf32>
    %c0_8 = arith.constant 0 : index
    %c0_9 = arith.constant 0 : index
    %10 = vector.load %arg7[%c0_8, %c0_9] : memref<128x128xf32, #tpu.memory_space<vmem>>, vector<128x128xf32>
    tpu.vector_store %arg7[%c0_8, %c0_9], %9 {strides = array<i32>} : memref<128x128xf32, #tpu.memory_space<vmem>>, vector<128x128xf32>,
    %c0_i32_10 = arith.constant 0 : i32
    %11 = arith.cmpi eq, %arg1, %c0_i32_10 : i32
    %12 = arith.extui %11 : i1 to i32
    %c0_i32_11 = arith.constant 0 : i32
    %13 = arith.cmpi ne, %12, %c0_i32_11 : i32
    scf.if %13 {
      %c0_12 = arith.constant 0 : index
      %c0_13 = arith.constant 0 : index
      %14 = vector.load %arg7[%c0_12, %c0_13] : memref<128x128xf32, #tpu.memory_space<vmem>>, vector<128x128xf32>
      %c0_14 = arith.constant 0 : index
      %c0_15 = arith.constant 0 : index
      %15 = vector.load %arg4[%c0_14, %c0_15] : memref<1x128xf32, #tpu.memory_space<vmem>>, vector<1x128xf32>
      %16 = vector.broadcast %15 : vector<1x128xf32> to vector<128x128xf32>
      %17 = arith.mulf %14, %16 : vector<128x128xf32>
      %c0_16 = arith.constant 0 : index
      %c0_17 = arith.constant 0 : index
      %18 = vector.load %arg5[%c0_16, %c0_17] : memref<1x128xf32, #tpu.memory_space<vmem>>, vector<1x128xf32>
      %19 = vector.broadcast %18 : vector<1x128xf32> to vector<128x128xf32>
      %20 = arith.addf %17, %19 : vector<128x128xf32>
      %21 = arith.truncf %20 : vector<128x128xf32> to vector<128x128xbf16>
      %c0_18 = arith.constant 0 : index
      %c0_19 = arith.constant 0 : index
      %22 = vector.load %arg6[%c0_18, %c0_19] : memref<128x128xbf16, #tpu.memory_space<vmem>>, vector<128x128xbf16>
      tpu.vector_store %arg6[%c0_18, %c0_19], %21 {strides = array<i32>} : memref<128x128xbf16, #tpu.memory_space<vmem>>, vector<128x128xbf16>,
    } else {
    }
    return
  }
  func.func @transform_0(%arg0: i32, %arg1: i32) -> (i32, i32, i32) {
    %c0_i32 = arith.constant 0 : i32
    %c0_i32_0 = arith.constant 0 : i32
    return %arg1, %arg0, %c0_i32 : i32, i32, i32
  }
  func.func @transform_1(%arg0: i32, %arg1: i32) -> (i32, i32, i32) {
    %c0_i32 = arith.constant 0 : i32
    %c0_i32_0 = arith.constant 0 : i32
    %c0_i32_1 = arith.constant 0 : i32
    return %arg1, %c0_i32, %c0_i32_0 : i32, i32, i32
  }
  func.func @transform_2(%arg0: i32, %arg1: i32) -> (i32, i32) {
    %c0_i32 = arith.constant 0 : i32
    %c0_i32_0 = arith.constant 0 : i32
    %c0_i32_1 = arith.constant 0 : i32
    return %c0_i32, %c0_i32_0 : i32, i32
  }
  func.func @transform_3(%arg0: i32, %arg1: i32) -> (i32, i32) {
    %c0_i32 = arith.constant 0 : i32
    %c0_i32_0 = arith.constant 0 : i32
    %c0_i32_1 = arith.constant 0 : i32
    return %c0_i32, %c0_i32_0 : i32, i32
  }
  func.func @transform_4(%arg0: i32, %arg1: i32) -> (i32, i32) {
    %c0_i32 = arith.constant 0 : i32
    %c0_i32_0 = arith.constant 0 : i32
    return %arg0, %c0_i32 : i32, i32
  }
}

module attributes {stable_mosaic.version = 11 : i64} {
  func.func @_conv_gemm_kernel(%arg0: i32, %arg1: i32, %arg2: memref<1x32x128xbf16, #tpu.memory_space<vmem>>, %arg3: memref<1x128x256xbf16, #tpu.memory_space<vmem>>, %arg4: memref<1x256xf32, #tpu.memory_space<vmem>>, %arg5: memref<1x256xf32, #tpu.memory_space<vmem>>, %arg6: memref<32x256xbf16, #tpu.memory_space<vmem>>, %arg7: memref<32x256xf32, #tpu.memory_space<vmem>>) attributes {dimension_semantics = [#tpu.dimension_semantics<parallel>, #tpu.dimension_semantics<arbitrary>], iteration_bounds = array<i64: 1, 9>, scalar_prefetch = 0 : i64, scratch_operands = 1 : i64, tpu.core_type = #tpu.core_type<tc>, window_params = [{transform_indices = @transform_0, window_bounds = array<i64: 1, 32, 128>}, {transform_indices = @transform_1, window_bounds = array<i64: 1, 128, 256>}, {pipeline_mode = #tpu.pipeline_mode<synchronous>, transform_indices = @transform_2, window_bounds = array<i64: 1, 256>}, {pipeline_mode = #tpu.pipeline_mode<synchronous>, transform_indices = @transform_3, window_bounds = array<i64: 1, 256>}, {transform_indices = @transform_4, window_bounds = array<i64: 32, 256>}]} {
    %c0_i32 = arith.constant 0 : i32
    %0 = arith.cmpi eq, %arg1, %c0_i32 : i32
    %1 = arith.extui %0 : i1 to i32
    %c0_i32_0 = arith.constant 0 : i32
    %2 = arith.cmpi ne, %1, %c0_i32_0 : i32
    scf.if %2 {
      %cst_11 = arith.constant 0.000000e+00 : f32
      %14 = vector.broadcast %cst_11 : f32 to vector<32x256xf32>
      %c0_12 = arith.constant 0 : index
      %c0_13 = arith.constant 0 : index
      %15 = vector.load %arg7[%c0_12, %c0_13] : memref<32x256xf32, #tpu.memory_space<vmem>>, vector<32x256xf32>
      tpu.vector_store %arg7[%c0_12, %c0_13], %14 {strides = array<i32>} : memref<32x256xf32, #tpu.memory_space<vmem>>, vector<32x256xf32>,
    } else {
    }
    %c0 = arith.constant 0 : index
    %c0_1 = arith.constant 0 : index
    %3 = vector.load %arg7[%c0, %c0_1] : memref<32x256xf32, #tpu.memory_space<vmem>>, vector<32x256xf32>
    %c0_2 = arith.constant 0 : index
    %c0_3 = arith.constant 0 : index
    %c0_4 = arith.constant 0 : index
    %4 = vector.load %arg2[%c0_2, %c0_3, %c0_4] : memref<1x32x128xbf16, #tpu.memory_space<vmem>>, vector<1x32x128xbf16>
    %5 = vector.shape_cast %4 : vector<1x32x128xbf16> to vector<32x128xbf16>
    %c0_5 = arith.constant 0 : index
    %c0_6 = arith.constant 0 : index
    %c0_7 = arith.constant 0 : index
    %6 = vector.load %arg3[%c0_5, %c0_6, %c0_7] : memref<1x128x256xbf16, #tpu.memory_space<vmem>>, vector<1x128x256xbf16>
    %7 = vector.shape_cast %6 : vector<1x128x256xbf16> to vector<128x256xbf16>
    %cst = arith.constant dense<0.000000e+00> : vector<32x256xf32>
    %8 = tpu.matmul %5, %7, %cst {dimension_numbers = #tpu.dot_dimension_numbers<[1], [0], [0], [1], [0, 0, 1, 1], [], []>} : vector<32x128xbf16>, vector<128x256xbf16>, vector<32x256xf32> -> vector<32x256xf32>
    %9 = arith.addf %3, %8 : vector<32x256xf32>
    %c0_8 = arith.constant 0 : index
    %c0_9 = arith.constant 0 : index
    %10 = vector.load %arg7[%c0_8, %c0_9] : memref<32x256xf32, #tpu.memory_space<vmem>>, vector<32x256xf32>
    tpu.vector_store %arg7[%c0_8, %c0_9], %9 {strides = array<i32>} : memref<32x256xf32, #tpu.memory_space<vmem>>, vector<32x256xf32>,
    %c8_i32 = arith.constant 8 : i32
    %11 = arith.cmpi eq, %arg1, %c8_i32 : i32
    %12 = arith.extui %11 : i1 to i32
    %c0_i32_10 = arith.constant 0 : i32
    %13 = arith.cmpi ne, %12, %c0_i32_10 : i32
    scf.if %13 {
      %c0_11 = arith.constant 0 : index
      %c0_12 = arith.constant 0 : index
      %14 = vector.load %arg7[%c0_11, %c0_12] : memref<32x256xf32, #tpu.memory_space<vmem>>, vector<32x256xf32>
      %c0_13 = arith.constant 0 : index
      %c0_14 = arith.constant 0 : index
      %15 = vector.load %arg4[%c0_13, %c0_14] : memref<1x256xf32, #tpu.memory_space<vmem>>, vector<1x256xf32>
      %16 = vector.broadcast %15 : vector<1x256xf32> to vector<32x256xf32>
      %17 = arith.mulf %14, %16 : vector<32x256xf32>
      %c0_15 = arith.constant 0 : index
      %c0_16 = arith.constant 0 : index
      %18 = vector.load %arg5[%c0_15, %c0_16] : memref<1x256xf32, #tpu.memory_space<vmem>>, vector<1x256xf32>
      %19 = vector.broadcast %18 : vector<1x256xf32> to vector<32x256xf32>
      %20 = arith.addf %17, %19 : vector<32x256xf32>
      %cst_17 = arith.constant 0.000000e+00 : f32
      %21 = vector.broadcast %cst_17 : f32 to vector<32x256xf32>
      %22 = arith.maximumf %20, %21 : vector<32x256xf32>
      %23 = arith.truncf %22 : vector<32x256xf32> to vector<32x256xbf16>
      %c0_18 = arith.constant 0 : index
      %c0_19 = arith.constant 0 : index
      %24 = vector.load %arg6[%c0_18, %c0_19] : memref<32x256xbf16, #tpu.memory_space<vmem>>, vector<32x256xbf16>
      tpu.vector_store %arg6[%c0_18, %c0_19], %23 {strides = array<i32>} : memref<32x256xbf16, #tpu.memory_space<vmem>>, vector<32x256xbf16>,
    } else {
    }
    return
  }
  func.func @transform_0(%arg0: i32, %arg1: i32) -> (i32, i32, i32) {
    %c0_i32 = arith.constant 0 : i32
    %c0_i32_0 = arith.constant 0 : i32
    return %arg1, %arg0, %c0_i32 : i32, i32, i32
  }
  func.func @transform_1(%arg0: i32, %arg1: i32) -> (i32, i32, i32) {
    %c0_i32 = arith.constant 0 : i32
    %c0_i32_0 = arith.constant 0 : i32
    %c0_i32_1 = arith.constant 0 : i32
    return %arg1, %c0_i32, %c0_i32_0 : i32, i32, i32
  }
  func.func @transform_2(%arg0: i32, %arg1: i32) -> (i32, i32) {
    %c0_i32 = arith.constant 0 : i32
    %c0_i32_0 = arith.constant 0 : i32
    %c0_i32_1 = arith.constant 0 : i32
    return %c0_i32, %c0_i32_0 : i32, i32
  }
  func.func @transform_3(%arg0: i32, %arg1: i32) -> (i32, i32) {
    %c0_i32 = arith.constant 0 : i32
    %c0_i32_0 = arith.constant 0 : i32
    %c0_i32_1 = arith.constant 0 : i32
    return %c0_i32, %c0_i32_0 : i32, i32
  }
  func.func @transform_4(%arg0: i32, %arg1: i32) -> (i32, i32) {
    %c0_i32 = arith.constant 0 : i32
    %c0_i32_0 = arith.constant 0 : i32
    return %arg0, %c0_i32 : i32, i32
  }
}

module attributes {stable_mosaic.version = 11 : i64} {
  func.func @_conv_gemm_res_kernel(%arg0: i32, %arg1: i32, %arg2: memref<1x32x256xbf16, #tpu.memory_space<vmem>>, %arg3: memref<1x256x256xbf16, #tpu.memory_space<vmem>>, %arg4: memref<1x256xf32, #tpu.memory_space<vmem>>, %arg5: memref<1x256xf32, #tpu.memory_space<vmem>>, %arg6: memref<32x256xbf16, #tpu.memory_space<vmem>>, %arg7: memref<32x256xbf16, #tpu.memory_space<vmem>>, %arg8: memref<32x256xf32, #tpu.memory_space<vmem>>) attributes {dimension_semantics = [#tpu.dimension_semantics<parallel>, #tpu.dimension_semantics<arbitrary>], iteration_bounds = array<i64: 1, 9>, scalar_prefetch = 0 : i64, scratch_operands = 1 : i64, tpu.core_type = #tpu.core_type<tc>, window_params = [{transform_indices = @transform_0, window_bounds = array<i64: 1, 32, 256>}, {transform_indices = @transform_1, window_bounds = array<i64: 1, 256, 256>}, {pipeline_mode = #tpu.pipeline_mode<synchronous>, transform_indices = @transform_2, window_bounds = array<i64: 1, 256>}, {pipeline_mode = #tpu.pipeline_mode<synchronous>, transform_indices = @transform_3, window_bounds = array<i64: 1, 256>}, {transform_indices = @transform_4, window_bounds = array<i64: 32, 256>}, {transform_indices = @transform_5, window_bounds = array<i64: 32, 256>}]} {
    %c0_i32 = arith.constant 0 : i32
    %0 = arith.cmpi eq, %arg1, %c0_i32 : i32
    %1 = arith.extui %0 : i1 to i32
    %c0_i32_0 = arith.constant 0 : i32
    %2 = arith.cmpi ne, %1, %c0_i32_0 : i32
    scf.if %2 {
      %cst_11 = arith.constant 0.000000e+00 : f32
      %14 = vector.broadcast %cst_11 : f32 to vector<32x256xf32>
      %c0_12 = arith.constant 0 : index
      %c0_13 = arith.constant 0 : index
      %15 = vector.load %arg8[%c0_12, %c0_13] : memref<32x256xf32, #tpu.memory_space<vmem>>, vector<32x256xf32>
      tpu.vector_store %arg8[%c0_12, %c0_13], %14 {strides = array<i32>} : memref<32x256xf32, #tpu.memory_space<vmem>>, vector<32x256xf32>,
    } else {
    }
    %c0 = arith.constant 0 : index
    %c0_1 = arith.constant 0 : index
    %3 = vector.load %arg8[%c0, %c0_1] : memref<32x256xf32, #tpu.memory_space<vmem>>, vector<32x256xf32>
    %c0_2 = arith.constant 0 : index
    %c0_3 = arith.constant 0 : index
    %c0_4 = arith.constant 0 : index
    %4 = vector.load %arg2[%c0_2, %c0_3, %c0_4] : memref<1x32x256xbf16, #tpu.memory_space<vmem>>, vector<1x32x256xbf16>
    %5 = vector.shape_cast %4 : vector<1x32x256xbf16> to vector<32x256xbf16>
    %c0_5 = arith.constant 0 : index
    %c0_6 = arith.constant 0 : index
    %c0_7 = arith.constant 0 : index
    %6 = vector.load %arg3[%c0_5, %c0_6, %c0_7] : memref<1x256x256xbf16, #tpu.memory_space<vmem>>, vector<1x256x256xbf16>
    %7 = vector.shape_cast %6 : vector<1x256x256xbf16> to vector<256x256xbf16>
    %cst = arith.constant dense<0.000000e+00> : vector<32x256xf32>
    %8 = tpu.matmul %5, %7, %cst {dimension_numbers = #tpu.dot_dimension_numbers<[1], [0], [0], [1], [0, 0, 1, 1], [], []>} : vector<32x256xbf16>, vector<256x256xbf16>, vector<32x256xf32> -> vector<32x256xf32>
    %9 = arith.addf %3, %8 : vector<32x256xf32>
    %c0_8 = arith.constant 0 : index
    %c0_9 = arith.constant 0 : index
    %10 = vector.load %arg8[%c0_8, %c0_9] : memref<32x256xf32, #tpu.memory_space<vmem>>, vector<32x256xf32>
    tpu.vector_store %arg8[%c0_8, %c0_9], %9 {strides = array<i32>} : memref<32x256xf32, #tpu.memory_space<vmem>>, vector<32x256xf32>,
    %c8_i32 = arith.constant 8 : i32
    %11 = arith.cmpi eq, %arg1, %c8_i32 : i32
    %12 = arith.extui %11 : i1 to i32
    %c0_i32_10 = arith.constant 0 : i32
    %13 = arith.cmpi ne, %12, %c0_i32_10 : i32
    scf.if %13 {
      %c0_11 = arith.constant 0 : index
      %c0_12 = arith.constant 0 : index
      %14 = vector.load %arg8[%c0_11, %c0_12] : memref<32x256xf32, #tpu.memory_space<vmem>>, vector<32x256xf32>
      %c0_13 = arith.constant 0 : index
      %c0_14 = arith.constant 0 : index
      %15 = vector.load %arg4[%c0_13, %c0_14] : memref<1x256xf32, #tpu.memory_space<vmem>>, vector<1x256xf32>
      %16 = vector.broadcast %15 : vector<1x256xf32> to vector<32x256xf32>
      %17 = arith.mulf %14, %16 : vector<32x256xf32>
      %c0_15 = arith.constant 0 : index
      %c0_16 = arith.constant 0 : index
      %18 = vector.load %arg5[%c0_15, %c0_16] : memref<1x256xf32, #tpu.memory_space<vmem>>, vector<1x256xf32>
      %19 = vector.broadcast %18 : vector<1x256xf32> to vector<32x256xf32>
      %20 = arith.addf %17, %19 : vector<32x256xf32>
      %c0_17 = arith.constant 0 : index
      %c0_18 = arith.constant 0 : index
      %21 = vector.load %arg6[%c0_17, %c0_18] : memref<32x256xbf16, #tpu.memory_space<vmem>>, vector<32x256xbf16>
      %22 = arith.extf %21 : vector<32x256xbf16> to vector<32x256xf32>
      %23 = arith.addf %20, %22 : vector<32x256xf32>
      %cst_19 = arith.constant 0.000000e+00 : f32
      %24 = vector.broadcast %cst_19 : f32 to vector<32x256xf32>
      %25 = arith.maximumf %23, %24 : vector<32x256xf32>
      %26 = arith.truncf %25 : vector<32x256xf32> to vector<32x256xbf16>
      %c0_20 = arith.constant 0 : index
      %c0_21 = arith.constant 0 : index
      %27 = vector.load %arg7[%c0_20, %c0_21] : memref<32x256xbf16, #tpu.memory_space<vmem>>, vector<32x256xbf16>
      tpu.vector_store %arg7[%c0_20, %c0_21], %26 {strides = array<i32>} : memref<32x256xbf16, #tpu.memory_space<vmem>>, vector<32x256xbf16>,
    } else {
    }
    return
  }
  func.func @transform_0(%arg0: i32, %arg1: i32) -> (i32, i32, i32) {
    %c0_i32 = arith.constant 0 : i32
    %c0_i32_0 = arith.constant 0 : i32
    return %arg1, %arg0, %c0_i32 : i32, i32, i32
  }
  func.func @transform_1(%arg0: i32, %arg1: i32) -> (i32, i32, i32) {
    %c0_i32 = arith.constant 0 : i32
    %c0_i32_0 = arith.constant 0 : i32
    %c0_i32_1 = arith.constant 0 : i32
    return %arg1, %c0_i32, %c0_i32_0 : i32, i32, i32
  }
  func.func @transform_2(%arg0: i32, %arg1: i32) -> (i32, i32) {
    %c0_i32 = arith.constant 0 : i32
    %c0_i32_0 = arith.constant 0 : i32
    %c0_i32_1 = arith.constant 0 : i32
    return %c0_i32, %c0_i32_0 : i32, i32
  }
  func.func @transform_3(%arg0: i32, %arg1: i32) -> (i32, i32) {
    %c0_i32 = arith.constant 0 : i32
    %c0_i32_0 = arith.constant 0 : i32
    %c0_i32_1 = arith.constant 0 : i32
    return %c0_i32, %c0_i32_0 : i32, i32
  }
  func.func @transform_4(%arg0: i32, %arg1: i32) -> (i32, i32) {
    %c0_i32 = arith.constant 0 : i32
    %c0_i32_0 = arith.constant 0 : i32
    return %arg0, %c0_i32 : i32, i32
  }
  func.func @transform_5(%arg0: i32, %arg1: i32) -> (i32, i32) {
    %c0_i32 = arith.constant 0 : i32
    %c0_i32_0 = arith.constant 0 : i32
    return %arg0, %c0_i32 : i32, i32
  }
}

module attributes {stable_mosaic.version = 11 : i64} {
  func.func @_conv_gemm_kernel(%arg0: i32, %arg1: i32, %arg2: memref<1x32x128xbf16, #tpu.memory_space<vmem>>, %arg3: memref<1x128x256xbf16, #tpu.memory_space<vmem>>, %arg4: memref<1x256xf32, #tpu.memory_space<vmem>>, %arg5: memref<1x256xf32, #tpu.memory_space<vmem>>, %arg6: memref<32x256xbf16, #tpu.memory_space<vmem>>, %arg7: memref<32x256xf32, #tpu.memory_space<vmem>>) attributes {dimension_semantics = [#tpu.dimension_semantics<parallel>, #tpu.dimension_semantics<arbitrary>], iteration_bounds = array<i64: 1, 1>, scalar_prefetch = 0 : i64, scratch_operands = 1 : i64, tpu.core_type = #tpu.core_type<tc>, window_params = [{transform_indices = @transform_0, window_bounds = array<i64: 1, 32, 128>}, {transform_indices = @transform_1, window_bounds = array<i64: 1, 128, 256>}, {pipeline_mode = #tpu.pipeline_mode<synchronous>, transform_indices = @transform_2, window_bounds = array<i64: 1, 256>}, {pipeline_mode = #tpu.pipeline_mode<synchronous>, transform_indices = @transform_3, window_bounds = array<i64: 1, 256>}, {transform_indices = @transform_4, window_bounds = array<i64: 32, 256>}]} {
    %c0_i32 = arith.constant 0 : i32
    %0 = arith.cmpi eq, %arg1, %c0_i32 : i32
    %1 = arith.extui %0 : i1 to i32
    %c0_i32_0 = arith.constant 0 : i32
    %2 = arith.cmpi ne, %1, %c0_i32_0 : i32
    scf.if %2 {
      %cst_12 = arith.constant 0.000000e+00 : f32
      %14 = vector.broadcast %cst_12 : f32 to vector<32x256xf32>
      %c0_13 = arith.constant 0 : index
      %c0_14 = arith.constant 0 : index
      %15 = vector.load %arg7[%c0_13, %c0_14] : memref<32x256xf32, #tpu.memory_space<vmem>>, vector<32x256xf32>
      tpu.vector_store %arg7[%c0_13, %c0_14], %14 {strides = array<i32>} : memref<32x256xf32, #tpu.memory_space<vmem>>, vector<32x256xf32>,
    } else {
    }
    %c0 = arith.constant 0 : index
    %c0_1 = arith.constant 0 : index
    %3 = vector.load %arg7[%c0, %c0_1] : memref<32x256xf32, #tpu.memory_space<vmem>>, vector<32x256xf32>
    %c0_2 = arith.constant 0 : index
    %c0_3 = arith.constant 0 : index
    %c0_4 = arith.constant 0 : index
    %4 = vector.load %arg2[%c0_2, %c0_3, %c0_4] : memref<1x32x128xbf16, #tpu.memory_space<vmem>>, vector<1x32x128xbf16>
    %5 = vector.shape_cast %4 : vector<1x32x128xbf16> to vector<32x128xbf16>
    %c0_5 = arith.constant 0 : index
    %c0_6 = arith.constant 0 : index
    %c0_7 = arith.constant 0 : index
    %6 = vector.load %arg3[%c0_5, %c0_6, %c0_7] : memref<1x128x256xbf16, #tpu.memory_space<vmem>>, vector<1x128x256xbf16>
    %7 = vector.shape_cast %6 : vector<1x128x256xbf16> to vector<128x256xbf16>
    %cst = arith.constant dense<0.000000e+00> : vector<32x256xf32>
    %8 = tpu.matmul %5, %7, %cst {dimension_numbers = #tpu.dot_dimension_numbers<[1], [0], [0], [1], [0, 0, 1, 1], [], []>} : vector<32x128xbf16>, vector<128x256xbf16>, vector<32x256xf32> -> vector<32x256xf32>
    %9 = arith.addf %3, %8 : vector<32x256xf32>
    %c0_8 = arith.constant 0 : index
    %c0_9 = arith.constant 0 : index
    %10 = vector.load %arg7[%c0_8, %c0_9] : memref<32x256xf32, #tpu.memory_space<vmem>>, vector<32x256xf32>
    tpu.vector_store %arg7[%c0_8, %c0_9], %9 {strides = array<i32>} : memref<32x256xf32, #tpu.memory_space<vmem>>, vector<32x256xf32>,
    %c0_i32_10 = arith.constant 0 : i32
    %11 = arith.cmpi eq, %arg1, %c0_i32_10 : i32
    %12 = arith.extui %11 : i1 to i32
    %c0_i32_11 = arith.constant 0 : i32
    %13 = arith.cmpi ne, %12, %c0_i32_11 : i32
    scf.if %13 {
      %c0_12 = arith.constant 0 : index
      %c0_13 = arith.constant 0 : index
      %14 = vector.load %arg7[%c0_12, %c0_13] : memref<32x256xf32, #tpu.memory_space<vmem>>, vector<32x256xf32>
      %c0_14 = arith.constant 0 : index
      %c0_15 = arith.constant 0 : index
      %15 = vector.load %arg4[%c0_14, %c0_15] : memref<1x256xf32, #tpu.memory_space<vmem>>, vector<1x256xf32>
      %16 = vector.broadcast %15 : vector<1x256xf32> to vector<32x256xf32>
      %17 = arith.mulf %14, %16 : vector<32x256xf32>
      %c0_16 = arith.constant 0 : index
      %c0_17 = arith.constant 0 : index
      %18 = vector.load %arg5[%c0_16, %c0_17] : memref<1x256xf32, #tpu.memory_space<vmem>>, vector<1x256xf32>
      %19 = vector.broadcast %18 : vector<1x256xf32> to vector<32x256xf32>
      %20 = arith.addf %17, %19 : vector<32x256xf32>
      %21 = arith.truncf %20 : vector<32x256xf32> to vector<32x256xbf16>
      %c0_18 = arith.constant 0 : index
      %c0_19 = arith.constant 0 : index
      %22 = vector.load %arg6[%c0_18, %c0_19] : memref<32x256xbf16, #tpu.memory_space<vmem>>, vector<32x256xbf16>
      tpu.vector_store %arg6[%c0_18, %c0_19], %21 {strides = array<i32>} : memref<32x256xbf16, #tpu.memory_space<vmem>>, vector<32x256xbf16>,
    } else {
    }
    return
  }
  func.func @transform_0(%arg0: i32, %arg1: i32) -> (i32, i32, i32) {
    %c0_i32 = arith.constant 0 : i32
    %c0_i32_0 = arith.constant 0 : i32
    return %arg1, %arg0, %c0_i32 : i32, i32, i32
  }
  func.func @transform_1(%arg0: i32, %arg1: i32) -> (i32, i32, i32) {
    %c0_i32 = arith.constant 0 : i32
    %c0_i32_0 = arith.constant 0 : i32
    %c0_i32_1 = arith.constant 0 : i32
    return %arg1, %c0_i32, %c0_i32_0 : i32, i32, i32
  }
  func.func @transform_2(%arg0: i32, %arg1: i32) -> (i32, i32) {
    %c0_i32 = arith.constant 0 : i32
    %c0_i32_0 = arith.constant 0 : i32
    %c0_i32_1 = arith.constant 0 : i32
    return %c0_i32, %c0_i32_0 : i32, i32
  }
  func.func @transform_3(%arg0: i32, %arg1: i32) -> (i32, i32) {
    %c0_i32 = arith.constant 0 : i32
    %c0_i32_0 = arith.constant 0 : i32
    %c0_i32_1 = arith.constant 0 : i32
    return %c0_i32, %c0_i32_0 : i32, i32
  }
  func.func @transform_4(%arg0: i32, %arg1: i32) -> (i32, i32) {
    %c0_i32 = arith.constant 0 : i32
    %c0_i32_0 = arith.constant 0 : i32
    return %arg0, %c0_i32 : i32, i32
  }
}

module attributes {stable_mosaic.version = 11 : i64} {
  func.func @_conv_gemm_kernel(%arg0: i32, %arg1: i32, %arg2: memref<1x8x256xbf16, #tpu.memory_space<vmem>>, %arg3: memref<1x256x512xbf16, #tpu.memory_space<vmem>>, %arg4: memref<1x512xf32, #tpu.memory_space<vmem>>, %arg5: memref<1x512xf32, #tpu.memory_space<vmem>>, %arg6: memref<8x512xbf16, #tpu.memory_space<vmem>>, %arg7: memref<8x512xf32, #tpu.memory_space<vmem>>) attributes {dimension_semantics = [#tpu.dimension_semantics<parallel>, #tpu.dimension_semantics<arbitrary>], iteration_bounds = array<i64: 1, 9>, scalar_prefetch = 0 : i64, scratch_operands = 1 : i64, tpu.core_type = #tpu.core_type<tc>, window_params = [{transform_indices = @transform_0, window_bounds = array<i64: 1, 8, 256>}, {transform_indices = @transform_1, window_bounds = array<i64: 1, 256, 512>}, {pipeline_mode = #tpu.pipeline_mode<synchronous>, transform_indices = @transform_2, window_bounds = array<i64: 1, 512>}, {pipeline_mode = #tpu.pipeline_mode<synchronous>, transform_indices = @transform_3, window_bounds = array<i64: 1, 512>}, {transform_indices = @transform_4, window_bounds = array<i64: 8, 512>}]} {
    %c0_i32 = arith.constant 0 : i32
    %0 = arith.cmpi eq, %arg1, %c0_i32 : i32
    %1 = arith.extui %0 : i1 to i32
    %c0_i32_0 = arith.constant 0 : i32
    %2 = arith.cmpi ne, %1, %c0_i32_0 : i32
    scf.if %2 {
      %cst_11 = arith.constant 0.000000e+00 : f32
      %14 = vector.broadcast %cst_11 : f32 to vector<8x512xf32>
      %c0_12 = arith.constant 0 : index
      %c0_13 = arith.constant 0 : index
      %15 = vector.load %arg7[%c0_12, %c0_13] : memref<8x512xf32, #tpu.memory_space<vmem>>, vector<8x512xf32>
      tpu.vector_store %arg7[%c0_12, %c0_13], %14 {strides = array<i32>} : memref<8x512xf32, #tpu.memory_space<vmem>>, vector<8x512xf32>,
    } else {
    }
    %c0 = arith.constant 0 : index
    %c0_1 = arith.constant 0 : index
    %3 = vector.load %arg7[%c0, %c0_1] : memref<8x512xf32, #tpu.memory_space<vmem>>, vector<8x512xf32>
    %c0_2 = arith.constant 0 : index
    %c0_3 = arith.constant 0 : index
    %c0_4 = arith.constant 0 : index
    %4 = vector.load %arg2[%c0_2, %c0_3, %c0_4] : memref<1x8x256xbf16, #tpu.memory_space<vmem>>, vector<1x8x256xbf16>
    %5 = vector.shape_cast %4 : vector<1x8x256xbf16> to vector<8x256xbf16>
    %c0_5 = arith.constant 0 : index
    %c0_6 = arith.constant 0 : index
    %c0_7 = arith.constant 0 : index
    %6 = vector.load %arg3[%c0_5, %c0_6, %c0_7] : memref<1x256x512xbf16, #tpu.memory_space<vmem>>, vector<1x256x512xbf16>
    %7 = vector.shape_cast %6 : vector<1x256x512xbf16> to vector<256x512xbf16>
    %cst = arith.constant dense<0.000000e+00> : vector<8x512xf32>
    %8 = tpu.matmul %5, %7, %cst {dimension_numbers = #tpu.dot_dimension_numbers<[1], [0], [0], [1], [0, 0, 1, 1], [], []>} : vector<8x256xbf16>, vector<256x512xbf16>, vector<8x512xf32> -> vector<8x512xf32>
    %9 = arith.addf %3, %8 : vector<8x512xf32>
    %c0_8 = arith.constant 0 : index
    %c0_9 = arith.constant 0 : index
    %10 = vector.load %arg7[%c0_8, %c0_9] : memref<8x512xf32, #tpu.memory_space<vmem>>, vector<8x512xf32>
    tpu.vector_store %arg7[%c0_8, %c0_9], %9 {strides = array<i32>} : memref<8x512xf32, #tpu.memory_space<vmem>>, vector<8x512xf32>,
    %c8_i32 = arith.constant 8 : i32
    %11 = arith.cmpi eq, %arg1, %c8_i32 : i32
    %12 = arith.extui %11 : i1 to i32
    %c0_i32_10 = arith.constant 0 : i32
    %13 = arith.cmpi ne, %12, %c0_i32_10 : i32
    scf.if %13 {
      %c0_11 = arith.constant 0 : index
      %c0_12 = arith.constant 0 : index
      %14 = vector.load %arg7[%c0_11, %c0_12] : memref<8x512xf32, #tpu.memory_space<vmem>>, vector<8x512xf32>
      %c0_13 = arith.constant 0 : index
      %c0_14 = arith.constant 0 : index
      %15 = vector.load %arg4[%c0_13, %c0_14] : memref<1x512xf32, #tpu.memory_space<vmem>>, vector<1x512xf32>
      %16 = vector.broadcast %15 : vector<1x512xf32> to vector<8x512xf32>
      %17 = arith.mulf %14, %16 : vector<8x512xf32>
      %c0_15 = arith.constant 0 : index
      %c0_16 = arith.constant 0 : index
      %18 = vector.load %arg5[%c0_15, %c0_16] : memref<1x512xf32, #tpu.memory_space<vmem>>, vector<1x512xf32>
      %19 = vector.broadcast %18 : vector<1x512xf32> to vector<8x512xf32>
      %20 = arith.addf %17, %19 : vector<8x512xf32>
      %cst_17 = arith.constant 0.000000e+00 : f32
      %21 = vector.broadcast %cst_17 : f32 to vector<8x512xf32>
      %22 = arith.maximumf %20, %21 : vector<8x512xf32>
      %23 = arith.truncf %22 : vector<8x512xf32> to vector<8x512xbf16>
      %c0_18 = arith.constant 0 : index
      %c0_19 = arith.constant 0 : index
      %24 = vector.load %arg6[%c0_18, %c0_19] : memref<8x512xbf16, #tpu.memory_space<vmem>>, vector<8x512xbf16>
      tpu.vector_store %arg6[%c0_18, %c0_19], %23 {strides = array<i32>} : memref<8x512xbf16, #tpu.memory_space<vmem>>, vector<8x512xbf16>,
    } else {
    }
    return
  }
  func.func @transform_0(%arg0: i32, %arg1: i32) -> (i32, i32, i32) {
    %c0_i32 = arith.constant 0 : i32
    %c0_i32_0 = arith.constant 0 : i32
    return %arg1, %arg0, %c0_i32 : i32, i32, i32
  }
  func.func @transform_1(%arg0: i32, %arg1: i32) -> (i32, i32, i32) {
    %c0_i32 = arith.constant 0 : i32
    %c0_i32_0 = arith.constant 0 : i32
    %c0_i32_1 = arith.constant 0 : i32
    return %arg1, %c0_i32, %c0_i32_0 : i32, i32, i32
  }
  func.func @transform_2(%arg0: i32, %arg1: i32) -> (i32, i32) {
    %c0_i32 = arith.constant 0 : i32
    %c0_i32_0 = arith.constant 0 : i32
    %c0_i32_1 = arith.constant 0 : i32
    return %c0_i32, %c0_i32_0 : i32, i32
  }
  func.func @transform_3(%arg0: i32, %arg1: i32) -> (i32, i32) {
    %c0_i32 = arith.constant 0 : i32
    %c0_i32_0 = arith.constant 0 : i32
    %c0_i32_1 = arith.constant 0 : i32
    return %c0_i32, %c0_i32_0 : i32, i32
  }
  func.func @transform_4(%arg0: i32, %arg1: i32) -> (i32, i32) {
    %c0_i32 = arith.constant 0 : i32
    %c0_i32_0 = arith.constant 0 : i32
    return %arg0, %c0_i32 : i32, i32
  }
}

module attributes {stable_mosaic.version = 11 : i64} {
  func.func @_conv_gemm_res_kernel(%arg0: i32, %arg1: i32, %arg2: memref<1x8x512xbf16, #tpu.memory_space<vmem>>, %arg3: memref<1x512x512xbf16, #tpu.memory_space<vmem>>, %arg4: memref<1x512xf32, #tpu.memory_space<vmem>>, %arg5: memref<1x512xf32, #tpu.memory_space<vmem>>, %arg6: memref<8x512xbf16, #tpu.memory_space<vmem>>, %arg7: memref<8x512xbf16, #tpu.memory_space<vmem>>, %arg8: memref<8x512xf32, #tpu.memory_space<vmem>>) attributes {dimension_semantics = [#tpu.dimension_semantics<parallel>, #tpu.dimension_semantics<arbitrary>], iteration_bounds = array<i64: 1, 9>, scalar_prefetch = 0 : i64, scratch_operands = 1 : i64, tpu.core_type = #tpu.core_type<tc>, window_params = [{transform_indices = @transform_0, window_bounds = array<i64: 1, 8, 512>}, {transform_indices = @transform_1, window_bounds = array<i64: 1, 512, 512>}, {pipeline_mode = #tpu.pipeline_mode<synchronous>, transform_indices = @transform_2, window_bounds = array<i64: 1, 512>}, {pipeline_mode = #tpu.pipeline_mode<synchronous>, transform_indices = @transform_3, window_bounds = array<i64: 1, 512>}, {transform_indices = @transform_4, window_bounds = array<i64: 8, 512>}, {transform_indices = @transform_5, window_bounds = array<i64: 8, 512>}]} {
    %c0_i32 = arith.constant 0 : i32
    %0 = arith.cmpi eq, %arg1, %c0_i32 : i32
    %1 = arith.extui %0 : i1 to i32
    %c0_i32_0 = arith.constant 0 : i32
    %2 = arith.cmpi ne, %1, %c0_i32_0 : i32
    scf.if %2 {
      %cst_11 = arith.constant 0.000000e+00 : f32
      %14 = vector.broadcast %cst_11 : f32 to vector<8x512xf32>
      %c0_12 = arith.constant 0 : index
      %c0_13 = arith.constant 0 : index
      %15 = vector.load %arg8[%c0_12, %c0_13] : memref<8x512xf32, #tpu.memory_space<vmem>>, vector<8x512xf32>
      tpu.vector_store %arg8[%c0_12, %c0_13], %14 {strides = array<i32>} : memref<8x512xf32, #tpu.memory_space<vmem>>, vector<8x512xf32>,
    } else {
    }
    %c0 = arith.constant 0 : index
    %c0_1 = arith.constant 0 : index
    %3 = vector.load %arg8[%c0, %c0_1] : memref<8x512xf32, #tpu.memory_space<vmem>>, vector<8x512xf32>
    %c0_2 = arith.constant 0 : index
    %c0_3 = arith.constant 0 : index
    %c0_4 = arith.constant 0 : index
    %4 = vector.load %arg2[%c0_2, %c0_3, %c0_4] : memref<1x8x512xbf16, #tpu.memory_space<vmem>>, vector<1x8x512xbf16>
    %5 = vector.shape_cast %4 : vector<1x8x512xbf16> to vector<8x512xbf16>
    %c0_5 = arith.constant 0 : index
    %c0_6 = arith.constant 0 : index
    %c0_7 = arith.constant 0 : index
    %6 = vector.load %arg3[%c0_5, %c0_6, %c0_7] : memref<1x512x512xbf16, #tpu.memory_space<vmem>>, vector<1x512x512xbf16>
    %7 = vector.shape_cast %6 : vector<1x512x512xbf16> to vector<512x512xbf16>
    %cst = arith.constant dense<0.000000e+00> : vector<8x512xf32>
    %8 = tpu.matmul %5, %7, %cst {dimension_numbers = #tpu.dot_dimension_numbers<[1], [0], [0], [1], [0, 0, 1, 1], [], []>} : vector<8x512xbf16>, vector<512x512xbf16>, vector<8x512xf32> -> vector<8x512xf32>
    %9 = arith.addf %3, %8 : vector<8x512xf32>
    %c0_8 = arith.constant 0 : index
    %c0_9 = arith.constant 0 : index
    %10 = vector.load %arg8[%c0_8, %c0_9] : memref<8x512xf32, #tpu.memory_space<vmem>>, vector<8x512xf32>
    tpu.vector_store %arg8[%c0_8, %c0_9], %9 {strides = array<i32>} : memref<8x512xf32, #tpu.memory_space<vmem>>, vector<8x512xf32>,
    %c8_i32 = arith.constant 8 : i32
    %11 = arith.cmpi eq, %arg1, %c8_i32 : i32
    %12 = arith.extui %11 : i1 to i32
    %c0_i32_10 = arith.constant 0 : i32
    %13 = arith.cmpi ne, %12, %c0_i32_10 : i32
    scf.if %13 {
      %c0_11 = arith.constant 0 : index
      %c0_12 = arith.constant 0 : index
      %14 = vector.load %arg8[%c0_11, %c0_12] : memref<8x512xf32, #tpu.memory_space<vmem>>, vector<8x512xf32>
      %c0_13 = arith.constant 0 : index
      %c0_14 = arith.constant 0 : index
      %15 = vector.load %arg4[%c0_13, %c0_14] : memref<1x512xf32, #tpu.memory_space<vmem>>, vector<1x512xf32>
      %16 = vector.broadcast %15 : vector<1x512xf32> to vector<8x512xf32>
      %17 = arith.mulf %14, %16 : vector<8x512xf32>
      %c0_15 = arith.constant 0 : index
      %c0_16 = arith.constant 0 : index
      %18 = vector.load %arg5[%c0_15, %c0_16] : memref<1x512xf32, #tpu.memory_space<vmem>>, vector<1x512xf32>
      %19 = vector.broadcast %18 : vector<1x512xf32> to vector<8x512xf32>
      %20 = arith.addf %17, %19 : vector<8x512xf32>
      %c0_17 = arith.constant 0 : index
      %c0_18 = arith.constant 0 : index
      %21 = vector.load %arg6[%c0_17, %c0_18] : memref<8x512xbf16, #tpu.memory_space<vmem>>, vector<8x512xbf16>
      %22 = arith.extf %21 : vector<8x512xbf16> to vector<8x512xf32>
      %23 = arith.addf %20, %22 : vector<8x512xf32>
      %cst_19 = arith.constant 0.000000e+00 : f32
      %24 = vector.broadcast %cst_19 : f32 to vector<8x512xf32>
      %25 = arith.maximumf %23, %24 : vector<8x512xf32>
      %26 = arith.truncf %25 : vector<8x512xf32> to vector<8x512xbf16>
      %c0_20 = arith.constant 0 : index
      %c0_21 = arith.constant 0 : index
      %27 = vector.load %arg7[%c0_20, %c0_21] : memref<8x512xbf16, #tpu.memory_space<vmem>>, vector<8x512xbf16>
      tpu.vector_store %arg7[%c0_20, %c0_21], %26 {strides = array<i32>} : memref<8x512xbf16, #tpu.memory_space<vmem>>, vector<8x512xbf16>,
    } else {
    }
    return
  }
  func.func @transform_0(%arg0: i32, %arg1: i32) -> (i32, i32, i32) {
    %c0_i32 = arith.constant 0 : i32
    %c0_i32_0 = arith.constant 0 : i32
    return %arg1, %arg0, %c0_i32 : i32, i32, i32
  }
  func.func @transform_1(%arg0: i32, %arg1: i32) -> (i32, i32, i32) {
    %c0_i32 = arith.constant 0 : i32
    %c0_i32_0 = arith.constant 0 : i32
    %c0_i32_1 = arith.constant 0 : i32
    return %arg1, %c0_i32, %c0_i32_0 : i32, i32, i32
  }
  func.func @transform_2(%arg0: i32, %arg1: i32) -> (i32, i32) {
    %c0_i32 = arith.constant 0 : i32
    %c0_i32_0 = arith.constant 0 : i32
    %c0_i32_1 = arith.constant 0 : i32
    return %c0_i32, %c0_i32_0 : i32, i32
  }
  func.func @transform_3(%arg0: i32, %arg1: i32) -> (i32, i32) {
    %c0_i32 = arith.constant 0 : i32
    %c0_i32_0 = arith.constant 0 : i32
    %c0_i32_1 = arith.constant 0 : i32
    return %c0_i32, %c0_i32_0 : i32, i32
  }
  func.func @transform_4(%arg0: i32, %arg1: i32) -> (i32, i32) {
    %c0_i32 = arith.constant 0 : i32
    %c0_i32_0 = arith.constant 0 : i32
    return %arg0, %c0_i32 : i32, i32
  }
  func.func @transform_5(%arg0: i32, %arg1: i32) -> (i32, i32) {
    %c0_i32 = arith.constant 0 : i32
    %c0_i32_0 = arith.constant 0 : i32
    return %arg0, %c0_i32 : i32, i32
  }
}

module attributes {stable_mosaic.version = 11 : i64} {
  func.func @_conv_gemm_kernel(%arg0: i32, %arg1: i32, %arg2: memref<1x8x256xbf16, #tpu.memory_space<vmem>>, %arg3: memref<1x256x512xbf16, #tpu.memory_space<vmem>>, %arg4: memref<1x512xf32, #tpu.memory_space<vmem>>, %arg5: memref<1x512xf32, #tpu.memory_space<vmem>>, %arg6: memref<8x512xbf16, #tpu.memory_space<vmem>>, %arg7: memref<8x512xf32, #tpu.memory_space<vmem>>) attributes {dimension_semantics = [#tpu.dimension_semantics<parallel>, #tpu.dimension_semantics<arbitrary>], iteration_bounds = array<i64: 1, 1>, scalar_prefetch = 0 : i64, scratch_operands = 1 : i64, tpu.core_type = #tpu.core_type<tc>, window_params = [{transform_indices = @transform_0, window_bounds = array<i64: 1, 8, 256>}, {transform_indices = @transform_1, window_bounds = array<i64: 1, 256, 512>}, {pipeline_mode = #tpu.pipeline_mode<synchronous>, transform_indices = @transform_2, window_bounds = array<i64: 1, 512>}, {pipeline_mode = #tpu.pipeline_mode<synchronous>, transform_indices = @transform_3, window_bounds = array<i64: 1, 512>}, {transform_indices = @transform_4, window_bounds = array<i64: 8, 512>}]} {
    %c0_i32 = arith.constant 0 : i32
    %0 = arith.cmpi eq, %arg1, %c0_i32 : i32
    %1 = arith.extui %0 : i1 to i32
    %c0_i32_0 = arith.constant 0 : i32
    %2 = arith.cmpi ne, %1, %c0_i32_0 : i32
    scf.if %2 {
      %cst_12 = arith.constant 0.000000e+00 : f32
      %14 = vector.broadcast %cst_12 : f32 to vector<8x512xf32>
      %c0_13 = arith.constant 0 : index
      %c0_14 = arith.constant 0 : index
      %15 = vector.load %arg7[%c0_13, %c0_14] : memref<8x512xf32, #tpu.memory_space<vmem>>, vector<8x512xf32>
      tpu.vector_store %arg7[%c0_13, %c0_14], %14 {strides = array<i32>} : memref<8x512xf32, #tpu.memory_space<vmem>>, vector<8x512xf32>,
    } else {
    }
    %c0 = arith.constant 0 : index
    %c0_1 = arith.constant 0 : index
    %3 = vector.load %arg7[%c0, %c0_1] : memref<8x512xf32, #tpu.memory_space<vmem>>, vector<8x512xf32>
    %c0_2 = arith.constant 0 : index
    %c0_3 = arith.constant 0 : index
    %c0_4 = arith.constant 0 : index
    %4 = vector.load %arg2[%c0_2, %c0_3, %c0_4] : memref<1x8x256xbf16, #tpu.memory_space<vmem>>, vector<1x8x256xbf16>
    %5 = vector.shape_cast %4 : vector<1x8x256xbf16> to vector<8x256xbf16>
    %c0_5 = arith.constant 0 : index
    %c0_6 = arith.constant 0 : index
    %c0_7 = arith.constant 0 : index
    %6 = vector.load %arg3[%c0_5, %c0_6, %c0_7] : memref<1x256x512xbf16, #tpu.memory_space<vmem>>, vector<1x256x512xbf16>
    %7 = vector.shape_cast %6 : vector<1x256x512xbf16> to vector<256x512xbf16>
    %cst = arith.constant dense<0.000000e+00> : vector<8x512xf32>
    %8 = tpu.matmul %5, %7, %cst {dimension_numbers = #tpu.dot_dimension_numbers<[1], [0], [0], [1], [0, 0, 1, 1], [], []>} : vector<8x256xbf16>, vector<256x512xbf16>, vector<8x512xf32> -> vector<8x512xf32>
    %9 = arith.addf %3, %8 : vector<8x512xf32>
    %c0_8 = arith.constant 0 : index
    %c0_9 = arith.constant 0 : index
    %10 = vector.load %arg7[%c0_8, %c0_9] : memref<8x512xf32, #tpu.memory_space<vmem>>, vector<8x512xf32>
    tpu.vector_store %arg7[%c0_8, %c0_9], %9 {strides = array<i32>} : memref<8x512xf32, #tpu.memory_space<vmem>>, vector<8x512xf32>,
    %c0_i32_10 = arith.constant 0 : i32
    %11 = arith.cmpi eq, %arg1, %c0_i32_10 : i32
    %12 = arith.extui %11 : i1 to i32
    %c0_i32_11 = arith.constant 0 : i32
    %13 = arith.cmpi ne, %12, %c0_i32_11 : i32
    scf.if %13 {
      %c0_12 = arith.constant 0 : index
      %c0_13 = arith.constant 0 : index
      %14 = vector.load %arg7[%c0_12, %c0_13] : memref<8x512xf32, #tpu.memory_space<vmem>>, vector<8x512xf32>
      %c0_14 = arith.constant 0 : index
      %c0_15 = arith.constant 0 : index
      %15 = vector.load %arg4[%c0_14, %c0_15] : memref<1x512xf32, #tpu.memory_space<vmem>>, vector<1x512xf32>
      %16 = vector.broadcast %15 : vector<1x512xf32> to vector<8x512xf32>
      %17 = arith.mulf %14, %16 : vector<8x512xf32>
      %c0_16 = arith.constant 0 : index
      %c0_17 = arith.constant 0 : index
      %18 = vector.load %arg5[%c0_16, %c0_17] : memref<1x512xf32, #tpu.memory_space<vmem>>, vector<1x512xf32>
      %19 = vector.broadcast %18 : vector<1x512xf32> to vector<8x512xf32>
      %20 = arith.addf %17, %19 : vector<8x512xf32>
      %21 = arith.truncf %20 : vector<8x512xf32> to vector<8x512xbf16>
      %c0_18 = arith.constant 0 : index
      %c0_19 = arith.constant 0 : index
      %22 = vector.load %arg6[%c0_18, %c0_19] : memref<8x512xbf16, #tpu.memory_space<vmem>>, vector<8x512xbf16>
      tpu.vector_store %arg6[%c0_18, %c0_19], %21 {strides = array<i32>} : memref<8x512xbf16, #tpu.memory_space<vmem>>, vector<8x512xbf16>,
    } else {
    }
    return
  }
  func.func @transform_0(%arg0: i32, %arg1: i32) -> (i32, i32, i32) {
    %c0_i32 = arith.constant 0 : i32
    %c0_i32_0 = arith.constant 0 : i32
    return %arg1, %arg0, %c0_i32 : i32, i32, i32
  }
  func.func @transform_1(%arg0: i32, %arg1: i32) -> (i32, i32, i32) {
    %c0_i32 = arith.constant 0 : i32
    %c0_i32_0 = arith.constant 0 : i32
    %c0_i32_1 = arith.constant 0 : i32
    return %arg1, %c0_i32, %c0_i32_0 : i32, i32, i32
  }
  func.func @transform_2(%arg0: i32, %arg1: i32) -> (i32, i32) {
    %c0_i32 = arith.constant 0 : i32
    %c0_i32_0 = arith.constant 0 : i32
    %c0_i32_1 = arith.constant 0 : i32
    return %c0_i32, %c0_i32_0 : i32, i32
  }
  func.func @transform_3(%arg0: i32, %arg1: i32) -> (i32, i32) {
    %c0_i32 = arith.constant 0 : i32
    %c0_i32_0 = arith.constant 0 : i32
    %c0_i32_1 = arith.constant 0 : i32
    return %c0_i32, %c0_i32_0 : i32, i32
  }
  func.func @transform_4(%arg0: i32, %arg1: i32) -> (i32, i32) {
    %c0_i32 = arith.constant 0 : i32
    %c0_i32_0 = arith.constant 0 : i32
    return %arg0, %c0_i32 : i32, i32
  }
}

module attributes {stable_mosaic.version = 11 : i64} {
  func.func @_pool_fc_kernel(%arg0: memref<2x4x512xbf16, #tpu.memory_space<vmem>>, %arg1: memref<512x10xf32, #tpu.memory_space<vmem>>, %arg2: memref<1x10xf32, #tpu.memory_space<vmem>>, %arg3: memref<2x10xf32, #tpu.memory_space<vmem>>) attributes {dimension_semantics = [], scalar_prefetch = 0 : i64, scratch_operands = 0 : i64, tpu.core_type = #tpu.core_type<tc>} {
    %c0 = arith.constant 0 : index
    %c0_0 = arith.constant 0 : index
    %c0_1 = arith.constant 0 : index
    %0 = vector.load %arg0[%c0, %c0_0, %c0_1] : memref<2x4x512xbf16, #tpu.memory_space<vmem>>, vector<2x4x512xbf16>
    %1 = arith.extf %0 : vector<2x4x512xbf16> to vector<2x4x512xf32>
    %cst = arith.constant dense<0.000000e+00> : vector<2x512xf32>
    %2 = vector.multi_reduction <add>, %1, %cst [1] : vector<2x4x512xf32> to vector<2x512xf32>
    %cst_2 = arith.constant 4.000000e+00 : f32
    %3 = vector.broadcast %cst_2 : f32 to vector<2x512xf32>
    %4 = arith.divf %2, %3 : vector<2x512xf32>
    %c0_3 = arith.constant 0 : index
    %c0_4 = arith.constant 0 : index
    %5 = vector.load %arg1[%c0_3, %c0_4] : memref<512x10xf32, #tpu.memory_space<vmem>>, vector<512x10xf32>
    %cst_5 = arith.constant dense<0.000000e+00> : vector<2x10xf32>
    %6 = tpu.matmul %4, %5, %cst_5 {dimension_numbers = #tpu.dot_dimension_numbers<[1], [0], [0], [1], [0, 0, 1, 1], [], []>} : vector<2x512xf32>, vector<512x10xf32>, vector<2x10xf32> -> vector<2x10xf32>
    %c0_6 = arith.constant 0 : index
    %c0_7 = arith.constant 0 : index
    %7 = vector.load %arg2[%c0_6, %c0_7] : memref<1x10xf32, #tpu.memory_space<vmem>>, vector<1x10xf32>
    %8 = vector.broadcast %7 : vector<1x10xf32> to vector<2x10xf32>
    %9 = arith.addf %6, %8 : vector<2x10xf32>
    %c0_8 = arith.constant 0 : index
    %c0_9 = arith.constant 0 : index
    %10 = vector.load %arg3[%c0_8, %c0_9] : memref<2x10xf32, #tpu.memory_space<vmem>>, vector<2x10xf32>
    tpu.vector_store %arg3[%c0_8, %c0_9], %9 {strides = array<i32>} : memref<2x10xf32, #tpu.memory_space<vmem>>, vector<2x10xf32>,
    return
  }
}

</mosaic_0001>

<llo_original>
// kernel: resnet_forward.13
$region0: #{resnet_forward.13}
  #allocation0 [shape = 'u32[]', space=smem, size = 0x4, offset = 0x4, fixed_abs, tag = 'smem constant byte address 0x4 - core index']
  #allocation1 [shape = 'u32[144,128]{1,0:T(1,128)}', space=vmem, size = 0x12000, scoped, tag = 'internal scratch']
  #allocation2 [shape = 'f32[256,64]{1,0:T(8,128)}', space=vmem, size = 0x20000, scoped, tag = 'scratch operand']
  %s0 = inlined_call_operand.vmem [shape: bf16[9,512,3], index: 0, kind: input, shape index: {}]
  %s1 = inlined_call_operand.vmem [shape: bf16[9,3,64], index: 1, kind: input, shape index: {}]
  %s2 = inlined_call_operand.vmem [shape: f32[1,64], index: 2, kind: input, shape index: {}]
  %s3 = inlined_call_operand.vmem [shape: f32[1,64], index: 3, kind: input, shape index: {}]
  %s4 = inlined_call_operand.vmem [shape: bf16[512,64], index: 4, kind: output, shape index: {}]
  %s5 = sld [smem:[#allocation0]]
  $region57: #{resnet_forward.13} parent=0
    _
  %s7 = ssub.s32 1, %s5
  %s8 = scalar_select 0, %s7, %s5
  loop: start=0, step=1, limit=20
  $region2: #{resnet_forward.13} parent=0 // loop_pre_header
    _
  $region3: #{resnet_forward.13} parent=0 // loop_header
    %s10 = sphi 0, %s14
    %p11 = scmp.ge.s32.totalorder %s10, 20
    %s17 = sphi 0, %s29
    %s18 = sphi 0, %s25
    %s19 = sphi 0, %s17
    %s20 = sphi 0, %s18
    %s21 = sphi 0, %s19
    %s22 = sphi 0, %s20
    %s34 = sphi 0, %s36
    %s37 = sphi 0, %s34
    %s38 = sphi 0, %s37
    %s54 = sphi 0, %s38
    %s60 = sphi 0, %s62
    %s63 = sphi 0, %s60
    %s64 = sphi 0, %s63
    %s80 = sphi 0, %s64
    %s84 = sphi 0, %s84
    %s86 = sphi 0, %s84
    %s87 = sphi 0, %s86
    %s101 = sphi 0, %s87
    %s105 = sphi 0, %s105
    %s107 = sphi 0, %s105
    %s108 = sphi 0, %s107
    %s122 = sphi 0, %s108
    %s128 = sphi 0, %s130
    %s131 = sphi 0, %s128
    %s132 = sphi 0, %s131
    %s148 = sphi 0, %s132
  $region4: #{resnet_forward.13} parent=0 // loop_header_branch
    %13 = sbr.rel (%p11) target = $region8
  $region5: #{resnet_forward.13} parent=0 // loop_body
    %s15 = ssub.s32 %s10, 1
    %s16 = ssub.s32 %s10, 2
    %s23 = sadd.s32 1, %s18
    %p24 = scmp.ge.s32.totalorder %s23, 9
    %s25 = scalar_select %p24, 0, %s23
    %s26 = sadd.s32 1, %s17
    %s27 = scalar_select %p24, %s26, %s17
    %p28 = scmp.ge.s32.totalorder %s27, 2
    %s29 = scalar_select %p28, 0, %s27
    %s30 = ssub.s32 %s18, %s25
    %s31 = ssub.s32 %s17, %s29
    %s32 = sor.u32 %s30, %s31
    %p33 = scmp.eq.s32.totalorder %s32, 0
    %s35 = sadd.s32 %s34, 1
    %s36 = scalar_select %p33, %s34, %s35
    %p39 = pneg %p33
    %p40 = scmp.eq.s32.totalorder %s10, 17
    %p41 = por %p39, %p40
    %p42 = scmp.ne.s32.totalorder %s34, %s37
    %p43 = scmp.eq.s32.totalorder %s10, 0
    %p44 = por %p42, %p43
    %p45 = scmp.ne.s32.totalorder %s34, %s37
    %p46 = scmp.eq.s32.totalorder %s15, 17
    %p47 = por %p45, %p46
    %p48 = scmp.ne.s32.totalorder %s37, %s38
    %p49 = scmp.eq.s32.totalorder %s15, 0
    %p50 = por %p48, %p49
    %p51 = scmp.ne.s32.totalorder %s37, %s38
    %p52 = scmp.eq.s32.totalorder %s16, 17
    %p53 = por %p51, %p52
    %p55 = scmp.ne.s32.totalorder %s38, %s54
    %p56 = scmp.eq.s32.totalorder %s16, 0
    %p57 = por %p55, %p56
    %s58 = ssub.s32 %s18, %s25
    %p59 = scmp.eq.s32.totalorder %s58, 0
    %s61 = sadd.s32 %s60, 1
    %s62 = scalar_select %p59, %s60, %s61
    %p65 = pneg %p59
    %p66 = scmp.eq.s32.totalorder %s10, 17
    %p67 = por %p65, %p66
    %p68 = scmp.ne.s32.totalorder %s60, %s63
    %p69 = scmp.eq.s32.totalorder %s10, 0
    %p70 = por %p68, %p69
    %p71 = scmp.ne.s32.totalorder %s60, %s63
    %p72 = scmp.eq.s32.totalorder %s15, 17
    %p73 = por %p71, %p72
    %p74 = scmp.ne.s32.totalorder %s63, %s64
    %p75 = scmp.eq.s32.totalorder %s15, 0
    %p76 = por %p74, %p75
    %p77 = scmp.ne.s32.totalorder %s63, %s64
    %p78 = scmp.eq.s32.totalorder %s16, 17
    %p79 = por %p77, %p78
    %p81 = scmp.ne.s32.totalorder %s64, %s80
    %p82 = scmp.eq.s32.totalorder %s16, 0
    %p83 = por %p81, %p82
    %s85 = sadd.s32 %s84, 1
    %p88 = scmp.eq.s32.totalorder %s10, 17
    %p89 = scmp.ne.s32.totalorder %s84, %s86
    %p90 = scmp.eq.s32.totalorder %s10, 0
    %p91 = por %p89, %p90
    %p92 = scmp.ne.s32.totalorder %s84, %s86
    %p93 = scmp.eq.s32.totalorder %s15, 17
    %p94 = por %p92, %p93
    %p95 = scmp.ne.s32.totalorder %s86, %s87
    %p96 = scmp.eq.s32.totalorder %s15, 0
    %p97 = por %p95, %p96
    %p98 = scmp.ne.s32.totalorder %s86, %s87
    %p99 = scmp.eq.s32.totalorder %s16, 17
    %p100 = por %p98, %p99
    %p102 = scmp.ne.s32.totalorder %s87, %s101
    %p103 = scmp.eq.s32.totalorder %s16, 0
    %p104 = por %p102, %p103
    %s106 = sadd.s32 %s105, 1
    %p109 = scmp.eq.s32.totalorder %s10, 17
    %p110 = scmp.ne.s32.totalorder %s105, %s107
    %p111 = scmp.eq.s32.totalorder %s10, 0
    %p112 = por %p110, %p111
    %p113 = scmp.ne.s32.totalorder %s105, %s107
    %p114 = scmp.eq.s32.totalorder %s15, 17
    %p115 = por %p113, %p114
    %p116 = scmp.ne.s32.totalorder %s107, %s108
    %p117 = scmp.eq.s32.totalorder %s15, 0
    %p118 = por %p116, %p117
    %p119 = scmp.ne.s32.totalorder %s107, %s108
    %p120 = scmp.eq.s32.totalorder %s16, 17
    %p121 = por %p119, %p120
    %p123 = scmp.ne.s32.totalorder %s108, %s122
    %p124 = scmp.eq.s32.totalorder %s16, 0
    %p125 = por %p123, %p124
    %s126 = ssub.s32 %s17, %s29
    %p127 = scmp.eq.s32.totalorder %s126, 0
    %s129 = sadd.s32 %s128, 1
    %s130 = scalar_select %p127, %s128, %s129
    %p133 = pneg %p127
    %p134 = scmp.eq.s32.totalorder %s10, 17
    %p135 = por %p133, %p134
    %p136 = scmp.ne.s32.totalorder %s128, %s131
    %p137 = scmp.eq.s32.totalorder %s10, 0
    %p138 = por %p136, %p137
    %p139 = scmp.ne.s32.totalorder %s128, %s131
    %p140 = scmp.eq.s32.totalorder %s15, 17
    %p141 = por %p139, %p140
    %p142 = scmp.ne.s32.totalorder %s131, %s132
    %p143 = scmp.eq.s32.totalorder %s15, 0
    %p144 = por %p142, %p143
    %p145 = scmp.ne.s32.totalorder %s131, %s132
    %p146 = scmp.eq.s32.totalorder %s16, 17
    %p147 = por %p145, %p146
    %p149 = scmp.ne.s32.totalorder %s132, %s148
    %p150 = scmp.eq.s32.totalorder %s16, 0
    %p151 = por %p149, %p150
    %p152 = scmp.le.s32.totalorder 1, %s10
    %p153 = scmp.lt.s32.totalorder %s10, 19
    %p154 = pnand %p152, %p153
    %p155 = pneg %p154
    // Predicated region
    $region9: #{resnet_forward.13} parent=5 // pred_check
      _
    $region10: #{resnet_forward.13} parent=5 // pred_check_branch
      %157 = sbr.rel (%p154) target = $region12
    $region11: #{resnet_forward.13} parent=5 // pred_region
      %s158 = ssub.s32 %s10, 1
      // Predicated region
      $region13: #{resnet_forward.13} parent=11 // pred_check
        %p159 = pneg %p97
      $region14: #{resnet_forward.13} parent=11 // pred_check_branch
        %161 = sbr.rel (%p159) target = $region16
      $region15: #{resnet_forward.13} parent=11 // pred_region
        _
      $region16: #{resnet_forward.13} parent=11 // pred_fallthru
        _
      // Predicated region
      $region17: #{resnet_forward.13} parent=11 // pred_check
        %p162 = pneg %p118
      $region18: #{resnet_forward.13} parent=11 // pred_check_branch
        %164 = sbr.rel (%p162) target = $region20
      $region19: #{resnet_forward.13} parent=11 // pred_region
        _
      $region20: #{resnet_forward.13} parent=11 // pred_fallthru
        _
    $region12: #{resnet_forward.13} parent=5 // pred_fallthru
      _
    %p165 = scmp.lt.s32.totalorder %s10, 18
    // Predicated region
    $region21: #{resnet_forward.13} parent=5 // pred_check
      %p166 = pneg %p165
    $region22: #{resnet_forward.13} parent=5 // pred_check_branch
      %168 = sbr.rel (%p166) target = $region24
    $region23: #{resnet_forward.13} parent=5 // pred_region
      // Predicated region
      $region25: #{resnet_forward.13} parent=23 // pred_check
        %p169 = pneg %p44
      $region26: #{resnet_forward.13} parent=23 // pred_check_branch
        %171 = sbr.rel (%p169) target = $region28
      $region27: #{resnet_forward.13} parent=23 // pred_region
        %s172 = smul.u32 32, %s17
        %p173 = scmp.lt.s32.totalorder %s18, 8
        %s174 = scalar_select %p173, %s18, 8
        %p175 = scmp.lt.s32.totalorder %s172, 63
        %s176 = scalar_select %p175, %s172, 63
        %s177 = smul.addr %s174, 64
        %s178 = sadd.s32 %s176, %s177
        %s179 = smul.addr %s178, 4
        %s180 = scalar_lea.vmem %s0, %s179
        %s181 = smul.u32 32, %s17
      $region28: #{resnet_forward.13} parent=23 // pred_fallthru
        _
      // Predicated region
      $region29: #{resnet_forward.13} parent=23 // pred_check
        %p182 = pneg %p70
      $region30: #{resnet_forward.13} parent=23 // pred_check_branch
        %184 = sbr.rel (%p182) target = $region32
      $region31: #{resnet_forward.13} parent=23 // pred_region
        %p185 = scmp.lt.s32.totalorder %s18, 8
        %s186 = scalar_select %p185, %s18, 8
        %s187 = smul.addr %s186, 2
        %s188 = scalar_lea.vmem %s1, %s187
      $region32: #{resnet_forward.13} parent=23 // pred_fallthru
        _
    $region24: #{resnet_forward.13} parent=5 // pred_fallthru
      _
    %p189 = scmp.le.s32.totalorder 1, %s10
    %p190 = scmp.lt.s32.totalorder %s10, 19
    %p191 = pnand %p189, %p190
    %p192 = pneg %p191
    // Predicated region
    $region33: #{resnet_forward.13} parent=5 // pred_check
      _
    $region34: #{resnet_forward.13} parent=5 // pred_check_branch
      %194 = sbr.rel (%p191) target = $region36
    $region35: #{resnet_forward.13} parent=5 // pred_region
      %s195 = ssub.s32 %s10, 1
      %s196 = smul.u32 32, %s19
      %p197 = scmp.lt.s32.totalorder %s20, 8
      %s198 = scalar_select %p197, %s20, 8
      %p199 = scmp.lt.s32.totalorder %s196, 63
      %s200 = scalar_select %p199, %s196, 63
      %s201 = smul.addr %s198, 64
      %s202 = sadd.s32 %s200, %s201
      %s203 = smul.addr %s202, 4
      %s204 = scalar_lea.vmem %s0, %s203
      %p205 = pneg %p50
      %p206 = pneg %p47
      %p207 = scmp.lt.s32.totalorder %s20, 8
      %s208 = scalar_select %p207, %s20, 8
      %s209 = smul.addr %s208, 2
      %s210 = scalar_lea.vmem %s1, %s209
      %p211 = pneg %p76
      %p212 = pneg %p73
      %p213 = pneg %p97
      %p214 = pneg %p94
      %p215 = pneg %p118
      %p216 = pneg %p115
      %p217 = pneg %p144
      %p218 = pneg %p141
      %s219 = smul.u32 32, %s19
      %p220 = scmp.lt.s32.totalorder %s219, 63
      %s221 = scalar_select %p220, %s219, 63
      %s222 = smul.addr %s221, 4
      %s223 = scalar_lea.vmem %s4, %s222
      %s224 = smul.u32 32, %s19
      %p225 = scmp.lt.s32.totalorder %s20, 8
      %s226 = scalar_select %p225, %s20, 8
      %p227 = scmp.lt.s32.totalorder %s224, 63
      %s228 = scalar_select %p227, %s224, 63
      %s229 = smul.addr %s226, 64
      %s230 = sadd.s32 %s228, %s229
      %s231 = smul.addr %s230, 4
      %s232 = scalar_lea.vmem %s0, %s231
      %s233 = smul.u32 32, %s19
      %p234 = scmp.lt.s32.totalorder %s20, 8
      %s235 = scalar_select %p234, %s20, 8
      %s236 = smul.addr %s235, 2
      %s237 = scalar_lea.vmem %s1, %s236
      %s238 = smul.u32 32, %s19
      %p239 = scmp.lt.s32.totalorder %s238, 63
      %s240 = scalar_select %p239, %s238, 63
      %s241 = smul.addr %s240, 4
      %s242 = scalar_lea.vmem %s4, %s241
      %s243 = smul.u32 32, %s19
      %p245 = scmp.eq.s32.totalorder %s20, 0
      // Predicated region
      $region37: #{resnet_forward.13} parent=35 // pred_check
        %p246 = pneg %p245
      $region38: #{resnet_forward.13} parent=35 // pred_check_branch
        %248 = sbr.rel (%p246) target = $region40
      $region39: #{resnet_forward.13} parent=35 // pred_region
        %vm249 = vcmask 523264
        %250 = vst.msk [vmem:[#allocation2] sm:$0xff] %vm249, 0.0
        %251 = vst.msk [vmem:[#allocation2 + $0x8] sm:$0xff] %vm249, 0.0
        %252 = vst.msk [vmem:[#allocation2 + $0x10] sm:$0xff] %vm249, 0.0
        %253 = vst.msk [vmem:[#allocation2 + $0x18] sm:$0xff] %vm249, 0.0
        %254 = vst.msk [vmem:[#allocation2 + $0x20] sm:$0xff] %vm249, 0.0
        %255 = vst.msk [vmem:[#allocation2 + $0x28] sm:$0xff] %vm249, 0.0
        %256 = vst.msk [vmem:[#allocation2 + $0x30] sm:$0xff] %vm249, 0.0
        %257 = vst.msk [vmem:[#allocation2 + $0x38] sm:$0xff] %vm249, 0.0
        %258 = vst.msk [vmem:[#allocation2 + $0x40] sm:$0xff] %vm249, 0.0
        %259 = vst.msk [vmem:[#allocation2 + $0x48] sm:$0xff] %vm249, 0.0
        %260 = vst.msk [vmem:[#allocation2 + $0x50] sm:$0xff] %vm249, 0.0
        %261 = vst.msk [vmem:[#allocation2 + $0x58] sm:$0xff] %vm249, 0.0
        %262 = vst.msk [vmem:[#allocation2 + $0x60] sm:$0xff] %vm249, 0.0
        %263 = vst.msk [vmem:[#allocation2 + $0x68] sm:$0xff] %vm249, 0.0
        %264 = vst.msk [vmem:[#allocation2 + $0x70] sm:$0xff] %vm249, 0.0
        %265 = vst.msk [vmem:[#allocation2 + $0x78] sm:$0xff] %vm249, 0.0
        %266 = vst.msk [vmem:[#allocation2 + $0x80] sm:$0xff] %vm249, 0.0
        %267 = vst.msk [vmem:[#allocation2 + $0x88] sm:$0xff] %vm249, 0.0
        %268 = vst.msk [vmem:[#allocation2 + $0x90] sm:$0xff] %vm249, 0.0
        %269 = vst.msk [vmem:[#allocation2 + $0x98] sm:$0xff] %vm249, 0.0
        %270 = vst.msk [vmem:[#allocation2 + $0xa0] sm:$0xff] %vm249, 0.0
        %271 = vst.msk [vmem:[#allocation2 + $0xa8] sm:$0xff] %vm249, 0.0
        %272 = vst.msk [vmem:[#allocation2 + $0xb0] sm:$0xff] %vm249, 0.0
        %273 = vst.msk [vmem:[#allocation2 + $0xb8] sm:$0xff] %vm249, 0.0
        %274 = vst.msk [vmem:[#allocation2 + $0xc0] sm:$0xff] %vm249, 0.0
        %275 = vst.msk [vmem:[#allocation2 + $0xc8] sm:$0xff] %vm249, 0.0
        %276 = vst.msk [vmem:[#allocation2 + $0xd0] sm:$0xff] %vm249, 0.0
        %277 = vst.msk [vmem:[#allocation2 + $0xd8] sm:$0xff] %vm249, 0.0
        %278 = vst.msk [vmem:[#allocation2 + $0xe0] sm:$0xff] %vm249, 0.0
        %279 = vst.msk [vmem:[#allocation2 + $0xe8] sm:$0xff] %vm249, 0.0
        %280 = vst.msk [vmem:[#allocation2 + $0xf0] sm:$0xff] %vm249, 0.0
        %281 = vst.msk [vmem:[#allocation2 + $0xf8] sm:$0xff] %vm249, 0.0
      $region40: #{resnet_forward.13} parent=35 // pred_fallthru
        _
      %v282 = vld [vmem:[#allocation2] sm:$0xff]
      %v283 = vld [vmem:[#allocation2 + $0x8] sm:$0xff]
      %v284 = vld [vmem:[#allocation2 + $0x10] sm:$0xff]
      %v285 = vld [vmem:[#allocation2 + $0x18] sm:$0xff]
      %v286 = vld [vmem:[#allocation2 + $0x20] sm:$0xff]
      %v287 = vld [vmem:[#allocation2 + $0x28] sm:$0xff]
      %v288 = vld [vmem:[#allocation2 + $0x30] sm:$0xff]
      %v289 = vld [vmem:[#allocation2 + $0x38] sm:$0xff]
      %v290 = vld [vmem:[#allocation2 + $0x40] sm:$0xff]
      %v291 = vld [vmem:[#allocation2 + $0x48] sm:$0xff]
      %v292 = vld [vmem:[#allocation2 + $0x50] sm:$0xff]
      %v293 = vld [vmem:[#allocation2 + $0x58] sm:$0xff]
      %v294 = vld [vmem:[#allocation2 + $0x60] sm:$0xff]
      %v295 = vld [vmem:[#allocation2 + $0x68] sm:$0xff]
      %v296 = vld [vmem:[#allocation2 + $0x70] sm:$0xff]
      %v297 = vld [vmem:[#allocation2 + $0x78] sm:$0xff]
      %v298 = vld [vmem:[#allocation2 + $0x80] sm:$0xff]
      %v299 = vld [vmem:[#allocation2 + $0x88] sm:$0xff]
      %v300 = vld [vmem:[#allocation2 + $0x90] sm:$0xff]
      %v301 = vld [vmem:[#allocation2 + $0x98] sm:$0xff]
      %v302 = vld [vmem:[#allocation2 + $0xa0] sm:$0xff]
      %v303 = vld [vmem:[#allocation2 + $0xa8] sm:$0xff]
      %v304 = vld [vmem:[#allocation2 + $0xb0] sm:$0xff]
      %v305 = vld [vmem:[#allocation2 + $0xb8] sm:$0xff]
      %v306 = vld [vmem:[#allocation2 + $0xc0] sm:$0xff]
      %v307 = vld [vmem:[#allocation2 + $0xc8] sm:$0xff]
      %v308 = vld [vmem:[#allocation2 + $0xd0] sm:$0xff]
      %v309 = vld [vmem:[#allocation2 + $0xd8] sm:$0xff]
      %v310 = vld [vmem:[#allocation2 + $0xe0] sm:$0xff]
      %v311 = vld [vmem:[#allocation2 + $0xe8] sm:$0xff]
      %v312 = vld [vmem:[#allocation2 + $0xf0] sm:$0xff]
      %v313 = vld [vmem:[#allocation2 + $0xf8] sm:$0xff]
      %v314 = vld [vmem:[%s232] sm:$0xf]
      %v315 = vld [vmem:[%s232 + $0x4] sm:$0xf]
      %v316 = vld [vmem:[%s232 + $0x8] sm:$0xf]
      %v317 = vld [vmem:[%s232 + $0xc] sm:$0xf]
      %v318 = vld [vmem:[%s232 + $0x10] sm:$0xf]
      %v319 = vld [vmem:[%s232 + $0x14] sm:$0xf]
      %v320 = vld [vmem:[%s232 + $0x18] sm:$0xf]
      %v321 = vld [vmem:[%s232 + $0x1c] sm:$0xf]
      %v322 = vld [vmem:[%s232 + $0x20] sm:$0xf]
      %v323 = vld [vmem:[%s232 + $0x24] sm:$0xf]
      %v324 = vld [vmem:[%s232 + $0x28] sm:$0xf]
      %v325 = vld [vmem:[%s232 + $0x2c] sm:$0xf]
      %v326 = vld [vmem:[%s232 + $0x30] sm:$0xf]
      %v327 = vld [vmem:[%s232 + $0x34] sm:$0xf]
      %v328 = vld [vmem:[%s232 + $0x38] sm:$0xf]
      %v329 = vld [vmem:[%s232 + $0x3c] sm:$0xf]
      %v330 = vld [vmem:[%s232 + $0x40] sm:$0xf]
      %v331 = vld [vmem:[%s232 + $0x44] sm:$0xf]
      %v332 = vld [vmem:[%s232 + $0x48] sm:$0xf]
      %v333 = vld [vmem:[%s232 + $0x4c] sm:$0xf]
      %v334 = vld [vmem:[%s232 + $0x50] sm:$0xf]
      %v335 = vld [vmem:[%s232 + $0x54] sm:$0xf]
      %v336 = vld [vmem:[%s232 + $0x58] sm:$0xf]
      %v337 = vld [vmem:[%s232 + $0x5c] sm:$0xf]
      %v338 = vld [vmem:[%s232 + $0x60] sm:$0xf]
      %v339 = vld [vmem:[%s232 + $0x64] sm:$0xf]
      %v340 = vld [vmem:[%s232 + $0x68] sm:$0xf]
      %v341 = vld [vmem:[%s232 + $0x6c] sm:$0xf]
      %v342 = vld [vmem:[%s232 + $0x70] sm:$0xf]
      %v343 = vld [vmem:[%s232 + $0x74] sm:$0xf]
      %v344 = vld [vmem:[%s232 + $0x78] sm:$0xf]
      %v345 = vld [vmem:[%s232 + $0x7c] sm:$0xf]
      %v346 = vld [vmem:[%s237] sm:$0x3]
      %v379 = vunpack.c.l.b16 %v314
      %v380 = vunpack.c.l.b16 %v315
      %v381 = vunpack.c.l.b16 %v316
      %v382 = vunpack.c.l.b16 %v317
      %v383 = vunpack.c.l.b16 %v318
      %v384 = vunpack.c.l.b16 %v319
      %v385 = vunpack.c.l.b16 %v320
      %v386 = vunpack.c.l.b16 %v321
      %v387 = vunpack.c.l.b16 %v322
      %v388 = vunpack.c.l.b16 %v323
      %v389 = vunpack.c.l.b16 %v324
      %v390 = vunpack.c.l.b16 %v325
      %v391 = vunpack.c.l.b16 %v326
      %v392 = vunpack.c.l.b16 %v327
      %v393 = vunpack.c.l.b16 %v328
      %v394 = vunpack.c.l.b16 %v329
      %v395 = vunpack.c.l.b16 %v330
      %v396 = vunpack.c.l.b16 %v331
      %v397 = vunpack.c.l.b16 %v332
      %v398 = vunpack.c.l.b16 %v333
      %v399 = vunpack.c.l.b16 %v334
      %v400 = vunpack.c.l.b16 %v335
      %v401 = vunpack.c.l.b16 %v336
      %v402 = vunpack.c.l.b16 %v337
      %v403 = vunpack.c.l.b16 %v338
      %v404 = vunpack.c.l.b16 %v339
      %v405 = vunpack.c.l.b16 %v340
      %v406 = vunpack.c.l.b16 %v341
      %v407 = vunpack.c.l.b16 %v342
      %v408 = vunpack.c.l.b16 %v343
      %v409 = vunpack.c.l.b16 %v344
      %v410 = vunpack.c.l.b16 %v345
      %v411 = vpack.c.b16 %v380, %v379
      %v412 = vpack.c.b16 %v382, %v381
      %v413 = vpack.c.b16 %v384, %v383
      %v414 = vpack.c.b16 %v386, %v385
      %v415 = vpack.c.b16 %v388, %v387
      %v416 = vpack.c.b16 %v390, %v389
      %v417 = vpack.c.b16 %v392, %v391
      %v418 = vpack.c.b16 %v394, %v393
      %v419 = vpack.c.b16 %v396, %v395
      %v420 = vpack.c.b16 %v398, %v397
      %v421 = vpack.c.b16 %v400, %v399
      %v422 = vpack.c.b16 %v402, %v401
      %v423 = vpack.c.b16 %v404, %v403
      %v424 = vpack.c.b16 %v406, %v405
      %v425 = vpack.c.b16 %v408, %v407
      %v426 = vpack.c.b16 %v410, %v409
      %vm427 = vcmask 23552
      %v429 = vsel %vm427, %v411, 0
      %v432 = vsel %vm427, %v412, 0
      %v435 = vsel %vm427, %v413, 0
      %v438 = vsel %vm427, %v414, 0
      %v441 = vsel %vm427, %v415, 0
      %v444 = vsel %vm427, %v416, 0
      %v447 = vsel %vm427, %v417, 0
      %v450 = vsel %vm427, %v418, 0
      %v453 = vsel %vm427, %v419, 0
      %v456 = vsel %vm427, %v420, 0
      %v459 = vsel %vm427, %v421, 0
      %v462 = vsel %vm427, %v422, 0
      %v465 = vsel %vm427, %v423, 0
      %v468 = vsel %vm427, %v424, 0
      %v471 = vsel %vm427, %v425, 0
      %v474 = vsel %vm427, %v426, 0
      %vm476 = vcmask 1040384
      %vm477 = vcmask 1041408
      %v478 = vsel %vm476, 4294967295, 65535
      %v479 = vsel %vm477, %v478, 0
      %v481 = vand.u32 %v346, %v479
      %483 = vmatprep.subr.bf16.mxu0 0
      %484 = vmatpush1.bf16.msra.mxu0 %v481
      %485 = vmatprep.subr.bf16.mxu0 0
      %486 = vmatpush1.bf16.msra.mxu0 0
      %487 = vmatprep.subr.bf16.mxu0 0
      %488 = vmatpush1.bf16.msra.mxu0 0
      %489 = vmatprep.subr.bf16.mxu0 0
      %490 = vmatpush1.bf16.msra.mxu0 0
      %491 = vmatprep.subr.bf16.mxu0 0
      %492 = vmatpush1.bf16.msra.mxu0 0
      %493 = vmatprep.subr.bf16.mxu0 0
      %494 = vmatpush1.bf16.msra.mxu0 0
      %495 = vmatprep.subr.bf16.mxu0 0
      %496 = vmatpush1.bf16.msra.mxu0 0
      %497 = vmatprep.subr.bf16.mxu0 0
      %498 = vmatpush1.bf16.msra.mxu0 0
      %499 = vmatprep.subr.bf16.mxu0 0
      %500 = vmatpush1.bf16.msra.mxu0 0
      %501 = vmatprep.subr.bf16.mxu0 0
      %502 = vmatpush1.bf16.msra.mxu0 0
      %503 = vmatprep.subr.bf16.mxu0 0
      %504 = vmatpush1.bf16.msra.mxu0 0
      %505 = vmatprep.subr.bf16.mxu0 0
      %506 = vmatpush1.bf16.msra.mxu0 0
      %507 = vmatprep.subr.bf16.mxu0 0
      %508 = vmatpush1.bf16.msra.mxu0 0
      %509 = vmatprep.subr.bf16.mxu0 0
      %510 = vmatpush1.bf16.msra.mxu0 0
      %511 = vmatprep.subr.bf16.mxu0 0
      %512 = vmatpush1.bf16.msra.mxu0 0
      %513 = vmatprep.subr.bf16.mxu0 0
      %514 = vmatpush1.bf16.msra.mxu0 0
      %515 = vmatprep.mubr.bf16.mxu0 0
      %516 = vmatmul.mubr.bf16.gmra.mrb[0].mxu0 %v429
      %v517 = vpop.f32.mrb[0].mxu0
      %v518 = vadd.f32 0.0, %v517
      %v519 = vpop.f32.mrb[0].mxu0
      %v520 = vpop.f32.mrb[0].mxu0
      %v521 = vadd.f32 0.0, %v520
      %v522 = vpop.f32.mrb[0].mxu0
      %523 = vmatprep.mubr.bf16.mxu0 0
      %524 = vmatmul.mubr.bf16.gmra.mrb[0].mxu0 %v432
      %v525 = vpop.f32.mrb[0].mxu0
      %v526 = vadd.f32 0.0, %v525
      %v527 = vpop.f32.mrb[0].mxu0
      %v528 = vpop.f32.mrb[0].mxu0
      %v529 = vadd.f32 0.0, %v528
      %v530 = vpop.f32.mrb[0].mxu0
      %531 = vmatprep.mubr.bf16.mxu0 0
      %532 = vmatmul.mubr.bf16.gmra.mrb[0].mxu0 %v435
      %v533 = vpop.f32.mrb[0].mxu0
      %v534 = vadd.f32 0.0, %v533
      %v535 = vpop.f32.mrb[0].mxu0
      %v536 = vpop.f32.mrb[0].mxu0
      %v537 = vadd.f32 0.0, %v536
      %v538 = vpop.f32.mrb[0].mxu0
      %539 = vmatprep.mubr.bf16.mxu0 0
      %540 = vmatmul.mubr.bf16.gmra.mrb[0].mxu0 %v438
      %v541 = vpop.f32.mrb[0].mxu0
      %v542 = vadd.f32 0.0, %v541
      %v543 = vpop.f32.mrb[0].mxu0
      %v544 = vpop.f32.mrb[0].mxu0
      %v545 = vadd.f32 0.0, %v544
      %v546 = vpop.f32.mrb[0].mxu0
      %547 = vmatprep.mubr.bf16.mxu0 0
      %548 = vmatmul.mubr.bf16.gmra.mrb[0].mxu0 %v441
      %v549 = vpop.f32.mrb[0].mxu0
      %v550 = vadd.f32 0.0, %v549
      %v551 = vpop.f32.mrb[0].mxu0
      %v552 = vpop.f32.mrb[0].mxu0
      %v553 = vadd.f32 0.0, %v552
      %v554 = vpop.f32.mrb[0].mxu0
      %555 = vmatprep.mubr.bf16.mxu0 0
      %556 = vmatmul.mubr.bf16.gmra.mrb[0].mxu0 %v444
      %v557 = vpop.f32.mrb[0].mxu0
      %v558 = vadd.f32 0.0, %v557
      %v559 = vpop.f32.mrb[0].mxu0
      %v560 = vpop.f32.mrb[0].mxu0
      %v561 = vadd.f32 0.0, %v560
      %v562 = vpop.f32.mrb[0].mxu0
      %563 = vmatprep.mubr.bf16.mxu0 0
      %564 = vmatmul.mubr.bf16.gmra.mrb[0].mxu0 %v447
      %v565 = vpop.f32.mrb[0].mxu0
      %v566 = vadd.f32 0.0, %v565
      %v567 = vpop.f32.mrb[0].mxu0
      %v568 = vpop.f32.mrb[0].mxu0
      %v569 = vadd.f32 0.0, %v568
      %v570 = vpop.f32.mrb[0].mxu0
      %571 = vmatprep.mubr.bf16.mxu0 0
      %572 = vmatmul.mubr.bf16.gmra.mrb[0].mxu0 %v450
      %v573 = vpop.f32.mrb[0].mxu0
      %v574 = vadd.f32 0.0, %v573
      %v575 = vpop.f32.mrb[0].mxu0
      %v576 = vpop.f32.mrb[0].mxu0
      %v577 = vadd.f32 0.0, %v576
      %v578 = vpop.f32.mrb[0].mxu0
      %579 = vmatprep.mubr.bf16.mxu0 0
      %580 = vmatmul.mubr.bf16.gmra.mrb[0].mxu0 %v453
      %v581 = vpop.f32.mrb[0].mxu0
      %v582 = vadd.f32 0.0, %v581
      %v583 = vpop.f32.mrb[0].mxu0
      %v584 = vpop.f32.mrb[0].mxu0
      %v585 = vadd.f32 0.0, %v584
      %v586 = vpop.f32.mrb[0].mxu0
      %587 = vmatprep.mubr.bf16.mxu0 0
      %588 = vmatmul.mubr.bf16.gmra.mrb[0].mxu0 %v456
      %v589 = vpop.f32.mrb[0].mxu0
      %v590 = vadd.f32 0.0, %v589
      %v591 = vpop.f32.mrb[0].mxu0
      %v592 = vpop.f32.mrb[0].mxu0
      %v593 = vadd.f32 0.0, %v592
      %v594 = vpop.f32.mrb[0].mxu0
      %595 = vmatprep.mubr.bf16.mxu0 0
      %596 = vmatmul.mubr.bf16.gmra.mrb[0].mxu0 %v459
      %v597 = vpop.f32.mrb[0].mxu0
      %v598 = vadd.f32 0.0, %v597
      %v599 = vpop.f32.mrb[0].mxu0
      %v600 = vpop.f32.mrb[0].mxu0
      %v601 = vadd.f32 0.0, %v600
      %v602 = vpop.f32.mrb[0].mxu0
      %603 = vmatprep.mubr.bf16.mxu0 0
      %604 = vmatmul.mubr.bf16.gmra.mrb[0].mxu0 %v462
      %v605 = vpop.f32.mrb[0].mxu0
      %v606 = vadd.f32 0.0, %v605
      %v607 = vpop.f32.mrb[0].mxu0
      %v608 = vpop.f32.mrb[0].mxu0
      %v609 = vadd.f32 0.0, %v608
      %v610 = vpop.f32.mrb[0].mxu0
      %611 = vmatprep.mubr.bf16.mxu0 0
      %612 = vmatmul.mubr.bf16.gmra.mrb[0].mxu0 %v465
      %v613 = vpop.f32.mrb[0].mxu0
      %v614 = vadd.f32 0.0, %v613
      %v615 = vpop.f32.mrb[0].mxu0
      %v616 = vpop.f32.mrb[0].mxu0
      %v617 = vadd.f32 0.0, %v616
      %v618 = vpop.f32.mrb[0].mxu0
      %619 = vmatprep.mubr.bf16.mxu0 0
      %620 = vmatmul.mubr.bf16.gmra.mrb[0].mxu0 %v468
      %v621 = vpop.f32.mrb[0].mxu0
      %v622 = vadd.f32 0.0, %v621
      %v623 = vpop.f32.mrb[0].mxu0
      %v624 = vpop.f32.mrb[0].mxu0
      %v625 = vadd.f32 0.0, %v624
      %v626 = vpop.f32.mrb[0].mxu0
      %627 = vmatprep.mubr.bf16.mxu0 0
      %628 = vmatmul.mubr.bf16.gmra.mrb[0].mxu0 %v471
      %v629 = vpop.f32.mrb[0].mxu0
      %v630 = vadd.f32 0.0, %v629
      %v631 = vpop.f32.mrb[0].mxu0
      %v632 = vpop.f32.mrb[0].mxu0
      %v633 = vadd.f32 0.0, %v632
      %v634 = vpop.f32.mrb[0].mxu0
      %635 = vmatprep.mubr.bf16.mxu0 0
      %636 = vmatmul.mubr.bf16.gmra.mrb[0].mxu0 %v474
      %v637 = vpop.f32.mrb[0].mxu0
      %v638 = vadd.f32 0.0, %v637
      %v639 = vpop.f32.mrb[0].mxu0
      %v640 = vpop.f32.mrb[0].mxu0
      %v641 = vadd.f32 0.0, %v640
      %v642 = vpop.f32.mrb[0].mxu0
      %643 = vdwg.mxu0
      %v644 = vadd.f32 %v282, %v518
      %v645 = vadd.f32 %v283, %v521
      %v646 = vadd.f32 %v284, %v526
      %v647 = vadd.f32 %v285, %v529
      %v648 = vadd.f32 %v286, %v534
      %v649 = vadd.f32 %v287, %v537
      %v650 = vadd.f32 %v288, %v542
      %v651 = vadd.f32 %v289, %v545
      %v652 = vadd.f32 %v290, %v550
      %v653 = vadd.f32 %v291, %v553
      %v654 = vadd.f32 %v292, %v558
      %v655 = vadd.f32 %v293, %v561
      %v656 = vadd.f32 %v294, %v566
      %v657 = vadd.f32 %v295, %v569
      %v658 = vadd.f32 %v296, %v574
      %v659 = vadd.f32 %v297, %v577
      %v660 = vadd.f32 %v298, %v582
      %v661 = vadd.f32 %v299, %v585
      %v662 = vadd.f32 %v300, %v590
      %v663 = vadd.f32 %v301, %v593
      %v664 = vadd.f32 %v302, %v598
      %v665 = vadd.f32 %v303, %v601
      %v666 = vadd.f32 %v304, %v606
      %v667 = vadd.f32 %v305, %v609
      %v668 = vadd.f32 %v306, %v614
      %v669 = vadd.f32 %v307, %v617
      %v670 = vadd.f32 %v308, %v622
      %v671 = vadd.f32 %v309, %v625
      %v672 = vadd.f32 %v310, %v630
      %v673 = vadd.f32 %v311, %v633
      %v674 = vadd.f32 %v312, %v638
      %v675 = vadd.f32 %v313, %v641
      %vm676 = vcmask 523264
      %677 = vst.msk [vmem:[#allocation2] sm:$0xff] %vm676, %v644
      %678 = vst.msk [vmem:[#allocation2 + $0x8] sm:$0xff] %vm676, %v645
      %679 = vst.msk [vmem:[#allocation2 + $0x10] sm:$0xff] %vm676, %v646
      %680 = vst.msk [vmem:[#allocation2 + $0x18] sm:$0xff] %vm676, %v647
      %681 = vst.msk [vmem:[#allocation2 + $0x20] sm:$0xff] %vm676, %v648
      %682 = vst.msk [vmem:[#allocation2 + $0x28] sm:$0xff] %vm676, %v649
      %683 = vst.msk [vmem:[#allocation2 + $0x30] sm:$0xff] %vm676, %v650
      %684 = vst.msk [vmem:[#allocation2 + $0x38] sm:$0xff] %vm676, %v651
      %685 = vst.msk [vmem:[#allocation2 + $0x40] sm:$0xff] %vm676, %v652
      %686 = vst.msk [vmem:[#allocation2 + $0x48] sm:$0xff] %vm676, %v653
      %687 = vst.msk [vmem:[#allocation2 + $0x50] sm:$0xff] %vm676, %v654
      %688 = vst.msk [vmem:[#allocation2 + $0x58] sm:$0xff] %vm676, %v655
      %689 = vst.msk [vmem:[#allocation2 + $0x60] sm:$0xff] %vm676, %v656
      %690 = vst.msk [vmem:[#allocation2 + $0x68] sm:$0xff] %vm676, %v657
      %691 = vst.msk [vmem:[#allocation2 + $0x70] sm:$0xff] %vm676, %v658
      %692 = vst.msk [vmem:[#allocation2 + $0x78] sm:$0xff] %vm676, %v659
      %693 = vst.msk [vmem:[#allocation2 + $0x80] sm:$0xff] %vm676, %v660
      %694 = vst.msk [vmem:[#allocation2 + $0x88] sm:$0xff] %vm676, %v661
      %695 = vst.msk [vmem:[#allocation2 + $0x90] sm:$0xff] %vm676, %v662
      %696 = vst.msk [vmem:[#allocation2 + $0x98] sm:$0xff] %vm676, %v663
      %697 = vst.msk [vmem:[#allocation2 + $0xa0] sm:$0xff] %vm676, %v664
      %698 = vst.msk [vmem:[#allocation2 + $0xa8] sm:$0xff] %vm676, %v665
      %699 = vst.msk [vmem:[#allocation2 + $0xb0] sm:$0xff] %vm676, %v666
      %700 = vst.msk [vmem:[#allocation2 + $0xb8] sm:$0xff] %vm676, %v667
      %701 = vst.msk [vmem:[#allocation2 + $0xc0] sm:$0xff] %vm676, %v668
      %702 = vst.msk [vmem:[#allocation2 + $0xc8] sm:$0xff] %vm676, %v669
      %703 = vst.msk [vmem:[#allocation2 + $0xd0] sm:$0xff] %vm676, %v670
      %704 = vst.msk [vmem:[#allocation2 + $0xd8] sm:$0xff] %vm676, %v671
      %705 = vst.msk [vmem:[#allocation2 + $0xe0] sm:$0xff] %vm676, %v672
      %706 = vst.msk [vmem:[#allocation2 + $0xe8] sm:$0xff] %vm676, %v673
      %707 = vst.msk [vmem:[#allocation2 + $0xf0] sm:$0xff] %vm676, %v674
      %708 = vst.msk [vmem:[#allocation2 + $0xf8] sm:$0xff] %vm676, %v675
      %p709 = scmp.eq.s32.totalorder %s20, 8
      // Predicated region
      $region41: #{resnet_forward.13} parent=35 // pred_check
        %p710 = pneg %p709
      $region42: #{resnet_forward.13} parent=35 // pred_check_branch
        %712 = sbr.rel (%p710) target = $region44
      $region43: #{resnet_forward.13} parent=35 // pred_region
        %v713 = vld [vmem:[#allocation2] sm:$0xff]
        %v714 = vld [vmem:[#allocation2 + $0x8] sm:$0xff]
        %v715 = vld [vmem:[#allocation2 + $0x10] sm:$0xff]
        %v716 = vld [vmem:[#allocation2 + $0x18] sm:$0xff]
        %v717 = vld [vmem:[#allocation2 + $0x20] sm:$0xff]
        %v718 = vld [vmem:[#allocation2 + $0x28] sm:$0xff]
        %v719 = vld [vmem:[#allocation2 + $0x30] sm:$0xff]
        %v720 = vld [vmem:[#allocation2 + $0x38] sm:$0xff]
        %v721 = vld [vmem:[#allocation2 + $0x40] sm:$0xff]
        %v722 = vld [vmem:[#allocation2 + $0x48] sm:$0xff]
        %v723 = vld [vmem:[#allocation2 + $0x50] sm:$0xff]
        %v724 = vld [vmem:[#allocation2 + $0x58] sm:$0xff]
        %v725 = vld [vmem:[#allocation2 + $0x60] sm:$0xff]
        %v726 = vld [vmem:[#allocation2 + $0x68] sm:$0xff]
        %v727 = vld [vmem:[#allocation2 + $0x70] sm:$0xff]
        %v728 = vld [vmem:[#allocation2 + $0x78] sm:$0xff]
        %v729 = vld [vmem:[#allocation2 + $0x80] sm:$0xff]
        %v730 = vld [vmem:[#allocation2 + $0x88] sm:$0xff]
        %v731 = vld [vmem:[#allocation2 + $0x90] sm:$0xff]
        %v732 = vld [vmem:[#allocation2 + $0x98] sm:$0xff]
        %v733 = vld [vmem:[#allocation2 + $0xa0] sm:$0xff]
        %v734 = vld [vmem:[#allocation2 + $0xa8] sm:$0xff]
        %v735 = vld [vmem:[#allocation2 + $0xb0] sm:$0xff]
        %v736 = vld [vmem:[#allocation2 + $0xb8] sm:$0xff]
        %v737 = vld [vmem:[#allocation2 + $0xc0] sm:$0xff]
        %v738 = vld [vmem:[#allocation2 + $0xc8] sm:$0xff]
        %v739 = vld [vmem:[#allocation2 + $0xd0] sm:$0xff]
        %v740 = vld [vmem:[#allocation2 + $0xd8] sm:$0xff]
        %v741 = vld [vmem:[#allocation2 + $0xe0] sm:$0xff]
        %v742 = vld [vmem:[#allocation2 + $0xe8] sm:$0xff]
        %v743 = vld [vmem:[#allocation2 + $0xf0] sm:$0xff]
        %v744 = vld [vmem:[#allocation2 + $0xf8] sm:$0xff]
        %v745 = vld [vmem:[%s2] sm:$0x1]
        %v747 = vlaneseq
        %v748 = vshrl.u32 %v747, 7
        %v749 = vsub.s32 0, %v748
        %v750 = vrot.slane %v745, %v749
        %v752 = vmul.f32 %v713, %v750
        %v753 = vmul.f32 %v714, %v750
        %v754 = vmul.f32 %v715, %v750
        %v755 = vmul.f32 %v716, %v750
        %v756 = vmul.f32 %v717, %v750
        %v757 = vmul.f32 %v718, %v750
        %v758 = vmul.f32 %v719, %v750
        %v759 = vmul.f32 %v720, %v750
        %v760 = vmul.f32 %v721, %v750
        %v761 = vmul.f32 %v722, %v750
        %v762 = vmul.f32 %v723, %v750
        %v763 = vmul.f32 %v724, %v750
        %v764 = vmul.f32 %v725, %v750
        %v765 = vmul.f32 %v726, %v750
        %v766 = vmul.f32 %v727, %v750
        %v767 = vmul.f32 %v728, %v750
        %v768 = vmul.f32 %v729, %v750
        %v769 = vmul.f32 %v730, %v750
        %v770 = vmul.f32 %v731, %v750
        %v771 = vmul.f32 %v732, %v750
        %v772 = vmul.f32 %v733, %v750
        %v773 = vmul.f32 %v734, %v750
        %v774 = vmul.f32 %v735, %v750
        %v775 = vmul.f32 %v736, %v750
        %v776 = vmul.f32 %v737, %v750
        %v777 = vmul.f32 %v738, %v750
        %v778 = vmul.f32 %v739, %v750
        %v779 = vmul.f32 %v740, %v750
        %v780 = vmul.f32 %v741, %v750
        %v781 = vmul.f32 %v742, %v750
        %v782 = vmul.f32 %v743, %v750
        %v783 = vmul.f32 %v744, %v750
        %v784 = vld [vmem:[%s3] sm:$0x1]
        %v786 = vlaneseq
        %v787 = vshrl.u32 %v786, 7
        %v788 = vsub.s32 0, %v787
        %v789 = vrot.slane %v784, %v788
        %v791 = vadd.f32 %v752, %v789
        %v792 = vadd.f32 %v753, %v789
        %v793 = vadd.f32 %v754, %v789
        %v794 = vadd.f32 %v755, %v789
        %v795 = vadd.f32 %v756, %v789
        %v796 = vadd.f32 %v757, %v789
        %v797 = vadd.f32 %v758, %v789
        %v798 = vadd.f32 %v759, %v789
        %v799 = vadd.f32 %v760, %v789
        %v800 = vadd.f32 %v761, %v789
        %v801 = vadd.f32 %v762, %v789
        %v802 = vadd.f32 %v763, %v789
        %v803 = vadd.f32 %v764, %v789
        %v804 = vadd.f32 %v765, %v789
        %v805 = vadd.f32 %v766, %v789
        %v806 = vadd.f32 %v767, %v789
        %v807 = vadd.f32 %v768, %v789
        %v808 = vadd.f32 %v769, %v789
        %v809 = vadd.f32 %v770, %v789
        %v810 = vadd.f32 %v771, %v789
        %v811 = vadd.f32 %v772, %v789
        %v812 = vadd.f32 %v773, %v789
        %v813 = vadd.f32 %v774, %v789
        %v814 = vadd.f32 %v775, %v789
        %v815 = vadd.f32 %v776, %v789
        %v816 = vadd.f32 %v777, %v789
        %v817 = vadd.f32 %v778, %v789
        %v818 = vadd.f32 %v779, %v789
        %v819 = vadd.f32 %v780, %v789
        %v820 = vadd.f32 %v781, %v789
        %v821 = vadd.f32 %v782, %v789
        %v822 = vadd.f32 %v783, %v789
        %v823 = vmax.f32 %v791, 0.0
        %v824 = vmax.f32 %v792, 0.0
        %v825 = vmax.f32 %v793, 0.0
        %v826 = vmax.f32 %v794, 0.0
        %v827 = vmax.f32 %v795, 0.0
        %v828 = vmax.f32 %v796, 0.0
        %v829 = vmax.f32 %v797, 0.0
        %v830 = vmax.f32 %v798, 0.0
        %v831 = vmax.f32 %v799, 0.0
        %v832 = vmax.f32 %v800, 0.0
        %v833 = vmax.f32 %v801, 0.0
        %v834 = vmax.f32 %v802, 0.0
        %v835 = vmax.f32 %v803, 0.0
        %v836 = vmax.f32 %v804, 0.0
        %v837 = vmax.f32 %v805, 0.0
        %v838 = vmax.f32 %v806, 0.0
        %v839 = vmax.f32 %v807, 0.0
        %v840 = vmax.f32 %v808, 0.0
        %v841 = vmax.f32 %v809, 0.0
        %v842 = vmax.f32 %v810, 0.0
        %v843 = vmax.f32 %v811, 0.0
        %v844 = vmax.f32 %v812, 0.0
        %v845 = vmax.f32 %v813, 0.0
        %v846 = vmax.f32 %v814, 0.0
        %v847 = vmax.f32 %v815, 0.0
        %v848 = vmax.f32 %v816, 0.0
        %v849 = vmax.f32 %v817, 0.0
        %v850 = vmax.f32 %v818, 0.0
        %v851 = vmax.f32 %v819, 0.0
        %v852 = vmax.f32 %v820, 0.0
        %v853 = vmax.f32 %v821, 0.0
        %v854 = vmax.f32 %v822, 0.0
        %v855 = vpack.c.bf16 %v824, %v823
        %v856 = vpack.c.bf16 %v826, %v825
        %v857 = vpack.c.bf16 %v828, %v827
        %v858 = vpack.c.bf16 %v830, %v829
        %v859 = vpack.c.bf16 %v832, %v831
        %v860 = vpack.c.bf16 %v834, %v833
        %v861 = vpack.c.bf16 %v836, %v835
        %v862 = vpack.c.bf16 %v838, %v837
        %v863 = vpack.c.bf16 %v840, %v839
        %v864 = vpack.c.bf16 %v842, %v841
        %v865 = vpack.c.bf16 %v844, %v843
        %v866 = vpack.c.bf16 %v846, %v845
        %v867 = vpack.c.bf16 %v848, %v847
        %v868 = vpack.c.bf16 %v850, %v849
        %v869 = vpack.c.bf16 %v852, %v851
        %v870 = vpack.c.bf16 %v854, %v853
        %v887 = vunpack.c.l.b16 %v855
        %v888 = vunpack.c.h.b16 %v855
        %v889 = vunpack.c.l.b16 %v856
        %v890 = vunpack.c.h.b16 %v856
        %v891 = vunpack.c.l.b16 %v857
        %v892 = vunpack.c.h.b16 %v857
        %v893 = vunpack.c.l.b16 %v858
        %v894 = vunpack.c.h.b16 %v858
        %v895 = vunpack.c.l.b16 %v859
        %v896 = vunpack.c.h.b16 %v859
        %v897 = vunpack.c.l.b16 %v860
        %v898 = vunpack.c.h.b16 %v860
        %v899 = vunpack.c.l.b16 %v861
        %v900 = vunpack.c.h.b16 %v861
        %v901 = vunpack.c.l.b16 %v862
        %v902 = vunpack.c.h.b16 %v862
        %v903 = vunpack.c.l.b16 %v863
        %v904 = vunpack.c.h.b16 %v863
        %v905 = vunpack.c.l.b16 %v864
        %v906 = vunpack.c.h.b16 %v864
        %v907 = vunpack.c.l.b16 %v865
        %v908 = vunpack.c.h.b16 %v865
        %v909 = vunpack.c.l.b16 %v866
        %v910 = vunpack.c.h.b16 %v866
        %v911 = vunpack.c.l.b16 %v867
        %v912 = vunpack.c.h.b16 %v867
        %v913 = vunpack.c.l.b16 %v868
        %v914 = vunpack.c.h.b16 %v868
        %v915 = vunpack.c.l.b16 %v869
        %v916 = vunpack.c.h.b16 %v869
        %v917 = vunpack.c.l.b16 %v870
        %v918 = vunpack.c.h.b16 %v870
        %v919 = vpack.c.b16 %v887, %v887
        %v920 = vpack.c.b16 %v888, %v888
        %v921 = vpack.c.b16 %v889, %v889
        %v922 = vpack.c.b16 %v890, %v890
        %v923 = vpack.c.b16 %v891, %v891
        %v924 = vpack.c.b16 %v892, %v892
        %v925 = vpack.c.b16 %v893, %v893
        %v926 = vpack.c.b16 %v894, %v894
        %v927 = vpack.c.b16 %v895, %v895
        %v928 = vpack.c.b16 %v896, %v896
        %v929 = vpack.c.b16 %v897, %v897
        %v930 = vpack.c.b16 %v898, %v898
        %v931 = vpack.c.b16 %v899, %v899
        %v932 = vpack.c.b16 %v900, %v900
        %v933 = vpack.c.b16 %v901, %v901
        %v934 = vpack.c.b16 %v902, %v902
        %v935 = vpack.c.b16 %v903, %v903
        %v936 = vpack.c.b16 %v904, %v904
        %v937 = vpack.c.b16 %v905, %v905
        %v938 = vpack.c.b16 %v906, %v906
        %v939 = vpack.c.b16 %v907, %v907
        %v940 = vpack.c.b16 %v908, %v908
        %v941 = vpack.c.b16 %v909, %v909
        %v942 = vpack.c.b16 %v910, %v910
        %v943 = vpack.c.b16 %v911, %v911
        %v944 = vpack.c.b16 %v912, %v912
        %v945 = vpack.c.b16 %v913, %v913
        %v946 = vpack.c.b16 %v914, %v914
        %v947 = vpack.c.b16 %v915, %v915
        %v948 = vpack.c.b16 %v916, %v916
        %v949 = vpack.c.b16 %v917, %v917
        %v950 = vpack.c.b16 %v918, %v918
        %vm983 = vcmask 519168
        %984 = vst.msk [vmem:[%s242] sm:$0xf] %vm983, %v919
        %985 = vst.msk [vmem:[%s242 + $0x4] sm:$0xf] %vm983, %v920
        %986 = vst.msk [vmem:[%s242 + $0x8] sm:$0xf] %vm983, %v921
        %987 = vst.msk [vmem:[%s242 + $0xc] sm:$0xf] %vm983, %v922
        %988 = vst.msk [vmem:[%s242 + $0x10] sm:$0xf] %vm983, %v923
        %989 = vst.msk [vmem:[%s242 + $0x14] sm:$0xf] %vm983, %v924
        %990 = vst.msk [vmem:[%s242 + $0x18] sm:$0xf] %vm983, %v925
        %991 = vst.msk [vmem:[%s242 + $0x1c] sm:$0xf] %vm983, %v926
        %992 = vst.msk [vmem:[%s242 + $0x20] sm:$0xf] %vm983, %v927
        %993 = vst.msk [vmem:[%s242 + $0x24] sm:$0xf] %vm983, %v928
        %994 = vst.msk [vmem:[%s242 + $0x28] sm:$0xf] %vm983, %v929
        %995 = vst.msk [vmem:[%s242 + $0x2c] sm:$0xf] %vm983, %v930
        %996 = vst.msk [vmem:[%s242 + $0x30] sm:$0xf] %vm983, %v931
        %997 = vst.msk [vmem:[%s242 + $0x34] sm:$0xf] %vm983, %v932
        %998 = vst.msk [vmem:[%s242 + $0x38] sm:$0xf] %vm983, %v933
        %999 = vst.msk [vmem:[%s242 + $0x3c] sm:$0xf] %vm983, %v934
        %1000 = vst.msk [vmem:[%s242 + $0x40] sm:$0xf] %vm983, %v935
        %1001 = vst.msk [vmem:[%s242 + $0x44] sm:$0xf] %vm983, %v936
        %1002 = vst.msk [vmem:[%s242 + $0x48] sm:$0xf] %vm983, %v937
        %1003 = vst.msk [vmem:[%s242 + $0x4c] sm:$0xf] %vm983, %v938
        %1004 = vst.msk [vmem:[%s242 + $0x50] sm:$0xf] %vm983, %v939
        %1005 = vst.msk [vmem:[%s242 + $0x54] sm:$0xf] %vm983, %v940
        %1006 = vst.msk [vmem:[%s242 + $0x58] sm:$0xf] %vm983, %v941
        %1007 = vst.msk [vmem:[%s242 + $0x5c] sm:$0xf] %vm983, %v942
        %1008 = vst.msk [vmem:[%s242 + $0x60] sm:$0xf] %vm983, %v943
        %1009 = vst.msk [vmem:[%s242 + $0x64] sm:$0xf] %vm983, %v944
        %1010 = vst.msk [vmem:[%s242 + $0x68] sm:$0xf] %vm983, %v945
        %1011 = vst.msk [vmem:[%s242 + $0x6c] sm:$0xf] %vm983, %v946
        %1012 = vst.msk [vmem:[%s242 + $0x70] sm:$0xf] %vm983, %v947
        %1013 = vst.msk [vmem:[%s242 + $0x74] sm:$0xf] %vm983, %v948
        %1014 = vst.msk [vmem:[%s242 + $0x78] sm:$0xf] %vm983, %v949
        %1015 = vst.msk [vmem:[%s242 + $0x7c] sm:$0xf] %vm983, %v950
      $region44: #{resnet_forward.13} parent=35 // pred_fallthru
        _
      %s1016 = smul.u32 32, %s19
      %p1017 = scmp.lt.s32.totalorder %s1016, 63
      %s1018 = scalar_select %p1017, %s1016, 63
      %s1019 = smul.addr %s1018, 4
      %s1020 = scalar_lea.vmem %s4, %s1019
      // Predicated region
      $region45: #{resnet_forward.13} parent=35 // pred_check
        %p1021 = pneg %p141
      $region46: #{resnet_forward.13} parent=35 // pred_check_branch
        %1023 = sbr.rel (%p1021) target = $region48
      $region47: #{resnet_forward.13} parent=35 // pred_region
        %s1024 = smul.u32 32, %s19
      $region48: #{resnet_forward.13} parent=35 // pred_fallthru
        _
    $region36: #{resnet_forward.13} parent=5 // pred_fallthru
      _
    %p1025 = scmp.le.s32.totalorder 2, %s10
    // Predicated region
    $region49: #{resnet_forward.13} parent=5 // pred_check
      %p1026 = pneg %p1025
    $region50: #{resnet_forward.13} parent=5 // pred_check_branch
      %1028 = sbr.rel (%p1026) target = $region52
    $region51: #{resnet_forward.13} parent=5 // pred_region
      %s1029 = ssub.s32 %s10, 2
      // Predicated region
      $region53: #{resnet_forward.13} parent=51 // pred_check
        %p1030 = pneg %p147
      $region54: #{resnet_forward.13} parent=51 // pred_check_branch
        %1032 = sbr.rel (%p1030) target = $region56
      $region55: #{resnet_forward.13} parent=51 // pred_region
        %s1033 = smul.u32 32, %s21
        %p1034 = scmp.lt.s32.totalorder %s1033, 63
        %s1035 = scalar_select %p1034, %s1033, 63
        %s1036 = smul.addr %s1035, 4
        %s1037 = scalar_lea.vmem %s4, %s1036
      $region56: #{resnet_forward.13} parent=51 // pred_fallthru
        _
    $region52: #{resnet_forward.13} parent=5 // pred_fallthru
      _
  $region6: #{resnet_forward.13} parent=0 // loop_footer
    %s14 = sadd.s32 1, %s10
  $region7: #{resnet_forward.13} parent=0 // loop_footer_branch
    %9 = sbr.rel target = $region3
  $region8: #{resnet_forward.13} parent=0 // loop_exit
    _

// kernel: resnet_forward.15
$region0: #{resnet_forward.15}
  #allocation0 [shape = 'u32[]', space=smem, size = 0x4, offset = 0x4, fixed_abs, tag = 'smem constant byte address 0x4 - core index']
  #allocation1 [shape = 'u32[144,128]{1,0:T(1,128)}', space=vmem, size = 0x12000, scoped, tag = 'internal scratch']
  #allocation2 [shape = 'f32[256,64]{1,0:T(8,128)}', space=vmem, size = 0x20000, scoped, tag = 'scratch operand']
  %s0 = inlined_call_operand.vmem [shape: bf16[9,512,64], index: 0, kind: input, shape index: {}]
  %s1 = inlined_call_operand.vmem [shape: bf16[9,64,64], index: 1, kind: input, shape index: {}]
  %s2 = inlined_call_operand.vmem [shape: f32[1,64], index: 2, kind: input, shape index: {}]
  %s3 = inlined_call_operand.vmem [shape: f32[1,64], index: 3, kind: input, shape index: {}]
  %s4 = inlined_call_operand.vmem [shape: bf16[512,64], index: 4, kind: input, shape index: {}]
  %s5 = inlined_call_operand.vmem [shape: bf16[512,64], index: 5, kind: output, shape index: {}]
  %s6 = sld [smem:[#allocation0]]
  $region61: #{resnet_forward.15} parent=0
    _
  %s8 = ssub.s32 1, %s6
  %s9 = scalar_select 0, %s8, %s6
  loop: start=0, step=1, limit=20
  $region2: #{resnet_forward.15} parent=0 // loop_pre_header
    _
  $region3: #{resnet_forward.15} parent=0 // loop_header
    %s11 = sphi 0, %s15
    %p12 = scmp.ge.s32.totalorder %s11, 20
    %s18 = sphi 0, %s30
    %s19 = sphi 0, %s26
    %s20 = sphi 0, %s18
    %s21 = sphi 0, %s19
    %s22 = sphi 0, %s20
    %s23 = sphi 0, %s21
    %s35 = sphi 0, %s37
    %s38 = sphi 0, %s35
    %s39 = sphi 0, %s38
    %s55 = sphi 0, %s39
    %s61 = sphi 0, %s63
    %s64 = sphi 0, %s61
    %s65 = sphi 0, %s64
    %s81 = sphi 0, %s65
    %s85 = sphi 0, %s85
    %s87 = sphi 0, %s85
    %s88 = sphi 0, %s87
    %s102 = sphi 0, %s88
    %s106 = sphi 0, %s106
    %s108 = sphi 0, %s106
    %s109 = sphi 0, %s108
    %s123 = sphi 0, %s109
    %s129 = sphi 0, %s131
    %s132 = sphi 0, %s129
    %s133 = sphi 0, %s132
    %s149 = sphi 0, %s133
    %s155 = sphi 0, %s157
    %s158 = sphi 0, %s155
    %s159 = sphi 0, %s158
    %s175 = sphi 0, %s159
  $region4: #{resnet_forward.15} parent=0 // loop_header_branch
    %14 = sbr.rel (%p12) target = $region8
  $region5: #{resnet_forward.15} parent=0 // loop_body
    %s16 = ssub.s32 %s11, 1
    %s17 = ssub.s32 %s11, 2
    %s24 = sadd.s32 1, %s19
    %p25 = scmp.ge.s32.totalorder %s24, 9
    %s26 = scalar_select %p25, 0, %s24
    %s27 = sadd.s32 1, %s18
    %s28 = scalar_select %p25, %s27, %s18
    %p29 = scmp.ge.s32.totalorder %s28, 2
    %s30 = scalar_select %p29, 0, %s28
    %s31 = ssub.s32 %s19, %s26
    %s32 = ssub.s32 %s18, %s30
    %s33 = sor.u32 %s31, %s32
    %p34 = scmp.eq.s32.totalorder %s33, 0
    %s36 = sadd.s32 %s35, 1
    %s37 = scalar_select %p34, %s35, %s36
    %p40 = pneg %p34
    %p41 = scmp.eq.s32.totalorder %s11, 17
    %p42 = por %p40, %p41
    %p43 = scmp.ne.s32.totalorder %s35, %s38
    %p44 = scmp.eq.s32.totalorder %s11, 0
    %p45 = por %p43, %p44
    %p46 = scmp.ne.s32.totalorder %s35, %s38
    %p47 = scmp.eq.s32.totalorder %s16, 17
    %p48 = por %p46, %p47
    %p49 = scmp.ne.s32.totalorder %s38, %s39
    %p50 = scmp.eq.s32.totalorder %s16, 0
    %p51 = por %p49, %p50
    %p52 = scmp.ne.s32.totalorder %s38, %s39
    %p53 = scmp.eq.s32.totalorder %s17, 17
    %p54 = por %p52, %p53
    %p56 = scmp.ne.s32.totalorder %s39, %s55
    %p57 = scmp.eq.s32.totalorder %s17, 0
    %p58 = por %p56, %p57
    %s59 = ssub.s32 %s19, %s26
    %p60 = scmp.eq.s32.totalorder %s59, 0
    %s62 = sadd.s32 %s61, 1
    %s63 = scalar_select %p60, %s61, %s62
    %p66 = pneg %p60
    %p67 = scmp.eq.s32.totalorder %s11, 17
    %p68 = por %p66, %p67
    %p69 = scmp.ne.s32.totalorder %s61, %s64
    %p70 = scmp.eq.s32.totalorder %s11, 0
    %p71 = por %p69, %p70
    %p72 = scmp.ne.s32.totalorder %s61, %s64
    %p73 = scmp.eq.s32.totalorder %s16, 17
    %p74 = por %p72, %p73
    %p75 = scmp.ne.s32.totalorder %s64, %s65
    %p76 = scmp.eq.s32.totalorder %s16, 0
    %p77 = por %p75, %p76
    %p78 = scmp.ne.s32.totalorder %s64, %s65
    %p79 = scmp.eq.s32.totalorder %s17, 17
    %p80 = por %p78, %p79
    %p82 = scmp.ne.s32.totalorder %s65, %s81
    %p83 = scmp.eq.s32.totalorder %s17, 0
    %p84 = por %p82, %p83
    %s86 = sadd.s32 %s85, 1
    %p89 = scmp.eq.s32.totalorder %s11, 17
    %p90 = scmp.ne.s32.totalorder %s85, %s87
    %p91 = scmp.eq.s32.totalorder %s11, 0
    %p92 = por %p90, %p91
    %p93 = scmp.ne.s32.totalorder %s85, %s87
    %p94 = scmp.eq.s32.totalorder %s16, 17
    %p95 = por %p93, %p94
    %p96 = scmp.ne.s32.totalorder %s87, %s88
    %p97 = scmp.eq.s32.totalorder %s16, 0
    %p98 = por %p96, %p97
    %p99 = scmp.ne.s32.totalorder %s87, %s88
    %p100 = scmp.eq.s32.totalorder %s17, 17
    %p101 = por %p99, %p100
    %p103 = scmp.ne.s32.totalorder %s88, %s102
    %p104 = scmp.eq.s32.totalorder %s17, 0
    %p105 = por %p103, %p104
    %s107 = sadd.s32 %s106, 1
    %p110 = scmp.eq.s32.totalorder %s11, 17
    %p111 = scmp.ne.s32.totalorder %s106, %s108
    %p112 = scmp.eq.s32.totalorder %s11, 0
    %p113 = por %p111, %p112
    %p114 = scmp.ne.s32.totalorder %s106, %s108
    %p115 = scmp.eq.s32.totalorder %s16, 17
    %p116 = por %p114, %p115
    %p117 = scmp.ne.s32.totalorder %s108, %s109
    %p118 = scmp.eq.s32.totalorder %s16, 0
    %p119 = por %p117, %p118
    %p120 = scmp.ne.s32.totalorder %s108, %s109
    %p121 = scmp.eq.s32.totalorder %s17, 17
    %p122 = por %p120, %p121
    %p124 = scmp.ne.s32.totalorder %s109, %s123
    %p125 = scmp.eq.s32.totalorder %s17, 0
    %p126 = por %p124, %p125
    %s127 = ssub.s32 %s18, %s30
    %p128 = scmp.eq.s32.totalorder %s127, 0
    %s130 = sadd.s32 %s129, 1
    %s131 = scalar_select %p128, %s129, %s130
    %p134 = pneg %p128
    %p135 = scmp.eq.s32.totalorder %s11, 17
    %p136 = por %p134, %p135
    %p137 = scmp.ne.s32.totalorder %s129, %s132
    %p138 = scmp.eq.s32.totalorder %s11, 0
    %p139 = por %p137, %p138
    %p140 = scmp.ne.s32.totalorder %s129, %s132
    %p141 = scmp.eq.s32.totalorder %s16, 17
    %p142 = por %p140, %p141
    %p143 = scmp.ne.s32.totalorder %s132, %s133
    %p144 = scmp.eq.s32.totalorder %s16, 0
    %p145 = por %p143, %p144
    %p146 = scmp.ne.s32.totalorder %s132, %s133
    %p147 = scmp.eq.s32.totalorder %s17, 17
    %p148 = por %p146, %p147
    %p150 = scmp.ne.s32.totalorder %s133, %s149
    %p151 = scmp.eq.s32.totalorder %s17, 0
    %p152 = por %p150, %p151
    %s153 = ssub.s32 %s18, %s30
    %p154 = scmp.eq.s32.totalorder %s153, 0
    %s156 = sadd.s32 %s155, 1
    %s157 = scalar_select %p154, %s155, %s156
    %p160 = pneg %p154
    %p161 = scmp.eq.s32.totalorder %s11, 17
    %p162 = por %p160, %p161
    %p163 = scmp.ne.s32.totalorder %s155, %s158
    %p164 = scmp.eq.s32.totalorder %s11, 0
    %p165 = por %p163, %p164
    %p166 = scmp.ne.s32.totalorder %s155, %s158
    %p167 = scmp.eq.s32.totalorder %s16, 17
    %p168 = por %p166, %p167
    %p169 = scmp.ne.s32.totalorder %s158, %s159
    %p170 = scmp.eq.s32.totalorder %s16, 0
    %p171 = por %p169, %p170
    %p172 = scmp.ne.s32.totalorder %s158, %s159
    %p173 = scmp.eq.s32.totalorder %s17, 17
    %p174 = por %p172, %p173
    %p176 = scmp.ne.s32.totalorder %s159, %s175
    %p177 = scmp.eq.s32.totalorder %s17, 0
    %p178 = por %p176, %p177
    %p179 = scmp.le.s32.totalorder 1, %s11
    %p180 = scmp.lt.s32.totalorder %s11, 19
    %p181 = pnand %p179, %p180
    %p182 = pneg %p181
    // Predicated region
    $region9: #{resnet_forward.15} parent=5 // pred_check
      _
    $region10: #{resnet_forward.15} parent=5 // pred_check_branch
      %184 = sbr.rel (%p181) target = $region12
    $region11: #{resnet_forward.15} parent=5 // pred_region
      %s185 = ssub.s32 %s11, 1
      // Predicated region
      $region13: #{resnet_forward.15} parent=11 // pred_check
        %p186 = pneg %p98
      $region14: #{resnet_forward.15} parent=11 // pred_check_branch
        %188 = sbr.rel (%p186) target = $region16
      $region15: #{resnet_forward.15} parent=11 // pred_region
        _
      $region16: #{resnet_forward.15} parent=11 // pred_fallthru
        _
      // Predicated region
      $region17: #{resnet_forward.15} parent=11 // pred_check
        %p189 = pneg %p119
      $region18: #{resnet_forward.15} parent=11 // pred_check_branch
        %191 = sbr.rel (%p189) target = $region20
      $region19: #{resnet_forward.15} parent=11 // pred_region
        _
      $region20: #{resnet_forward.15} parent=11 // pred_fallthru
        _
    $region12: #{resnet_forward.15} parent=5 // pred_fallthru
      _
    %p192 = scmp.lt.s32.totalorder %s11, 18
    // Predicated region
    $region21: #{resnet_forward.15} parent=5 // pred_check
      %p193 = pneg %p192
    $region22: #{resnet_forward.15} parent=5 // pred_check_branch
      %195 = sbr.rel (%p193) target = $region24
    $region23: #{resnet_forward.15} parent=5 // pred_region
      // Predicated region
      $region25: #{resnet_forward.15} parent=23 // pred_check
        %p196 = pneg %p45
      $region26: #{resnet_forward.15} parent=23 // pred_check_branch
        %198 = sbr.rel (%p196) target = $region28
      $region27: #{resnet_forward.15} parent=23 // pred_region
        %s199 = smul.u32 32, %s18
        %p200 = scmp.lt.s32.totalorder %s19, 8
        %s201 = scalar_select %p200, %s19, 8
        %p202 = scmp.lt.s32.totalorder %s199, 63
        %s203 = scalar_select %p202, %s199, 63
        %s204 = smul.addr %s201, 64
        %s205 = sadd.s32 %s203, %s204
        %s206 = smul.addr %s205, 4
        %s207 = scalar_lea.vmem %s0, %s206
        %s208 = smul.u32 32, %s18
      $region28: #{resnet_forward.15} parent=23 // pred_fallthru
        _
      // Predicated region
      $region29: #{resnet_forward.15} parent=23 // pred_check
        %p209 = pneg %p71
      $region30: #{resnet_forward.15} parent=23 // pred_check_branch
        %211 = sbr.rel (%p209) target = $region32
      $region31: #{resnet_forward.15} parent=23 // pred_region
        %p212 = scmp.lt.s32.totalorder %s19, 8
        %s213 = scalar_select %p212, %s19, 8
        %s214 = smul.addr %s213, 8
        %s215 = smul.addr %s214, 4
        %s216 = scalar_lea.vmem %s1, %s215
      $region32: #{resnet_forward.15} parent=23 // pred_fallthru
        _
      // Predicated region
      $region33: #{resnet_forward.15} parent=23 // pred_check
        %p217 = pneg %p139
      $region34: #{resnet_forward.15} parent=23 // pred_check_branch
        %219 = sbr.rel (%p217) target = $region36
      $region35: #{resnet_forward.15} parent=23 // pred_region
        %s220 = smul.u32 32, %s18
        %p221 = scmp.lt.s32.totalorder %s220, 63
        %s222 = scalar_select %p221, %s220, 63
        %s223 = smul.addr %s222, 4
        %s224 = scalar_lea.vmem %s4, %s223
        %s225 = smul.u32 32, %s18
      $region36: #{resnet_forward.15} parent=23 // pred_fallthru
        _
    $region24: #{resnet_forward.15} parent=5 // pred_fallthru
      _
    %p226 = scmp.le.s32.totalorder 1, %s11
    %p227 = scmp.lt.s32.totalorder %s11, 19
    %p228 = pnand %p226, %p227
    %p229 = pneg %p228
    // Predicated region
    $region37: #{resnet_forward.15} parent=5 // pred_check
      _
    $region38: #{resnet_forward.15} parent=5 // pred_check_branch
      %231 = sbr.rel (%p228) target = $region40
    $region39: #{resnet_forward.15} parent=5 // pred_region
      %s232 = ssub.s32 %s11, 1
      %s233 = smul.u32 32, %s20
      %p234 = scmp.lt.s32.totalorder %s21, 8
      %s235 = scalar_select %p234, %s21, 8
      %p236 = scmp.lt.s32.totalorder %s233, 63
      %s237 = scalar_select %p236, %s233, 63
      %s238 = smul.addr %s235, 64
      %s239 = sadd.s32 %s237, %s238
      %s240 = smul.addr %s239, 4
      %s241 = scalar_lea.vmem %s0, %s240
      %p242 = pneg %p51
      %p243 = pneg %p48
      %p244 = scmp.lt.s32.totalorder %s21, 8
      %s245 = scalar_select %p244, %s21, 8
      %s246 = smul.addr %s245, 8
      %s247 = smul.addr %s246, 4
      %s248 = scalar_lea.vmem %s1, %s247
      %p249 = pneg %p77
      %p250 = pneg %p74
      %p251 = pneg %p98
      %p252 = pneg %p95
      %p253 = pneg %p119
      %p254 = pneg %p116
      %s255 = smul.u32 32, %s20
      %p256 = scmp.lt.s32.totalorder %s255, 63
      %s257 = scalar_select %p256, %s255, 63
      %s258 = smul.addr %s257, 4
      %s259 = scalar_lea.vmem %s4, %s258
      %p260 = pneg %p145
      %p261 = pneg %p142
      %p262 = pneg %p171
      %p263 = pneg %p168
      %s264 = smul.u32 32, %s20
      %p265 = scmp.lt.s32.totalorder %s264, 63
      %s266 = scalar_select %p265, %s264, 63
      %s267 = smul.addr %s266, 4
      %s268 = scalar_lea.vmem %s5, %s267
      %s269 = smul.u32 32, %s20
      %p270 = scmp.lt.s32.totalorder %s21, 8
      %s271 = scalar_select %p270, %s21, 8
      %p272 = scmp.lt.s32.totalorder %s269, 63
      %s273 = scalar_select %p272, %s269, 63
      %s274 = smul.addr %s271, 64
      %s275 = sadd.s32 %s273, %s274
      %s276 = smul.addr %s275, 4
      %s277 = scalar_lea.vmem %s0, %s276
      %s278 = smul.u32 32, %s20
      %p279 = scmp.lt.s32.totalorder %s21, 8
      %s280 = scalar_select %p279, %s21, 8
      %s281 = smul.addr %s280, 8
      %s282 = smul.addr %s281, 4
      %s283 = scalar_lea.vmem %s1, %s282
      %s284 = smul.u32 32, %s20
      %p285 = scmp.lt.s32.totalorder %s284, 63
      %s286 = scalar_select %p285, %s284, 63
      %s287 = smul.addr %s286, 4
      %s288 = scalar_lea.vmem %s4, %s287
      %s289 = smul.u32 32, %s20
      %s290 = smul.u32 32, %s20
      %p291 = scmp.lt.s32.totalorder %s290, 63
      %s292 = scalar_select %p291, %s290, 63
      %s293 = smul.addr %s292, 4
      %s294 = scalar_lea.vmem %s5, %s293
      %s295 = smul.u32 32, %s20
      %p297 = scmp.eq.s32.totalorder %s21, 0
      // Predicated region
      $region41: #{resnet_forward.15} parent=39 // pred_check
        %p298 = pneg %p297
      $region42: #{resnet_forward.15} parent=39 // pred_check_branch
        %300 = sbr.rel (%p298) target = $region44
      $region43: #{resnet_forward.15} parent=39 // pred_region
        %vm301 = vcmask 523264
        %302 = vst.msk [vmem:[#allocation2] sm:$0xff] %vm301, 0.0
        %303 = vst.msk [vmem:[#allocation2 + $0x8] sm:$0xff] %vm301, 0.0
        %304 = vst.msk [vmem:[#allocation2 + $0x10] sm:$0xff] %vm301, 0.0
        %305 = vst.msk [vmem:[#allocation2 + $0x18] sm:$0xff] %vm301, 0.0
        %306 = vst.msk [vmem:[#allocation2 + $0x20] sm:$0xff] %vm301, 0.0
        %307 = vst.msk [vmem:[#allocation2 + $0x28] sm:$0xff] %vm301, 0.0
        %308 = vst.msk [vmem:[#allocation2 + $0x30] sm:$0xff] %vm301, 0.0
        %309 = vst.msk [vmem:[#allocation2 + $0x38] sm:$0xff] %vm301, 0.0
        %310 = vst.msk [vmem:[#allocation2 + $0x40] sm:$0xff] %vm301, 0.0
        %311 = vst.msk [vmem:[#allocation2 + $0x48] sm:$0xff] %vm301, 0.0
        %312 = vst.msk [vmem:[#allocation2 + $0x50] sm:$0xff] %vm301, 0.0
        %313 = vst.msk [vmem:[#allocation2 + $0x58] sm:$0xff] %vm301, 0.0
        %314 = vst.msk [vmem:[#allocation2 + $0x60] sm:$0xff] %vm301, 0.0
        %315 = vst.msk [vmem:[#allocation2 + $0x68] sm:$0xff] %vm301, 0.0
        %316 = vst.msk [vmem:[#allocation2 + $0x70] sm:$0xff] %vm301, 0.0
        %317 = vst.msk [vmem:[#allocation2 + $0x78] sm:$0xff] %vm301, 0.0
        %318 = vst.msk [vmem:[#allocation2 + $0x80] sm:$0xff] %vm301, 0.0
        %319 = vst.msk [vmem:[#allocation2 + $0x88] sm:$0xff] %vm301, 0.0
        %320 = vst.msk [vmem:[#allocation2 + $0x90] sm:$0xff] %vm301, 0.0
        %321 = vst.msk [vmem:[#allocation2 + $0x98] sm:$0xff] %vm301, 0.0
        %322 = vst.msk [vmem:[#allocation2 + $0xa0] sm:$0xff] %vm301, 0.0
        %323 = vst.msk [vmem:[#allocation2 + $0xa8] sm:$0xff] %vm301, 0.0
        %324 = vst.msk [vmem:[#allocation2 + $0xb0] sm:$0xff] %vm301, 0.0
        %325 = vst.msk [vmem:[#allocation2 + $0xb8] sm:$0xff] %vm301, 0.0
        %326 = vst.msk [vmem:[#allocation2 + $0xc0] sm:$0xff] %vm301, 0.0
        %327 = vst.msk [vmem:[#allocation2 + $0xc8] sm:$0xff] %vm301, 0.0
        %328 = vst.msk [vmem:[#allocation2 + $0xd0] sm:$0xff] %vm301, 0.0
        %329 = vst.msk [vmem:[#allocation2 + $0xd8] sm:$0xff] %vm301, 0.0
        %330 = vst.msk [vmem:[#allocation2 + $0xe0] sm:$0xff] %vm301, 0.0
        %331 = vst.msk [vmem:[#allocation2 + $0xe8] sm:$0xff] %vm301, 0.0
        %332 = vst.msk [vmem:[#allocation2 + $0xf0] sm:$0xff] %vm301, 0.0
        %333 = vst.msk [vmem:[#allocation2 + $0xf8] sm:$0xff] %vm301, 0.0
      $region44: #{resnet_forward.15} parent=39 // pred_fallthru
        _
      %v334 = vld [vmem:[#allocation2] sm:$0xff]
      %v335 = vld [vmem:[#allocation2 + $0x8] sm:$0xff]
      %v336 = vld [vmem:[#allocation2 + $0x10] sm:$0xff]
      %v337 = vld [vmem:[#allocation2 + $0x18] sm:$0xff]
      %v338 = vld [vmem:[#allocation2 + $0x20] sm:$0xff]
      %v339 = vld [vmem:[#allocation2 + $0x28] sm:$0xff]
      %v340 = vld [vmem:[#allocation2 + $0x30] sm:$0xff]
      %v341 = vld [vmem:[#allocation2 + $0x38] sm:$0xff]
      %v342 = vld [vmem:[#allocation2 + $0x40] sm:$0xff]
      %v343 = vld [vmem:[#allocation2 + $0x48] sm:$0xff]
      %v344 = vld [vmem:[#allocation2 + $0x50] sm:$0xff]
      %v345 = vld [vmem:[#allocation2 + $0x58] sm:$0xff]
      %v346 = vld [vmem:[#allocation2 + $0x60] sm:$0xff]
      %v347 = vld [vmem:[#allocation2 + $0x68] sm:$0xff]
      %v348 = vld [vmem:[#allocation2 + $0x70] sm:$0xff]
      %v349 = vld [vmem:[#allocation2 + $0x78] sm:$0xff]
      %v350 = vld [vmem:[#allocation2 + $0x80] sm:$0xff]
      %v351 = vld [vmem:[#allocation2 + $0x88] sm:$0xff]
      %v352 = vld [vmem:[#allocation2 + $0x90] sm:$0xff]
      %v353 = vld [vmem:[#allocation2 + $0x98] sm:$0xff]
      %v354 = vld [vmem:[#allocation2 + $0xa0] sm:$0xff]
      %v355 = vld [vmem:[#allocation2 + $0xa8] sm:$0xff]
      %v356 = vld [vmem:[#allocation2 + $0xb0] sm:$0xff]
      %v357 = vld [vmem:[#allocation2 + $0xb8] sm:$0xff]
      %v358 = vld [vmem:[#allocation2 + $0xc0] sm:$0xff]
      %v359 = vld [vmem:[#allocation2 + $0xc8] sm:$0xff]
      %v360 = vld [vmem:[#allocation2 + $0xd0] sm:$0xff]
      %v361 = vld [vmem:[#allocation2 + $0xd8] sm:$0xff]
      %v362 = vld [vmem:[#allocation2 + $0xe0] sm:$0xff]
      %v363 = vld [vmem:[#allocation2 + $0xe8] sm:$0xff]
      %v364 = vld [vmem:[#allocation2 + $0xf0] sm:$0xff]
      %v365 = vld [vmem:[#allocation2 + $0xf8] sm:$0xff]
      %v366 = vld [vmem:[%s277] sm:$0xf]
      %v367 = vld [vmem:[%s277 + $0x4] sm:$0xf]
      %v368 = vld [vmem:[%s277 + $0x8] sm:$0xf]
      %v369 = vld [vmem:[%s277 + $0xc] sm:$0xf]
      %v370 = vld [vmem:[%s277 + $0x10] sm:$0xf]
      %v371 = vld [vmem:[%s277 + $0x14] sm:$0xf]
      %v372 = vld [vmem:[%s277 + $0x18] sm:$0xf]
      %v373 = vld [vmem:[%s277 + $0x1c] sm:$0xf]
      %v374 = vld [vmem:[%s277 + $0x20] sm:$0xf]
      %v375 = vld [vmem:[%s277 + $0x24] sm:$0xf]
      %v376 = vld [vmem:[%s277 + $0x28] sm:$0xf]
      %v377 = vld [vmem:[%s277 + $0x2c] sm:$0xf]
      %v378 = vld [vmem:[%s277 + $0x30] sm:$0xf]
      %v379 = vld [vmem:[%s277 + $0x34] sm:$0xf]
      %v380 = vld [vmem:[%s277 + $0x38] sm:$0xf]
      %v381 = vld [vmem:[%s277 + $0x3c] sm:$0xf]
      %v382 = vld [vmem:[%s277 + $0x40] sm:$0xf]
      %v383 = vld [vmem:[%s277 + $0x44] sm:$0xf]
      %v384 = vld [vmem:[%s277 + $0x48] sm:$0xf]
      %v385 = vld [vmem:[%s277 + $0x4c] sm:$0xf]
      %v386 = vld [vmem:[%s277 + $0x50] sm:$0xf]
      %v387 = vld [vmem:[%s277 + $0x54] sm:$0xf]
      %v388 = vld [vmem:[%s277 + $0x58] sm:$0xf]
      %v389 = vld [vmem:[%s277 + $0x5c] sm:$0xf]
      %v390 = vld [vmem:[%s277 + $0x60] sm:$0xf]
      %v391 = vld [vmem:[%s277 + $0x64] sm:$0xf]
      %v392 = vld [vmem:[%s277 + $0x68] sm:$0xf]
      %v393 = vld [vmem:[%s277 + $0x6c] sm:$0xf]
      %v394 = vld [vmem:[%s277 + $0x70] sm:$0xf]
      %v395 = vld [vmem:[%s277 + $0x74] sm:$0xf]
      %v396 = vld [vmem:[%s277 + $0x78] sm:$0xf]
      %v397 = vld [vmem:[%s277 + $0x7c] sm:$0xf]
      %v398 = vld [vmem:[%s283] sm:$0xf]
      %v399 = vld [vmem:[%s283 + $0x4] sm:$0xf]
      %v400 = vld [vmem:[%s283 + $0x8] sm:$0xf]
      %v401 = vld [vmem:[%s283 + $0xc] sm:$0xf]
      %v402 = vld [vmem:[%s283 + $0x10] sm:$0xf]
      %v403 = vld [vmem:[%s283 + $0x14] sm:$0xf]
      %v404 = vld [vmem:[%s283 + $0x18] sm:$0xf]
      %v405 = vld [vmem:[%s283 + $0x1c] sm:$0xf]
      %v438 = vunpack.c.l.b16 %v366
      %v439 = vunpack.c.l.b16 %v367
      %v440 = vunpack.c.l.b16 %v368
      %v441 = vunpack.c.l.b16 %v369
      %v442 = vunpack.c.l.b16 %v370
      %v443 = vunpack.c.l.b16 %v371
      %v444 = vunpack.c.l.b16 %v372
      %v445 = vunpack.c.l.b16 %v373
      %v446 = vunpack.c.l.b16 %v374
      %v447 = vunpack.c.l.b16 %v375
      %v448 = vunpack.c.l.b16 %v376
      %v449 = vunpack.c.l.b16 %v377
      %v450 = vunpack.c.l.b16 %v378
      %v451 = vunpack.c.l.b16 %v379
      %v452 = vunpack.c.l.b16 %v380
      %v453 = vunpack.c.l.b16 %v381
      %v454 = vunpack.c.l.b16 %v382
      %v455 = vunpack.c.l.b16 %v383
      %v456 = vunpack.c.l.b16 %v384
      %v457 = vunpack.c.l.b16 %v385
      %v458 = vunpack.c.l.b16 %v386
      %v459 = vunpack.c.l.b16 %v387
      %v460 = vunpack.c.l.b16 %v388
      %v461 = vunpack.c.l.b16 %v389
      %v462 = vunpack.c.l.b16 %v390
      %v463 = vunpack.c.l.b16 %v391
      %v464 = vunpack.c.l.b16 %v392
      %v465 = vunpack.c.l.b16 %v393
      %v466 = vunpack.c.l.b16 %v394
      %v467 = vunpack.c.l.b16 %v395
      %v468 = vunpack.c.l.b16 %v396
      %v469 = vunpack.c.l.b16 %v397
      %v470 = vpack.c.b16 %v439, %v438
      %v471 = vpack.c.b16 %v441, %v440
      %v472 = vpack.c.b16 %v443, %v442
      %v473 = vpack.c.b16 %v445, %v444
      %v474 = vpack.c.b16 %v447, %v446
      %v475 = vpack.c.b16 %v449, %v448
      %v476 = vpack.c.b16 %v451, %v450
      %v477 = vpack.c.b16 %v453, %v452
      %v478 = vpack.c.b16 %v455, %v454
      %v479 = vpack.c.b16 %v457, %v456
      %v480 = vpack.c.b16 %v459, %v458
      %v481 = vpack.c.b16 %v461, %v460
      %v482 = vpack.c.b16 %v463, %v462
      %v483 = vpack.c.b16 %v465, %v464
      %v484 = vpack.c.b16 %v467, %v466
      %v485 = vpack.c.b16 %v469, %v468
      %v494 = vunpack.c.l.b16 %v398
      %v495 = vunpack.c.l.b16 %v399
      %v496 = vunpack.c.l.b16 %v400
      %v497 = vunpack.c.l.b16 %v401
      %v498 = vunpack.c.l.b16 %v402
      %v499 = vunpack.c.l.b16 %v403
      %v500 = vunpack.c.l.b16 %v404
      %v501 = vunpack.c.l.b16 %v405
      %v502 = vpack.c.b16 %v495, %v494
      %v503 = vpack.c.b16 %v497, %v496
      %v504 = vpack.c.b16 %v499, %v498
      %v505 = vpack.c.b16 %v501, %v500
      %vm510 = vcmask 523264
      %v512 = vsel %vm510, %v470, 0
      %v515 = vsel %vm510, %v471, 0
      %v518 = vsel %vm510, %v472, 0
      %v521 = vsel %vm510, %v473, 0
      %v524 = vsel %vm510, %v474, 0
      %v527 = vsel %vm510, %v475, 0
      %v530 = vsel %vm510, %v476, 0
      %v533 = vsel %vm510, %v477, 0
      %v536 = vsel %vm510, %v478, 0
      %v539 = vsel %vm510, %v479, 0
      %v542 = vsel %vm510, %v480, 0
      %v545 = vsel %vm510, %v481, 0
      %v548 = vsel %vm510, %v482, 0
      %v551 = vsel %vm510, %v483, 0
      %v554 = vsel %vm510, %v484, 0
      %v557 = vsel %vm510, %v485, 0
      %559 = vmatprep.subr.bf16.mxu0 0
      %560 = vmatpush1.bf16.msra.mxu0 %v502
      %561 = vmatprep.subr.bf16.mxu0 0
      %562 = vmatpush1.bf16.msra.mxu0 %v503
      %563 = vmatprep.subr.bf16.mxu0 0
      %564 = vmatpush1.bf16.msra.mxu0 %v504
      %565 = vmatprep.subr.bf16.mxu0 0
      %566 = vmatpush1.bf16.msra.mxu0 %v505
      %567 = vmatprep.subr.bf16.mxu0 0
      %568 = vmatpush1.bf16.msra.mxu0 0
      %569 = vmatprep.subr.bf16.mxu0 0
      %570 = vmatpush1.bf16.msra.mxu0 0
      %571 = vmatprep.subr.bf16.mxu0 0
      %572 = vmatpush1.bf16.msra.mxu0 0
      %573 = vmatprep.subr.bf16.mxu0 0
      %574 = vmatpush1.bf16.msra.mxu0 0
      %575 = vmatprep.subr.bf16.mxu0 0
      %576 = vmatpush1.bf16.msra.mxu0 0
      %577 = vmatprep.subr.bf16.mxu0 0
      %578 = vmatpush1.bf16.msra.mxu0 0
      %579 = vmatprep.subr.bf16.mxu0 0
      %580 = vmatpush1.bf16.msra.mxu0 0
      %581 = vmatprep.subr.bf16.mxu0 0
      %582 = vmatpush1.bf16.msra.mxu0 0
      %583 = vmatprep.subr.bf16.mxu0 0
      %584 = vmatpush1.bf16.msra.mxu0 0
      %585 = vmatprep.subr.bf16.mxu0 0
      %586 = vmatpush1.bf16.msra.mxu0 0
      %587 = vmatprep.subr.bf16.mxu0 0
      %588 = vmatpush1.bf16.msra.mxu0 0
      %589 = vmatprep.subr.bf16.mxu0 0
      %590 = vmatpush1.bf16.msra.mxu0 0
      %591 = vmatprep.mubr.bf16.mxu0 0
      %592 = vmatmul.mubr.bf16.gmra.mrb[0].mxu0 %v512
      %v593 = vpop.f32.mrb[0].mxu0
      %v594 = vadd.f32 0.0, %v593
      %v595 = vpop.f32.mrb[0].mxu0
      %v596 = vpop.f32.mrb[0].mxu0
      %v597 = vadd.f32 0.0, %v596
      %v598 = vpop.f32.mrb[0].mxu0
      %599 = vmatprep.mubr.bf16.mxu0 0
      %600 = vmatmul.mubr.bf16.gmra.mrb[0].mxu0 %v515
      %v601 = vpop.f32.mrb[0].mxu0
      %v602 = vadd.f32 0.0, %v601
      %v603 = vpop.f32.mrb[0].mxu0
      %v604 = vpop.f32.mrb[0].mxu0
      %v605 = vadd.f32 0.0, %v604
      %v606 = vpop.f32.mrb[0].mxu0
      %607 = vmatprep.mubr.bf16.mxu0 0
      %608 = vmatmul.mubr.bf16.gmra.mrb[0].mxu0 %v518
      %v609 = vpop.f32.mrb[0].mxu0
      %v610 = vadd.f32 0.0, %v609
      %v611 = vpop.f32.mrb[0].mxu0
      %v612 = vpop.f32.mrb[0].mxu0
      %v613 = vadd.f32 0.0, %v612
      %v614 = vpop.f32.mrb[0].mxu0
      %615 = vmatprep.mubr.bf16.mxu0 0
      %616 = vmatmul.mubr.bf16.gmra.mrb[0].mxu0 %v521
      %v617 = vpop.f32.mrb[0].mxu0
      %v618 = vadd.f32 0.0, %v617
      %v619 = vpop.f32.mrb[0].mxu0
      %v620 = vpop.f32.mrb[0].mxu0
      %v621 = vadd.f32 0.0, %v620
      %v622 = vpop.f32.mrb[0].mxu0
      %623 = vmatprep.mubr.bf16.mxu0 0
      %624 = vmatmul.mubr.bf16.gmra.mrb[0].mxu0 %v524
      %v625 = vpop.f32.mrb[0].mxu0
      %v626 = vadd.f32 0.0, %v625
      %v627 = vpop.f32.mrb[0].mxu0
      %v628 = vpop.f32.mrb[0].mxu0
      %v629 = vadd.f32 0.0, %v628
      %v630 = vpop.f32.mrb[0].mxu0
      %631 = vmatprep.mubr.bf16.mxu0 0
      %632 = vmatmul.mubr.bf16.gmra.mrb[0].mxu0 %v527
      %v633 = vpop.f32.mrb[0].mxu0
      %v634 = vadd.f32 0.0, %v633
      %v635 = vpop.f32.mrb[0].mxu0
      %v636 = vpop.f32.mrb[0].mxu0
      %v637 = vadd.f32 0.0, %v636
      %v638 = vpop.f32.mrb[0].mxu0
      %639 = vmatprep.mubr.bf16.mxu0 0
      %640 = vmatmul.mubr.bf16.gmra.mrb[0].mxu0 %v530
      %v641 = vpop.f32.mrb[0].mxu0
      %v642 = vadd.f32 0.0, %v641
      %v643 = vpop.f32.mrb[0].mxu0
      %v644 = vpop.f32.mrb[0].mxu0
      %v645 = vadd.f32 0.0, %v644
      %v646 = vpop.f32.mrb[0].mxu0
      %647 = vmatprep.mubr.bf16.mxu0 0
      %648 = vmatmul.mubr.bf16.gmra.mrb[0].mxu0 %v533
      %v649 = vpop.f32.mrb[0].mxu0
      %v650 = vadd.f32 0.0, %v649
      %v651 = vpop.f32.mrb[0].mxu0
      %v652 = vpop.f32.mrb[0].mxu0
      %v653 = vadd.f32 0.0, %v652
      %v654 = vpop.f32.mrb[0].mxu0
      %655 = vmatprep.mubr.bf16.mxu0 0
      %656 = vmatmul.mubr.bf16.gmra.mrb[0].mxu0 %v536
      %v657 = vpop.f32.mrb[0].mxu0
      %v658 = vadd.f32 0.0, %v657
      %v659 = vpop.f32.mrb[0].mxu0
      %v660 = vpop.f32.mrb[0].mxu0
      %v661 = vadd.f32 0.0, %v660
      %v662 = vpop.f32.mrb[0].mxu0
      %663 = vmatprep.mubr.bf16.mxu0 0
      %664 = vmatmul.mubr.bf16.gmra.mrb[0].mxu0 %v539
      %v665 = vpop.f32.mrb[0].mxu0
      %v666 = vadd.f32 0.0, %v665
      %v667 = vpop.f32.mrb[0].mxu0
      %v668 = vpop.f32.mrb[0].mxu0
      %v669 = vadd.f32 0.0, %v668
      %v670 = vpop.f32.mrb[0].mxu0
      %671 = vmatprep.mubr.bf16.mxu0 0
      %672 = vmatmul.mubr.bf16.gmra.mrb[0].mxu0 %v542
      %v673 = vpop.f32.mrb[0].mxu0
      %v674 = vadd.f32 0.0, %v673
      %v675 = vpop.f32.mrb[0].mxu0
      %v676 = vpop.f32.mrb[0].mxu0
      %v677 = vadd.f32 0.0, %v676
      %v678 = vpop.f32.mrb[0].mxu0
      %679 = vmatprep.mubr.bf16.mxu0 0
      %680 = vmatmul.mubr.bf16.gmra.mrb[0].mxu0 %v545
      %v681 = vpop.f32.mrb[0].mxu0
      %v682 = vadd.f32 0.0, %v681
      %v683 = vpop.f32.mrb[0].mxu0
      %v684 = vpop.f32.mrb[0].mxu0
      %v685 = vadd.f32 0.0, %v684
      %v686 = vpop.f32.mrb[0].mxu0
      %687 = vmatprep.mubr.bf16.mxu0 0
      %688 = vmatmul.mubr.bf16.gmra.mrb[0].mxu0 %v548
      %v689 = vpop.f32.mrb[0].mxu0
      %v690 = vadd.f32 0.0, %v689
      %v691 = vpop.f32.mrb[0].mxu0
      %v692 = vpop.f32.mrb[0].mxu0
      %v693 = vadd.f32 0.0, %v692
      %v694 = vpop.f32.mrb[0].mxu0
      %695 = vmatprep.mubr.bf16.mxu0 0
      %696 = vmatmul.mubr.bf16.gmra.mrb[0].mxu0 %v551
      %v697 = vpop.f32.mrb[0].mxu0
      %v698 = vadd.f32 0.0, %v697
      %v699 = vpop.f32.mrb[0].mxu0
      %v700 = vpop.f32.mrb[0].mxu0
      %v701 = vadd.f32 0.0, %v700
      %v702 = vpop.f32.mrb[0].mxu0
      %703 = vmatprep.mubr.bf16.mxu0 0
      %704 = vmatmul.mubr.bf16.gmra.mrb[0].mxu0 %v554
      %v705 = vpop.f32.mrb[0].mxu0
      %v706 = vadd.f32 0.0, %v705
      %v707 = vpop.f32.mrb[0].mxu0
      %v708 = vpop.f32.mrb[0].mxu0
      %v709 = vadd.f32 0.0, %v708
      %v710 = vpop.f32.mrb[0].mxu0
      %711 = vmatprep.mubr.bf16.mxu0 0
      %712 = vmatmul.mubr.bf16.gmra.mrb[0].mxu0 %v557
      %v713 = vpop.f32.mrb[0].mxu0
      %v714 = vadd.f32 0.0, %v713
      %v715 = vpop.f32.mrb[0].mxu0
      %v716 = vpop.f32.mrb[0].mxu0
      %v717 = vadd.f32 0.0, %v716
      %v718 = vpop.f32.mrb[0].mxu0
      %719 = vdwg.mxu0
      %v720 = vadd.f32 %v334, %v594
      %v721 = vadd.f32 %v335, %v597
      %v722 = vadd.f32 %v336, %v602
      %v723 = vadd.f32 %v337, %v605
      %v724 = vadd.f32 %v338, %v610
      %v725 = vadd.f32 %v339, %v613
      %v726 = vadd.f32 %v340, %v618
      %v727 = vadd.f32 %v341, %v621
      %v728 = vadd.f32 %v342, %v626
      %v729 = vadd.f32 %v343, %v629
      %v730 = vadd.f32 %v344, %v634
      %v731 = vadd.f32 %v345, %v637
      %v732 = vadd.f32 %v346, %v642
      %v733 = vadd.f32 %v347, %v645
      %v734 = vadd.f32 %v348, %v650
      %v735 = vadd.f32 %v349, %v653
      %v736 = vadd.f32 %v350, %v658
      %v737 = vadd.f32 %v351, %v661
      %v738 = vadd.f32 %v352, %v666
      %v739 = vadd.f32 %v353, %v669
      %v740 = vadd.f32 %v354, %v674
      %v741 = vadd.f32 %v355, %v677
      %v742 = vadd.f32 %v356, %v682
      %v743 = vadd.f32 %v357, %v685
      %v744 = vadd.f32 %v358, %v690
      %v745 = vadd.f32 %v359, %v693
      %v746 = vadd.f32 %v360, %v698
      %v747 = vadd.f32 %v361, %v701
      %v748 = vadd.f32 %v362, %v706
      %v749 = vadd.f32 %v363, %v709
      %v750 = vadd.f32 %v364, %v714
      %v751 = vadd.f32 %v365, %v717
      %752 = vst.msk [vmem:[#allocation2] sm:$0xff] %vm510, %v720
      %753 = vst.msk [vmem:[#allocation2 + $0x8] sm:$0xff] %vm510, %v721
      %754 = vst.msk [vmem:[#allocation2 + $0x10] sm:$0xff] %vm510, %v722
      %755 = vst.msk [vmem:[#allocation2 + $0x18] sm:$0xff] %vm510, %v723
      %756 = vst.msk [vmem:[#allocation2 + $0x20] sm:$0xff] %vm510, %v724
      %757 = vst.msk [vmem:[#allocation2 + $0x28] sm:$0xff] %vm510, %v725
      %758 = vst.msk [vmem:[#allocation2 + $0x30] sm:$0xff] %vm510, %v726
      %759 = vst.msk [vmem:[#allocation2 + $0x38] sm:$0xff] %vm510, %v727
      %760 = vst.msk [vmem:[#allocation2 + $0x40] sm:$0xff] %vm510, %v728
      %761 = vst.msk [vmem:[#allocation2 + $0x48] sm:$0xff] %vm510, %v729
      %762 = vst.msk [vmem:[#allocation2 + $0x50] sm:$0xff] %vm510, %v730
      %763 = vst.msk [vmem:[#allocation2 + $0x58] sm:$0xff] %vm510, %v731
      %764 = vst.msk [vmem:[#allocation2 + $0x60] sm:$0xff] %vm510, %v732
      %765 = vst.msk [vmem:[#allocation2 + $0x68] sm:$0xff] %vm510, %v733
      %766 = vst.msk [vmem:[#allocation2 + $0x70] sm:$0xff] %vm510, %v734
      %767 = vst.msk [vmem:[#allocation2 + $0x78] sm:$0xff] %vm510, %v735
      %768 = vst.msk [vmem:[#allocation2 + $0x80] sm:$0xff] %vm510, %v736
      %769 = vst.msk [vmem:[#allocation2 + $0x88] sm:$0xff] %vm510, %v737
      %770 = vst.msk [vmem:[#allocation2 + $0x90] sm:$0xff] %vm510, %v738
      %771 = vst.msk [vmem:[#allocation2 + $0x98] sm:$0xff] %vm510, %v739
      %772 = vst.msk [vmem:[#allocation2 + $0xa0] sm:$0xff] %vm510, %v740
      %773 = vst.msk [vmem:[#allocation2 + $0xa8] sm:$0xff] %vm510, %v741
      %774 = vst.msk [vmem:[#allocation2 + $0xb0] sm:$0xff] %vm510, %v742
      %775 = vst.msk [vmem:[#allocation2 + $0xb8] sm:$0xff] %vm510, %v743
      %776 = vst.msk [vmem:[#allocation2 + $0xc0] sm:$0xff] %vm510, %v744
      %777 = vst.msk [vmem:[#allocation2 + $0xc8] sm:$0xff] %vm510, %v745
      %778 = vst.msk [vmem:[#allocation2 + $0xd0] sm:$0xff] %vm510, %v746
      %779 = vst.msk [vmem:[#allocation2 + $0xd8] sm:$0xff] %vm510, %v747
      %780 = vst.msk [vmem:[#allocation2 + $0xe0] sm:$0xff] %vm510, %v748
      %781 = vst.msk [vmem:[#allocation2 + $0xe8] sm:$0xff] %vm510, %v749
      %782 = vst.msk [vmem:[#allocation2 + $0xf0] sm:$0xff] %vm510, %v750
      %783 = vst.msk [vmem:[#allocation2 + $0xf8] sm:$0xff] %vm510, %v751
      %p784 = scmp.eq.s32.totalorder %s21, 8
      // Predicated region
      $region45: #{resnet_forward.15} parent=39 // pred_check
        %p785 = pneg %p784
      $region46: #{resnet_forward.15} parent=39 // pred_check_branch
        %787 = sbr.rel (%p785) target = $region48
      $region47: #{resnet_forward.15} parent=39 // pred_region
        %v788 = vld [vmem:[#allocation2] sm:$0xff]
        %v789 = vld [vmem:[#allocation2 + $0x8] sm:$0xff]
        %v790 = vld [vmem:[#allocation2 + $0x10] sm:$0xff]
        %v791 = vld [vmem:[#allocation2 + $0x18] sm:$0xff]
        %v792 = vld [vmem:[#allocation2 + $0x20] sm:$0xff]
        %v793 = vld [vmem:[#allocation2 + $0x28] sm:$0xff]
        %v794 = vld [vmem:[#allocation2 + $0x30] sm:$0xff]
        %v795 = vld [vmem:[#allocation2 + $0x38] sm:$0xff]
        %v796 = vld [vmem:[#allocation2 + $0x40] sm:$0xff]
        %v797 = vld [vmem:[#allocation2 + $0x48] sm:$0xff]
        %v798 = vld [vmem:[#allocation2 + $0x50] sm:$0xff]
        %v799 = vld [vmem:[#allocation2 + $0x58] sm:$0xff]
        %v800 = vld [vmem:[#allocation2 + $0x60] sm:$0xff]
        %v801 = vld [vmem:[#allocation2 + $0x68] sm:$0xff]
        %v802 = vld [vmem:[#allocation2 + $0x70] sm:$0xff]
        %v803 = vld [vmem:[#allocation2 + $0x78] sm:$0xff]
        %v804 = vld [vmem:[#allocation2 + $0x80] sm:$0xff]
        %v805 = vld [vmem:[#allocation2 + $0x88] sm:$0xff]
        %v806 = vld [vmem:[#allocation2 + $0x90] sm:$0xff]
        %v807 = vld [vmem:[#allocation2 + $0x98] sm:$0xff]
        %v808 = vld [vmem:[#allocation2 + $0xa0] sm:$0xff]
        %v809 = vld [vmem:[#allocation2 + $0xa8] sm:$0xff]
        %v810 = vld [vmem:[#allocation2 + $0xb0] sm:$0xff]
        %v811 = vld [vmem:[#allocation2 + $0xb8] sm:$0xff]
        %v812 = vld [vmem:[#allocation2 + $0xc0] sm:$0xff]
        %v813 = vld [vmem:[#allocation2 + $0xc8] sm:$0xff]
        %v814 = vld [vmem:[#allocation2 + $0xd0] sm:$0xff]
        %v815 = vld [vmem:[#allocation2 + $0xd8] sm:$0xff]
        %v816 = vld [vmem:[#allocation2 + $0xe0] sm:$0xff]
        %v817 = vld [vmem:[#allocation2 + $0xe8] sm:$0xff]
        %v818 = vld [vmem:[#allocation2 + $0xf0] sm:$0xff]
        %v819 = vld [vmem:[#allocation2 + $0xf8] sm:$0xff]
        %v820 = vld [vmem:[%s2] sm:$0x1]
        %v822 = vlaneseq
        %v823 = vshrl.u32 %v822, 7
        %v824 = vsub.s32 0, %v823
        %v825 = vrot.slane %v820, %v824
        %v827 = vmul.f32 %v788, %v825
        %v828 = vmul.f32 %v789, %v825
        %v829 = vmul.f32 %v790, %v825
        %v830 = vmul.f32 %v791, %v825
        %v831 = vmul.f32 %v792, %v825
        %v832 = vmul.f32 %v793, %v825
        %v833 = vmul.f32 %v794, %v825
        %v834 = vmul.f32 %v795, %v825
        %v835 = vmul.f32 %v796, %v825
        %v836 = vmul.f32 %v797, %v825
        %v837 = vmul.f32 %v798, %v825
        %v838 = vmul.f32 %v799, %v825
        %v839 = vmul.f32 %v800, %v825
        %v840 = vmul.f32 %v801, %v825
        %v841 = vmul.f32 %v802, %v825
        %v842 = vmul.f32 %v803, %v825
        %v843 = vmul.f32 %v804, %v825
        %v844 = vmul.f32 %v805, %v825
        %v845 = vmul.f32 %v806, %v825
        %v846 = vmul.f32 %v807, %v825
        %v847 = vmul.f32 %v808, %v825
        %v848 = vmul.f32 %v809, %v825
        %v849 = vmul.f32 %v810, %v825
        %v850 = vmul.f32 %v811, %v825
        %v851 = vmul.f32 %v812, %v825
        %v852 = vmul.f32 %v813, %v825
        %v853 = vmul.f32 %v814, %v825
        %v854 = vmul.f32 %v815, %v825
        %v855 = vmul.f32 %v816, %v825
        %v856 = vmul.f32 %v817, %v825
        %v857 = vmul.f32 %v818, %v825
        %v858 = vmul.f32 %v819, %v825
        %v859 = vld [vmem:[%s3] sm:$0x1]
        %v861 = vlaneseq
        %v862 = vshrl.u32 %v861, 7
        %v863 = vsub.s32 0, %v862
        %v864 = vrot.slane %v859, %v863
        %v866 = vadd.f32 %v827, %v864
        %v867 = vadd.f32 %v828, %v864
        %v868 = vadd.f32 %v829, %v864
        %v869 = vadd.f32 %v830, %v864
        %v870 = vadd.f32 %v831, %v864
        %v871 = vadd.f32 %v832, %v864
        %v872 = vadd.f32 %v833, %v864
        %v873 = vadd.f32 %v834, %v864
        %v874 = vadd.f32 %v835, %v864
        %v875 = vadd.f32 %v836, %v864
        %v876 = vadd.f32 %v837, %v864
        %v877 = vadd.f32 %v838, %v864
        %v878 = vadd.f32 %v839, %v864
        %v879 = vadd.f32 %v840, %v864
        %v880 = vadd.f32 %v841, %v864
        %v881 = vadd.f32 %v842, %v864
        %v882 = vadd.f32 %v843, %v864
        %v883 = vadd.f32 %v844, %v864
        %v884 = vadd.f32 %v845, %v864
        %v885 = vadd.f32 %v846, %v864
        %v886 = vadd.f32 %v847, %v864
        %v887 = vadd.f32 %v848, %v864
        %v888 = vadd.f32 %v849, %v864
        %v889 = vadd.f32 %v850, %v864
        %v890 = vadd.f32 %v851, %v864
        %v891 = vadd.f32 %v852, %v864
        %v892 = vadd.f32 %v853, %v864
        %v893 = vadd.f32 %v854, %v864
        %v894 = vadd.f32 %v855, %v864
        %v895 = vadd.f32 %v856, %v864
        %v896 = vadd.f32 %v857, %v864
        %v897 = vadd.f32 %v858, %v864
        %v898 = vld [vmem:[%s288] sm:$0xf]
        %v899 = vld [vmem:[%s288 + $0x4] sm:$0xf]
        %v900 = vld [vmem:[%s288 + $0x8] sm:$0xf]
        %v901 = vld [vmem:[%s288 + $0xc] sm:$0xf]
        %v902 = vld [vmem:[%s288 + $0x10] sm:$0xf]
        %v903 = vld [vmem:[%s288 + $0x14] sm:$0xf]
        %v904 = vld [vmem:[%s288 + $0x18] sm:$0xf]
        %v905 = vld [vmem:[%s288 + $0x1c] sm:$0xf]
        %v906 = vld [vmem:[%s288 + $0x20] sm:$0xf]
        %v907 = vld [vmem:[%s288 + $0x24] sm:$0xf]
        %v908 = vld [vmem:[%s288 + $0x28] sm:$0xf]
        %v909 = vld [vmem:[%s288 + $0x2c] sm:$0xf]
        %v910 = vld [vmem:[%s288 + $0x30] sm:$0xf]
        %v911 = vld [vmem:[%s288 + $0x34] sm:$0xf]
        %v912 = vld [vmem:[%s288 + $0x38] sm:$0xf]
        %v913 = vld [vmem:[%s288 + $0x3c] sm:$0xf]
        %v914 = vld [vmem:[%s288 + $0x40] sm:$0xf]
        %v915 = vld [vmem:[%s288 + $0x44] sm:$0xf]
        %v916 = vld [vmem:[%s288 + $0x48] sm:$0xf]
        %v917 = vld [vmem:[%s288 + $0x4c] sm:$0xf]
        %v918 = vld [vmem:[%s288 + $0x50] sm:$0xf]
        %v919 = vld [vmem:[%s288 + $0x54] sm:$0xf]
        %v920 = vld [vmem:[%s288 + $0x58] sm:$0xf]
        %v921 = vld [vmem:[%s288 + $0x5c] sm:$0xf]
        %v922 = vld [vmem:[%s288 + $0x60] sm:$0xf]
        %v923 = vld [vmem:[%s288 + $0x64] sm:$0xf]
        %v924 = vld [vmem:[%s288 + $0x68] sm:$0xf]
        %v925 = vld [vmem:[%s288 + $0x6c] sm:$0xf]
        %v926 = vld [vmem:[%s288 + $0x70] sm:$0xf]
        %v927 = vld [vmem:[%s288 + $0x74] sm:$0xf]
        %v928 = vld [vmem:[%s288 + $0x78] sm:$0xf]
        %v929 = vld [vmem:[%s288 + $0x7c] sm:$0xf]
        %v930 = vunpack.c.l.bf16 %v898
        %v931 = vunpack.c.l.bf16 %v899
        %v932 = vunpack.c.l.bf16 %v900
        %v933 = vunpack.c.l.bf16 %v901
        %v934 = vunpack.c.l.bf16 %v902
        %v935 = vunpack.c.l.bf16 %v903
        %v936 = vunpack.c.l.bf16 %v904
        %v937 = vunpack.c.l.bf16 %v905
        %v938 = vunpack.c.l.bf16 %v906
        %v939 = vunpack.c.l.bf16 %v907
        %v940 = vunpack.c.l.bf16 %v908
        %v941 = vunpack.c.l.bf16 %v909
        %v942 = vunpack.c.l.bf16 %v910
        %v943 = vunpack.c.l.bf16 %v911
        %v944 = vunpack.c.l.bf16 %v912
        %v945 = vunpack.c.l.bf16 %v913
        %v946 = vunpack.c.l.bf16 %v914
        %v947 = vunpack.c.l.bf16 %v915
        %v948 = vunpack.c.l.bf16 %v916
        %v949 = vunpack.c.l.bf16 %v917
        %v950 = vunpack.c.l.bf16 %v918
        %v951 = vunpack.c.l.bf16 %v919
        %v952 = vunpack.c.l.bf16 %v920
        %v953 = vunpack.c.l.bf16 %v921
        %v954 = vunpack.c.l.bf16 %v922
        %v955 = vunpack.c.l.bf16 %v923
        %v956 = vunpack.c.l.bf16 %v924
        %v957 = vunpack.c.l.bf16 %v925
        %v958 = vunpack.c.l.bf16 %v926
        %v959 = vunpack.c.l.bf16 %v927
        %v960 = vunpack.c.l.bf16 %v928
        %v961 = vunpack.c.l.bf16 %v929
        %v962 = vadd.f32 %v866, %v930
        %v963 = vadd.f32 %v867, %v931
        %v964 = vadd.f32 %v868, %v932
        %v965 = vadd.f32 %v869, %v933
        %v966 = vadd.f32 %v870, %v934
        %v967 = vadd.f32 %v871, %v935
        %v968 = vadd.f32 %v872, %v936
        %v969 = vadd.f32 %v873, %v937
        %v970 = vadd.f32 %v874, %v938
        %v971 = vadd.f32 %v875, %v939
        %v972 = vadd.f32 %v876, %v940
        %v973 = vadd.f32 %v877, %v941
        %v974 = vadd.f32 %v878, %v942
        %v975 = vadd.f32 %v879, %v943
        %v976 = vadd.f32 %v880, %v944
        %v977 = vadd.f32 %v881, %v945
        %v978 = vadd.f32 %v882, %v946
        %v979 = vadd.f32 %v883, %v947
        %v980 = vadd.f32 %v884, %v948
        %v981 = vadd.f32 %v885, %v949
        %v982 = vadd.f32 %v886, %v950
        %v983 = vadd.f32 %v887, %v951
        %v984 = vadd.f32 %v888, %v952
        %v985 = vadd.f32 %v889, %v953
        %v986 = vadd.f32 %v890, %v954
        %v987 = vadd.f32 %v891, %v955
        %v988 = vadd.f32 %v892, %v956
        %v989 = vadd.f32 %v893, %v957
        %v990 = vadd.f32 %v894, %v958
        %v991 = vadd.f32 %v895, %v959
        %v992 = vadd.f32 %v896, %v960
        %v993 = vadd.f32 %v897, %v961
        %v994 = vmax.f32 %v962, 0.0
        %v995 = vmax.f32 %v963, 0.0
        %v996 = vmax.f32 %v964, 0.0
        %v997 = vmax.f32 %v965, 0.0
        %v998 = vmax.f32 %v966, 0.0
        %v999 = vmax.f32 %v967, 0.0
        %v1000 = vmax.f32 %v968, 0.0
        %v1001 = vmax.f32 %v969, 0.0
        %v1002 = vmax.f32 %v970, 0.0
        %v1003 = vmax.f32 %v971, 0.0
        %v1004 = vmax.f32 %v972, 0.0
        %v1005 = vmax.f32 %v973, 0.0
        %v1006 = vmax.f32 %v974, 0.0
        %v1007 = vmax.f32 %v975, 0.0
        %v1008 = vmax.f32 %v976, 0.0
        %v1009 = vmax.f32 %v977, 0.0
        %v1010 = vmax.f32 %v978, 0.0
        %v1011 = vmax.f32 %v979, 0.0
        %v1012 = vmax.f32 %v980, 0.0
        %v1013 = vmax.f32 %v981, 0.0
        %v1014 = vmax.f32 %v982, 0.0
        %v1015 = vmax.f32 %v983, 0.0
        %v1016 = vmax.f32 %v984, 0.0
        %v1017 = vmax.f32 %v985, 0.0
        %v1018 = vmax.f32 %v986, 0.0
        %v1019 = vmax.f32 %v987, 0.0
        %v1020 = vmax.f32 %v988, 0.0
        %v1021 = vmax.f32 %v989, 0.0
        %v1022 = vmax.f32 %v990, 0.0
        %v1023 = vmax.f32 %v991, 0.0
        %v1024 = vmax.f32 %v992, 0.0
        %v1025 = vmax.f32 %v993, 0.0
        %v1026 = vpack.c.bf16 %v995, %v994
        %v1027 = vpack.c.bf16 %v997, %v996
        %v1028 = vpack.c.bf16 %v999, %v998
        %v1029 = vpack.c.bf16 %v1001, %v1000
        %v1030 = vpack.c.bf16 %v1003, %v1002
        %v1031 = vpack.c.bf16 %v1005, %v1004
        %v1032 = vpack.c.bf16 %v1007, %v1006
        %v1033 = vpack.c.bf16 %v1009, %v1008
        %v1034 = vpack.c.bf16 %v1011, %v1010
        %v1035 = vpack.c.bf16 %v1013, %v1012
        %v1036 = vpack.c.bf16 %v1015, %v1014
        %v1037 = vpack.c.bf16 %v1017, %v1016
        %v1038 = vpack.c.bf16 %v1019, %v1018
        %v1039 = vpack.c.bf16 %v1021, %v1020
        %v1040 = vpack.c.bf16 %v1023, %v1022
        %v1041 = vpack.c.bf16 %v1025, %v1024
        %v1058 = vunpack.c.l.b16 %v1026
        %v1059 = vunpack.c.h.b16 %v1026
        %v1060 = vunpack.c.l.b16 %v1027
        %v1061 = vunpack.c.h.b16 %v1027
        %v1062 = vunpack.c.l.b16 %v1028
        %v1063 = vunpack.c.h.b16 %v1028
        %v1064 = vunpack.c.l.b16 %v1029
        %v1065 = vunpack.c.h.b16 %v1029
        %v1066 = vunpack.c.l.b16 %v1030
        %v1067 = vunpack.c.h.b16 %v1030
        %v1068 = vunpack.c.l.b16 %v1031
        %v1069 = vunpack.c.h.b16 %v1031
        %v1070 = vunpack.c.l.b16 %v1032
        %v1071 = vunpack.c.h.b16 %v1032
        %v1072 = vunpack.c.l.b16 %v1033
        %v1073 = vunpack.c.h.b16 %v1033
        %v1074 = vunpack.c.l.b16 %v1034
        %v1075 = vunpack.c.h.b16 %v1034
        %v1076 = vunpack.c.l.b16 %v1035
        %v1077 = vunpack.c.h.b16 %v1035
        %v1078 = vunpack.c.l.b16 %v1036
        %v1079 = vunpack.c.h.b16 %v1036
        %v1080 = vunpack.c.l.b16 %v1037
        %v1081 = vunpack.c.h.b16 %v1037
        %v1082 = vunpack.c.l.b16 %v1038
        %v1083 = vunpack.c.h.b16 %v1038
        %v1084 = vunpack.c.l.b16 %v1039
        %v1085 = vunpack.c.h.b16 %v1039
        %v1086 = vunpack.c.l.b16 %v1040
        %v1087 = vunpack.c.h.b16 %v1040
        %v1088 = vunpack.c.l.b16 %v1041
        %v1089 = vunpack.c.h.b16 %v1041
        %v1090 = vpack.c.b16 %v1058, %v1058
        %v1091 = vpack.c.b16 %v1059, %v1059
        %v1092 = vpack.c.b16 %v1060, %v1060
        %v1093 = vpack.c.b16 %v1061, %v1061
        %v1094 = vpack.c.b16 %v1062, %v1062
        %v1095 = vpack.c.b16 %v1063, %v1063
        %v1096 = vpack.c.b16 %v1064, %v1064
        %v1097 = vpack.c.b16 %v1065, %v1065
        %v1098 = vpack.c.b16 %v1066, %v1066
        %v1099 = vpack.c.b16 %v1067, %v1067
        %v1100 = vpack.c.b16 %v1068, %v1068
        %v1101 = vpack.c.b16 %v1069, %v1069
        %v1102 = vpack.c.b16 %v1070, %v1070
        %v1103 = vpack.c.b16 %v1071, %v1071
        %v1104 = vpack.c.b16 %v1072, %v1072
        %v1105 = vpack.c.b16 %v1073, %v1073
        %v1106 = vpack.c.b16 %v1074, %v1074
        %v1107 = vpack.c.b16 %v1075, %v1075
        %v1108 = vpack.c.b16 %v1076, %v1076
        %v1109 = vpack.c.b16 %v1077, %v1077
        %v1110 = vpack.c.b16 %v1078, %v1078
        %v1111 = vpack.c.b16 %v1079, %v1079
        %v1112 = vpack.c.b16 %v1080, %v1080
        %v1113 = vpack.c.b16 %v1081, %v1081
        %v1114 = vpack.c.b16 %v1082, %v1082
        %v1115 = vpack.c.b16 %v1083, %v1083
        %v1116 = vpack.c.b16 %v1084, %v1084
        %v1117 = vpack.c.b16 %v1085, %v1085
        %v1118 = vpack.c.b16 %v1086, %v1086
        %v1119 = vpack.c.b16 %v1087, %v1087
        %v1120 = vpack.c.b16 %v1088, %v1088
        %v1121 = vpack.c.b16 %v1089, %v1089
        %vm1154 = vcmask 519168
        %1155 = vst.msk [vmem:[%s294] sm:$0xf] %vm1154, %v1090
        %1156 = vst.msk [vmem:[%s294 + $0x4] sm:$0xf] %vm1154, %v1091
        %1157 = vst.msk [vmem:[%s294 + $0x8] sm:$0xf] %vm1154, %v1092
        %1158 = vst.msk [vmem:[%s294 + $0xc] sm:$0xf] %vm1154, %v1093
        %1159 = vst.msk [vmem:[%s294 + $0x10] sm:$0xf] %vm1154, %v1094
        %1160 = vst.msk [vmem:[%s294 + $0x14] sm:$0xf] %vm1154, %v1095
        %1161 = vst.msk [vmem:[%s294 + $0x18] sm:$0xf] %vm1154, %v1096
        %1162 = vst.msk [vmem:[%s294 + $0x1c] sm:$0xf] %vm1154, %v1097
        %1163 = vst.msk [vmem:[%s294 + $0x20] sm:$0xf] %vm1154, %v1098
        %1164 = vst.msk [vmem:[%s294 + $0x24] sm:$0xf] %vm1154, %v1099
        %1165 = vst.msk [vmem:[%s294 + $0x28] sm:$0xf] %vm1154, %v1100
        %1166 = vst.msk [vmem:[%s294 + $0x2c] sm:$0xf] %vm1154, %v1101
        %1167 = vst.msk [vmem:[%s294 + $0x30] sm:$0xf] %vm1154, %v1102
        %1168 = vst.msk [vmem:[%s294 + $0x34] sm:$0xf] %vm1154, %v1103
        %1169 = vst.msk [vmem:[%s294 + $0x38] sm:$0xf] %vm1154, %v1104
        %1170 = vst.msk [vmem:[%s294 + $0x3c] sm:$0xf] %vm1154, %v1105
        %1171 = vst.msk [vmem:[%s294 + $0x40] sm:$0xf] %vm1154, %v1106
        %1172 = vst.msk [vmem:[%s294 + $0x44] sm:$0xf] %vm1154, %v1107
        %1173 = vst.msk [vmem:[%s294 + $0x48] sm:$0xf] %vm1154, %v1108
        %1174 = vst.msk [vmem:[%s294 + $0x4c] sm:$0xf] %vm1154, %v1109
        %1175 = vst.msk [vmem:[%s294 + $0x50] sm:$0xf] %vm1154, %v1110
        %1176 = vst.msk [vmem:[%s294 + $0x54] sm:$0xf] %vm1154, %v1111
        %1177 = vst.msk [vmem:[%s294 + $0x58] sm:$0xf] %vm1154, %v1112
        %1178 = vst.msk [vmem:[%s294 + $0x5c] sm:$0xf] %vm1154, %v1113
        %1179 = vst.msk [vmem:[%s294 + $0x60] sm:$0xf] %vm1154, %v1114
        %1180 = vst.msk [vmem:[%s294 + $0x64] sm:$0xf] %vm1154, %v1115
        %1181 = vst.msk [vmem:[%s294 + $0x68] sm:$0xf] %vm1154, %v1116
        %1182 = vst.msk [vmem:[%s294 + $0x6c] sm:$0xf] %vm1154, %v1117
        %1183 = vst.msk [vmem:[%s294 + $0x70] sm:$0xf] %vm1154, %v1118
        %1184 = vst.msk [vmem:[%s294 + $0x74] sm:$0xf] %vm1154, %v1119
        %1185 = vst.msk [vmem:[%s294 + $0x78] sm:$0xf] %vm1154, %v1120
        %1186 = vst.msk [vmem:[%s294 + $0x7c] sm:$0xf] %vm1154, %v1121
      $region48: #{resnet_forward.15} parent=39 // pred_fallthru
        _
      %s1187 = smul.u32 32, %s20
      %p1188 = scmp.lt.s32.totalorder %s1187, 63
      %s1189 = scalar_select %p1188, %s1187, 63
      %s1190 = smul.addr %s1189, 4
      %s1191 = scalar_lea.vmem %s5, %s1190
      // Predicated region
      $region49: #{resnet_forward.15} parent=39 // pred_check
        %p1192 = pneg %p168
      $region50: #{resnet_forward.15} parent=39 // pred_check_branch
        %1194 = sbr.rel (%p1192) target = $region52
      $region51: #{resnet_forward.15} parent=39 // pred_region
        %s1195 = smul.u32 32, %s20
      $region52: #{resnet_forward.15} parent=39 // pred_fallthru
        _
    $region40: #{resnet_forward.15} parent=5 // pred_fallthru
      _
    %p1196 = scmp.le.s32.totalorder 2, %s11
    // Predicated region
    $region53: #{resnet_forward.15} parent=5 // pred_check
      %p1197 = pneg %p1196
    $region54: #{resnet_forward.15} parent=5 // pred_check_branch
      %1199 = sbr.rel (%p1197) target = $region56
    $region55: #{resnet_forward.15} parent=5 // pred_region
      %s1200 = ssub.s32 %s11, 2
      // Predicated region
      $region57: #{resnet_forward.15} parent=55 // pred_check
        %p1201 = pneg %p174
      $region58: #{resnet_forward.15} parent=55 // pred_check_branch
        %1203 = sbr.rel (%p1201) target = $region60
      $region59: #{resnet_forward.15} parent=55 // pred_region
        %s1204 = smul.u32 32, %s22
        %p1205 = scmp.lt.s32.totalorder %s1204, 63
        %s1206 = scalar_select %p1205, %s1204, 63
        %s1207 = smul.addr %s1206, 4
        %s1208 = scalar_lea.vmem %s5, %s1207
      $region60: #{resnet_forward.15} parent=55 // pred_fallthru
        _
    $region56: #{resnet_forward.15} parent=5 // pred_fallthru
      _
  $region6: #{resnet_forward.15} parent=0 // loop_footer
    %s15 = sadd.s32 1, %s11
  $region7: #{resnet_forward.15} parent=0 // loop_footer_branch
    %10 = sbr.rel target = $region3
  $region8: #{resnet_forward.15} parent=0 // loop_exit
    _

// kernel: resnet_forward.14
$region0: #{resnet_forward.14}
  #allocation0 [shape = 'u32[]', space=smem, size = 0x4, offset = 0x4, fixed_abs, tag = 'smem constant byte address 0x4 - core index']
  #allocation1 [shape = 'u32[144,128]{1,0:T(1,128)}', space=vmem, size = 0x12000, scoped, tag = 'internal scratch']
  #allocation2 [shape = 'f32[256,64]{1,0:T(8,128)}', space=vmem, size = 0x20000, scoped, tag = 'scratch operand']
  %s0 = inlined_call_operand.vmem [shape: bf16[9,512,64], index: 0, kind: input, shape index: {}]
  %s1 = inlined_call_operand.vmem [shape: bf16[9,64,64], index: 1, kind: input, shape index: {}]
  %s2 = inlined_call_operand.vmem [shape: f32[1,64], index: 2, kind: input, shape index: {}]
  %s3 = inlined_call_operand.vmem [shape: f32[1,64], index: 3, kind: input, shape index: {}]
  %s4 = inlined_call_operand.vmem [shape: bf16[512,64], index: 4, kind: output, shape index: {}]
  %s5 = sld [smem:[#allocation0]]
  $region57: #{resnet_forward.14} parent=0
    _
  %s7 = ssub.s32 1, %s5
  %s8 = scalar_select 0, %s7, %s5
  loop: start=0, step=1, limit=20
  $region2: #{resnet_forward.14} parent=0 // loop_pre_header
    _
  $region3: #{resnet_forward.14} parent=0 // loop_header
    %s10 = sphi 0, %s14
    %p11 = scmp.ge.s32.totalorder %s10, 20
    %s17 = sphi 0, %s29
    %s18 = sphi 0, %s25
    %s19 = sphi 0, %s17
    %s20 = sphi 0, %s18
    %s21 = sphi 0, %s19
    %s22 = sphi 0, %s20
    %s34 = sphi 0, %s36
    %s37 = sphi 0, %s34
    %s38 = sphi 0, %s37
    %s54 = sphi 0, %s38
    %s60 = sphi 0, %s62
    %s63 = sphi 0, %s60
    %s64 = sphi 0, %s63
    %s80 = sphi 0, %s64
    %s84 = sphi 0, %s84
    %s86 = sphi 0, %s84
    %s87 = sphi 0, %s86
    %s101 = sphi 0, %s87
    %s105 = sphi 0, %s105
    %s107 = sphi 0, %s105
    %s108 = sphi 0, %s107
    %s122 = sphi 0, %s108
    %s128 = sphi 0, %s130
    %s131 = sphi 0, %s128
    %s132 = sphi 0, %s131
    %s148 = sphi 0, %s132
  $region4: #{resnet_forward.14} parent=0 // loop_header_branch
    %13 = sbr.rel (%p11) target = $region8
  $region5: #{resnet_forward.14} parent=0 // loop_body
    %s15 = ssub.s32 %s10, 1
    %s16 = ssub.s32 %s10, 2
    %s23 = sadd.s32 1, %s18
    %p24 = scmp.ge.s32.totalorder %s23, 9
    %s25 = scalar_select %p24, 0, %s23
    %s26 = sadd.s32 1, %s17
    %s27 = scalar_select %p24, %s26, %s17
    %p28 = scmp.ge.s32.totalorder %s27, 2
    %s29 = scalar_select %p28, 0, %s27
    %s30 = ssub.s32 %s18, %s25
    %s31 = ssub.s32 %s17, %s29
    %s32 = sor.u32 %s30, %s31
    %p33 = scmp.eq.s32.totalorder %s32, 0
    %s35 = sadd.s32 %s34, 1
    %s36 = scalar_select %p33, %s34, %s35
    %p39 = pneg %p33
    %p40 = scmp.eq.s32.totalorder %s10, 17
    %p41 = por %p39, %p40
    %p42 = scmp.ne.s32.totalorder %s34, %s37
    %p43 = scmp.eq.s32.totalorder %s10, 0
    %p44 = por %p42, %p43
    %p45 = scmp.ne.s32.totalorder %s34, %s37
    %p46 = scmp.eq.s32.totalorder %s15, 17
    %p47 = por %p45, %p46
    %p48 = scmp.ne.s32.totalorder %s37, %s38
    %p49 = scmp.eq.s32.totalorder %s15, 0
    %p50 = por %p48, %p49
    %p51 = scmp.ne.s32.totalorder %s37, %s38
    %p52 = scmp.eq.s32.totalorder %s16, 17
    %p53 = por %p51, %p52
    %p55 = scmp.ne.s32.totalorder %s38, %s54
    %p56 = scmp.eq.s32.totalorder %s16, 0
    %p57 = por %p55, %p56
    %s58 = ssub.s32 %s18, %s25
    %p59 = scmp.eq.s32.totalorder %s58, 0
    %s61 = sadd.s32 %s60, 1
    %s62 = scalar_select %p59, %s60, %s61
    %p65 = pneg %p59
    %p66 = scmp.eq.s32.totalorder %s10, 17
    %p67 = por %p65, %p66
    %p68 = scmp.ne.s32.totalorder %s60, %s63
    %p69 = scmp.eq.s32.totalorder %s10, 0
    %p70 = por %p68, %p69
    %p71 = scmp.ne.s32.totalorder %s60, %s63
    %p72 = scmp.eq.s32.totalorder %s15, 17
    %p73 = por %p71, %p72
    %p74 = scmp.ne.s32.totalorder %s63, %s64
    %p75 = scmp.eq.s32.totalorder %s15, 0
    %p76 = por %p74, %p75
    %p77 = scmp.ne.s32.totalorder %s63, %s64
    %p78 = scmp.eq.s32.totalorder %s16, 17
    %p79 = por %p77, %p78
    %p81 = scmp.ne.s32.totalorder %s64, %s80
    %p82 = scmp.eq.s32.totalorder %s16, 0
    %p83 = por %p81, %p82
    %s85 = sadd.s32 %s84, 1
    %p88 = scmp.eq.s32.totalorder %s10, 17
    %p89 = scmp.ne.s32.totalorder %s84, %s86
    %p90 = scmp.eq.s32.totalorder %s10, 0
    %p91 = por %p89, %p90
    %p92 = scmp.ne.s32.totalorder %s84, %s86
    %p93 = scmp.eq.s32.totalorder %s15, 17
    %p94 = por %p92, %p93
    %p95 = scmp.ne.s32.totalorder %s86, %s87
    %p96 = scmp.eq.s32.totalorder %s15, 0
    %p97 = por %p95, %p96
    %p98 = scmp.ne.s32.totalorder %s86, %s87
    %p99 = scmp.eq.s32.totalorder %s16, 17
    %p100 = por %p98, %p99
    %p102 = scmp.ne.s32.totalorder %s87, %s101
    %p103 = scmp.eq.s32.totalorder %s16, 0
    %p104 = por %p102, %p103
    %s106 = sadd.s32 %s105, 1
    %p109 = scmp.eq.s32.totalorder %s10, 17
    %p110 = scmp.ne.s32.totalorder %s105, %s107
    %p111 = scmp.eq.s32.totalorder %s10, 0
    %p112 = por %p110, %p111
    %p113 = scmp.ne.s32.totalorder %s105, %s107
    %p114 = scmp.eq.s32.totalorder %s15, 17
    %p115 = por %p113, %p114
    %p116 = scmp.ne.s32.totalorder %s107, %s108
    %p117 = scmp.eq.s32.totalorder %s15, 0
    %p118 = por %p116, %p117
    %p119 = scmp.ne.s32.totalorder %s107, %s108
    %p120 = scmp.eq.s32.totalorder %s16, 17
    %p121 = por %p119, %p120
    %p123 = scmp.ne.s32.totalorder %s108, %s122
    %p124 = scmp.eq.s32.totalorder %s16, 0
    %p125 = por %p123, %p124
    %s126 = ssub.s32 %s17, %s29
    %p127 = scmp.eq.s32.totalorder %s126, 0
    %s129 = sadd.s32 %s128, 1
    %s130 = scalar_select %p127, %s128, %s129
    %p133 = pneg %p127
    %p134 = scmp.eq.s32.totalorder %s10, 17
    %p135 = por %p133, %p134
    %p136 = scmp.ne.s32.totalorder %s128, %s131
    %p137 = scmp.eq.s32.totalorder %s10, 0
    %p138 = por %p136, %p137
    %p139 = scmp.ne.s32.totalorder %s128, %s131
    %p140 = scmp.eq.s32.totalorder %s15, 17
    %p141 = por %p139, %p140
    %p142 = scmp.ne.s32.totalorder %s131, %s132
    %p143 = scmp.eq.s32.totalorder %s15, 0
    %p144 = por %p142, %p143
    %p145 = scmp.ne.s32.totalorder %s131, %s132
    %p146 = scmp.eq.s32.totalorder %s16, 17
    %p147 = por %p145, %p146
    %p149 = scmp.ne.s32.totalorder %s132, %s148
    %p150 = scmp.eq.s32.totalorder %s16, 0
    %p151 = por %p149, %p150
    %p152 = scmp.le.s32.totalorder 1, %s10
    %p153 = scmp.lt.s32.totalorder %s10, 19
    %p154 = pnand %p152, %p153
    %p155 = pneg %p154
    // Predicated region
    $region9: #{resnet_forward.14} parent=5 // pred_check
      _
    $region10: #{resnet_forward.14} parent=5 // pred_check_branch
      %157 = sbr.rel (%p154) target = $region12
    $region11: #{resnet_forward.14} parent=5 // pred_region
      %s158 = ssub.s32 %s10, 1
      // Predicated region
      $region13: #{resnet_forward.14} parent=11 // pred_check
        %p159 = pneg %p97
      $region14: #{resnet_forward.14} parent=11 // pred_check_branch
        %161 = sbr.rel (%p159) target = $region16
      $region15: #{resnet_forward.14} parent=11 // pred_region
        _
      $region16: #{resnet_forward.14} parent=11 // pred_fallthru
        _
      // Predicated region
      $region17: #{resnet_forward.14} parent=11 // pred_check
        %p162 = pneg %p118
      $region18: #{resnet_forward.14} parent=11 // pred_check_branch
        %164 = sbr.rel (%p162) target = $region20
      $region19: #{resnet_forward.14} parent=11 // pred_region
        _
      $region20: #{resnet_forward.14} parent=11 // pred_fallthru
        _
    $region12: #{resnet_forward.14} parent=5 // pred_fallthru
      _
    %p165 = scmp.lt.s32.totalorder %s10, 18
    // Predicated region
    $region21: #{resnet_forward.14} parent=5 // pred_check
      %p166 = pneg %p165
    $region22: #{resnet_forward.14} parent=5 // pred_check_branch
      %168 = sbr.rel (%p166) target = $region24
    $region23: #{resnet_forward.14} parent=5 // pred_region
      // Predicated region
      $region25: #{resnet_forward.14} parent=23 // pred_check
        %p169 = pneg %p44
      $region26: #{resnet_forward.14} parent=23 // pred_check_branch
        %171 = sbr.rel (%p169) target = $region28
      $region27: #{resnet_forward.14} parent=23 // pred_region
        %s172 = smul.u32 32, %s17
        %p173 = scmp.lt.s32.totalorder %s18, 8
        %s174 = scalar_select %p173, %s18, 8
        %p175 = scmp.lt.s32.totalorder %s172, 63
        %s176 = scalar_select %p175, %s172, 63
        %s177 = smul.addr %s174, 64
        %s178 = sadd.s32 %s176, %s177
        %s179 = smul.addr %s178, 4
        %s180 = scalar_lea.vmem %s0, %s179
        %s181 = smul.u32 32, %s17
      $region28: #{resnet_forward.14} parent=23 // pred_fallthru
        _
      // Predicated region
      $region29: #{resnet_forward.14} parent=23 // pred_check
        %p182 = pneg %p70
      $region30: #{resnet_forward.14} parent=23 // pred_check_branch
        %184 = sbr.rel (%p182) target = $region32
      $region31: #{resnet_forward.14} parent=23 // pred_region
        %p185 = scmp.lt.s32.totalorder %s18, 8
        %s186 = scalar_select %p185, %s18, 8
        %s187 = smul.addr %s186, 8
        %s188 = smul.addr %s187, 4
        %s189 = scalar_lea.vmem %s1, %s188
      $region32: #{resnet_forward.14} parent=23 // pred_fallthru
        _
    $region24: #{resnet_forward.14} parent=5 // pred_fallthru
      _
    %p190 = scmp.le.s32.totalorder 1, %s10
    %p191 = scmp.lt.s32.totalorder %s10, 19
    %p192 = pnand %p190, %p191
    %p193 = pneg %p192
    // Predicated region
    $region33: #{resnet_forward.14} parent=5 // pred_check
      _
    $region34: #{resnet_forward.14} parent=5 // pred_check_branch
      %195 = sbr.rel (%p192) target = $region36
    $region35: #{resnet_forward.14} parent=5 // pred_region
      %s196 = ssub.s32 %s10, 1
      %s197 = smul.u32 32, %s19
      %p198 = scmp.lt.s32.totalorder %s20, 8
      %s199 = scalar_select %p198, %s20, 8
      %p200 = scmp.lt.s32.totalorder %s197, 63
      %s201 = scalar_select %p200, %s197, 63
      %s202 = smul.addr %s199, 64
      %s203 = sadd.s32 %s201, %s202
      %s204 = smul.addr %s203, 4
      %s205 = scalar_lea.vmem %s0, %s204
      %p206 = pneg %p50
      %p207 = pneg %p47
      %p208 = scmp.lt.s32.totalorder %s20, 8
      %s209 = scalar_select %p208, %s20, 8
      %s210 = smul.addr %s209, 8
      %s211 = smul.addr %s210, 4
      %s212 = scalar_lea.vmem %s1, %s211
      %p213 = pneg %p76
      %p214 = pneg %p73
      %p215 = pneg %p97
      %p216 = pneg %p94
      %p217 = pneg %p118
      %p218 = pneg %p115
      %p219 = pneg %p144
      %p220 = pneg %p141
      %s221 = smul.u32 32, %s19
      %p222 = scmp.lt.s32.totalorder %s221, 63
      %s223 = scalar_select %p222, %s221, 63
      %s224 = smul.addr %s223, 4
      %s225 = scalar_lea.vmem %s4, %s224
      %s226 = smul.u32 32, %s19
      %p227 = scmp.lt.s32.totalorder %s20, 8
      %s228 = scalar_select %p227, %s20, 8
      %p229 = scmp.lt.s32.totalorder %s226, 63
      %s230 = scalar_select %p229, %s226, 63
      %s231 = smul.addr %s228, 64
      %s232 = sadd.s32 %s230, %s231
      %s233 = smul.addr %s232, 4
      %s234 = scalar_lea.vmem %s0, %s233
      %s235 = smul.u32 32, %s19
      %p236 = scmp.lt.s32.totalorder %s20, 8
      %s237 = scalar_select %p236, %s20, 8
      %s238 = smul.addr %s237, 8
      %s239 = smul.addr %s238, 4
      %s240 = scalar_lea.vmem %s1, %s239
      %s241 = smul.u32 32, %s19
      %p242 = scmp.lt.s32.totalorder %s241, 63
      %s243 = scalar_select %p242, %s241, 63
      %s244 = smul.addr %s243, 4
      %s245 = scalar_lea.vmem %s4, %s244
      %s246 = smul.u32 32, %s19
      %p248 = scmp.eq.s32.totalorder %s20, 0
      // Predicated region
      $region37: #{resnet_forward.14} parent=35 // pred_check
        %p249 = pneg %p248
      $region38: #{resnet_forward.14} parent=35 // pred_check_branch
        %251 = sbr.rel (%p249) target = $region40
      $region39: #{resnet_forward.14} parent=35 // pred_region
        %vm252 = vcmask 523264
        %253 = vst.msk [vmem:[#allocation2] sm:$0xff] %vm252, 0.0
        %254 = vst.msk [vmem:[#allocation2 + $0x8] sm:$0xff] %vm252, 0.0
        %255 = vst.msk [vmem:[#allocation2 + $0x10] sm:$0xff] %vm252, 0.0
        %256 = vst.msk [vmem:[#allocation2 + $0x18] sm:$0xff] %vm252, 0.0
        %257 = vst.msk [vmem:[#allocation2 + $0x20] sm:$0xff] %vm252, 0.0
        %258 = vst.msk [vmem:[#allocation2 + $0x28] sm:$0xff] %vm252, 0.0
        %259 = vst.msk [vmem:[#allocation2 + $0x30] sm:$0xff] %vm252, 0.0
        %260 = vst.msk [vmem:[#allocation2 + $0x38] sm:$0xff] %vm252, 0.0
        %261 = vst.msk [vmem:[#allocation2 + $0x40] sm:$0xff] %vm252, 0.0
        %262 = vst.msk [vmem:[#allocation2 + $0x48] sm:$0xff] %vm252, 0.0
        %263 = vst.msk [vmem:[#allocation2 + $0x50] sm:$0xff] %vm252, 0.0
        %264 = vst.msk [vmem:[#allocation2 + $0x58] sm:$0xff] %vm252, 0.0
        %265 = vst.msk [vmem:[#allocation2 + $0x60] sm:$0xff] %vm252, 0.0
        %266 = vst.msk [vmem:[#allocation2 + $0x68] sm:$0xff] %vm252, 0.0
        %267 = vst.msk [vmem:[#allocation2 + $0x70] sm:$0xff] %vm252, 0.0
        %268 = vst.msk [vmem:[#allocation2 + $0x78] sm:$0xff] %vm252, 0.0
        %269 = vst.msk [vmem:[#allocation2 + $0x80] sm:$0xff] %vm252, 0.0
        %270 = vst.msk [vmem:[#allocation2 + $0x88] sm:$0xff] %vm252, 0.0
        %271 = vst.msk [vmem:[#allocation2 + $0x90] sm:$0xff] %vm252, 0.0
        %272 = vst.msk [vmem:[#allocation2 + $0x98] sm:$0xff] %vm252, 0.0
        %273 = vst.msk [vmem:[#allocation2 + $0xa0] sm:$0xff] %vm252, 0.0
        %274 = vst.msk [vmem:[#allocation2 + $0xa8] sm:$0xff] %vm252, 0.0
        %275 = vst.msk [vmem:[#allocation2 + $0xb0] sm:$0xff] %vm252, 0.0
        %276 = vst.msk [vmem:[#allocation2 + $0xb8] sm:$0xff] %vm252, 0.0
        %277 = vst.msk [vmem:[#allocation2 + $0xc0] sm:$0xff] %vm252, 0.0
        %278 = vst.msk [vmem:[#allocation2 + $0xc8] sm:$0xff] %vm252, 0.0
        %279 = vst.msk [vmem:[#allocation2 + $0xd0] sm:$0xff] %vm252, 0.0
        %280 = vst.msk [vmem:[#allocation2 + $0xd8] sm:$0xff] %vm252, 0.0
        %281 = vst.msk [vmem:[#allocation2 + $0xe0] sm:$0xff] %vm252, 0.0
        %282 = vst.msk [vmem:[#allocation2 + $0xe8] sm:$0xff] %vm252, 0.0
        %283 = vst.msk [vmem:[#allocation2 + $0xf0] sm:$0xff] %vm252, 0.0
        %284 = vst.msk [vmem:[#allocation2 + $0xf8] sm:$0xff] %vm252, 0.0
      $region40: #{resnet_forward.14} parent=35 // pred_fallthru
        _
      %v285 = vld [vmem:[#allocation2] sm:$0xff]
      %v286 = vld [vmem:[#allocation2 + $0x8] sm:$0xff]
      %v287 = vld [vmem:[#allocation2 + $0x10] sm:$0xff]
      %v288 = vld [vmem:[#allocation2 + $0x18] sm:$0xff]
      %v289 = vld [vmem:[#allocation2 + $0x20] sm:$0xff]
      %v290 = vld [vmem:[#allocation2 + $0x28] sm:$0xff]
      %v291 = vld [vmem:[#allocation2 + $0x30] sm:$0xff]
      %v292 = vld [vmem:[#allocation2 + $0x38] sm:$0xff]
      %v293 = vld [vmem:[#allocation2 + $0x40] sm:$0xff]
      %v294 = vld [vmem:[#allocation2 + $0x48] sm:$0xff]
      %v295 = vld [vmem:[#allocation2 + $0x50] sm:$0xff]
      %v296 = vld [vmem:[#allocation2 + $0x58] sm:$0xff]
      %v297 = vld [vmem:[#allocation2 + $0x60] sm:$0xff]
      %v298 = vld [vmem:[#allocation2 + $0x68] sm:$0xff]
      %v299 = vld [vmem:[#allocation2 + $0x70] sm:$0xff]
      %v300 = vld [vmem:[#allocation2 + $0x78] sm:$0xff]
      %v301 = vld [vmem:[#allocation2 + $0x80] sm:$0xff]
      %v302 = vld [vmem:[#allocation2 + $0x88] sm:$0xff]
      %v303 = vld [vmem:[#allocation2 + $0x90] sm:$0xff]
      %v304 = vld [vmem:[#allocation2 + $0x98] sm:$0xff]
      %v305 = vld [vmem:[#allocation2 + $0xa0] sm:$0xff]
      %v306 = vld [vmem:[#allocation2 + $0xa8] sm:$0xff]
      %v307 = vld [vmem:[#allocation2 + $0xb0] sm:$0xff]
      %v308 = vld [vmem:[#allocation2 + $0xb8] sm:$0xff]
      %v309 = vld [vmem:[#allocation2 + $0xc0] sm:$0xff]
      %v310 = vld [vmem:[#allocation2 + $0xc8] sm:$0xff]
      %v311 = vld [vmem:[#allocation2 + $0xd0] sm:$0xff]
      %v312 = vld [vmem:[#allocation2 + $0xd8] sm:$0xff]
      %v313 = vld [vmem:[#allocation2 + $0xe0] sm:$0xff]
      %v314 = vld [vmem:[#allocation2 + $0xe8] sm:$0xff]
      %v315 = vld [vmem:[#allocation2 + $0xf0] sm:$0xff]
      %v316 = vld [vmem:[#allocation2 + $0xf8] sm:$0xff]
      %v317 = vld [vmem:[%s234] sm:$0xf]
      %v318 = vld [vmem:[%s234 + $0x4] sm:$0xf]
      %v319 = vld [vmem:[%s234 + $0x8] sm:$0xf]
      %v320 = vld [vmem:[%s234 + $0xc] sm:$0xf]
      %v321 = vld [vmem:[%s234 + $0x10] sm:$0xf]
      %v322 = vld [vmem:[%s234 + $0x14] sm:$0xf]
      %v323 = vld [vmem:[%s234 + $0x18] sm:$0xf]
      %v324 = vld [vmem:[%s234 + $0x1c] sm:$0xf]
      %v325 = vld [vmem:[%s234 + $0x20] sm:$0xf]
      %v326 = vld [vmem:[%s234 + $0x24] sm:$0xf]
      %v327 = vld [vmem:[%s234 + $0x28] sm:$0xf]
      %v328 = vld [vmem:[%s234 + $0x2c] sm:$0xf]
      %v329 = vld [vmem:[%s234 + $0x30] sm:$0xf]
      %v330 = vld [vmem:[%s234 + $0x34] sm:$0xf]
      %v331 = vld [vmem:[%s234 + $0x38] sm:$0xf]
      %v332 = vld [vmem:[%s234 + $0x3c] sm:$0xf]
      %v333 = vld [vmem:[%s234 + $0x40] sm:$0xf]
      %v334 = vld [vmem:[%s234 + $0x44] sm:$0xf]
      %v335 = vld [vmem:[%s234 + $0x48] sm:$0xf]
      %v336 = vld [vmem:[%s234 + $0x4c] sm:$0xf]
      %v337 = vld [vmem:[%s234 + $0x50] sm:$0xf]
      %v338 = vld [vmem:[%s234 + $0x54] sm:$0xf]
      %v339 = vld [vmem:[%s234 + $0x58] sm:$0xf]
      %v340 = vld [vmem:[%s234 + $0x5c] sm:$0xf]
      %v341 = vld [vmem:[%s234 + $0x60] sm:$0xf]
      %v342 = vld [vmem:[%s234 + $0x64] sm:$0xf]
      %v343 = vld [vmem:[%s234 + $0x68] sm:$0xf]
      %v344 = vld [vmem:[%s234 + $0x6c] sm:$0xf]
      %v345 = vld [vmem:[%s234 + $0x70] sm:$0xf]
      %v346 = vld [vmem:[%s234 + $0x74] sm:$0xf]
      %v347 = vld [vmem:[%s234 + $0x78] sm:$0xf]
      %v348 = vld [vmem:[%s234 + $0x7c] sm:$0xf]
      %v349 = vld [vmem:[%s240] sm:$0xf]
      %v350 = vld [vmem:[%s240 + $0x4] sm:$0xf]
      %v351 = vld [vmem:[%s240 + $0x8] sm:$0xf]
      %v352 = vld [vmem:[%s240 + $0xc] sm:$0xf]
      %v353 = vld [vmem:[%s240 + $0x10] sm:$0xf]
      %v354 = vld [vmem:[%s240 + $0x14] sm:$0xf]
      %v355 = vld [vmem:[%s240 + $0x18] sm:$0xf]
      %v356 = vld [vmem:[%s240 + $0x1c] sm:$0xf]
      %v389 = vunpack.c.l.b16 %v317
      %v390 = vunpack.c.l.b16 %v318
      %v391 = vunpack.c.l.b16 %v319
      %v392 = vunpack.c.l.b16 %v320
      %v393 = vunpack.c.l.b16 %v321
      %v394 = vunpack.c.l.b16 %v322
      %v395 = vunpack.c.l.b16 %v323
      %v396 = vunpack.c.l.b16 %v324
      %v397 = vunpack.c.l.b16 %v325
      %v398 = vunpack.c.l.b16 %v326
      %v399 = vunpack.c.l.b16 %v327
      %v400 = vunpack.c.l.b16 %v328
      %v401 = vunpack.c.l.b16 %v329
      %v402 = vunpack.c.l.b16 %v330
      %v403 = vunpack.c.l.b16 %v331
      %v404 = vunpack.c.l.b16 %v332
      %v405 = vunpack.c.l.b16 %v333
      %v406 = vunpack.c.l.b16 %v334
      %v407 = vunpack.c.l.b16 %v335
      %v408 = vunpack.c.l.b16 %v336
      %v409 = vunpack.c.l.b16 %v337
      %v410 = vunpack.c.l.b16 %v338
      %v411 = vunpack.c.l.b16 %v339
      %v412 = vunpack.c.l.b16 %v340
      %v413 = vunpack.c.l.b16 %v341
      %v414 = vunpack.c.l.b16 %v342
      %v415 = vunpack.c.l.b16 %v343
      %v416 = vunpack.c.l.b16 %v344
      %v417 = vunpack.c.l.b16 %v345
      %v418 = vunpack.c.l.b16 %v346
      %v419 = vunpack.c.l.b16 %v347
      %v420 = vunpack.c.l.b16 %v348
      %v421 = vpack.c.b16 %v390, %v389
      %v422 = vpack.c.b16 %v392, %v391
      %v423 = vpack.c.b16 %v394, %v393
      %v424 = vpack.c.b16 %v396, %v395
      %v425 = vpack.c.b16 %v398, %v397
      %v426 = vpack.c.b16 %v400, %v399
      %v427 = vpack.c.b16 %v402, %v401
      %v428 = vpack.c.b16 %v404, %v403
      %v429 = vpack.c.b16 %v406, %v405
      %v430 = vpack.c.b16 %v408, %v407
      %v431 = vpack.c.b16 %v410, %v409
      %v432 = vpack.c.b16 %v412, %v411
      %v433 = vpack.c.b16 %v414, %v413
      %v434 = vpack.c.b16 %v416, %v415
      %v435 = vpack.c.b16 %v418, %v417
      %v436 = vpack.c.b16 %v420, %v419
      %v445 = vunpack.c.l.b16 %v349
      %v446 = vunpack.c.l.b16 %v350
      %v447 = vunpack.c.l.b16 %v351
      %v448 = vunpack.c.l.b16 %v352
      %v449 = vunpack.c.l.b16 %v353
      %v450 = vunpack.c.l.b16 %v354
      %v451 = vunpack.c.l.b16 %v355
      %v452 = vunpack.c.l.b16 %v356
      %v453 = vpack.c.b16 %v446, %v445
      %v454 = vpack.c.b16 %v448, %v447
      %v455 = vpack.c.b16 %v450, %v449
      %v456 = vpack.c.b16 %v452, %v451
      %vm461 = vcmask 523264
      %v463 = vsel %vm461, %v421, 0
      %v466 = vsel %vm461, %v422, 0
      %v469 = vsel %vm461, %v423, 0
      %v472 = vsel %vm461, %v424, 0
      %v475 = vsel %vm461, %v425, 0
      %v478 = vsel %vm461, %v426, 0
      %v481 = vsel %vm461, %v427, 0
      %v484 = vsel %vm461, %v428, 0
      %v487 = vsel %vm461, %v429, 0
      %v490 = vsel %vm461, %v430, 0
      %v493 = vsel %vm461, %v431, 0
      %v496 = vsel %vm461, %v432, 0
      %v499 = vsel %vm461, %v433, 0
      %v502 = vsel %vm461, %v434, 0
      %v505 = vsel %vm461, %v435, 0
      %v508 = vsel %vm461, %v436, 0
      %510 = vmatprep.subr.bf16.mxu0 0
      %511 = vmatpush1.bf16.msra.mxu0 %v453
      %512 = vmatprep.subr.bf16.mxu0 0
      %513 = vmatpush1.bf16.msra.mxu0 %v454
      %514 = vmatprep.subr.bf16.mxu0 0
      %515 = vmatpush1.bf16.msra.mxu0 %v455
      %516 = vmatprep.subr.bf16.mxu0 0
      %517 = vmatpush1.bf16.msra.mxu0 %v456
      %518 = vmatprep.subr.bf16.mxu0 0
      %519 = vmatpush1.bf16.msra.mxu0 0
      %520 = vmatprep.subr.bf16.mxu0 0
      %521 = vmatpush1.bf16.msra.mxu0 0
      %522 = vmatprep.subr.bf16.mxu0 0
      %523 = vmatpush1.bf16.msra.mxu0 0
      %524 = vmatprep.subr.bf16.mxu0 0
      %525 = vmatpush1.bf16.msra.mxu0 0
      %526 = vmatprep.subr.bf16.mxu0 0
      %527 = vmatpush1.bf16.msra.mxu0 0
      %528 = vmatprep.subr.bf16.mxu0 0
      %529 = vmatpush1.bf16.msra.mxu0 0
      %530 = vmatprep.subr.bf16.mxu0 0
      %531 = vmatpush1.bf16.msra.mxu0 0
      %532 = vmatprep.subr.bf16.mxu0 0
      %533 = vmatpush1.bf16.msra.mxu0 0
      %534 = vmatprep.subr.bf16.mxu0 0
      %535 = vmatpush1.bf16.msra.mxu0 0
      %536 = vmatprep.subr.bf16.mxu0 0
      %537 = vmatpush1.bf16.msra.mxu0 0
      %538 = vmatprep.subr.bf16.mxu0 0
      %539 = vmatpush1.bf16.msra.mxu0 0
      %540 = vmatprep.subr.bf16.mxu0 0
      %541 = vmatpush1.bf16.msra.mxu0 0
      %542 = vmatprep.mubr.bf16.mxu0 0
      %543 = vmatmul.mubr.bf16.gmra.mrb[0].mxu0 %v463
      %v544 = vpop.f32.mrb[0].mxu0
      %v545 = vadd.f32 0.0, %v544
      %v546 = vpop.f32.mrb[0].mxu0
      %v547 = vpop.f32.mrb[0].mxu0
      %v548 = vadd.f32 0.0, %v547
      %v549 = vpop.f32.mrb[0].mxu0
      %550 = vmatprep.mubr.bf16.mxu0 0
      %551 = vmatmul.mubr.bf16.gmra.mrb[0].mxu0 %v466
      %v552 = vpop.f32.mrb[0].mxu0
      %v553 = vadd.f32 0.0, %v552
      %v554 = vpop.f32.mrb[0].mxu0
      %v555 = vpop.f32.mrb[0].mxu0
      %v556 = vadd.f32 0.0, %v555
      %v557 = vpop.f32.mrb[0].mxu0
      %558 = vmatprep.mubr.bf16.mxu0 0
      %559 = vmatmul.mubr.bf16.gmra.mrb[0].mxu0 %v469
      %v560 = vpop.f32.mrb[0].mxu0
      %v561 = vadd.f32 0.0, %v560
      %v562 = vpop.f32.mrb[0].mxu0
      %v563 = vpop.f32.mrb[0].mxu0
      %v564 = vadd.f32 0.0, %v563
      %v565 = vpop.f32.mrb[0].mxu0
      %566 = vmatprep.mubr.bf16.mxu0 0
      %567 = vmatmul.mubr.bf16.gmra.mrb[0].mxu0 %v472
      %v568 = vpop.f32.mrb[0].mxu0
      %v569 = vadd.f32 0.0, %v568
      %v570 = vpop.f32.mrb[0].mxu0
      %v571 = vpop.f32.mrb[0].mxu0
      %v572 = vadd.f32 0.0, %v571
      %v573 = vpop.f32.mrb[0].mxu0
      %574 = vmatprep.mubr.bf16.mxu0 0
      %575 = vmatmul.mubr.bf16.gmra.mrb[0].mxu0 %v475
      %v576 = vpop.f32.mrb[0].mxu0
      %v577 = vadd.f32 0.0, %v576
      %v578 = vpop.f32.mrb[0].mxu0
      %v579 = vpop.f32.mrb[0].mxu0
      %v580 = vadd.f32 0.0, %v579
      %v581 = vpop.f32.mrb[0].mxu0
      %582 = vmatprep.mubr.bf16.mxu0 0
      %583 = vmatmul.mubr.bf16.gmra.mrb[0].mxu0 %v478
      %v584 = vpop.f32.mrb[0].mxu0
      %v585 = vadd.f32 0.0, %v584
      %v586 = vpop.f32.mrb[0].mxu0
      %v587 = vpop.f32.mrb[0].mxu0
      %v588 = vadd.f32 0.0, %v587
      %v589 = vpop.f32.mrb[0].mxu0
      %590 = vmatprep.mubr.bf16.mxu0 0
      %591 = vmatmul.mubr.bf16.gmra.mrb[0].mxu0 %v481
      %v592 = vpop.f32.mrb[0].mxu0
      %v593 = vadd.f32 0.0, %v592
      %v594 = vpop.f32.mrb[0].mxu0
      %v595 = vpop.f32.mrb[0].mxu0
      %v596 = vadd.f32 0.0, %v595
      %v597 = vpop.f32.mrb[0].mxu0
      %598 = vmatprep.mubr.bf16.mxu0 0
      %599 = vmatmul.mubr.bf16.gmra.mrb[0].mxu0 %v484
      %v600 = vpop.f32.mrb[0].mxu0
      %v601 = vadd.f32 0.0, %v600
      %v602 = vpop.f32.mrb[0].mxu0
      %v603 = vpop.f32.mrb[0].mxu0
      %v604 = vadd.f32 0.0, %v603
      %v605 = vpop.f32.mrb[0].mxu0
      %606 = vmatprep.mubr.bf16.mxu0 0
      %607 = vmatmul.mubr.bf16.gmra.mrb[0].mxu0 %v487
      %v608 = vpop.f32.mrb[0].mxu0
      %v609 = vadd.f32 0.0, %v608
      %v610 = vpop.f32.mrb[0].mxu0
      %v611 = vpop.f32.mrb[0].mxu0
      %v612 = vadd.f32 0.0, %v611
      %v613 = vpop.f32.mrb[0].mxu0
      %614 = vmatprep.mubr.bf16.mxu0 0
      %615 = vmatmul.mubr.bf16.gmra.mrb[0].mxu0 %v490
      %v616 = vpop.f32.mrb[0].mxu0
      %v617 = vadd.f32 0.0, %v616
      %v618 = vpop.f32.mrb[0].mxu0
      %v619 = vpop.f32.mrb[0].mxu0
      %v620 = vadd.f32 0.0, %v619
      %v621 = vpop.f32.mrb[0].mxu0
      %622 = vmatprep.mubr.bf16.mxu0 0
      %623 = vmatmul.mubr.bf16.gmra.mrb[0].mxu0 %v493
      %v624 = vpop.f32.mrb[0].mxu0
      %v625 = vadd.f32 0.0, %v624
      %v626 = vpop.f32.mrb[0].mxu0
      %v627 = vpop.f32.mrb[0].mxu0
      %v628 = vadd.f32 0.0, %v627
      %v629 = vpop.f32.mrb[0].mxu0
      %630 = vmatprep.mubr.bf16.mxu0 0
      %631 = vmatmul.mubr.bf16.gmra.mrb[0].mxu0 %v496
      %v632 = vpop.f32.mrb[0].mxu0
      %v633 = vadd.f32 0.0, %v632
      %v634 = vpop.f32.mrb[0].mxu0
      %v635 = vpop.f32.mrb[0].mxu0
      %v636 = vadd.f32 0.0, %v635
      %v637 = vpop.f32.mrb[0].mxu0
      %638 = vmatprep.mubr.bf16.mxu0 0
      %639 = vmatmul.mubr.bf16.gmra.mrb[0].mxu0 %v499
      %v640 = vpop.f32.mrb[0].mxu0
      %v641 = vadd.f32 0.0, %v640
      %v642 = vpop.f32.mrb[0].mxu0
      %v643 = vpop.f32.mrb[0].mxu0
      %v644 = vadd.f32 0.0, %v643
      %v645 = vpop.f32.mrb[0].mxu0
      %646 = vmatprep.mubr.bf16.mxu0 0
      %647 = vmatmul.mubr.bf16.gmra.mrb[0].mxu0 %v502
      %v648 = vpop.f32.mrb[0].mxu0
      %v649 = vadd.f32 0.0, %v648
      %v650 = vpop.f32.mrb[0].mxu0
      %v651 = vpop.f32.mrb[0].mxu0
      %v652 = vadd.f32 0.0, %v651
      %v653 = vpop.f32.mrb[0].mxu0
      %654 = vmatprep.mubr.bf16.mxu0 0
      %655 = vmatmul.mubr.bf16.gmra.mrb[0].mxu0 %v505
      %v656 = vpop.f32.mrb[0].mxu0
      %v657 = vadd.f32 0.0, %v656
      %v658 = vpop.f32.mrb[0].mxu0
      %v659 = vpop.f32.mrb[0].mxu0
      %v660 = vadd.f32 0.0, %v659
      %v661 = vpop.f32.mrb[0].mxu0
      %662 = vmatprep.mubr.bf16.mxu0 0
      %663 = vmatmul.mubr.bf16.gmra.mrb[0].mxu0 %v508
      %v664 = vpop.f32.mrb[0].mxu0
      %v665 = vadd.f32 0.0, %v664
      %v666 = vpop.f32.mrb[0].mxu0
      %v667 = vpop.f32.mrb[0].mxu0
      %v668 = vadd.f32 0.0, %v667
      %v669 = vpop.f32.mrb[0].mxu0
      %670 = vdwg.mxu0
      %v671 = vadd.f32 %v285, %v545
      %v672 = vadd.f32 %v286, %v548
      %v673 = vadd.f32 %v287, %v553
      %v674 = vadd.f32 %v288, %v556
      %v675 = vadd.f32 %v289, %v561
      %v676 = vadd.f32 %v290, %v564
      %v677 = vadd.f32 %v291, %v569
      %v678 = vadd.f32 %v292, %v572
      %v679 = vadd.f32 %v293, %v577
      %v680 = vadd.f32 %v294, %v580
      %v681 = vadd.f32 %v295, %v585
      %v682 = vadd.f32 %v296, %v588
      %v683 = vadd.f32 %v297, %v593
      %v684 = vadd.f32 %v298, %v596
      %v685 = vadd.f32 %v299, %v601
      %v686 = vadd.f32 %v300, %v604
      %v687 = vadd.f32 %v301, %v609
      %v688 = vadd.f32 %v302, %v612
      %v689 = vadd.f32 %v303, %v617
      %v690 = vadd.f32 %v304, %v620
      %v691 = vadd.f32 %v305, %v625
      %v692 = vadd.f32 %v306, %v628
      %v693 = vadd.f32 %v307, %v633
      %v694 = vadd.f32 %v308, %v636
      %v695 = vadd.f32 %v309, %v641
      %v696 = vadd.f32 %v310, %v644
      %v697 = vadd.f32 %v311, %v649
      %v698 = vadd.f32 %v312, %v652
      %v699 = vadd.f32 %v313, %v657
      %v700 = vadd.f32 %v314, %v660
      %v701 = vadd.f32 %v315, %v665
      %v702 = vadd.f32 %v316, %v668
      %703 = vst.msk [vmem:[#allocation2] sm:$0xff] %vm461, %v671
      %704 = vst.msk [vmem:[#allocation2 + $0x8] sm:$0xff] %vm461, %v672
      %705 = vst.msk [vmem:[#allocation2 + $0x10] sm:$0xff] %vm461, %v673
      %706 = vst.msk [vmem:[#allocation2 + $0x18] sm:$0xff] %vm461, %v674
      %707 = vst.msk [vmem:[#allocation2 + $0x20] sm:$0xff] %vm461, %v675
      %708 = vst.msk [vmem:[#allocation2 + $0x28] sm:$0xff] %vm461, %v676
      %709 = vst.msk [vmem:[#allocation2 + $0x30] sm:$0xff] %vm461, %v677
      %710 = vst.msk [vmem:[#allocation2 + $0x38] sm:$0xff] %vm461, %v678
      %711 = vst.msk [vmem:[#allocation2 + $0x40] sm:$0xff] %vm461, %v679
      %712 = vst.msk [vmem:[#allocation2 + $0x48] sm:$0xff] %vm461, %v680
      %713 = vst.msk [vmem:[#allocation2 + $0x50] sm:$0xff] %vm461, %v681
      %714 = vst.msk [vmem:[#allocation2 + $0x58] sm:$0xff] %vm461, %v682
      %715 = vst.msk [vmem:[#allocation2 + $0x60] sm:$0xff] %vm461, %v683
      %716 = vst.msk [vmem:[#allocation2 + $0x68] sm:$0xff] %vm461, %v684
      %717 = vst.msk [vmem:[#allocation2 + $0x70] sm:$0xff] %vm461, %v685
      %718 = vst.msk [vmem:[#allocation2 + $0x78] sm:$0xff] %vm461, %v686
      %719 = vst.msk [vmem:[#allocation2 + $0x80] sm:$0xff] %vm461, %v687
      %720 = vst.msk [vmem:[#allocation2 + $0x88] sm:$0xff] %vm461, %v688
      %721 = vst.msk [vmem:[#allocation2 + $0x90] sm:$0xff] %vm461, %v689
      %722 = vst.msk [vmem:[#allocation2 + $0x98] sm:$0xff] %vm461, %v690
      %723 = vst.msk [vmem:[#allocation2 + $0xa0] sm:$0xff] %vm461, %v691
      %724 = vst.msk [vmem:[#allocation2 + $0xa8] sm:$0xff] %vm461, %v692
      %725 = vst.msk [vmem:[#allocation2 + $0xb0] sm:$0xff] %vm461, %v693
      %726 = vst.msk [vmem:[#allocation2 + $0xb8] sm:$0xff] %vm461, %v694
      %727 = vst.msk [vmem:[#allocation2 + $0xc0] sm:$0xff] %vm461, %v695
      %728 = vst.msk [vmem:[#allocation2 + $0xc8] sm:$0xff] %vm461, %v696
      %729 = vst.msk [vmem:[#allocation2 + $0xd0] sm:$0xff] %vm461, %v697
      %730 = vst.msk [vmem:[#allocation2 + $0xd8] sm:$0xff] %vm461, %v698
      %731 = vst.msk [vmem:[#allocation2 + $0xe0] sm:$0xff] %vm461, %v699
      %732 = vst.msk [vmem:[#allocation2 + $0xe8] sm:$0xff] %vm461, %v700
      %733 = vst.msk [vmem:[#allocation2 + $0xf0] sm:$0xff] %vm461, %v701
      %734 = vst.msk [vmem:[#allocation2 + $0xf8] sm:$0xff] %vm461, %v702
      %p735 = scmp.eq.s32.totalorder %s20, 8
      // Predicated region
      $region41: #{resnet_forward.14} parent=35 // pred_check
        %p736 = pneg %p735
      $region42: #{resnet_forward.14} parent=35 // pred_check_branch
        %738 = sbr.rel (%p736) target = $region44
      $region43: #{resnet_forward.14} parent=35 // pred_region
        %v739 = vld [vmem:[#allocation2] sm:$0xff]
        %v740 = vld [vmem:[#allocation2 + $0x8] sm:$0xff]
        %v741 = vld [vmem:[#allocation2 + $0x10] sm:$0xff]
        %v742 = vld [vmem:[#allocation2 + $0x18] sm:$0xff]
        %v743 = vld [vmem:[#allocation2 + $0x20] sm:$0xff]
        %v744 = vld [vmem:[#allocation2 + $0x28] sm:$0xff]
        %v745 = vld [vmem:[#allocation2 + $0x30] sm:$0xff]
        %v746 = vld [vmem:[#allocation2 + $0x38] sm:$0xff]
        %v747 = vld [vmem:[#allocation2 + $0x40] sm:$0xff]
        %v748 = vld [vmem:[#allocation2 + $0x48] sm:$0xff]
        %v749 = vld [vmem:[#allocation2 + $0x50] sm:$0xff]
        %v750 = vld [vmem:[#allocation2 + $0x58] sm:$0xff]
        %v751 = vld [vmem:[#allocation2 + $0x60] sm:$0xff]
        %v752 = vld [vmem:[#allocation2 + $0x68] sm:$0xff]
        %v753 = vld [vmem:[#allocation2 + $0x70] sm:$0xff]
        %v754 = vld [vmem:[#allocation2 + $0x78] sm:$0xff]
        %v755 = vld [vmem:[#allocation2 + $0x80] sm:$0xff]
        %v756 = vld [vmem:[#allocation2 + $0x88] sm:$0xff]
        %v757 = vld [vmem:[#allocation2 + $0x90] sm:$0xff]
        %v758 = vld [vmem:[#allocation2 + $0x98] sm:$0xff]
        %v759 = vld [vmem:[#allocation2 + $0xa0] sm:$0xff]
        %v760 = vld [vmem:[#allocation2 + $0xa8] sm:$0xff]
        %v761 = vld [vmem:[#allocation2 + $0xb0] sm:$0xff]
        %v762 = vld [vmem:[#allocation2 + $0xb8] sm:$0xff]
        %v763 = vld [vmem:[#allocation2 + $0xc0] sm:$0xff]
        %v764 = vld [vmem:[#allocation2 + $0xc8] sm:$0xff]
        %v765 = vld [vmem:[#allocation2 + $0xd0] sm:$0xff]
        %v766 = vld [vmem:[#allocation2 + $0xd8] sm:$0xff]
        %v767 = vld [vmem:[#allocation2 + $0xe0] sm:$0xff]
        %v768 = vld [vmem:[#allocation2 + $0xe8] sm:$0xff]
        %v769 = vld [vmem:[#allocation2 + $0xf0] sm:$0xff]
        %v770 = vld [vmem:[#allocation2 + $0xf8] sm:$0xff]
        %v771 = vld [vmem:[%s2] sm:$0x1]
        %v773 = vlaneseq
        %v774 = vshrl.u32 %v773, 7
        %v775 = vsub.s32 0, %v774
        %v776 = vrot.slane %v771, %v775
        %v778 = vmul.f32 %v739, %v776
        %v779 = vmul.f32 %v740, %v776
        %v780 = vmul.f32 %v741, %v776
        %v781 = vmul.f32 %v742, %v776
        %v782 = vmul.f32 %v743, %v776
        %v783 = vmul.f32 %v744, %v776
        %v784 = vmul.f32 %v745, %v776
        %v785 = vmul.f32 %v746, %v776
        %v786 = vmul.f32 %v747, %v776
        %v787 = vmul.f32 %v748, %v776
        %v788 = vmul.f32 %v749, %v776
        %v789 = vmul.f32 %v750, %v776
        %v790 = vmul.f32 %v751, %v776
        %v791 = vmul.f32 %v752, %v776
        %v792 = vmul.f32 %v753, %v776
        %v793 = vmul.f32 %v754, %v776
        %v794 = vmul.f32 %v755, %v776
        %v795 = vmul.f32 %v756, %v776
        %v796 = vmul.f32 %v757, %v776
        %v797 = vmul.f32 %v758, %v776
        %v798 = vmul.f32 %v759, %v776
        %v799 = vmul.f32 %v760, %v776
        %v800 = vmul.f32 %v761, %v776
        %v801 = vmul.f32 %v762, %v776
        %v802 = vmul.f32 %v763, %v776
        %v803 = vmul.f32 %v764, %v776
        %v804 = vmul.f32 %v765, %v776
        %v805 = vmul.f32 %v766, %v776
        %v806 = vmul.f32 %v767, %v776
        %v807 = vmul.f32 %v768, %v776
        %v808 = vmul.f32 %v769, %v776
        %v809 = vmul.f32 %v770, %v776
        %v810 = vld [vmem:[%s3] sm:$0x1]
        %v812 = vlaneseq
        %v813 = vshrl.u32 %v812, 7
        %v814 = vsub.s32 0, %v813
        %v815 = vrot.slane %v810, %v814
        %v817 = vadd.f32 %v778, %v815
        %v818 = vadd.f32 %v779, %v815
        %v819 = vadd.f32 %v780, %v815
        %v820 = vadd.f32 %v781, %v815
        %v821 = vadd.f32 %v782, %v815
        %v822 = vadd.f32 %v783, %v815
        %v823 = vadd.f32 %v784, %v815
        %v824 = vadd.f32 %v785, %v815
        %v825 = vadd.f32 %v786, %v815
        %v826 = vadd.f32 %v787, %v815
        %v827 = vadd.f32 %v788, %v815
        %v828 = vadd.f32 %v789, %v815
        %v829 = vadd.f32 %v790, %v815
        %v830 = vadd.f32 %v791, %v815
        %v831 = vadd.f32 %v792, %v815
        %v832 = vadd.f32 %v793, %v815
        %v833 = vadd.f32 %v794, %v815
        %v834 = vadd.f32 %v795, %v815
        %v835 = vadd.f32 %v796, %v815
        %v836 = vadd.f32 %v797, %v815
        %v837 = vadd.f32 %v798, %v815
        %v838 = vadd.f32 %v799, %v815
        %v839 = vadd.f32 %v800, %v815
        %v840 = vadd.f32 %v801, %v815
        %v841 = vadd.f32 %v802, %v815
        %v842 = vadd.f32 %v803, %v815
        %v843 = vadd.f32 %v804, %v815
        %v844 = vadd.f32 %v805, %v815
        %v845 = vadd.f32 %v806, %v815
        %v846 = vadd.f32 %v807, %v815
        %v847 = vadd.f32 %v808, %v815
        %v848 = vadd.f32 %v809, %v815
        %v849 = vmax.f32 %v817, 0.0
        %v850 = vmax.f32 %v818, 0.0
        %v851 = vmax.f32 %v819, 0.0
        %v852 = vmax.f32 %v820, 0.0
        %v853 = vmax.f32 %v821, 0.0
        %v854 = vmax.f32 %v822, 0.0
        %v855 = vmax.f32 %v823, 0.0
        %v856 = vmax.f32 %v824, 0.0
        %v857 = vmax.f32 %v825, 0.0
        %v858 = vmax.f32 %v826, 0.0
        %v859 = vmax.f32 %v827, 0.0
        %v860 = vmax.f32 %v828, 0.0
        %v861 = vmax.f32 %v829, 0.0
        %v862 = vmax.f32 %v830, 0.0
        %v863 = vmax.f32 %v831, 0.0
        %v864 = vmax.f32 %v832, 0.0
        %v865 = vmax.f32 %v833, 0.0
        %v866 = vmax.f32 %v834, 0.0
        %v867 = vmax.f32 %v835, 0.0
        %v868 = vmax.f32 %v836, 0.0
        %v869 = vmax.f32 %v837, 0.0
        %v870 = vmax.f32 %v838, 0.0
        %v871 = vmax.f32 %v839, 0.0
        %v872 = vmax.f32 %v840, 0.0
        %v873 = vmax.f32 %v841, 0.0
        %v874 = vmax.f32 %v842, 0.0
        %v875 = vmax.f32 %v843, 0.0
        %v876 = vmax.f32 %v844, 0.0
        %v877 = vmax.f32 %v845, 0.0
        %v878 = vmax.f32 %v846, 0.0
        %v879 = vmax.f32 %v847, 0.0
        %v880 = vmax.f32 %v848, 0.0
        %v881 = vpack.c.bf16 %v850, %v849
        %v882 = vpack.c.bf16 %v852, %v851
        %v883 = vpack.c.bf16 %v854, %v853
        %v884 = vpack.c.bf16 %v856, %v855
        %v885 = vpack.c.bf16 %v858, %v857
        %v886 = vpack.c.bf16 %v860, %v859
        %v887 = vpack.c.bf16 %v862, %v861
        %v888 = vpack.c.bf16 %v864, %v863
        %v889 = vpack.c.bf16 %v866, %v865
        %v890 = vpack.c.bf16 %v868, %v867
        %v891 = vpack.c.bf16 %v870, %v869
        %v892 = vpack.c.bf16 %v872, %v871
        %v893 = vpack.c.bf16 %v874, %v873
        %v894 = vpack.c.bf16 %v876, %v875
        %v895 = vpack.c.bf16 %v878, %v877
        %v896 = vpack.c.bf16 %v880, %v879
        %v913 = vunpack.c.l.b16 %v881
        %v914 = vunpack.c.h.b16 %v881
        %v915 = vunpack.c.l.b16 %v882
        %v916 = vunpack.c.h.b16 %v882
        %v917 = vunpack.c.l.b16 %v883
        %v918 = vunpack.c.h.b16 %v883
        %v919 = vunpack.c.l.b16 %v884
        %v920 = vunpack.c.h.b16 %v884
        %v921 = vunpack.c.l.b16 %v885
        %v922 = vunpack.c.h.b16 %v885
        %v923 = vunpack.c.l.b16 %v886
        %v924 = vunpack.c.h.b16 %v886
        %v925 = vunpack.c.l.b16 %v887
        %v926 = vunpack.c.h.b16 %v887
        %v927 = vunpack.c.l.b16 %v888
        %v928 = vunpack.c.h.b16 %v888
        %v929 = vunpack.c.l.b16 %v889
        %v930 = vunpack.c.h.b16 %v889
        %v931 = vunpack.c.l.b16 %v890
        %v932 = vunpack.c.h.b16 %v890
        %v933 = vunpack.c.l.b16 %v891
        %v934 = vunpack.c.h.b16 %v891
        %v935 = vunpack.c.l.b16 %v892
        %v936 = vunpack.c.h.b16 %v892
        %v937 = vunpack.c.l.b16 %v893
        %v938 = vunpack.c.h.b16 %v893
        %v939 = vunpack.c.l.b16 %v894
        %v940 = vunpack.c.h.b16 %v894
        %v941 = vunpack.c.l.b16 %v895
        %v942 = vunpack.c.h.b16 %v895
        %v943 = vunpack.c.l.b16 %v896
        %v944 = vunpack.c.h.b16 %v896
        %v945 = vpack.c.b16 %v913, %v913
        %v946 = vpack.c.b16 %v914, %v914
        %v947 = vpack.c.b16 %v915, %v915
        %v948 = vpack.c.b16 %v916, %v916
        %v949 = vpack.c.b16 %v917, %v917
        %v950 = vpack.c.b16 %v918, %v918
        %v951 = vpack.c.b16 %v919, %v919
        %v952 = vpack.c.b16 %v920, %v920
        %v953 = vpack.c.b16 %v921, %v921
        %v954 = vpack.c.b16 %v922, %v922
        %v955 = vpack.c.b16 %v923, %v923
        %v956 = vpack.c.b16 %v924, %v924
        %v957 = vpack.c.b16 %v925, %v925
        %v958 = vpack.c.b16 %v926, %v926
        %v959 = vpack.c.b16 %v927, %v927
        %v960 = vpack.c.b16 %v928, %v928
        %v961 = vpack.c.b16 %v929, %v929
        %v962 = vpack.c.b16 %v930, %v930
        %v963 = vpack.c.b16 %v931, %v931
        %v964 = vpack.c.b16 %v932, %v932
        %v965 = vpack.c.b16 %v933, %v933
        %v966 = vpack.c.b16 %v934, %v934
        %v967 = vpack.c.b16 %v935, %v935
        %v968 = vpack.c.b16 %v936, %v936
        %v969 = vpack.c.b16 %v937, %v937
        %v970 = vpack.c.b16 %v938, %v938
        %v971 = vpack.c.b16 %v939, %v939
        %v972 = vpack.c.b16 %v940, %v940
        %v973 = vpack.c.b16 %v941, %v941
        %v974 = vpack.c.b16 %v942, %v942
        %v975 = vpack.c.b16 %v943, %v943
        %v976 = vpack.c.b16 %v944, %v944
        %vm1009 = vcmask 519168
        %1010 = vst.msk [vmem:[%s245] sm:$0xf] %vm1009, %v945
        %1011 = vst.msk [vmem:[%s245 + $0x4] sm:$0xf] %vm1009, %v946
        %1012 = vst.msk [vmem:[%s245 + $0x8] sm:$0xf] %vm1009, %v947
        %1013 = vst.msk [vmem:[%s245 + $0xc] sm:$0xf] %vm1009, %v948
        %1014 = vst.msk [vmem:[%s245 + $0x10] sm:$0xf] %vm1009, %v949
        %1015 = vst.msk [vmem:[%s245 + $0x14] sm:$0xf] %vm1009, %v950
        %1016 = vst.msk [vmem:[%s245 + $0x18] sm:$0xf] %vm1009, %v951
        %1017 = vst.msk [vmem:[%s245 + $0x1c] sm:$0xf] %vm1009, %v952
        %1018 = vst.msk [vmem:[%s245 + $0x20] sm:$0xf] %vm1009, %v953
        %1019 = vst.msk [vmem:[%s245 + $0x24] sm:$0xf] %vm1009, %v954
        %1020 = vst.msk [vmem:[%s245 + $0x28] sm:$0xf] %vm1009, %v955
        %1021 = vst.msk [vmem:[%s245 + $0x2c] sm:$0xf] %vm1009, %v956
        %1022 = vst.msk [vmem:[%s245 + $0x30] sm:$0xf] %vm1009, %v957
        %1023 = vst.msk [vmem:[%s245 + $0x34] sm:$0xf] %vm1009, %v958
        %1024 = vst.msk [vmem:[%s245 + $0x38] sm:$0xf] %vm1009, %v959
        %1025 = vst.msk [vmem:[%s245 + $0x3c] sm:$0xf] %vm1009, %v960
        %1026 = vst.msk [vmem:[%s245 + $0x40] sm:$0xf] %vm1009, %v961
        %1027 = vst.msk [vmem:[%s245 + $0x44] sm:$0xf] %vm1009, %v962
        %1028 = vst.msk [vmem:[%s245 + $0x48] sm:$0xf] %vm1009, %v963
        %1029 = vst.msk [vmem:[%s245 + $0x4c] sm:$0xf] %vm1009, %v964
        %1030 = vst.msk [vmem:[%s245 + $0x50] sm:$0xf] %vm1009, %v965
        %1031 = vst.msk [vmem:[%s245 + $0x54] sm:$0xf] %vm1009, %v966
        %1032 = vst.msk [vmem:[%s245 + $0x58] sm:$0xf] %vm1009, %v967
        %1033 = vst.msk [vmem:[%s245 + $0x5c] sm:$0xf] %vm1009, %v968
        %1034 = vst.msk [vmem:[%s245 + $0x60] sm:$0xf] %vm1009, %v969
        %1035 = vst.msk [vmem:[%s245 + $0x64] sm:$0xf] %vm1009, %v970
        %1036 = vst.msk [vmem:[%s245 + $0x68] sm:$0xf] %vm1009, %v971
        %1037 = vst.msk [vmem:[%s245 + $0x6c] sm:$0xf] %vm1009, %v972
        %1038 = vst.msk [vmem:[%s245 + $0x70] sm:$0xf] %vm1009, %v973
        %1039 = vst.msk [vmem:[%s245 + $0x74] sm:$0xf] %vm1009, %v974
        %1040 = vst.msk [vmem:[%s245 + $0x78] sm:$0xf] %vm1009, %v975
        %1041 = vst.msk [vmem:[%s245 + $0x7c] sm:$0xf] %vm1009, %v976
      $region44: #{resnet_forward.14} parent=35 // pred_fallthru
        _
      %s1042 = smul.u32 32, %s19
      %p1043 = scmp.lt.s32.totalorder %s1042, 63
      %s1044 = scalar_select %p1043, %s1042, 63
      %s1045 = smul.addr %s1044, 4
      %s1046 = scalar_lea.vmem %s4, %s1045
      // Predicated region
      $region45: #{resnet_forward.14} parent=35 // pred_check
        %p1047 = pneg %p141
      $region46: #{resnet_forward.14} parent=35 // pred_check_branch
        %1049 = sbr.rel (%p1047) target = $region48
      $region47: #{resnet_forward.14} parent=35 // pred_region
        %s1050 = smul.u32 32, %s19
      $region48: #{resnet_forward.14} parent=35 // pred_fallthru
        _
    $region36: #{resnet_forward.14} parent=5 // pred_fallthru
      _
    %p1051 = scmp.le.s32.totalorder 2, %s10
    // Predicated region
    $region49: #{resnet_forward.14} parent=5 // pred_check
      %p1052 = pneg %p1051
    $region50: #{resnet_forward.14} parent=5 // pred_check_branch
      %1054 = sbr.rel (%p1052) target = $region52
    $region51: #{resnet_forward.14} parent=5 // pred_region
      %s1055 = ssub.s32 %s10, 2
      // Predicated region
      $region53: #{resnet_forward.14} parent=51 // pred_check
        %p1056 = pneg %p147
      $region54: #{resnet_forward.14} parent=51 // pred_check_branch
        %1058 = sbr.rel (%p1056) target = $region56
      $region55: #{resnet_forward.14} parent=51 // pred_region
        %s1059 = smul.u32 32, %s21
        %p1060 = scmp.lt.s32.totalorder %s1059, 63
        %s1061 = scalar_select %p1060, %s1059, 63
        %s1062 = smul.addr %s1061, 4
        %s1063 = scalar_lea.vmem %s4, %s1062
      $region56: #{resnet_forward.14} parent=51 // pred_fallthru
        _
    $region52: #{resnet_forward.14} parent=5 // pred_fallthru
      _
  $region6: #{resnet_forward.14} parent=0 // loop_footer
    %s14 = sadd.s32 1, %s10
  $region7: #{resnet_forward.14} parent=0 // loop_footer_branch
    %9 = sbr.rel target = $region3
  $region8: #{resnet_forward.14} parent=0 // loop_exit
    _

// kernel: resnet_forward.17
$region0: #{resnet_forward.17}
  #allocation0 [shape = 'u32[]', space=smem, size = 0x4, offset = 0x4, fixed_abs, tag = 'smem constant byte address 0x4 - core index']
  #allocation1 [shape = 'u32[144,128]{1,0:T(1,128)}', space=vmem, size = 0x12000, scoped, tag = 'internal scratch']
  #allocation2 [shape = 'f32[128,128]{1,0:T(8,128)}', space=vmem, size = 0x10000, scoped, tag = 'scratch operand']
  %s0 = inlined_call_operand.vmem [shape: bf16[9,128,64], index: 0, kind: input, shape index: {}]
  %s1 = inlined_call_operand.vmem [shape: bf16[9,64,128], index: 1, kind: input, shape index: {}]
  %s2 = inlined_call_operand.vmem [shape: f32[1,128], index: 2, kind: input, shape index: {}]
  %s3 = inlined_call_operand.vmem [shape: f32[1,128], index: 3, kind: input, shape index: {}]
  %s4 = inlined_call_operand.vmem [shape: bf16[128,128], index: 4, kind: output, shape index: {}]
  %s5 = sld [smem:[#allocation0]]
  $region57: #{resnet_forward.17} parent=0
    _
  %s7 = ssub.s32 1, %s5
  %s8 = scalar_select 0, %s7, %s5
  loop: start=0, step=1, limit=11
  $region2: #{resnet_forward.17} parent=0 // loop_pre_header
    _
  $region3: #{resnet_forward.17} parent=0 // loop_header
    %s10 = sphi 0, %s14
    %p11 = scmp.ge.s32.totalorder %s10, 11
    %s17 = sphi 0, %s29
    %s18 = sphi 0, %s25
    %s19 = sphi 0, %s17
    %s20 = sphi 0, %s18
    %s21 = sphi 0, %s19
    %s22 = sphi 0, %s20
    %s34 = sphi 0, %s36
    %s37 = sphi 0, %s34
    %s38 = sphi 0, %s37
    %s54 = sphi 0, %s38
    %s60 = sphi 0, %s62
    %s63 = sphi 0, %s60
    %s64 = sphi 0, %s63
    %s80 = sphi 0, %s64
    %s84 = sphi 0, %s84
    %s86 = sphi 0, %s84
    %s87 = sphi 0, %s86
    %s101 = sphi 0, %s87
    %s105 = sphi 0, %s105
    %s107 = sphi 0, %s105
    %s108 = sphi 0, %s107
    %s122 = sphi 0, %s108
    %s128 = sphi 0, %s130
    %s131 = sphi 0, %s128
    %s132 = sphi 0, %s131
    %s148 = sphi 0, %s132
  $region4: #{resnet_forward.17} parent=0 // loop_header_branch
    %13 = sbr.rel (%p11) target = $region8
  $region5: #{resnet_forward.17} parent=0 // loop_body
    %s15 = ssub.s32 %s10, 1
    %s16 = ssub.s32 %s10, 2
    %s23 = sadd.s32 1, %s18
    %p24 = scmp.ge.s32.totalorder %s23, 9
    %s25 = scalar_select %p24, 0, %s23
    %s26 = sadd.s32 1, %s17
    %s27 = scalar_select %p24, %s26, %s17
    %p28 = scmp.ge.s32.totalorder %s27, 1
    %s29 = scalar_select %p28, 0, %s27
    %s30 = ssub.s32 %s18, %s25
    %s31 = ssub.s32 %s17, %s29
    %s32 = sor.u32 %s30, %s31
    %p33 = scmp.eq.s32.totalorder %s32, 0
    %s35 = sadd.s32 %s34, 1
    %s36 = scalar_select %p33, %s34, %s35
    %p39 = pneg %p33
    %p40 = scmp.eq.s32.totalorder %s10, 8
    %p41 = por %p39, %p40
    %p42 = scmp.ne.s32.totalorder %s34, %s37
    %p43 = scmp.eq.s32.totalorder %s10, 0
    %p44 = por %p42, %p43
    %p45 = scmp.ne.s32.totalorder %s34, %s37
    %p46 = scmp.eq.s32.totalorder %s15, 8
    %p47 = por %p45, %p46
    %p48 = scmp.ne.s32.totalorder %s37, %s38
    %p49 = scmp.eq.s32.totalorder %s15, 0
    %p50 = por %p48, %p49
    %p51 = scmp.ne.s32.totalorder %s37, %s38
    %p52 = scmp.eq.s32.totalorder %s16, 8
    %p53 = por %p51, %p52
    %p55 = scmp.ne.s32.totalorder %s38, %s54
    %p56 = scmp.eq.s32.totalorder %s16, 0
    %p57 = por %p55, %p56
    %s58 = ssub.s32 %s18, %s25
    %p59 = scmp.eq.s32.totalorder %s58, 0
    %s61 = sadd.s32 %s60, 1
    %s62 = scalar_select %p59, %s60, %s61
    %p65 = pneg %p59
    %p66 = scmp.eq.s32.totalorder %s10, 8
    %p67 = por %p65, %p66
    %p68 = scmp.ne.s32.totalorder %s60, %s63
    %p69 = scmp.eq.s32.totalorder %s10, 0
    %p70 = por %p68, %p69
    %p71 = scmp.ne.s32.totalorder %s60, %s63
    %p72 = scmp.eq.s32.totalorder %s15, 8
    %p73 = por %p71, %p72
    %p74 = scmp.ne.s32.totalorder %s63, %s64
    %p75 = scmp.eq.s32.totalorder %s15, 0
    %p76 = por %p74, %p75
    %p77 = scmp.ne.s32.totalorder %s63, %s64
    %p78 = scmp.eq.s32.totalorder %s16, 8
    %p79 = por %p77, %p78
    %p81 = scmp.ne.s32.totalorder %s64, %s80
    %p82 = scmp.eq.s32.totalorder %s16, 0
    %p83 = por %p81, %p82
    %s85 = sadd.s32 %s84, 1
    %p88 = scmp.eq.s32.totalorder %s10, 8
    %p89 = scmp.ne.s32.totalorder %s84, %s86
    %p90 = scmp.eq.s32.totalorder %s10, 0
    %p91 = por %p89, %p90
    %p92 = scmp.ne.s32.totalorder %s84, %s86
    %p93 = scmp.eq.s32.totalorder %s15, 8
    %p94 = por %p92, %p93
    %p95 = scmp.ne.s32.totalorder %s86, %s87
    %p96 = scmp.eq.s32.totalorder %s15, 0
    %p97 = por %p95, %p96
    %p98 = scmp.ne.s32.totalorder %s86, %s87
    %p99 = scmp.eq.s32.totalorder %s16, 8
    %p100 = por %p98, %p99
    %p102 = scmp.ne.s32.totalorder %s87, %s101
    %p103 = scmp.eq.s32.totalorder %s16, 0
    %p104 = por %p102, %p103
    %s106 = sadd.s32 %s105, 1
    %p109 = scmp.eq.s32.totalorder %s10, 8
    %p110 = scmp.ne.s32.totalorder %s105, %s107
    %p111 = scmp.eq.s32.totalorder %s10, 0
    %p112 = por %p110, %p111
    %p113 = scmp.ne.s32.totalorder %s105, %s107
    %p114 = scmp.eq.s32.totalorder %s15, 8
    %p115 = por %p113, %p114
    %p116 = scmp.ne.s32.totalorder %s107, %s108
    %p117 = scmp.eq.s32.totalorder %s15, 0
    %p118 = por %p116, %p117
    %p119 = scmp.ne.s32.totalorder %s107, %s108
    %p120 = scmp.eq.s32.totalorder %s16, 8
    %p121 = por %p119, %p120
    %p123 = scmp.ne.s32.totalorder %s108, %s122
    %p124 = scmp.eq.s32.totalorder %s16, 0
    %p125 = por %p123, %p124
    %s126 = ssub.s32 %s17, %s29
    %p127 = scmp.eq.s32.totalorder %s126, 0
    %s129 = sadd.s32 %s128, 1
    %s130 = scalar_select %p127, %s128, %s129
    %p133 = pneg %p127
    %p134 = scmp.eq.s32.totalorder %s10, 8
    %p135 = por %p133, %p134
    %p136 = scmp.ne.s32.totalorder %s128, %s131
    %p137 = scmp.eq.s32.totalorder %s10, 0
    %p138 = por %p136, %p137
    %p139 = scmp.ne.s32.totalorder %s128, %s131
    %p140 = scmp.eq.s32.totalorder %s15, 8
    %p141 = por %p139, %p140
    %p142 = scmp.ne.s32.totalorder %s131, %s132
    %p143 = scmp.eq.s32.totalorder %s15, 0
    %p144 = por %p142, %p143
    %p145 = scmp.ne.s32.totalorder %s131, %s132
    %p146 = scmp.eq.s32.totalorder %s16, 8
    %p147 = por %p145, %p146
    %p149 = scmp.ne.s32.totalorder %s132, %s148
    %p150 = scmp.eq.s32.totalorder %s16, 0
    %p151 = por %p149, %p150
    %p152 = scmp.le.s32.totalorder 1, %s10
    %p153 = scmp.lt.s32.totalorder %s10, 10
    %p154 = pnand %p152, %p153
    %p155 = pneg %p154
    // Predicated region
    $region9: #{resnet_forward.17} parent=5 // pred_check
      _
    $region10: #{resnet_forward.17} parent=5 // pred_check_branch
      %157 = sbr.rel (%p154) target = $region12
    $region11: #{resnet_forward.17} parent=5 // pred_region
      %s158 = ssub.s32 %s10, 1
      // Predicated region
      $region13: #{resnet_forward.17} parent=11 // pred_check
        %p159 = pneg %p97
      $region14: #{resnet_forward.17} parent=11 // pred_check_branch
        %161 = sbr.rel (%p159) target = $region16
      $region15: #{resnet_forward.17} parent=11 // pred_region
        _
      $region16: #{resnet_forward.17} parent=11 // pred_fallthru
        _
      // Predicated region
      $region17: #{resnet_forward.17} parent=11 // pred_check
        %p162 = pneg %p118
      $region18: #{resnet_forward.17} parent=11 // pred_check_branch
        %164 = sbr.rel (%p162) target = $region20
      $region19: #{resnet_forward.17} parent=11 // pred_region
        _
      $region20: #{resnet_forward.17} parent=11 // pred_fallthru
        _
    $region12: #{resnet_forward.17} parent=5 // pred_fallthru
      _
    %p165 = scmp.lt.s32.totalorder %s10, 9
    // Predicated region
    $region21: #{resnet_forward.17} parent=5 // pred_check
      %p166 = pneg %p165
    $region22: #{resnet_forward.17} parent=5 // pred_check_branch
      %168 = sbr.rel (%p166) target = $region24
    $region23: #{resnet_forward.17} parent=5 // pred_region
      // Predicated region
      $region25: #{resnet_forward.17} parent=23 // pred_check
        %p169 = pneg %p44
      $region26: #{resnet_forward.17} parent=23 // pred_check_branch
        %171 = sbr.rel (%p169) target = $region28
      $region27: #{resnet_forward.17} parent=23 // pred_region
        %s172 = smul.u32 16, %s17
        %p173 = scmp.lt.s32.totalorder %s18, 8
        %s174 = scalar_select %p173, %s18, 8
        %p175 = scmp.lt.s32.totalorder %s172, 15
        %s176 = scalar_select %p175, %s172, 15
        %s177 = smul.addr %s174, 16
        %s178 = sadd.s32 %s176, %s177
        %s179 = smul.addr %s178, 4
        %s180 = scalar_lea.vmem %s0, %s179
        %s181 = smul.u32 16, %s17
      $region28: #{resnet_forward.17} parent=23 // pred_fallthru
        _
      // Predicated region
      $region29: #{resnet_forward.17} parent=23 // pred_check
        %p182 = pneg %p70
      $region30: #{resnet_forward.17} parent=23 // pred_check_branch
        %184 = sbr.rel (%p182) target = $region32
      $region31: #{resnet_forward.17} parent=23 // pred_region
        %p185 = scmp.lt.s32.totalorder %s18, 8
        %s186 = scalar_select %p185, %s18, 8
        %s187 = smul.addr %s186, 8
        %s188 = smul.addr %s187, 4
        %s189 = scalar_lea.vmem %s1, %s188
      $region32: #{resnet_forward.17} parent=23 // pred_fallthru
        _
    $region24: #{resnet_forward.17} parent=5 // pred_fallthru
      _
    %p190 = scmp.le.s32.totalorder 1, %s10
    %p191 = scmp.lt.s32.totalorder %s10, 10
    %p192 = pnand %p190, %p191
    %p193 = pneg %p192
    // Predicated region
    $region33: #{resnet_forward.17} parent=5 // pred_check
      _
    $region34: #{resnet_forward.17} parent=5 // pred_check_branch
      %195 = sbr.rel (%p192) target = $region36
    $region35: #{resnet_forward.17} parent=5 // pred_region
      %s196 = ssub.s32 %s10, 1
      %s197 = smul.u32 16, %s19
      %p198 = scmp.lt.s32.totalorder %s20, 8
      %s199 = scalar_select %p198, %s20, 8
      %p200 = scmp.lt.s32.totalorder %s197, 15
      %s201 = scalar_select %p200, %s197, 15
      %s202 = smul.addr %s199, 16
      %s203 = sadd.s32 %s201, %s202
      %s204 = smul.addr %s203, 4
      %s205 = scalar_lea.vmem %s0, %s204
      %p206 = pneg %p50
      %p207 = pneg %p47
      %p208 = scmp.lt.s32.totalorder %s20, 8
      %s209 = scalar_select %p208, %s20, 8
      %s210 = smul.addr %s209, 8
      %s211 = smul.addr %s210, 4
      %s212 = scalar_lea.vmem %s1, %s211
      %p213 = pneg %p76
      %p214 = pneg %p73
      %p215 = pneg %p97
      %p216 = pneg %p94
      %p217 = pneg %p118
      %p218 = pneg %p115
      %p219 = pneg %p144
      %p220 = pneg %p141
      %s221 = smul.u32 16, %s19
      %p222 = scmp.lt.s32.totalorder %s221, 15
      %s223 = scalar_select %p222, %s221, 15
      %s224 = smul.addr %s223, 4
      %s225 = scalar_lea.vmem %s4, %s224
      %s226 = smul.u32 16, %s19
      %p227 = scmp.lt.s32.totalorder %s20, 8
      %s228 = scalar_select %p227, %s20, 8
      %p229 = scmp.lt.s32.totalorder %s226, 15
      %s230 = scalar_select %p229, %s226, 15
      %s231 = smul.addr %s228, 16
      %s232 = sadd.s32 %s230, %s231
      %s233 = smul.addr %s232, 4
      %s234 = scalar_lea.vmem %s0, %s233
      %s235 = smul.u32 16, %s19
      %p236 = scmp.lt.s32.totalorder %s20, 8
      %s237 = scalar_select %p236, %s20, 8
      %s238 = smul.addr %s237, 8
      %s239 = smul.addr %s238, 4
      %s240 = scalar_lea.vmem %s1, %s239
      %s241 = smul.u32 16, %s19
      %p242 = scmp.lt.s32.totalorder %s241, 15
      %s243 = scalar_select %p242, %s241, 15
      %s244 = smul.addr %s243, 4
      %s245 = scalar_lea.vmem %s4, %s244
      %s246 = smul.u32 16, %s19
      %p248 = scmp.eq.s32.totalorder %s20, 0
      // Predicated region
      $region37: #{resnet_forward.17} parent=35 // pred_check
        %p249 = pneg %p248
      $region38: #{resnet_forward.17} parent=35 // pred_check_branch
        %251 = sbr.rel (%p249) target = $region40
      $region39: #{resnet_forward.17} parent=35 // pred_region
        %252 = vst [vmem:[#allocation2] sm:$0xff] 0.0
        %253 = vst [vmem:[#allocation2 + $0x8] sm:$0xff] 0.0
        %254 = vst [vmem:[#allocation2 + $0x10] sm:$0xff] 0.0
        %255 = vst [vmem:[#allocation2 + $0x18] sm:$0xff] 0.0
        %256 = vst [vmem:[#allocation2 + $0x20] sm:$0xff] 0.0
        %257 = vst [vmem:[#allocation2 + $0x28] sm:$0xff] 0.0
        %258 = vst [vmem:[#allocation2 + $0x30] sm:$0xff] 0.0
        %259 = vst [vmem:[#allocation2 + $0x38] sm:$0xff] 0.0
        %260 = vst [vmem:[#allocation2 + $0x40] sm:$0xff] 0.0
        %261 = vst [vmem:[#allocation2 + $0x48] sm:$0xff] 0.0
        %262 = vst [vmem:[#allocation2 + $0x50] sm:$0xff] 0.0
        %263 = vst [vmem:[#allocation2 + $0x58] sm:$0xff] 0.0
        %264 = vst [vmem:[#allocation2 + $0x60] sm:$0xff] 0.0
        %265 = vst [vmem:[#allocation2 + $0x68] sm:$0xff] 0.0
        %266 = vst [vmem:[#allocation2 + $0x70] sm:$0xff] 0.0
        %267 = vst [vmem:[#allocation2 + $0x78] sm:$0xff] 0.0
      $region40: #{resnet_forward.17} parent=35 // pred_fallthru
        _
      %v268 = vld [vmem:[#allocation2] sm:$0xff]
      %v269 = vld [vmem:[#allocation2 + $0x8] sm:$0xff]
      %v270 = vld [vmem:[#allocation2 + $0x10] sm:$0xff]
      %v271 = vld [vmem:[#allocation2 + $0x18] sm:$0xff]
      %v272 = vld [vmem:[#allocation2 + $0x20] sm:$0xff]
      %v273 = vld [vmem:[#allocation2 + $0x28] sm:$0xff]
      %v274 = vld [vmem:[#allocation2 + $0x30] sm:$0xff]
      %v275 = vld [vmem:[#allocation2 + $0x38] sm:$0xff]
      %v276 = vld [vmem:[#allocation2 + $0x40] sm:$0xff]
      %v277 = vld [vmem:[#allocation2 + $0x48] sm:$0xff]
      %v278 = vld [vmem:[#allocation2 + $0x50] sm:$0xff]
      %v279 = vld [vmem:[#allocation2 + $0x58] sm:$0xff]
      %v280 = vld [vmem:[#allocation2 + $0x60] sm:$0xff]
      %v281 = vld [vmem:[#allocation2 + $0x68] sm:$0xff]
      %v282 = vld [vmem:[#allocation2 + $0x70] sm:$0xff]
      %v283 = vld [vmem:[#allocation2 + $0x78] sm:$0xff]
      %v284 = vld [vmem:[%s234] sm:$0xf]
      %v285 = vld [vmem:[%s234 + $0x4] sm:$0xf]
      %v286 = vld [vmem:[%s234 + $0x8] sm:$0xf]
      %v287 = vld [vmem:[%s234 + $0xc] sm:$0xf]
      %v288 = vld [vmem:[%s234 + $0x10] sm:$0xf]
      %v289 = vld [vmem:[%s234 + $0x14] sm:$0xf]
      %v290 = vld [vmem:[%s234 + $0x18] sm:$0xf]
      %v291 = vld [vmem:[%s234 + $0x1c] sm:$0xf]
      %v292 = vld [vmem:[%s234 + $0x20] sm:$0xf]
      %v293 = vld [vmem:[%s234 + $0x24] sm:$0xf]
      %v294 = vld [vmem:[%s234 + $0x28] sm:$0xf]
      %v295 = vld [vmem:[%s234 + $0x2c] sm:$0xf]
      %v296 = vld [vmem:[%s234 + $0x30] sm:$0xf]
      %v297 = vld [vmem:[%s234 + $0x34] sm:$0xf]
      %v298 = vld [vmem:[%s234 + $0x38] sm:$0xf]
      %v299 = vld [vmem:[%s234 + $0x3c] sm:$0xf]
      %v300 = vld [vmem:[%s240] sm:$0xf]
      %v301 = vld [vmem:[%s240 + $0x4] sm:$0xf]
      %v302 = vld [vmem:[%s240 + $0x8] sm:$0xf]
      %v303 = vld [vmem:[%s240 + $0xc] sm:$0xf]
      %v304 = vld [vmem:[%s240 + $0x10] sm:$0xf]
      %v305 = vld [vmem:[%s240 + $0x14] sm:$0xf]
      %v306 = vld [vmem:[%s240 + $0x18] sm:$0xf]
      %v307 = vld [vmem:[%s240 + $0x1c] sm:$0xf]
      %v324 = vunpack.c.l.b16 %v284
      %v325 = vunpack.c.l.b16 %v285
      %v326 = vunpack.c.l.b16 %v286
      %v327 = vunpack.c.l.b16 %v287
      %v328 = vunpack.c.l.b16 %v288
      %v329 = vunpack.c.l.b16 %v289
      %v330 = vunpack.c.l.b16 %v290
      %v331 = vunpack.c.l.b16 %v291
      %v332 = vunpack.c.l.b16 %v292
      %v333 = vunpack.c.l.b16 %v293
      %v334 = vunpack.c.l.b16 %v294
      %v335 = vunpack.c.l.b16 %v295
      %v336 = vunpack.c.l.b16 %v296
      %v337 = vunpack.c.l.b16 %v297
      %v338 = vunpack.c.l.b16 %v298
      %v339 = vunpack.c.l.b16 %v299
      %v340 = vpack.c.b16 %v325, %v324
      %v341 = vpack.c.b16 %v327, %v326
      %v342 = vpack.c.b16 %v329, %v328
      %v343 = vpack.c.b16 %v331, %v330
      %v344 = vpack.c.b16 %v333, %v332
      %v345 = vpack.c.b16 %v335, %v334
      %v346 = vpack.c.b16 %v337, %v336
      %v347 = vpack.c.b16 %v339, %v338
      %v356 = vunpack.c.l.b16 %v300
      %v357 = vunpack.c.l.b16 %v301
      %v358 = vunpack.c.l.b16 %v302
      %v359 = vunpack.c.l.b16 %v303
      %v360 = vunpack.c.l.b16 %v304
      %v361 = vunpack.c.l.b16 %v305
      %v362 = vunpack.c.l.b16 %v306
      %v363 = vunpack.c.l.b16 %v307
      %v364 = vpack.c.b16 %v357, %v356
      %v365 = vpack.c.b16 %v359, %v358
      %v366 = vpack.c.b16 %v361, %v360
      %v367 = vpack.c.b16 %v363, %v362
      %vm372 = vcmask 523264
      %v374 = vsel %vm372, %v340, 0
      %v377 = vsel %vm372, %v341, 0
      %v380 = vsel %vm372, %v342, 0
      %v383 = vsel %vm372, %v343, 0
      %v386 = vsel %vm372, %v344, 0
      %v389 = vsel %vm372, %v345, 0
      %v392 = vsel %vm372, %v346, 0
      %v395 = vsel %vm372, %v347, 0
      %397 = vmatprep.subr.bf16.mxu0 0
      %398 = vmatpush1.bf16.msra.mxu0 %v364
      %399 = vmatprep.subr.bf16.mxu0 0
      %400 = vmatpush1.bf16.msra.mxu0 %v365
      %401 = vmatprep.subr.bf16.mxu0 0
      %402 = vmatpush1.bf16.msra.mxu0 %v366
      %403 = vmatprep.subr.bf16.mxu0 0
      %404 = vmatpush1.bf16.msra.mxu0 %v367
      %405 = vmatprep.subr.bf16.mxu0 0
      %406 = vmatpush1.bf16.msra.mxu0 0
      %407 = vmatprep.subr.bf16.mxu0 0
      %408 = vmatpush1.bf16.msra.mxu0 0
      %409 = vmatprep.subr.bf16.mxu0 0
      %410 = vmatpush1.bf16.msra.mxu0 0
      %411 = vmatprep.subr.bf16.mxu0 0
      %412 = vmatpush1.bf16.msra.mxu0 0
      %413 = vmatprep.subr.bf16.mxu0 0
      %414 = vmatpush1.bf16.msra.mxu0 0
      %415 = vmatprep.subr.bf16.mxu0 0
      %416 = vmatpush1.bf16.msra.mxu0 0
      %417 = vmatprep.subr.bf16.mxu0 0
      %418 = vmatpush1.bf16.msra.mxu0 0
      %419 = vmatprep.subr.bf16.mxu0 0
      %420 = vmatpush1.bf16.msra.mxu0 0
      %421 = vmatprep.subr.bf16.mxu0 0
      %422 = vmatpush1.bf16.msra.mxu0 0
      %423 = vmatprep.subr.bf16.mxu0 0
      %424 = vmatpush1.bf16.msra.mxu0 0
      %425 = vmatprep.subr.bf16.mxu0 0
      %426 = vmatpush1.bf16.msra.mxu0 0
      %427 = vmatprep.subr.bf16.mxu0 0
      %428 = vmatpush1.bf16.msra.mxu0 0
      %429 = vmatprep.mubr.bf16.mxu0 0
      %430 = vmatmul.mubr.bf16.gmra.mrb[0].mxu0 %v374
      %v431 = vpop.f32.mrb[0].mxu0
      %v432 = vadd.f32 0.0, %v431
      %v433 = vpop.f32.mrb[0].mxu0
      %v434 = vpop.f32.mrb[0].mxu0
      %v435 = vadd.f32 0.0, %v434
      %v436 = vpop.f32.mrb[0].mxu0
      %437 = vmatprep.mubr.bf16.mxu0 0
      %438 = vmatmul.mubr.bf16.gmra.mrb[0].mxu0 %v377
      %v439 = vpop.f32.mrb[0].mxu0
      %v440 = vadd.f32 0.0, %v439
      %v441 = vpop.f32.mrb[0].mxu0
      %v442 = vpop.f32.mrb[0].mxu0
      %v443 = vadd.f32 0.0, %v442
      %v444 = vpop.f32.mrb[0].mxu0
      %445 = vmatprep.mubr.bf16.mxu0 0
      %446 = vmatmul.mubr.bf16.gmra.mrb[0].mxu0 %v380
      %v447 = vpop.f32.mrb[0].mxu0
      %v448 = vadd.f32 0.0, %v447
      %v449 = vpop.f32.mrb[0].mxu0
      %v450 = vpop.f32.mrb[0].mxu0
      %v451 = vadd.f32 0.0, %v450
      %v452 = vpop.f32.mrb[0].mxu0
      %453 = vmatprep.mubr.bf16.mxu0 0
      %454 = vmatmul.mubr.bf16.gmra.mrb[0].mxu0 %v383
      %v455 = vpop.f32.mrb[0].mxu0
      %v456 = vadd.f32 0.0, %v455
      %v457 = vpop.f32.mrb[0].mxu0
      %v458 = vpop.f32.mrb[0].mxu0
      %v459 = vadd.f32 0.0, %v458
      %v460 = vpop.f32.mrb[0].mxu0
      %461 = vmatprep.mubr.bf16.mxu0 0
      %462 = vmatmul.mubr.bf16.gmra.mrb[0].mxu0 %v386
      %v463 = vpop.f32.mrb[0].mxu0
      %v464 = vadd.f32 0.0, %v463
      %v465 = vpop.f32.mrb[0].mxu0
      %v466 = vpop.f32.mrb[0].mxu0
      %v467 = vadd.f32 0.0, %v466
      %v468 = vpop.f32.mrb[0].mxu0
      %469 = vmatprep.mubr.bf16.mxu0 0
      %470 = vmatmul.mubr.bf16.gmra.mrb[0].mxu0 %v389
      %v471 = vpop.f32.mrb[0].mxu0
      %v472 = vadd.f32 0.0, %v471
      %v473 = vpop.f32.mrb[0].mxu0
      %v474 = vpop.f32.mrb[0].mxu0
      %v475 = vadd.f32 0.0, %v474
      %v476 = vpop.f32.mrb[0].mxu0
      %477 = vmatprep.mubr.bf16.mxu0 0
      %478 = vmatmul.mubr.bf16.gmra.mrb[0].mxu0 %v392
      %v479 = vpop.f32.mrb[0].mxu0
      %v480 = vadd.f32 0.0, %v479
      %v481 = vpop.f32.mrb[0].mxu0
      %v482 = vpop.f32.mrb[0].mxu0
      %v483 = vadd.f32 0.0, %v482
      %v484 = vpop.f32.mrb[0].mxu0
      %485 = vmatprep.mubr.bf16.mxu0 0
      %486 = vmatmul.mubr.bf16.gmra.mrb[0].mxu0 %v395
      %v487 = vpop.f32.mrb[0].mxu0
      %v488 = vadd.f32 0.0, %v487
      %v489 = vpop.f32.mrb[0].mxu0
      %v490 = vpop.f32.mrb[0].mxu0
      %v491 = vadd.f32 0.0, %v490
      %v492 = vpop.f32.mrb[0].mxu0
      %493 = vdwg.mxu0
      %v494 = vadd.f32 %v268, %v432
      %v495 = vadd.f32 %v269, %v435
      %v496 = vadd.f32 %v270, %v440
      %v497 = vadd.f32 %v271, %v443
      %v498 = vadd.f32 %v272, %v448
      %v499 = vadd.f32 %v273, %v451
      %v500 = vadd.f32 %v274, %v456
      %v501 = vadd.f32 %v275, %v459
      %v502 = vadd.f32 %v276, %v464
      %v503 = vadd.f32 %v277, %v467
      %v504 = vadd.f32 %v278, %v472
      %v505 = vadd.f32 %v279, %v475
      %v506 = vadd.f32 %v280, %v480
      %v507 = vadd.f32 %v281, %v483
      %v508 = vadd.f32 %v282, %v488
      %v509 = vadd.f32 %v283, %v491
      %510 = vst [vmem:[#allocation2] sm:$0xff] %v494
      %511 = vst [vmem:[#allocation2 + $0x8] sm:$0xff] %v495
      %512 = vst [vmem:[#allocation2 + $0x10] sm:$0xff] %v496
      %513 = vst [vmem:[#allocation2 + $0x18] sm:$0xff] %v497
      %514 = vst [vmem:[#allocation2 + $0x20] sm:$0xff] %v498
      %515 = vst [vmem:[#allocation2 + $0x28] sm:$0xff] %v499
      %516 = vst [vmem:[#allocation2 + $0x30] sm:$0xff] %v500
      %517 = vst [vmem:[#allocation2 + $0x38] sm:$0xff] %v501
      %518 = vst [vmem:[#allocation2 + $0x40] sm:$0xff] %v502
      %519 = vst [vmem:[#allocation2 + $0x48] sm:$0xff] %v503
      %520 = vst [vmem:[#allocation2 + $0x50] sm:$0xff] %v504
      %521 = vst [vmem:[#allocation2 + $0x58] sm:$0xff] %v505
      %522 = vst [vmem:[#allocation2 + $0x60] sm:$0xff] %v506
      %523 = vst [vmem:[#allocation2 + $0x68] sm:$0xff] %v507
      %524 = vst [vmem:[#allocation2 + $0x70] sm:$0xff] %v508
      %525 = vst [vmem:[#allocation2 + $0x78] sm:$0xff] %v509
      %p526 = scmp.eq.s32.totalorder %s20, 8
      // Predicated region
      $region41: #{resnet_forward.17} parent=35 // pred_check
        %p527 = pneg %p526
      $region42: #{resnet_forward.17} parent=35 // pred_check_branch
        %529 = sbr.rel (%p527) target = $region44
      $region43: #{resnet_forward.17} parent=35 // pred_region
        %v530 = vld [vmem:[#allocation2] sm:$0xff]
        %v531 = vld [vmem:[#allocation2 + $0x8] sm:$0xff]
        %v532 = vld [vmem:[#allocation2 + $0x10] sm:$0xff]
        %v533 = vld [vmem:[#allocation2 + $0x18] sm:$0xff]
        %v534 = vld [vmem:[#allocation2 + $0x20] sm:$0xff]
        %v535 = vld [vmem:[#allocation2 + $0x28] sm:$0xff]
        %v536 = vld [vmem:[#allocation2 + $0x30] sm:$0xff]
        %v537 = vld [vmem:[#allocation2 + $0x38] sm:$0xff]
        %v538 = vld [vmem:[#allocation2 + $0x40] sm:$0xff]
        %v539 = vld [vmem:[#allocation2 + $0x48] sm:$0xff]
        %v540 = vld [vmem:[#allocation2 + $0x50] sm:$0xff]
        %v541 = vld [vmem:[#allocation2 + $0x58] sm:$0xff]
        %v542 = vld [vmem:[#allocation2 + $0x60] sm:$0xff]
        %v543 = vld [vmem:[#allocation2 + $0x68] sm:$0xff]
        %v544 = vld [vmem:[#allocation2 + $0x70] sm:$0xff]
        %v545 = vld [vmem:[#allocation2 + $0x78] sm:$0xff]
        %v546 = vld [vmem:[%s2] sm:$0x1]
        %v548 = vlaneseq
        %v549 = vshrl.u32 %v548, 7
        %v550 = vsub.s32 0, %v549
        %v551 = vrot.slane %v546, %v550
        %v553 = vmul.f32 %v530, %v551
        %v554 = vmul.f32 %v531, %v551
        %v555 = vmul.f32 %v532, %v551
        %v556 = vmul.f32 %v533, %v551
        %v557 = vmul.f32 %v534, %v551
        %v558 = vmul.f32 %v535, %v551
        %v559 = vmul.f32 %v536, %v551
        %v560 = vmul.f32 %v537, %v551
        %v561 = vmul.f32 %v538, %v551
        %v562 = vmul.f32 %v539, %v551
        %v563 = vmul.f32 %v540, %v551
        %v564 = vmul.f32 %v541, %v551
        %v565 = vmul.f32 %v542, %v551
        %v566 = vmul.f32 %v543, %v551
        %v567 = vmul.f32 %v544, %v551
        %v568 = vmul.f32 %v545, %v551
        %v569 = vld [vmem:[%s3] sm:$0x1]
        %v571 = vlaneseq
        %v572 = vshrl.u32 %v571, 7
        %v573 = vsub.s32 0, %v572
        %v574 = vrot.slane %v569, %v573
        %v576 = vadd.f32 %v553, %v574
        %v577 = vadd.f32 %v554, %v574
        %v578 = vadd.f32 %v555, %v574
        %v579 = vadd.f32 %v556, %v574
        %v580 = vadd.f32 %v557, %v574
        %v581 = vadd.f32 %v558, %v574
        %v582 = vadd.f32 %v559, %v574
        %v583 = vadd.f32 %v560, %v574
        %v584 = vadd.f32 %v561, %v574
        %v585 = vadd.f32 %v562, %v574
        %v586 = vadd.f32 %v563, %v574
        %v587 = vadd.f32 %v564, %v574
        %v588 = vadd.f32 %v565, %v574
        %v589 = vadd.f32 %v566, %v574
        %v590 = vadd.f32 %v567, %v574
        %v591 = vadd.f32 %v568, %v574
        %v592 = vmax.f32 %v576, 0.0
        %v593 = vmax.f32 %v577, 0.0
        %v594 = vmax.f32 %v578, 0.0
        %v595 = vmax.f32 %v579, 0.0
        %v596 = vmax.f32 %v580, 0.0
        %v597 = vmax.f32 %v581, 0.0
        %v598 = vmax.f32 %v582, 0.0
        %v599 = vmax.f32 %v583, 0.0
        %v600 = vmax.f32 %v584, 0.0
        %v601 = vmax.f32 %v585, 0.0
        %v602 = vmax.f32 %v586, 0.0
        %v603 = vmax.f32 %v587, 0.0
        %v604 = vmax.f32 %v588, 0.0
        %v605 = vmax.f32 %v589, 0.0
        %v606 = vmax.f32 %v590, 0.0
        %v607 = vmax.f32 %v591, 0.0
        %v608 = vpack.c.bf16 %v593, %v592
        %v609 = vpack.c.bf16 %v595, %v594
        %v610 = vpack.c.bf16 %v597, %v596
        %v611 = vpack.c.bf16 %v599, %v598
        %v612 = vpack.c.bf16 %v601, %v600
        %v613 = vpack.c.bf16 %v603, %v602
        %v614 = vpack.c.bf16 %v605, %v604
        %v615 = vpack.c.bf16 %v607, %v606
        %v624 = vunpack.c.l.b16 %v608
        %v625 = vunpack.c.h.b16 %v608
        %v626 = vunpack.c.l.b16 %v609
        %v627 = vunpack.c.h.b16 %v609
        %v628 = vunpack.c.l.b16 %v610
        %v629 = vunpack.c.h.b16 %v610
        %v630 = vunpack.c.l.b16 %v611
        %v631 = vunpack.c.h.b16 %v611
        %v632 = vunpack.c.l.b16 %v612
        %v633 = vunpack.c.h.b16 %v612
        %v634 = vunpack.c.l.b16 %v613
        %v635 = vunpack.c.h.b16 %v613
        %v636 = vunpack.c.l.b16 %v614
        %v637 = vunpack.c.h.b16 %v614
        %v638 = vunpack.c.l.b16 %v615
        %v639 = vunpack.c.h.b16 %v615
        %v640 = vpack.c.b16 %v624, %v624
        %v641 = vpack.c.b16 %v625, %v625
        %v642 = vpack.c.b16 %v626, %v626
        %v643 = vpack.c.b16 %v627, %v627
        %v644 = vpack.c.b16 %v628, %v628
        %v645 = vpack.c.b16 %v629, %v629
        %v646 = vpack.c.b16 %v630, %v630
        %v647 = vpack.c.b16 %v631, %v631
        %v648 = vpack.c.b16 %v632, %v632
        %v649 = vpack.c.b16 %v633, %v633
        %v650 = vpack.c.b16 %v634, %v634
        %v651 = vpack.c.b16 %v635, %v635
        %v652 = vpack.c.b16 %v636, %v636
        %v653 = vpack.c.b16 %v637, %v637
        %v654 = vpack.c.b16 %v638, %v638
        %v655 = vpack.c.b16 %v639, %v639
        %672 = vst [vmem:[%s245] sm:$0xf] %v640
        %673 = vst [vmem:[%s245 + $0x4] sm:$0xf] %v641
        %674 = vst [vmem:[%s245 + $0x8] sm:$0xf] %v642
        %675 = vst [vmem:[%s245 + $0xc] sm:$0xf] %v643
        %676 = vst [vmem:[%s245 + $0x10] sm:$0xf] %v644
        %677 = vst [vmem:[%s245 + $0x14] sm:$0xf] %v645
        %678 = vst [vmem:[%s245 + $0x18] sm:$0xf] %v646
        %679 = vst [vmem:[%s245 + $0x1c] sm:$0xf] %v647
        %680 = vst [vmem:[%s245 + $0x20] sm:$0xf] %v648
        %681 = vst [vmem:[%s245 + $0x24] sm:$0xf] %v649
        %682 = vst [vmem:[%s245 + $0x28] sm:$0xf] %v650
        %683 = vst [vmem:[%s245 + $0x2c] sm:$0xf] %v651
        %684 = vst [vmem:[%s245 + $0x30] sm:$0xf] %v652
        %685 = vst [vmem:[%s245 + $0x34] sm:$0xf] %v653
        %686 = vst [vmem:[%s245 + $0x38] sm:$0xf] %v654
        %687 = vst [vmem:[%s245 + $0x3c] sm:$0xf] %v655
      $region44: #{resnet_forward.17} parent=35 // pred_fallthru
        _
      %s688 = smul.u32 16, %s19
      %p689 = scmp.lt.s32.totalorder %s688, 15
      %s690 = scalar_select %p689, %s688, 15
      %s691 = smul.addr %s690, 4
      %s692 = scalar_lea.vmem %s4, %s691
      // Predicated region
      $region45: #{resnet_forward.17} parent=35 // pred_check
        %p693 = pneg %p141
      $region46: #{resnet_forward.17} parent=35 // pred_check_branch
        %695 = sbr.rel (%p693) target = $region48
      $region47: #{resnet_forward.17} parent=35 // pred_region
        %s696 = smul.u32 16, %s19
      $region48: #{resnet_forward.17} parent=35 // pred_fallthru
        _
      // Predicated region
      $region49: #{resnet_forward.17} parent=35 // pred_check
        %p697 = pneg %p141
      $region50: #{resnet_forward.17} parent=35 // pred_check_branch
        %699 = sbr.rel (%p697) target = $region52
      $region51: #{resnet_forward.17} parent=35 // pred_region
        %s700 = smul.u32 16, %s19
        %p701 = scmp.lt.s32.totalorder %s700, 15
        %s702 = scalar_select %p701, %s700, 15
        %s703 = smul.addr %s702, 4
        %s704 = scalar_lea.vmem %s4, %s703
      $region52: #{resnet_forward.17} parent=35 // pred_fallthru
        _
    $region36: #{resnet_forward.17} parent=5 // pred_fallthru
      _
    %p705 = scmp.le.s32.totalorder 2, %s10
    // Predicated region
    $region53: #{resnet_forward.17} parent=5 // pred_check
      %p706 = pneg %p705
    $region54: #{resnet_forward.17} parent=5 // pred_check_branch
      %708 = sbr.rel (%p706) target = $region56
    $region55: #{resnet_forward.17} parent=5 // pred_region
      %s709 = ssub.s32 %s10, 2
    $region56: #{resnet_forward.17} parent=5 // pred_fallthru
      _
  $region6: #{resnet_forward.17} parent=0 // loop_footer
    %s14 = sadd.s32 1, %s10
  $region7: #{resnet_forward.17} parent=0 // loop_footer_branch
    %9 = sbr.rel target = $region3
  $region8: #{resnet_forward.17} parent=0 // loop_exit
    _

// kernel: resnet_forward.18
$region0: #{resnet_forward.18}
  #allocation0 [shape = 'u32[]', space=smem, size = 0x4, offset = 0x4, fixed_abs, tag = 'smem constant byte address 0x4 - core index']
  #allocation1 [shape = 'u32[144,128]{1,0:T(1,128)}', space=vmem, size = 0x12000, scoped, tag = 'internal scratch']
  #allocation2 [shape = 'f32[128,128]{1,0:T(8,128)}', space=vmem, size = 0x10000, scoped, tag = 'scratch operand']
  %s0 = inlined_call_operand.vmem [shape: bf16[9,128,128], index: 0, kind: input, shape index: {}]
  %s1 = inlined_call_operand.vmem [shape: bf16[9,128,128], index: 1, kind: input, shape index: {}]
  %s2 = inlined_call_operand.vmem [shape: f32[1,128], index: 2, kind: input, shape index: {}]
  %s3 = inlined_call_operand.vmem [shape: f32[1,128], index: 3, kind: input, shape index: {}]
  %s4 = inlined_call_operand.vmem [shape: bf16[128,128], index: 4, kind: input, shape index: {}]
  %s5 = inlined_call_operand.vmem [shape: bf16[128,128], index: 5, kind: output, shape index: {}]
  %s6 = sld [smem:[#allocation0]]
  $region61: #{resnet_forward.18} parent=0
    _
  %s8 = ssub.s32 1, %s6
  %s9 = scalar_select 0, %s8, %s6
  loop: start=0, step=1, limit=11
  $region2: #{resnet_forward.18} parent=0 // loop_pre_header
    _
  $region3: #{resnet_forward.18} parent=0 // loop_header
    %s11 = sphi 0, %s15
    %p12 = scmp.ge.s32.totalorder %s11, 11
    %s18 = sphi 0, %s30
    %s19 = sphi 0, %s26
    %s20 = sphi 0, %s18
    %s21 = sphi 0, %s19
    %s22 = sphi 0, %s20
    %s23 = sphi 0, %s21
    %s35 = sphi 0, %s37
    %s38 = sphi 0, %s35
    %s39 = sphi 0, %s38
    %s55 = sphi 0, %s39
    %s61 = sphi 0, %s63
    %s64 = sphi 0, %s61
    %s65 = sphi 0, %s64
    %s81 = sphi 0, %s65
    %s85 = sphi 0, %s85
    %s87 = sphi 0, %s85
    %s88 = sphi 0, %s87
    %s102 = sphi 0, %s88
    %s106 = sphi 0, %s106
    %s108 = sphi 0, %s106
    %s109 = sphi 0, %s108
    %s123 = sphi 0, %s109
    %s129 = sphi 0, %s131
    %s132 = sphi 0, %s129
    %s133 = sphi 0, %s132
    %s149 = sphi 0, %s133
    %s155 = sphi 0, %s157
    %s158 = sphi 0, %s155
    %s159 = sphi 0, %s158
    %s175 = sphi 0, %s159
  $region4: #{resnet_forward.18} parent=0 // loop_header_branch
    %14 = sbr.rel (%p12) target = $region8
  $region5: #{resnet_forward.18} parent=0 // loop_body
    %s16 = ssub.s32 %s11, 1
    %s17 = ssub.s32 %s11, 2
    %s24 = sadd.s32 1, %s19
    %p25 = scmp.ge.s32.totalorder %s24, 9
    %s26 = scalar_select %p25, 0, %s24
    %s27 = sadd.s32 1, %s18
    %s28 = scalar_select %p25, %s27, %s18
    %p29 = scmp.ge.s32.totalorder %s28, 1
    %s30 = scalar_select %p29, 0, %s28
    %s31 = ssub.s32 %s19, %s26
    %s32 = ssub.s32 %s18, %s30
    %s33 = sor.u32 %s31, %s32
    %p34 = scmp.eq.s32.totalorder %s33, 0
    %s36 = sadd.s32 %s35, 1
    %s37 = scalar_select %p34, %s35, %s36
    %p40 = pneg %p34
    %p41 = scmp.eq.s32.totalorder %s11, 8
    %p42 = por %p40, %p41
    %p43 = scmp.ne.s32.totalorder %s35, %s38
    %p44 = scmp.eq.s32.totalorder %s11, 0
    %p45 = por %p43, %p44
    %p46 = scmp.ne.s32.totalorder %s35, %s38
    %p47 = scmp.eq.s32.totalorder %s16, 8
    %p48 = por %p46, %p47
    %p49 = scmp.ne.s32.totalorder %s38, %s39
    %p50 = scmp.eq.s32.totalorder %s16, 0
    %p51 = por %p49, %p50
    %p52 = scmp.ne.s32.totalorder %s38, %s39
    %p53 = scmp.eq.s32.totalorder %s17, 8
    %p54 = por %p52, %p53
    %p56 = scmp.ne.s32.totalorder %s39, %s55
    %p57 = scmp.eq.s32.totalorder %s17, 0
    %p58 = por %p56, %p57
    %s59 = ssub.s32 %s19, %s26
    %p60 = scmp.eq.s32.totalorder %s59, 0
    %s62 = sadd.s32 %s61, 1
    %s63 = scalar_select %p60, %s61, %s62
    %p66 = pneg %p60
    %p67 = scmp.eq.s32.totalorder %s11, 8
    %p68 = por %p66, %p67
    %p69 = scmp.ne.s32.totalorder %s61, %s64
    %p70 = scmp.eq.s32.totalorder %s11, 0
    %p71 = por %p69, %p70
    %p72 = scmp.ne.s32.totalorder %s61, %s64
    %p73 = scmp.eq.s32.totalorder %s16, 8
    %p74 = por %p72, %p73
    %p75 = scmp.ne.s32.totalorder %s64, %s65
    %p76 = scmp.eq.s32.totalorder %s16, 0
    %p77 = por %p75, %p76
    %p78 = scmp.ne.s32.totalorder %s64, %s65
    %p79 = scmp.eq.s32.totalorder %s17, 8
    %p80 = por %p78, %p79
    %p82 = scmp.ne.s32.totalorder %s65, %s81
    %p83 = scmp.eq.s32.totalorder %s17, 0
    %p84 = por %p82, %p83
    %s86 = sadd.s32 %s85, 1
    %p89 = scmp.eq.s32.totalorder %s11, 8
    %p90 = scmp.ne.s32.totalorder %s85, %s87
    %p91 = scmp.eq.s32.totalorder %s11, 0
    %p92 = por %p90, %p91
    %p93 = scmp.ne.s32.totalorder %s85, %s87
    %p94 = scmp.eq.s32.totalorder %s16, 8
    %p95 = por %p93, %p94
    %p96 = scmp.ne.s32.totalorder %s87, %s88
    %p97 = scmp.eq.s32.totalorder %s16, 0
    %p98 = por %p96, %p97
    %p99 = scmp.ne.s32.totalorder %s87, %s88
    %p100 = scmp.eq.s32.totalorder %s17, 8
    %p101 = por %p99, %p100
    %p103 = scmp.ne.s32.totalorder %s88, %s102
    %p104 = scmp.eq.s32.totalorder %s17, 0
    %p105 = por %p103, %p104
    %s107 = sadd.s32 %s106, 1
    %p110 = scmp.eq.s32.totalorder %s11, 8
    %p111 = scmp.ne.s32.totalorder %s106, %s108
    %p112 = scmp.eq.s32.totalorder %s11, 0
    %p113 = por %p111, %p112
    %p114 = scmp.ne.s32.totalorder %s106, %s108
    %p115 = scmp.eq.s32.totalorder %s16, 8
    %p116 = por %p114, %p115
    %p117 = scmp.ne.s32.totalorder %s108, %s109
    %p118 = scmp.eq.s32.totalorder %s16, 0
    %p119 = por %p117, %p118
    %p120 = scmp.ne.s32.totalorder %s108, %s109
    %p121 = scmp.eq.s32.totalorder %s17, 8
    %p122 = por %p120, %p121
    %p124 = scmp.ne.s32.totalorder %s109, %s123
    %p125 = scmp.eq.s32.totalorder %s17, 0
    %p126 = por %p124, %p125
    %s127 = ssub.s32 %s18, %s30
    %p128 = scmp.eq.s32.totalorder %s127, 0
    %s130 = sadd.s32 %s129, 1
    %s131 = scalar_select %p128, %s129, %s130
    %p134 = pneg %p128
    %p135 = scmp.eq.s32.totalorder %s11, 8
    %p136 = por %p134, %p135
    %p137 = scmp.ne.s32.totalorder %s129, %s132
    %p138 = scmp.eq.s32.totalorder %s11, 0
    %p139 = por %p137, %p138
    %p140 = scmp.ne.s32.totalorder %s129, %s132
    %p141 = scmp.eq.s32.totalorder %s16, 8
    %p142 = por %p140, %p141
    %p143 = scmp.ne.s32.totalorder %s132, %s133
    %p144 = scmp.eq.s32.totalorder %s16, 0
    %p145 = por %p143, %p144
    %p146 = scmp.ne.s32.totalorder %s132, %s133
    %p147 = scmp.eq.s32.totalorder %s17, 8
    %p148 = por %p146, %p147
    %p150 = scmp.ne.s32.totalorder %s133, %s149
    %p151 = scmp.eq.s32.totalorder %s17, 0
    %p152 = por %p150, %p151
    %s153 = ssub.s32 %s18, %s30
    %p154 = scmp.eq.s32.totalorder %s153, 0
    %s156 = sadd.s32 %s155, 1
    %s157 = scalar_select %p154, %s155, %s156
    %p160 = pneg %p154
    %p161 = scmp.eq.s32.totalorder %s11, 8
    %p162 = por %p160, %p161
    %p163 = scmp.ne.s32.totalorder %s155, %s158
    %p164 = scmp.eq.s32.totalorder %s11, 0
    %p165 = por %p163, %p164
    %p166 = scmp.ne.s32.totalorder %s155, %s158
    %p167 = scmp.eq.s32.totalorder %s16, 8
    %p168 = por %p166, %p167
    %p169 = scmp.ne.s32.totalorder %s158, %s159
    %p170 = scmp.eq.s32.totalorder %s16, 0
    %p171 = por %p169, %p170
    %p172 = scmp.ne.s32.totalorder %s158, %s159
    %p173 = scmp.eq.s32.totalorder %s17, 8
    %p174 = por %p172, %p173
    %p176 = scmp.ne.s32.totalorder %s159, %s175
    %p177 = scmp.eq.s32.totalorder %s17, 0
    %p178 = por %p176, %p177
    %p179 = scmp.le.s32.totalorder 1, %s11
    %p180 = scmp.lt.s32.totalorder %s11, 10
    %p181 = pnand %p179, %p180
    %p182 = pneg %p181
    // Predicated region
    $region9: #{resnet_forward.18} parent=5 // pred_check
      _
    $region10: #{resnet_forward.18} parent=5 // pred_check_branch
      %184 = sbr.rel (%p181) target = $region12
    $region11: #{resnet_forward.18} parent=5 // pred_region
      %s185 = ssub.s32 %s11, 1
      // Predicated region
      $region13: #{resnet_forward.18} parent=11 // pred_check
        %p186 = pneg %p98
      $region14: #{resnet_forward.18} parent=11 // pred_check_branch
        %188 = sbr.rel (%p186) target = $region16
      $region15: #{resnet_forward.18} parent=11 // pred_region
        _
      $region16: #{resnet_forward.18} parent=11 // pred_fallthru
        _
      // Predicated region
      $region17: #{resnet_forward.18} parent=11 // pred_check
        %p189 = pneg %p119
      $region18: #{resnet_forward.18} parent=11 // pred_check_branch
        %191 = sbr.rel (%p189) target = $region20
      $region19: #{resnet_forward.18} parent=11 // pred_region
        _
      $region20: #{resnet_forward.18} parent=11 // pred_fallthru
        _
      // Predicated region
      $region21: #{resnet_forward.18} parent=11 // pred_check
        %p192 = pneg %p145
      $region22: #{resnet_forward.18} parent=11 // pred_check_branch
        %194 = sbr.rel (%p192) target = $region24
      $region23: #{resnet_forward.18} parent=11 // pred_region
        %s195 = smul.u32 16, %s20
        %p196 = scmp.lt.s32.totalorder %s195, 15
        %s197 = scalar_select %p196, %s195, 15
        %s198 = smul.addr %s197, 4
        %s199 = scalar_lea.vmem %s4, %s198
        %s200 = smul.u32 16, %s20
      $region24: #{resnet_forward.18} parent=11 // pred_fallthru
        _
    $region12: #{resnet_forward.18} parent=5 // pred_fallthru
      _
    %p201 = scmp.lt.s32.totalorder %s11, 9
    // Predicated region
    $region25: #{resnet_forward.18} parent=5 // pred_check
      %p202 = pneg %p201
    $region26: #{resnet_forward.18} parent=5 // pred_check_branch
      %204 = sbr.rel (%p202) target = $region28
    $region27: #{resnet_forward.18} parent=5 // pred_region
      // Predicated region
      $region29: #{resnet_forward.18} parent=27 // pred_check
        %p205 = pneg %p45
      $region30: #{resnet_forward.18} parent=27 // pred_check_branch
        %207 = sbr.rel (%p205) target = $region32
      $region31: #{resnet_forward.18} parent=27 // pred_region
        %s208 = smul.u32 16, %s18
        %p209 = scmp.lt.s32.totalorder %s19, 8
        %s210 = scalar_select %p209, %s19, 8
        %p211 = scmp.lt.s32.totalorder %s208, 15
        %s212 = scalar_select %p211, %s208, 15
        %s213 = smul.addr %s210, 16
        %s214 = sadd.s32 %s212, %s213
        %s215 = smul.addr %s214, 4
        %s216 = scalar_lea.vmem %s0, %s215
        %s217 = smul.u32 16, %s18
      $region32: #{resnet_forward.18} parent=27 // pred_fallthru
        _
      // Predicated region
      $region33: #{resnet_forward.18} parent=27 // pred_check
        %p218 = pneg %p71
      $region34: #{resnet_forward.18} parent=27 // pred_check_branch
        %220 = sbr.rel (%p218) target = $region36
      $region35: #{resnet_forward.18} parent=27 // pred_region
        %p221 = scmp.lt.s32.totalorder %s19, 8
        %s222 = scalar_select %p221, %s19, 8
        %s223 = smul.addr %s222, 16
        %s224 = smul.addr %s223, 4
        %s225 = scalar_lea.vmem %s1, %s224
      $region36: #{resnet_forward.18} parent=27 // pred_fallthru
        _
    $region28: #{resnet_forward.18} parent=5 // pred_fallthru
      _
    %p226 = scmp.le.s32.totalorder 1, %s11
    %p227 = scmp.lt.s32.totalorder %s11, 10
    %p228 = pnand %p226, %p227
    %p229 = pneg %p228
    // Predicated region
    $region37: #{resnet_forward.18} parent=5 // pred_check
      _
    $region38: #{resnet_forward.18} parent=5 // pred_check_branch
      %231 = sbr.rel (%p228) target = $region40
    $region39: #{resnet_forward.18} parent=5 // pred_region
      %s232 = ssub.s32 %s11, 1
      %s233 = smul.u32 16, %s20
      %p234 = scmp.lt.s32.totalorder %s21, 8
      %s235 = scalar_select %p234, %s21, 8
      %p236 = scmp.lt.s32.totalorder %s233, 15
      %s237 = scalar_select %p236, %s233, 15
      %s238 = smul.addr %s235, 16
      %s239 = sadd.s32 %s237, %s238
      %s240 = smul.addr %s239, 4
      %s241 = scalar_lea.vmem %s0, %s240
      %p242 = pneg %p51
      %p243 = pneg %p48
      %p244 = scmp.lt.s32.totalorder %s21, 8
      %s245 = scalar_select %p244, %s21, 8
      %s246 = smul.addr %s245, 16
      %s247 = smul.addr %s246, 4
      %s248 = scalar_lea.vmem %s1, %s247
      %p249 = pneg %p77
      %p250 = pneg %p74
      %p251 = pneg %p98
      %p252 = pneg %p95
      %p253 = pneg %p119
      %p254 = pneg %p116
      %s255 = smul.u32 16, %s20
      %p256 = scmp.lt.s32.totalorder %s255, 15
      %s257 = scalar_select %p256, %s255, 15
      %s258 = smul.addr %s257, 4
      %s259 = scalar_lea.vmem %s4, %s258
      %p260 = pneg %p145
      %p261 = pneg %p142
      %p262 = pneg %p171
      %p263 = pneg %p168
      %s264 = smul.u32 16, %s20
      %p265 = scmp.lt.s32.totalorder %s264, 15
      %s266 = scalar_select %p265, %s264, 15
      %s267 = smul.addr %s266, 4
      %s268 = scalar_lea.vmem %s5, %s267
      %s269 = smul.u32 16, %s20
      %p270 = scmp.lt.s32.totalorder %s21, 8
      %s271 = scalar_select %p270, %s21, 8
      %p272 = scmp.lt.s32.totalorder %s269, 15
      %s273 = scalar_select %p272, %s269, 15
      %s274 = smul.addr %s271, 16
      %s275 = sadd.s32 %s273, %s274
      %s276 = smul.addr %s275, 4
      %s277 = scalar_lea.vmem %s0, %s276
      %s278 = smul.u32 16, %s20
      %p279 = scmp.lt.s32.totalorder %s21, 8
      %s280 = scalar_select %p279, %s21, 8
      %s281 = smul.addr %s280, 16
      %s282 = smul.addr %s281, 4
      %s283 = scalar_lea.vmem %s1, %s282
      %s284 = smul.u32 16, %s20
      %p285 = scmp.lt.s32.totalorder %s284, 15
      %s286 = scalar_select %p285, %s284, 15
      %s287 = smul.addr %s286, 4
      %s288 = scalar_lea.vmem %s4, %s287
      %s289 = smul.u32 16, %s20
      %s290 = smul.u32 16, %s20
      %p291 = scmp.lt.s32.totalorder %s290, 15
      %s292 = scalar_select %p291, %s290, 15
      %s293 = smul.addr %s292, 4
      %s294 = scalar_lea.vmem %s5, %s293
      %s295 = smul.u32 16, %s20
      %p297 = scmp.eq.s32.totalorder %s21, 0
      // Predicated region
      $region41: #{resnet_forward.18} parent=39 // pred_check
        %p298 = pneg %p297
      $region42: #{resnet_forward.18} parent=39 // pred_check_branch
        %300 = sbr.rel (%p298) target = $region44
      $region43: #{resnet_forward.18} parent=39 // pred_region
        %301 = vst [vmem:[#allocation2] sm:$0xff] 0.0
        %302 = vst [vmem:[#allocation2 + $0x8] sm:$0xff] 0.0
        %303 = vst [vmem:[#allocation2 + $0x10] sm:$0xff] 0.0
        %304 = vst [vmem:[#allocation2 + $0x18] sm:$0xff] 0.0
        %305 = vst [vmem:[#allocation2 + $0x20] sm:$0xff] 0.0
        %306 = vst [vmem:[#allocation2 + $0x28] sm:$0xff] 0.0
        %307 = vst [vmem:[#allocation2 + $0x30] sm:$0xff] 0.0
        %308 = vst [vmem:[#allocation2 + $0x38] sm:$0xff] 0.0
        %309 = vst [vmem:[#allocation2 + $0x40] sm:$0xff] 0.0
        %310 = vst [vmem:[#allocation2 + $0x48] sm:$0xff] 0.0
        %311 = vst [vmem:[#allocation2 + $0x50] sm:$0xff] 0.0
        %312 = vst [vmem:[#allocation2 + $0x58] sm:$0xff] 0.0
        %313 = vst [vmem:[#allocation2 + $0x60] sm:$0xff] 0.0
        %314 = vst [vmem:[#allocation2 + $0x68] sm:$0xff] 0.0
        %315 = vst [vmem:[#allocation2 + $0x70] sm:$0xff] 0.0
        %316 = vst [vmem:[#allocation2 + $0x78] sm:$0xff] 0.0
      $region44: #{resnet_forward.18} parent=39 // pred_fallthru
        _
      %v317 = vld [vmem:[#allocation2] sm:$0xff]
      %v318 = vld [vmem:[#allocation2 + $0x8] sm:$0xff]
      %v319 = vld [vmem:[#allocation2 + $0x10] sm:$0xff]
      %v320 = vld [vmem:[#allocation2 + $0x18] sm:$0xff]
      %v321 = vld [vmem:[#allocation2 + $0x20] sm:$0xff]
      %v322 = vld [vmem:[#allocation2 + $0x28] sm:$0xff]
      %v323 = vld [vmem:[#allocation2 + $0x30] sm:$0xff]
      %v324 = vld [vmem:[#allocation2 + $0x38] sm:$0xff]
      %v325 = vld [vmem:[#allocation2 + $0x40] sm:$0xff]
      %v326 = vld [vmem:[#allocation2 + $0x48] sm:$0xff]
      %v327 = vld [vmem:[#allocation2 + $0x50] sm:$0xff]
      %v328 = vld [vmem:[#allocation2 + $0x58] sm:$0xff]
      %v329 = vld [vmem:[#allocation2 + $0x60] sm:$0xff]
      %v330 = vld [vmem:[#allocation2 + $0x68] sm:$0xff]
      %v331 = vld [vmem:[#allocation2 + $0x70] sm:$0xff]
      %v332 = vld [vmem:[#allocation2 + $0x78] sm:$0xff]
      %v333 = vld [vmem:[%s277] sm:$0xf]
      %v334 = vld [vmem:[%s277 + $0x4] sm:$0xf]
      %v335 = vld [vmem:[%s277 + $0x8] sm:$0xf]
      %v336 = vld [vmem:[%s277 + $0xc] sm:$0xf]
      %v337 = vld [vmem:[%s277 + $0x10] sm:$0xf]
      %v338 = vld [vmem:[%s277 + $0x14] sm:$0xf]
      %v339 = vld [vmem:[%s277 + $0x18] sm:$0xf]
      %v340 = vld [vmem:[%s277 + $0x1c] sm:$0xf]
      %v341 = vld [vmem:[%s277 + $0x20] sm:$0xf]
      %v342 = vld [vmem:[%s277 + $0x24] sm:$0xf]
      %v343 = vld [vmem:[%s277 + $0x28] sm:$0xf]
      %v344 = vld [vmem:[%s277 + $0x2c] sm:$0xf]
      %v345 = vld [vmem:[%s277 + $0x30] sm:$0xf]
      %v346 = vld [vmem:[%s277 + $0x34] sm:$0xf]
      %v347 = vld [vmem:[%s277 + $0x38] sm:$0xf]
      %v348 = vld [vmem:[%s277 + $0x3c] sm:$0xf]
      %v349 = vld [vmem:[%s283] sm:$0xf]
      %v350 = vld [vmem:[%s283 + $0x4] sm:$0xf]
      %v351 = vld [vmem:[%s283 + $0x8] sm:$0xf]
      %v352 = vld [vmem:[%s283 + $0xc] sm:$0xf]
      %v353 = vld [vmem:[%s283 + $0x10] sm:$0xf]
      %v354 = vld [vmem:[%s283 + $0x14] sm:$0xf]
      %v355 = vld [vmem:[%s283 + $0x18] sm:$0xf]
      %v356 = vld [vmem:[%s283 + $0x1c] sm:$0xf]
      %v357 = vld [vmem:[%s283 + $0x20] sm:$0xf]
      %v358 = vld [vmem:[%s283 + $0x24] sm:$0xf]
      %v359 = vld [vmem:[%s283 + $0x28] sm:$0xf]
      %v360 = vld [vmem:[%s283 + $0x2c] sm:$0xf]
      %v361 = vld [vmem:[%s283 + $0x30] sm:$0xf]
      %v362 = vld [vmem:[%s283 + $0x34] sm:$0xf]
      %v363 = vld [vmem:[%s283 + $0x38] sm:$0xf]
      %v364 = vld [vmem:[%s283 + $0x3c] sm:$0xf]
      %v381 = vunpack.c.l.b16 %v333
      %v382 = vunpack.c.l.b16 %v334
      %v383 = vunpack.c.l.b16 %v335
      %v384 = vunpack.c.l.b16 %v336
      %v385 = vunpack.c.l.b16 %v337
      %v386 = vunpack.c.l.b16 %v338
      %v387 = vunpack.c.l.b16 %v339
      %v388 = vunpack.c.l.b16 %v340
      %v389 = vunpack.c.l.b16 %v341
      %v390 = vunpack.c.l.b16 %v342
      %v391 = vunpack.c.l.b16 %v343
      %v392 = vunpack.c.l.b16 %v344
      %v393 = vunpack.c.l.b16 %v345
      %v394 = vunpack.c.l.b16 %v346
      %v395 = vunpack.c.l.b16 %v347
      %v396 = vunpack.c.l.b16 %v348
      %v397 = vpack.c.b16 %v382, %v381
      %v398 = vpack.c.b16 %v384, %v383
      %v399 = vpack.c.b16 %v386, %v385
      %v400 = vpack.c.b16 %v388, %v387
      %v401 = vpack.c.b16 %v390, %v389
      %v402 = vpack.c.b16 %v392, %v391
      %v403 = vpack.c.b16 %v394, %v393
      %v404 = vpack.c.b16 %v396, %v395
      %v429 = vunpack.c.l.b16 %v349
      %v430 = vunpack.c.l.b16 %v350
      %v431 = vunpack.c.l.b16 %v351
      %v432 = vunpack.c.l.b16 %v352
      %v433 = vunpack.c.l.b16 %v353
      %v434 = vunpack.c.l.b16 %v354
      %v435 = vunpack.c.l.b16 %v355
      %v436 = vunpack.c.l.b16 %v356
      %v437 = vunpack.c.l.b16 %v357
      %v438 = vunpack.c.l.b16 %v358
      %v439 = vunpack.c.l.b16 %v359
      %v440 = vunpack.c.l.b16 %v360
      %v441 = vunpack.c.l.b16 %v361
      %v442 = vunpack.c.l.b16 %v362
      %v443 = vunpack.c.l.b16 %v363
      %v444 = vunpack.c.l.b16 %v364
      %v445 = vpack.c.b16 %v430, %v429
      %v446 = vpack.c.b16 %v432, %v431
      %v447 = vpack.c.b16 %v434, %v433
      %v448 = vpack.c.b16 %v436, %v435
      %v449 = vpack.c.b16 %v438, %v437
      %v450 = vpack.c.b16 %v440, %v439
      %v451 = vpack.c.b16 %v442, %v441
      %v452 = vpack.c.b16 %v444, %v443
      %461 = vmatprep.subr.bf16.mxu0 0
      %462 = vmatpush1.bf16.msra.mxu0 %v445
      %463 = vmatprep.subr.bf16.mxu0 0
      %464 = vmatpush1.bf16.msra.mxu0 %v446
      %465 = vmatprep.subr.bf16.mxu0 0
      %466 = vmatpush1.bf16.msra.mxu0 %v447
      %467 = vmatprep.subr.bf16.mxu0 0
      %468 = vmatpush1.bf16.msra.mxu0 %v448
      %469 = vmatprep.subr.bf16.mxu0 0
      %470 = vmatpush1.bf16.msra.mxu0 %v449
      %471 = vmatprep.subr.bf16.mxu0 0
      %472 = vmatpush1.bf16.msra.mxu0 %v450
      %473 = vmatprep.subr.bf16.mxu0 0
      %474 = vmatpush1.bf16.msra.mxu0 %v451
      %475 = vmatprep.subr.bf16.mxu0 0
      %476 = vmatpush1.bf16.msra.mxu0 %v452
      %477 = vmatprep.subr.bf16.mxu0 0
      %478 = vmatpush1.bf16.msra.mxu0 0
      %479 = vmatprep.subr.bf16.mxu0 0
      %480 = vmatpush1.bf16.msra.mxu0 0
      %481 = vmatprep.subr.bf16.mxu0 0
      %482 = vmatpush1.bf16.msra.mxu0 0
      %483 = vmatprep.subr.bf16.mxu0 0
      %484 = vmatpush1.bf16.msra.mxu0 0
      %485 = vmatprep.subr.bf16.mxu0 0
      %486 = vmatpush1.bf16.msra.mxu0 0
      %487 = vmatprep.subr.bf16.mxu0 0
      %488 = vmatpush1.bf16.msra.mxu0 0
      %489 = vmatprep.subr.bf16.mxu0 0
      %490 = vmatpush1.bf16.msra.mxu0 0
      %491 = vmatprep.subr.bf16.mxu0 0
      %492 = vmatpush1.bf16.msra.mxu0 0
      %493 = vmatprep.mubr.bf16.mxu0 0
      %494 = vmatmul.mubr.bf16.gmra.mrb[0].mxu0 %v397
      %v495 = vpop.f32.mrb[0].mxu0
      %v496 = vadd.f32 0.0, %v495
      %v497 = vpop.f32.mrb[0].mxu0
      %v498 = vpop.f32.mrb[0].mxu0
      %v499 = vadd.f32 0.0, %v498
      %v500 = vpop.f32.mrb[0].mxu0
      %501 = vmatprep.mubr.bf16.mxu0 0
      %502 = vmatmul.mubr.bf16.gmra.mrb[0].mxu0 %v398
      %v503 = vpop.f32.mrb[0].mxu0
      %v504 = vadd.f32 0.0, %v503
      %v505 = vpop.f32.mrb[0].mxu0
      %v506 = vpop.f32.mrb[0].mxu0
      %v507 = vadd.f32 0.0, %v506
      %v508 = vpop.f32.mrb[0].mxu0
      %509 = vmatprep.mubr.bf16.mxu0 0
      %510 = vmatmul.mubr.bf16.gmra.mrb[0].mxu0 %v399
      %v511 = vpop.f32.mrb[0].mxu0
      %v512 = vadd.f32 0.0, %v511
      %v513 = vpop.f32.mrb[0].mxu0
      %v514 = vpop.f32.mrb[0].mxu0
      %v515 = vadd.f32 0.0, %v514
      %v516 = vpop.f32.mrb[0].mxu0
      %517 = vmatprep.mubr.bf16.mxu0 0
      %518 = vmatmul.mubr.bf16.gmra.mrb[0].mxu0 %v400
      %v519 = vpop.f32.mrb[0].mxu0
      %v520 = vadd.f32 0.0, %v519
      %v521 = vpop.f32.mrb[0].mxu0
      %v522 = vpop.f32.mrb[0].mxu0
      %v523 = vadd.f32 0.0, %v522
      %v524 = vpop.f32.mrb[0].mxu0
      %525 = vmatprep.mubr.bf16.mxu0 0
      %526 = vmatmul.mubr.bf16.gmra.mrb[0].mxu0 %v401
      %v527 = vpop.f32.mrb[0].mxu0
      %v528 = vadd.f32 0.0, %v527
      %v529 = vpop.f32.mrb[0].mxu0
      %v530 = vpop.f32.mrb[0].mxu0
      %v531 = vadd.f32 0.0, %v530
      %v532 = vpop.f32.mrb[0].mxu0
      %533 = vmatprep.mubr.bf16.mxu0 0
      %534 = vmatmul.mubr.bf16.gmra.mrb[0].mxu0 %v402
      %v535 = vpop.f32.mrb[0].mxu0
      %v536 = vadd.f32 0.0, %v535
      %v537 = vpop.f32.mrb[0].mxu0
      %v538 = vpop.f32.mrb[0].mxu0
      %v539 = vadd.f32 0.0, %v538
      %v540 = vpop.f32.mrb[0].mxu0
      %541 = vmatprep.mubr.bf16.mxu0 0
      %542 = vmatmul.mubr.bf16.gmra.mrb[0].mxu0 %v403
      %v543 = vpop.f32.mrb[0].mxu0
      %v544 = vadd.f32 0.0, %v543
      %v545 = vpop.f32.mrb[0].mxu0
      %v546 = vpop.f32.mrb[0].mxu0
      %v547 = vadd.f32 0.0, %v546
      %v548 = vpop.f32.mrb[0].mxu0
      %549 = vmatprep.mubr.bf16.mxu0 0
      %550 = vmatmul.mubr.bf16.gmra.mrb[0].mxu0 %v404
      %v551 = vpop.f32.mrb[0].mxu0
      %v552 = vadd.f32 0.0, %v551
      %v553 = vpop.f32.mrb[0].mxu0
      %v554 = vpop.f32.mrb[0].mxu0
      %v555 = vadd.f32 0.0, %v554
      %v556 = vpop.f32.mrb[0].mxu0
      %557 = vdwg.mxu0
      %v558 = vadd.f32 %v317, %v496
      %v559 = vadd.f32 %v318, %v499
      %v560 = vadd.f32 %v319, %v504
      %v561 = vadd.f32 %v320, %v507
      %v562 = vadd.f32 %v321, %v512
      %v563 = vadd.f32 %v322, %v515
      %v564 = vadd.f32 %v323, %v520
      %v565 = vadd.f32 %v324, %v523
      %v566 = vadd.f32 %v325, %v528
      %v567 = vadd.f32 %v326, %v531
      %v568 = vadd.f32 %v327, %v536
      %v569 = vadd.f32 %v328, %v539
      %v570 = vadd.f32 %v329, %v544
      %v571 = vadd.f32 %v330, %v547
      %v572 = vadd.f32 %v331, %v552
      %v573 = vadd.f32 %v332, %v555
      %574 = vst [vmem:[#allocation2] sm:$0xff] %v558
      %575 = vst [vmem:[#allocation2 + $0x8] sm:$0xff] %v559
      %576 = vst [vmem:[#allocation2 + $0x10] sm:$0xff] %v560
      %577 = vst [vmem:[#allocation2 + $0x18] sm:$0xff] %v561
      %578 = vst [vmem:[#allocation2 + $0x20] sm:$0xff] %v562
      %579 = vst [vmem:[#allocation2 + $0x28] sm:$0xff] %v563
      %580 = vst [vmem:[#allocation2 + $0x30] sm:$0xff] %v564
      %581 = vst [vmem:[#allocation2 + $0x38] sm:$0xff] %v565
      %582 = vst [vmem:[#allocation2 + $0x40] sm:$0xff] %v566
      %583 = vst [vmem:[#allocation2 + $0x48] sm:$0xff] %v567
      %584 = vst [vmem:[#allocation2 + $0x50] sm:$0xff] %v568
      %585 = vst [vmem:[#allocation2 + $0x58] sm:$0xff] %v569
      %586 = vst [vmem:[#allocation2 + $0x60] sm:$0xff] %v570
      %587 = vst [vmem:[#allocation2 + $0x68] sm:$0xff] %v571
      %588 = vst [vmem:[#allocation2 + $0x70] sm:$0xff] %v572
      %589 = vst [vmem:[#allocation2 + $0x78] sm:$0xff] %v573
      %p590 = scmp.eq.s32.totalorder %s21, 8
      // Predicated region
      $region45: #{resnet_forward.18} parent=39 // pred_check
        %p591 = pneg %p590
      $region46: #{resnet_forward.18} parent=39 // pred_check_branch
        %593 = sbr.rel (%p591) target = $region48
      $region47: #{resnet_forward.18} parent=39 // pred_region
        %v594 = vld [vmem:[#allocation2] sm:$0xff]
        %v595 = vld [vmem:[#allocation2 + $0x8] sm:$0xff]
        %v596 = vld [vmem:[#allocation2 + $0x10] sm:$0xff]
        %v597 = vld [vmem:[#allocation2 + $0x18] sm:$0xff]
        %v598 = vld [vmem:[#allocation2 + $0x20] sm:$0xff]
        %v599 = vld [vmem:[#allocation2 + $0x28] sm:$0xff]
        %v600 = vld [vmem:[#allocation2 + $0x30] sm:$0xff]
        %v601 = vld [vmem:[#allocation2 + $0x38] sm:$0xff]
        %v602 = vld [vmem:[#allocation2 + $0x40] sm:$0xff]
        %v603 = vld [vmem:[#allocation2 + $0x48] sm:$0xff]
        %v604 = vld [vmem:[#allocation2 + $0x50] sm:$0xff]
        %v605 = vld [vmem:[#allocation2 + $0x58] sm:$0xff]
        %v606 = vld [vmem:[#allocation2 + $0x60] sm:$0xff]
        %v607 = vld [vmem:[#allocation2 + $0x68] sm:$0xff]
        %v608 = vld [vmem:[#allocation2 + $0x70] sm:$0xff]
        %v609 = vld [vmem:[#allocation2 + $0x78] sm:$0xff]
        %v610 = vld [vmem:[%s2] sm:$0x1]
        %v612 = vlaneseq
        %v613 = vshrl.u32 %v612, 7
        %v614 = vsub.s32 0, %v613
        %v615 = vrot.slane %v610, %v614
        %v617 = vmul.f32 %v594, %v615
        %v618 = vmul.f32 %v595, %v615
        %v619 = vmul.f32 %v596, %v615
        %v620 = vmul.f32 %v597, %v615
        %v621 = vmul.f32 %v598, %v615
        %v622 = vmul.f32 %v599, %v615
        %v623 = vmul.f32 %v600, %v615
        %v624 = vmul.f32 %v601, %v615
        %v625 = vmul.f32 %v602, %v615
        %v626 = vmul.f32 %v603, %v615
        %v627 = vmul.f32 %v604, %v615
        %v628 = vmul.f32 %v605, %v615
        %v629 = vmul.f32 %v606, %v615
        %v630 = vmul.f32 %v607, %v615
        %v631 = vmul.f32 %v608, %v615
        %v632 = vmul.f32 %v609, %v615
        %v633 = vld [vmem:[%s3] sm:$0x1]
        %v635 = vlaneseq
        %v636 = vshrl.u32 %v635, 7
        %v637 = vsub.s32 0, %v636
        %v638 = vrot.slane %v633, %v637
        %v640 = vadd.f32 %v617, %v638
        %v641 = vadd.f32 %v618, %v638
        %v642 = vadd.f32 %v619, %v638
        %v643 = vadd.f32 %v620, %v638
        %v644 = vadd.f32 %v621, %v638
        %v645 = vadd.f32 %v622, %v638
        %v646 = vadd.f32 %v623, %v638
        %v647 = vadd.f32 %v624, %v638
        %v648 = vadd.f32 %v625, %v638
        %v649 = vadd.f32 %v626, %v638
        %v650 = vadd.f32 %v627, %v638
        %v651 = vadd.f32 %v628, %v638
        %v652 = vadd.f32 %v629, %v638
        %v653 = vadd.f32 %v630, %v638
        %v654 = vadd.f32 %v631, %v638
        %v655 = vadd.f32 %v632, %v638
        %v656 = vld [vmem:[%s288] sm:$0xf]
        %v657 = vld [vmem:[%s288 + $0x4] sm:$0xf]
        %v658 = vld [vmem:[%s288 + $0x8] sm:$0xf]
        %v659 = vld [vmem:[%s288 + $0xc] sm:$0xf]
        %v660 = vld [vmem:[%s288 + $0x10] sm:$0xf]
        %v661 = vld [vmem:[%s288 + $0x14] sm:$0xf]
        %v662 = vld [vmem:[%s288 + $0x18] sm:$0xf]
        %v663 = vld [vmem:[%s288 + $0x1c] sm:$0xf]
        %v664 = vld [vmem:[%s288 + $0x20] sm:$0xf]
        %v665 = vld [vmem:[%s288 + $0x24] sm:$0xf]
        %v666 = vld [vmem:[%s288 + $0x28] sm:$0xf]
        %v667 = vld [vmem:[%s288 + $0x2c] sm:$0xf]
        %v668 = vld [vmem:[%s288 + $0x30] sm:$0xf]
        %v669 = vld [vmem:[%s288 + $0x34] sm:$0xf]
        %v670 = vld [vmem:[%s288 + $0x38] sm:$0xf]
        %v671 = vld [vmem:[%s288 + $0x3c] sm:$0xf]
        %v672 = vunpack.c.l.bf16 %v656
        %v673 = vunpack.c.l.bf16 %v657
        %v674 = vunpack.c.l.bf16 %v658
        %v675 = vunpack.c.l.bf16 %v659
        %v676 = vunpack.c.l.bf16 %v660
        %v677 = vunpack.c.l.bf16 %v661
        %v678 = vunpack.c.l.bf16 %v662
        %v679 = vunpack.c.l.bf16 %v663
        %v680 = vunpack.c.l.bf16 %v664
        %v681 = vunpack.c.l.bf16 %v665
        %v682 = vunpack.c.l.bf16 %v666
        %v683 = vunpack.c.l.bf16 %v667
        %v684 = vunpack.c.l.bf16 %v668
        %v685 = vunpack.c.l.bf16 %v669
        %v686 = vunpack.c.l.bf16 %v670
        %v687 = vunpack.c.l.bf16 %v671
        %v688 = vadd.f32 %v640, %v672
        %v689 = vadd.f32 %v641, %v673
        %v690 = vadd.f32 %v642, %v674
        %v691 = vadd.f32 %v643, %v675
        %v692 = vadd.f32 %v644, %v676
        %v693 = vadd.f32 %v645, %v677
        %v694 = vadd.f32 %v646, %v678
        %v695 = vadd.f32 %v647, %v679
        %v696 = vadd.f32 %v648, %v680
        %v697 = vadd.f32 %v649, %v681
        %v698 = vadd.f32 %v650, %v682
        %v699 = vadd.f32 %v651, %v683
        %v700 = vadd.f32 %v652, %v684
        %v701 = vadd.f32 %v653, %v685
        %v702 = vadd.f32 %v654, %v686
        %v703 = vadd.f32 %v655, %v687
        %v704 = vmax.f32 %v688, 0.0
        %v705 = vmax.f32 %v689, 0.0
        %v706 = vmax.f32 %v690, 0.0
        %v707 = vmax.f32 %v691, 0.0
        %v708 = vmax.f32 %v692, 0.0
        %v709 = vmax.f32 %v693, 0.0
        %v710 = vmax.f32 %v694, 0.0
        %v711 = vmax.f32 %v695, 0.0
        %v712 = vmax.f32 %v696, 0.0
        %v713 = vmax.f32 %v697, 0.0
        %v714 = vmax.f32 %v698, 0.0
        %v715 = vmax.f32 %v699, 0.0
        %v716 = vmax.f32 %v700, 0.0
        %v717 = vmax.f32 %v701, 0.0
        %v718 = vmax.f32 %v702, 0.0
        %v719 = vmax.f32 %v703, 0.0
        %v720 = vpack.c.bf16 %v705, %v704
        %v721 = vpack.c.bf16 %v707, %v706
        %v722 = vpack.c.bf16 %v709, %v708
        %v723 = vpack.c.bf16 %v711, %v710
        %v724 = vpack.c.bf16 %v713, %v712
        %v725 = vpack.c.bf16 %v715, %v714
        %v726 = vpack.c.bf16 %v717, %v716
        %v727 = vpack.c.bf16 %v719, %v718
        %v736 = vunpack.c.l.b16 %v720
        %v737 = vunpack.c.h.b16 %v720
        %v738 = vunpack.c.l.b16 %v721
        %v739 = vunpack.c.h.b16 %v721
        %v740 = vunpack.c.l.b16 %v722
        %v741 = vunpack.c.h.b16 %v722
        %v742 = vunpack.c.l.b16 %v723
        %v743 = vunpack.c.h.b16 %v723
        %v744 = vunpack.c.l.b16 %v724
        %v745 = vunpack.c.h.b16 %v724
        %v746 = vunpack.c.l.b16 %v725
        %v747 = vunpack.c.h.b16 %v725
        %v748 = vunpack.c.l.b16 %v726
        %v749 = vunpack.c.h.b16 %v726
        %v750 = vunpack.c.l.b16 %v727
        %v751 = vunpack.c.h.b16 %v727
        %v752 = vpack.c.b16 %v736, %v736
        %v753 = vpack.c.b16 %v737, %v737
        %v754 = vpack.c.b16 %v738, %v738
        %v755 = vpack.c.b16 %v739, %v739
        %v756 = vpack.c.b16 %v740, %v740
        %v757 = vpack.c.b16 %v741, %v741
        %v758 = vpack.c.b16 %v742, %v742
        %v759 = vpack.c.b16 %v743, %v743
        %v760 = vpack.c.b16 %v744, %v744
        %v761 = vpack.c.b16 %v745, %v745
        %v762 = vpack.c.b16 %v746, %v746
        %v763 = vpack.c.b16 %v747, %v747
        %v764 = vpack.c.b16 %v748, %v748
        %v765 = vpack.c.b16 %v749, %v749
        %v766 = vpack.c.b16 %v750, %v750
        %v767 = vpack.c.b16 %v751, %v751
        %784 = vst [vmem:[%s294] sm:$0xf] %v752
        %785 = vst [vmem:[%s294 + $0x4] sm:$0xf] %v753
        %786 = vst [vmem:[%s294 + $0x8] sm:$0xf] %v754
        %787 = vst [vmem:[%s294 + $0xc] sm:$0xf] %v755
        %788 = vst [vmem:[%s294 + $0x10] sm:$0xf] %v756
        %789 = vst [vmem:[%s294 + $0x14] sm:$0xf] %v757
        %790 = vst [vmem:[%s294 + $0x18] sm:$0xf] %v758
        %791 = vst [vmem:[%s294 + $0x1c] sm:$0xf] %v759
        %792 = vst [vmem:[%s294 + $0x20] sm:$0xf] %v760
        %793 = vst [vmem:[%s294 + $0x24] sm:$0xf] %v761
        %794 = vst [vmem:[%s294 + $0x28] sm:$0xf] %v762
        %795 = vst [vmem:[%s294 + $0x2c] sm:$0xf] %v763
        %796 = vst [vmem:[%s294 + $0x30] sm:$0xf] %v764
        %797 = vst [vmem:[%s294 + $0x34] sm:$0xf] %v765
        %798 = vst [vmem:[%s294 + $0x38] sm:$0xf] %v766
        %799 = vst [vmem:[%s294 + $0x3c] sm:$0xf] %v767
      $region48: #{resnet_forward.18} parent=39 // pred_fallthru
        _
      %s800 = smul.u32 16, %s20
      %p801 = scmp.lt.s32.totalorder %s800, 15
      %s802 = scalar_select %p801, %s800, 15
      %s803 = smul.addr %s802, 4
      %s804 = scalar_lea.vmem %s5, %s803
      // Predicated region
      $region49: #{resnet_forward.18} parent=39 // pred_check
        %p805 = pneg %p168
      $region50: #{resnet_forward.18} parent=39 // pred_check_branch
        %807 = sbr.rel (%p805) target = $region52
      $region51: #{resnet_forward.18} parent=39 // pred_region
        %s808 = smul.u32 16, %s20
      $region52: #{resnet_forward.18} parent=39 // pred_fallthru
        _
      // Predicated region
      $region53: #{resnet_forward.18} parent=39 // pred_check
        %p809 = pneg %p168
      $region54: #{resnet_forward.18} parent=39 // pred_check_branch
        %811 = sbr.rel (%p809) target = $region56
      $region55: #{resnet_forward.18} parent=39 // pred_region
        %s812 = smul.u32 16, %s20
        %p813 = scmp.lt.s32.totalorder %s812, 15
        %s814 = scalar_select %p813, %s812, 15
        %s815 = smul.addr %s814, 4
        %s816 = scalar_lea.vmem %s5, %s815
      $region56: #{resnet_forward.18} parent=39 // pred_fallthru
        _
    $region40: #{resnet_forward.18} parent=5 // pred_fallthru
      _
    %p817 = scmp.le.s32.totalorder 2, %s11
    // Predicated region
    $region57: #{resnet_forward.18} parent=5 // pred_check
      %p818 = pneg %p817
    $region58: #{resnet_forward.18} parent=5 // pred_check_branch
      %820 = sbr.rel (%p818) target = $region60
    $region59: #{resnet_forward.18} parent=5 // pred_region
      %s821 = ssub.s32 %s11, 2
    $region60: #{resnet_forward.18} parent=5 // pred_fallthru
      _
  $region6: #{resnet_forward.18} parent=0 // loop_footer
    %s15 = sadd.s32 1, %s11
  $region7: #{resnet_forward.18} parent=0 // loop_footer_branch
    %10 = sbr.rel target = $region3
  $region8: #{resnet_forward.18} parent=0 // loop_exit
    _

// kernel: resnet_forward.16
$region0: #{resnet_forward.16}
  #allocation0 [shape = 'u32[]', space=smem, size = 0x4, offset = 0x4, fixed_abs, tag = 'smem constant byte address 0x4 - core index']
  #allocation1 [shape = 'u32[144,128]{1,0:T(1,128)}', space=vmem, size = 0x12000, scoped, tag = 'internal scratch']
  #allocation2 [shape = 'f32[128,128]{1,0:T(8,128)}', space=vmem, size = 0x10000, scoped, tag = 'scratch operand']
  %s0 = inlined_call_operand.vmem [shape: bf16[1,128,64], index: 0, kind: input, shape index: {}]
  %s1 = inlined_call_operand.vmem [shape: bf16[1,64,128], index: 1, kind: input, shape index: {}]
  %s2 = inlined_call_operand.vmem [shape: f32[1,128], index: 2, kind: input, shape index: {}]
  %s3 = inlined_call_operand.vmem [shape: f32[1,128], index: 3, kind: input, shape index: {}]
  %s4 = inlined_call_operand.vmem [shape: bf16[128,128], index: 4, kind: output, shape index: {}]
  %s5 = sld [smem:[#allocation0]]
  $region34: #{resnet_forward.16} parent=0
    _
  %s7 = ssub.s32 1, %s5
  %s8 = scalar_select 0, %s7, %s5
  // Predicated region
  $region2: #{resnet_forward.16} parent=0 // pred_check
    _
  $region3: #{resnet_forward.16} parent=0 // pred_check_branch
    %10 = sbr.rel (0) target = $region5
  $region4: #{resnet_forward.16} parent=0 // pred_region
    _
  $region5: #{resnet_forward.16} parent=0 // pred_fallthru
    _
  // Predicated region
  $region6: #{resnet_forward.16} parent=0 // pred_check
    _
  $region7: #{resnet_forward.16} parent=0 // pred_check_branch
    %12 = sbr.rel (0) target = $region9
  $region8: #{resnet_forward.16} parent=0 // pred_region
    _
  $region9: #{resnet_forward.16} parent=0 // pred_fallthru
    _
  // Predicated region
  $region10: #{resnet_forward.16} parent=0 // pred_check
    _
  $region11: #{resnet_forward.16} parent=0 // pred_check_branch
    %14 = sbr.rel (0) target = $region13
  $region12: #{resnet_forward.16} parent=0 // pred_region
    _
  $region13: #{resnet_forward.16} parent=0 // pred_fallthru
    _
  // Predicated region
  $region14: #{resnet_forward.16} parent=0 // pred_check
    _
  $region15: #{resnet_forward.16} parent=0 // pred_check_branch
    %16 = sbr.rel (0) target = $region17
  $region16: #{resnet_forward.16} parent=0 // pred_region
    _
  $region17: #{resnet_forward.16} parent=0 // pred_fallthru
    _
  %p18 = scmp.eq.s32.totalorder 0, 0
  // Predicated region
  $region18: #{resnet_forward.16} parent=0 // pred_check
    %p19 = pneg %p18
  $region19: #{resnet_forward.16} parent=0 // pred_check_branch
    %21 = sbr.rel (%p19) target = $region21
  $region20: #{resnet_forward.16} parent=0 // pred_region
    %22 = vst [vmem:[#allocation2] sm:$0xff] 0.0
    %23 = vst [vmem:[#allocation2 + $0x8] sm:$0xff] 0.0
    %24 = vst [vmem:[#allocation2 + $0x10] sm:$0xff] 0.0
    %25 = vst [vmem:[#allocation2 + $0x18] sm:$0xff] 0.0
    %26 = vst [vmem:[#allocation2 + $0x20] sm:$0xff] 0.0
    %27 = vst [vmem:[#allocation2 + $0x28] sm:$0xff] 0.0
    %28 = vst [vmem:[#allocation2 + $0x30] sm:$0xff] 0.0
    %29 = vst [vmem:[#allocation2 + $0x38] sm:$0xff] 0.0
    %30 = vst [vmem:[#allocation2 + $0x40] sm:$0xff] 0.0
    %31 = vst [vmem:[#allocation2 + $0x48] sm:$0xff] 0.0
    %32 = vst [vmem:[#allocation2 + $0x50] sm:$0xff] 0.0
    %33 = vst [vmem:[#allocation2 + $0x58] sm:$0xff] 0.0
    %34 = vst [vmem:[#allocation2 + $0x60] sm:$0xff] 0.0
    %35 = vst [vmem:[#allocation2 + $0x68] sm:$0xff] 0.0
    %36 = vst [vmem:[#allocation2 + $0x70] sm:$0xff] 0.0
    %37 = vst [vmem:[#allocation2 + $0x78] sm:$0xff] 0.0
  $region21: #{resnet_forward.16} parent=0 // pred_fallthru
    _
  %v38 = vld [vmem:[#allocation2] sm:$0xff]
  %v39 = vld [vmem:[#allocation2 + $0x8] sm:$0xff]
  %v40 = vld [vmem:[#allocation2 + $0x10] sm:$0xff]
  %v41 = vld [vmem:[#allocation2 + $0x18] sm:$0xff]
  %v42 = vld [vmem:[#allocation2 + $0x20] sm:$0xff]
  %v43 = vld [vmem:[#allocation2 + $0x28] sm:$0xff]
  %v44 = vld [vmem:[#allocation2 + $0x30] sm:$0xff]
  %v45 = vld [vmem:[#allocation2 + $0x38] sm:$0xff]
  %v46 = vld [vmem:[#allocation2 + $0x40] sm:$0xff]
  %v47 = vld [vmem:[#allocation2 + $0x48] sm:$0xff]
  %v48 = vld [vmem:[#allocation2 + $0x50] sm:$0xff]
  %v49 = vld [vmem:[#allocation2 + $0x58] sm:$0xff]
  %v50 = vld [vmem:[#allocation2 + $0x60] sm:$0xff]
  %v51 = vld [vmem:[#allocation2 + $0x68] sm:$0xff]
  %v52 = vld [vmem:[#allocation2 + $0x70] sm:$0xff]
  %v53 = vld [vmem:[#allocation2 + $0x78] sm:$0xff]
  %v54 = vld [vmem:[%s0] sm:$0xf]
  %v55 = vld [vmem:[%s0 + $0x4] sm:$0xf]
  %v56 = vld [vmem:[%s0 + $0x8] sm:$0xf]
  %v57 = vld [vmem:[%s0 + $0xc] sm:$0xf]
  %v58 = vld [vmem:[%s0 + $0x10] sm:$0xf]
  %v59 = vld [vmem:[%s0 + $0x14] sm:$0xf]
  %v60 = vld [vmem:[%s0 + $0x18] sm:$0xf]
  %v61 = vld [vmem:[%s0 + $0x1c] sm:$0xf]
  %v62 = vld [vmem:[%s0 + $0x20] sm:$0xf]
  %v63 = vld [vmem:[%s0 + $0x24] sm:$0xf]
  %v64 = vld [vmem:[%s0 + $0x28] sm:$0xf]
  %v65 = vld [vmem:[%s0 + $0x2c] sm:$0xf]
  %v66 = vld [vmem:[%s0 + $0x30] sm:$0xf]
  %v67 = vld [vmem:[%s0 + $0x34] sm:$0xf]
  %v68 = vld [vmem:[%s0 + $0x38] sm:$0xf]
  %v69 = vld [vmem:[%s0 + $0x3c] sm:$0xf]
  %v70 = vld [vmem:[%s1] sm:$0xf]
  %v71 = vld [vmem:[%s1 + $0x4] sm:$0xf]
  %v72 = vld [vmem:[%s1 + $0x8] sm:$0xf]
  %v73 = vld [vmem:[%s1 + $0xc] sm:$0xf]
  %v74 = vld [vmem:[%s1 + $0x10] sm:$0xf]
  %v75 = vld [vmem:[%s1 + $0x14] sm:$0xf]
  %v76 = vld [vmem:[%s1 + $0x18] sm:$0xf]
  %v77 = vld [vmem:[%s1 + $0x1c] sm:$0xf]
  %v94 = vunpack.c.l.b16 %v54
  %v95 = vunpack.c.l.b16 %v55
  %v96 = vunpack.c.l.b16 %v56
  %v97 = vunpack.c.l.b16 %v57
  %v98 = vunpack.c.l.b16 %v58
  %v99 = vunpack.c.l.b16 %v59
  %v100 = vunpack.c.l.b16 %v60
  %v101 = vunpack.c.l.b16 %v61
  %v102 = vunpack.c.l.b16 %v62
  %v103 = vunpack.c.l.b16 %v63
  %v104 = vunpack.c.l.b16 %v64
  %v105 = vunpack.c.l.b16 %v65
  %v106 = vunpack.c.l.b16 %v66
  %v107 = vunpack.c.l.b16 %v67
  %v108 = vunpack.c.l.b16 %v68
  %v109 = vunpack.c.l.b16 %v69
  %v110 = vpack.c.b16 %v95, %v94
  %v111 = vpack.c.b16 %v97, %v96
  %v112 = vpack.c.b16 %v99, %v98
  %v113 = vpack.c.b16 %v101, %v100
  %v114 = vpack.c.b16 %v103, %v102
  %v115 = vpack.c.b16 %v105, %v104
  %v116 = vpack.c.b16 %v107, %v106
  %v117 = vpack.c.b16 %v109, %v108
  %v126 = vunpack.c.l.b16 %v70
  %v127 = vunpack.c.l.b16 %v71
  %v128 = vunpack.c.l.b16 %v72
  %v129 = vunpack.c.l.b16 %v73
  %v130 = vunpack.c.l.b16 %v74
  %v131 = vunpack.c.l.b16 %v75
  %v132 = vunpack.c.l.b16 %v76
  %v133 = vunpack.c.l.b16 %v77
  %v134 = vpack.c.b16 %v127, %v126
  %v135 = vpack.c.b16 %v129, %v128
  %v136 = vpack.c.b16 %v131, %v130
  %v137 = vpack.c.b16 %v133, %v132
  %vm142 = vcmask 523264
  %v144 = vsel %vm142, %v110, 0
  %v147 = vsel %vm142, %v111, 0
  %v150 = vsel %vm142, %v112, 0
  %v153 = vsel %vm142, %v113, 0
  %v156 = vsel %vm142, %v114, 0
  %v159 = vsel %vm142, %v115, 0
  %v162 = vsel %vm142, %v116, 0
  %v165 = vsel %vm142, %v117, 0
  %167 = vmatprep.subr.bf16.mxu0 0
  %168 = vmatpush1.bf16.msra.mxu0 %v134
  %169 = vmatprep.subr.bf16.mxu0 0
  %170 = vmatpush1.bf16.msra.mxu0 %v135
  %171 = vmatprep.subr.bf16.mxu0 0
  %172 = vmatpush1.bf16.msra.mxu0 %v136
  %173 = vmatprep.subr.bf16.mxu0 0
  %174 = vmatpush1.bf16.msra.mxu0 %v137
  %175 = vmatprep.subr.bf16.mxu0 0
  %176 = vmatpush1.bf16.msra.mxu0 0
  %177 = vmatprep.subr.bf16.mxu0 0
  %178 = vmatpush1.bf16.msra.mxu0 0
  %179 = vmatprep.subr.bf16.mxu0 0
  %180 = vmatpush1.bf16.msra.mxu0 0
  %181 = vmatprep.subr.bf16.mxu0 0
  %182 = vmatpush1.bf16.msra.mxu0 0
  %183 = vmatprep.subr.bf16.mxu0 0
  %184 = vmatpush1.bf16.msra.mxu0 0
  %185 = vmatprep.subr.bf16.mxu0 0
  %186 = vmatpush1.bf16.msra.mxu0 0
  %187 = vmatprep.subr.bf16.mxu0 0
  %188 = vmatpush1.bf16.msra.mxu0 0
  %189 = vmatprep.subr.bf16.mxu0 0
  %190 = vmatpush1.bf16.msra.mxu0 0
  %191 = vmatprep.subr.bf16.mxu0 0
  %192 = vmatpush1.bf16.msra.mxu0 0
  %193 = vmatprep.subr.bf16.mxu0 0
  %194 = vmatpush1.bf16.msra.mxu0 0
  %195 = vmatprep.subr.bf16.mxu0 0
  %196 = vmatpush1.bf16.msra.mxu0 0
  %197 = vmatprep.subr.bf16.mxu0 0
  %198 = vmatpush1.bf16.msra.mxu0 0
  %199 = vmatprep.mubr.bf16.mxu0 0
  %200 = vmatmul.mubr.bf16.gmra.mrb[0].mxu0 %v144
  %v201 = vpop.f32.mrb[0].mxu0
  %v202 = vadd.f32 0.0, %v201
  %v203 = vpop.f32.mrb[0].mxu0
  %v204 = vpop.f32.mrb[0].mxu0
  %v205 = vadd.f32 0.0, %v204
  %v206 = vpop.f32.mrb[0].mxu0
  %207 = vmatprep.mubr.bf16.mxu0 0
  %208 = vmatmul.mubr.bf16.gmra.mrb[0].mxu0 %v147
  %v209 = vpop.f32.mrb[0].mxu0
  %v210 = vadd.f32 0.0, %v209
  %v211 = vpop.f32.mrb[0].mxu0
  %v212 = vpop.f32.mrb[0].mxu0
  %v213 = vadd.f32 0.0, %v212
  %v214 = vpop.f32.mrb[0].mxu0
  %215 = vmatprep.mubr.bf16.mxu0 0
  %216 = vmatmul.mubr.bf16.gmra.mrb[0].mxu0 %v150
  %v217 = vpop.f32.mrb[0].mxu0
  %v218 = vadd.f32 0.0, %v217
  %v219 = vpop.f32.mrb[0].mxu0
  %v220 = vpop.f32.mrb[0].mxu0
  %v221 = vadd.f32 0.0, %v220
  %v222 = vpop.f32.mrb[0].mxu0
  %223 = vmatprep.mubr.bf16.mxu0 0
  %224 = vmatmul.mubr.bf16.gmra.mrb[0].mxu0 %v153
  %v225 = vpop.f32.mrb[0].mxu0
  %v226 = vadd.f32 0.0, %v225
  %v227 = vpop.f32.mrb[0].mxu0
  %v228 = vpop.f32.mrb[0].mxu0
  %v229 = vadd.f32 0.0, %v228
  %v230 = vpop.f32.mrb[0].mxu0
  %231 = vmatprep.mubr.bf16.mxu0 0
  %232 = vmatmul.mubr.bf16.gmra.mrb[0].mxu0 %v156
  %v233 = vpop.f32.mrb[0].mxu0
  %v234 = vadd.f32 0.0, %v233
  %v235 = vpop.f32.mrb[0].mxu0
  %v236 = vpop.f32.mrb[0].mxu0
  %v237 = vadd.f32 0.0, %v236
  %v238 = vpop.f32.mrb[0].mxu0
  %239 = vmatprep.mubr.bf16.mxu0 0
  %240 = vmatmul.mubr.bf16.gmra.mrb[0].mxu0 %v159
  %v241 = vpop.f32.mrb[0].mxu0
  %v242 = vadd.f32 0.0, %v241
  %v243 = vpop.f32.mrb[0].mxu0
  %v244 = vpop.f32.mrb[0].mxu0
  %v245 = vadd.f32 0.0, %v244
  %v246 = vpop.f32.mrb[0].mxu0
  %247 = vmatprep.mubr.bf16.mxu0 0
  %248 = vmatmul.mubr.bf16.gmra.mrb[0].mxu0 %v162
  %v249 = vpop.f32.mrb[0].mxu0
  %v250 = vadd.f32 0.0, %v249
  %v251 = vpop.f32.mrb[0].mxu0
  %v252 = vpop.f32.mrb[0].mxu0
  %v253 = vadd.f32 0.0, %v252
  %v254 = vpop.f32.mrb[0].mxu0
  %255 = vmatprep.mubr.bf16.mxu0 0
  %256 = vmatmul.mubr.bf16.gmra.mrb[0].mxu0 %v165
  %v257 = vpop.f32.mrb[0].mxu0
  %v258 = vadd.f32 0.0, %v257
  %v259 = vpop.f32.mrb[0].mxu0
  %v260 = vpop.f32.mrb[0].mxu0
  %v261 = vadd.f32 0.0, %v260
  %v262 = vpop.f32.mrb[0].mxu0
  %263 = vdwg.mxu0
  %v264 = vadd.f32 %v38, %v202
  %v265 = vadd.f32 %v39, %v205
  %v266 = vadd.f32 %v40, %v210
  %v267 = vadd.f32 %v41, %v213
  %v268 = vadd.f32 %v42, %v218
  %v269 = vadd.f32 %v43, %v221
  %v270 = vadd.f32 %v44, %v226
  %v271 = vadd.f32 %v45, %v229
  %v272 = vadd.f32 %v46, %v234
  %v273 = vadd.f32 %v47, %v237
  %v274 = vadd.f32 %v48, %v242
  %v275 = vadd.f32 %v49, %v245
  %v276 = vadd.f32 %v50, %v250
  %v277 = vadd.f32 %v51, %v253
  %v278 = vadd.f32 %v52, %v258
  %v279 = vadd.f32 %v53, %v261
  %280 = vst [vmem:[#allocation2] sm:$0xff] %v264
  %281 = vst [vmem:[#allocation2 + $0x8] sm:$0xff] %v265
  %282 = vst [vmem:[#allocation2 + $0x10] sm:$0xff] %v266
  %283 = vst [vmem:[#allocation2 + $0x18] sm:$0xff] %v267
  %284 = vst [vmem:[#allocation2 + $0x20] sm:$0xff] %v268
  %285 = vst [vmem:[#allocation2 + $0x28] sm:$0xff] %v269
  %286 = vst [vmem:[#allocation2 + $0x30] sm:$0xff] %v270
  %287 = vst [vmem:[#allocation2 + $0x38] sm:$0xff] %v271
  %288 = vst [vmem:[#allocation2 + $0x40] sm:$0xff] %v272
  %289 = vst [vmem:[#allocation2 + $0x48] sm:$0xff] %v273
  %290 = vst [vmem:[#allocation2 + $0x50] sm:$0xff] %v274
  %291 = vst [vmem:[#allocation2 + $0x58] sm:$0xff] %v275
  %292 = vst [vmem:[#allocation2 + $0x60] sm:$0xff] %v276
  %293 = vst [vmem:[#allocation2 + $0x68] sm:$0xff] %v277
  %294 = vst [vmem:[#allocation2 + $0x70] sm:$0xff] %v278
  %295 = vst [vmem:[#allocation2 + $0x78] sm:$0xff] %v279
  // Predicated region
  $region22: #{resnet_forward.16} parent=0 // pred_check
    %p296 = pneg %p18
  $region23: #{resnet_forward.16} parent=0 // pred_check_branch
    %298 = sbr.rel (%p296) target = $region25
  $region24: #{resnet_forward.16} parent=0 // pred_region
    %v299 = vld [vmem:[#allocation2] sm:$0xff]
    %v300 = vld [vmem:[#allocation2 + $0x8] sm:$0xff]
    %v301 = vld [vmem:[#allocation2 + $0x10] sm:$0xff]
    %v302 = vld [vmem:[#allocation2 + $0x18] sm:$0xff]
    %v303 = vld [vmem:[#allocation2 + $0x20] sm:$0xff]
    %v304 = vld [vmem:[#allocation2 + $0x28] sm:$0xff]
    %v305 = vld [vmem:[#allocation2 + $0x30] sm:$0xff]
    %v306 = vld [vmem:[#allocation2 + $0x38] sm:$0xff]
    %v307 = vld [vmem:[#allocation2 + $0x40] sm:$0xff]
    %v308 = vld [vmem:[#allocation2 + $0x48] sm:$0xff]
    %v309 = vld [vmem:[#allocation2 + $0x50] sm:$0xff]
    %v310 = vld [vmem:[#allocation2 + $0x58] sm:$0xff]
    %v311 = vld [vmem:[#allocation2 + $0x60] sm:$0xff]
    %v312 = vld [vmem:[#allocation2 + $0x68] sm:$0xff]
    %v313 = vld [vmem:[#allocation2 + $0x70] sm:$0xff]
    %v314 = vld [vmem:[#allocation2 + $0x78] sm:$0xff]
    %v315 = vld [vmem:[%s2] sm:$0x1]
    %v317 = vlaneseq
    %v318 = vshrl.u32 %v317, 7
    %v319 = vsub.s32 0, %v318
    %v320 = vrot.slane %v315, %v319
    %v322 = vmul.f32 %v299, %v320
    %v323 = vmul.f32 %v300, %v320
    %v324 = vmul.f32 %v301, %v320
    %v325 = vmul.f32 %v302, %v320
    %v326 = vmul.f32 %v303, %v320
    %v327 = vmul.f32 %v304, %v320
    %v328 = vmul.f32 %v305, %v320
    %v329 = vmul.f32 %v306, %v320
    %v330 = vmul.f32 %v307, %v320
    %v331 = vmul.f32 %v308, %v320
    %v332 = vmul.f32 %v309, %v320
    %v333 = vmul.f32 %v310, %v320
    %v334 = vmul.f32 %v311, %v320
    %v335 = vmul.f32 %v312, %v320
    %v336 = vmul.f32 %v313, %v320
    %v337 = vmul.f32 %v314, %v320
    %v338 = vld [vmem:[%s3] sm:$0x1]
    %v340 = vlaneseq
    %v341 = vshrl.u32 %v340, 7
    %v342 = vsub.s32 0, %v341
    %v343 = vrot.slane %v338, %v342
    %v345 = vadd.f32 %v322, %v343
    %v346 = vadd.f32 %v323, %v343
    %v347 = vadd.f32 %v324, %v343
    %v348 = vadd.f32 %v325, %v343
    %v349 = vadd.f32 %v326, %v343
    %v350 = vadd.f32 %v327, %v343
    %v351 = vadd.f32 %v328, %v343
    %v352 = vadd.f32 %v329, %v343
    %v353 = vadd.f32 %v330, %v343
    %v354 = vadd.f32 %v331, %v343
    %v355 = vadd.f32 %v332, %v343
    %v356 = vadd.f32 %v333, %v343
    %v357 = vadd.f32 %v334, %v343
    %v358 = vadd.f32 %v335, %v343
    %v359 = vadd.f32 %v336, %v343
    %v360 = vadd.f32 %v337, %v343
    %v361 = vpack.c.bf16 %v346, %v345
    %v362 = vpack.c.bf16 %v348, %v347
    %v363 = vpack.c.bf16 %v350, %v349
    %v364 = vpack.c.bf16 %v352, %v351
    %v365 = vpack.c.bf16 %v354, %v353
    %v366 = vpack.c.bf16 %v356, %v355
    %v367 = vpack.c.bf16 %v358, %v357
    %v368 = vpack.c.bf16 %v360, %v359
    %v377 = vunpack.c.l.b16 %v361
    %v378 = vunpack.c.h.b16 %v361
    %v379 = vunpack.c.l.b16 %v362
    %v380 = vunpack.c.h.b16 %v362
    %v381 = vunpack.c.l.b16 %v363
    %v382 = vunpack.c.h.b16 %v363
    %v383 = vunpack.c.l.b16 %v364
    %v384 = vunpack.c.h.b16 %v364
    %v385 = vunpack.c.l.b16 %v365
    %v386 = vunpack.c.h.b16 %v365
    %v387 = vunpack.c.l.b16 %v366
    %v388 = vunpack.c.h.b16 %v366
    %v389 = vunpack.c.l.b16 %v367
    %v390 = vunpack.c.h.b16 %v367
    %v391 = vunpack.c.l.b16 %v368
    %v392 = vunpack.c.h.b16 %v368
    %v393 = vpack.c.b16 %v377, %v377
    %v394 = vpack.c.b16 %v378, %v378
    %v395 = vpack.c.b16 %v379, %v379
    %v396 = vpack.c.b16 %v380, %v380
    %v397 = vpack.c.b16 %v381, %v381
    %v398 = vpack.c.b16 %v382, %v382
    %v399 = vpack.c.b16 %v383, %v383
    %v400 = vpack.c.b16 %v384, %v384
    %v401 = vpack.c.b16 %v385, %v385
    %v402 = vpack.c.b16 %v386, %v386
    %v403 = vpack.c.b16 %v387, %v387
    %v404 = vpack.c.b16 %v388, %v388
    %v405 = vpack.c.b16 %v389, %v389
    %v406 = vpack.c.b16 %v390, %v390
    %v407 = vpack.c.b16 %v391, %v391
    %v408 = vpack.c.b16 %v392, %v392
    %425 = vst [vmem:[%s4] sm:$0xf] %v393
    %426 = vst [vmem:[%s4 + $0x4] sm:$0xf] %v394
    %427 = vst [vmem:[%s4 + $0x8] sm:$0xf] %v395
    %428 = vst [vmem:[%s4 + $0xc] sm:$0xf] %v396
    %429 = vst [vmem:[%s4 + $0x10] sm:$0xf] %v397
    %430 = vst [vmem:[%s4 + $0x14] sm:$0xf] %v398
    %431 = vst [vmem:[%s4 + $0x18] sm:$0xf] %v399
    %432 = vst [vmem:[%s4 + $0x1c] sm:$0xf] %v400
    %433 = vst [vmem:[%s4 + $0x20] sm:$0xf] %v401
    %434 = vst [vmem:[%s4 + $0x24] sm:$0xf] %v402
    %435 = vst [vmem:[%s4 + $0x28] sm:$0xf] %v403
    %436 = vst [vmem:[%s4 + $0x2c] sm:$0xf] %v404
    %437 = vst [vmem:[%s4 + $0x30] sm:$0xf] %v405
    %438 = vst [vmem:[%s4 + $0x34] sm:$0xf] %v406
    %439 = vst [vmem:[%s4 + $0x38] sm:$0xf] %v407
    %440 = vst [vmem:[%s4 + $0x3c] sm:$0xf] %v408
  $region25: #{resnet_forward.16} parent=0 // pred_fallthru
    _
  // Predicated region
  $region26: #{resnet_forward.16} parent=0 // pred_check
    _
  $region27: #{resnet_forward.16} parent=0 // pred_check_branch
    %442 = sbr.rel (0) target = $region29
  $region28: #{resnet_forward.16} parent=0 // pred_region
    _
  $region29: #{resnet_forward.16} parent=0 // pred_fallthru
    _
  // Predicated region
  $region30: #{resnet_forward.16} parent=0 // pred_check
    _
  $region31: #{resnet_forward.16} parent=0 // pred_check_branch
    %444 = sbr.rel (0) target = $region33
  $region32: #{resnet_forward.16} parent=0 // pred_region
    _
  $region33: #{resnet_forward.16} parent=0 // pred_fallthru
    _

// kernel: resnet_forward.20
$region0: #{resnet_forward.20}
  #allocation0 [shape = 'u32[]', space=smem, size = 0x4, offset = 0x4, fixed_abs, tag = 'smem constant byte address 0x4 - core index']
  #allocation1 [shape = 'u32[144,128]{1,0:T(1,128)}', space=vmem, size = 0x12000, scoped, tag = 'internal scratch']
  #allocation2 [shape = 'f32[32,256]{1,0:T(8,128)}', space=vmem, size = 0x8000, scoped, tag = 'scratch operand']
  %s0 = inlined_call_operand.vmem [shape: bf16[9,32,128], index: 0, kind: input, shape index: {}]
  %s1 = inlined_call_operand.vmem [shape: bf16[9,128,256], index: 1, kind: input, shape index: {}]
  %s2 = inlined_call_operand.vmem [shape: f32[1,256], index: 2, kind: input, shape index: {}]
  %s3 = inlined_call_operand.vmem [shape: f32[1,256], index: 3, kind: input, shape index: {}]
  %s4 = inlined_call_operand.vmem [shape: bf16[32,256], index: 4, kind: output, shape index: {}]
  %s5 = sld [smem:[#allocation0]]
  $region57: #{resnet_forward.20} parent=0
    _
  %s7 = ssub.s32 1, %s5
  %s8 = scalar_select 0, %s7, %s5
  loop: start=0, step=1, limit=11
  $region2: #{resnet_forward.20} parent=0 // loop_pre_header
    _
  $region3: #{resnet_forward.20} parent=0 // loop_header
    %s10 = sphi 0, %s14
    %p11 = scmp.ge.s32.totalorder %s10, 11
    %s17 = sphi 0, %s29
    %s18 = sphi 0, %s25
    %s19 = sphi 0, %s17
    %s20 = sphi 0, %s18
    %s21 = sphi 0, %s19
    %s22 = sphi 0, %s20
    %s34 = sphi 0, %s36
    %s37 = sphi 0, %s34
    %s38 = sphi 0, %s37
    %s54 = sphi 0, %s38
    %s60 = sphi 0, %s62
    %s63 = sphi 0, %s60
    %s64 = sphi 0, %s63
    %s80 = sphi 0, %s64
    %s84 = sphi 0, %s84
    %s86 = sphi 0, %s84
    %s87 = sphi 0, %s86
    %s101 = sphi 0, %s87
    %s105 = sphi 0, %s105
    %s107 = sphi 0, %s105
    %s108 = sphi 0, %s107
    %s122 = sphi 0, %s108
    %s128 = sphi 0, %s130
    %s131 = sphi 0, %s128
    %s132 = sphi 0, %s131
    %s148 = sphi 0, %s132
  $region4: #{resnet_forward.20} parent=0 // loop_header_branch
    %13 = sbr.rel (%p11) target = $region8
  $region5: #{resnet_forward.20} parent=0 // loop_body
    %s15 = ssub.s32 %s10, 1
    %s16 = ssub.s32 %s10, 2
    %s23 = sadd.s32 1, %s18
    %p24 = scmp.ge.s32.totalorder %s23, 9
    %s25 = scalar_select %p24, 0, %s23
    %s26 = sadd.s32 1, %s17
    %s27 = scalar_select %p24, %s26, %s17
    %p28 = scmp.ge.s32.totalorder %s27, 1
    %s29 = scalar_select %p28, 0, %s27
    %s30 = ssub.s32 %s18, %s25
    %s31 = ssub.s32 %s17, %s29
    %s32 = sor.u32 %s30, %s31
    %p33 = scmp.eq.s32.totalorder %s32, 0
    %s35 = sadd.s32 %s34, 1
    %s36 = scalar_select %p33, %s34, %s35
    %p39 = pneg %p33
    %p40 = scmp.eq.s32.totalorder %s10, 8
    %p41 = por %p39, %p40
    %p42 = scmp.ne.s32.totalorder %s34, %s37
    %p43 = scmp.eq.s32.totalorder %s10, 0
    %p44 = por %p42, %p43
    %p45 = scmp.ne.s32.totalorder %s34, %s37
    %p46 = scmp.eq.s32.totalorder %s15, 8
    %p47 = por %p45, %p46
    %p48 = scmp.ne.s32.totalorder %s37, %s38
    %p49 = scmp.eq.s32.totalorder %s15, 0
    %p50 = por %p48, %p49
    %p51 = scmp.ne.s32.totalorder %s37, %s38
    %p52 = scmp.eq.s32.totalorder %s16, 8
    %p53 = por %p51, %p52
    %p55 = scmp.ne.s32.totalorder %s38, %s54
    %p56 = scmp.eq.s32.totalorder %s16, 0
    %p57 = por %p55, %p56
    %s58 = ssub.s32 %s18, %s25
    %p59 = scmp.eq.s32.totalorder %s58, 0
    %s61 = sadd.s32 %s60, 1
    %s62 = scalar_select %p59, %s60, %s61
    %p65 = pneg %p59
    %p66 = scmp.eq.s32.totalorder %s10, 8
    %p67 = por %p65, %p66
    %p68 = scmp.ne.s32.totalorder %s60, %s63
    %p69 = scmp.eq.s32.totalorder %s10, 0
    %p70 = por %p68, %p69
    %p71 = scmp.ne.s32.totalorder %s60, %s63
    %p72 = scmp.eq.s32.totalorder %s15, 8
    %p73 = por %p71, %p72
    %p74 = scmp.ne.s32.totalorder %s63, %s64
    %p75 = scmp.eq.s32.totalorder %s15, 0
    %p76 = por %p74, %p75
    %p77 = scmp.ne.s32.totalorder %s63, %s64
    %p78 = scmp.eq.s32.totalorder %s16, 8
    %p79 = por %p77, %p78
    %p81 = scmp.ne.s32.totalorder %s64, %s80
    %p82 = scmp.eq.s32.totalorder %s16, 0
    %p83 = por %p81, %p82
    %s85 = sadd.s32 %s84, 1
    %p88 = scmp.eq.s32.totalorder %s10, 8
    %p89 = scmp.ne.s32.totalorder %s84, %s86
    %p90 = scmp.eq.s32.totalorder %s10, 0
    %p91 = por %p89, %p90
    %p92 = scmp.ne.s32.totalorder %s84, %s86
    %p93 = scmp.eq.s32.totalorder %s15, 8
    %p94 = por %p92, %p93
    %p95 = scmp.ne.s32.totalorder %s86, %s87
    %p96 = scmp.eq.s32.totalorder %s15, 0
    %p97 = por %p95, %p96
    %p98 = scmp.ne.s32.totalorder %s86, %s87
    %p99 = scmp.eq.s32.totalorder %s16, 8
    %p100 = por %p98, %p99
    %p102 = scmp.ne.s32.totalorder %s87, %s101
    %p103 = scmp.eq.s32.totalorder %s16, 0
    %p104 = por %p102, %p103
    %s106 = sadd.s32 %s105, 1
    %p109 = scmp.eq.s32.totalorder %s10, 8
    %p110 = scmp.ne.s32.totalorder %s105, %s107
    %p111 = scmp.eq.s32.totalorder %s10, 0
    %p112 = por %p110, %p111
    %p113 = scmp.ne.s32.totalorder %s105, %s107
    %p114 = scmp.eq.s32.totalorder %s15, 8
    %p115 = por %p113, %p114
    %p116 = scmp.ne.s32.totalorder %s107, %s108
    %p117 = scmp.eq.s32.totalorder %s15, 0
    %p118 = por %p116, %p117
    %p119 = scmp.ne.s32.totalorder %s107, %s108
    %p120 = scmp.eq.s32.totalorder %s16, 8
    %p121 = por %p119, %p120
    %p123 = scmp.ne.s32.totalorder %s108, %s122
    %p124 = scmp.eq.s32.totalorder %s16, 0
    %p125 = por %p123, %p124
    %s126 = ssub.s32 %s17, %s29
    %p127 = scmp.eq.s32.totalorder %s126, 0
    %s129 = sadd.s32 %s128, 1
    %s130 = scalar_select %p127, %s128, %s129
    %p133 = pneg %p127
    %p134 = scmp.eq.s32.totalorder %s10, 8
    %p135 = por %p133, %p134
    %p136 = scmp.ne.s32.totalorder %s128, %s131
    %p137 = scmp.eq.s32.totalorder %s10, 0
    %p138 = por %p136, %p137
    %p139 = scmp.ne.s32.totalorder %s128, %s131
    %p140 = scmp.eq.s32.totalorder %s15, 8
    %p141 = por %p139, %p140
    %p142 = scmp.ne.s32.totalorder %s131, %s132
    %p143 = scmp.eq.s32.totalorder %s15, 0
    %p144 = por %p142, %p143
    %p145 = scmp.ne.s32.totalorder %s131, %s132
    %p146 = scmp.eq.s32.totalorder %s16, 8
    %p147 = por %p145, %p146
    %p149 = scmp.ne.s32.totalorder %s132, %s148
    %p150 = scmp.eq.s32.totalorder %s16, 0
    %p151 = por %p149, %p150
    %p152 = scmp.le.s32.totalorder 1, %s10
    %p153 = scmp.lt.s32.totalorder %s10, 10
    %p154 = pnand %p152, %p153
    %p155 = pneg %p154
    // Predicated region
    $region9: #{resnet_forward.20} parent=5 // pred_check
      _
    $region10: #{resnet_forward.20} parent=5 // pred_check_branch
      %157 = sbr.rel (%p154) target = $region12
    $region11: #{resnet_forward.20} parent=5 // pred_region
      %s158 = ssub.s32 %s10, 1
      // Predicated region
      $region13: #{resnet_forward.20} parent=11 // pred_check
        %p159 = pneg %p97
      $region14: #{resnet_forward.20} parent=11 // pred_check_branch
        %161 = sbr.rel (%p159) target = $region16
      $region15: #{resnet_forward.20} parent=11 // pred_region
        _
      $region16: #{resnet_forward.20} parent=11 // pred_fallthru
        _
      // Predicated region
      $region17: #{resnet_forward.20} parent=11 // pred_check
        %p162 = pneg %p118
      $region18: #{resnet_forward.20} parent=11 // pred_check_branch
        %164 = sbr.rel (%p162) target = $region20
      $region19: #{resnet_forward.20} parent=11 // pred_region
        _
      $region20: #{resnet_forward.20} parent=11 // pred_fallthru
        _
    $region12: #{resnet_forward.20} parent=5 // pred_fallthru
      _
    %p165 = scmp.lt.s32.totalorder %s10, 9
    // Predicated region
    $region21: #{resnet_forward.20} parent=5 // pred_check
      %p166 = pneg %p165
    $region22: #{resnet_forward.20} parent=5 // pred_check_branch
      %168 = sbr.rel (%p166) target = $region24
    $region23: #{resnet_forward.20} parent=5 // pred_region
      // Predicated region
      $region25: #{resnet_forward.20} parent=23 // pred_check
        %p169 = pneg %p44
      $region26: #{resnet_forward.20} parent=23 // pred_check_branch
        %171 = sbr.rel (%p169) target = $region28
      $region27: #{resnet_forward.20} parent=23 // pred_region
        %s172 = smul.u32 4, %s17
        %p173 = scmp.lt.s32.totalorder %s18, 8
        %s174 = scalar_select %p173, %s18, 8
        %p175 = scmp.lt.s32.totalorder %s172, 3
        %s176 = scalar_select %p175, %s172, 3
        %s177 = smul.addr %s174, 4
        %s178 = sadd.s32 %s176, %s177
        %s179 = smul.addr %s178, 4
        %s180 = scalar_lea.vmem %s0, %s179
        %s181 = smul.u32 4, %s17
      $region28: #{resnet_forward.20} parent=23 // pred_fallthru
        _
      // Predicated region
      $region29: #{resnet_forward.20} parent=23 // pred_check
        %p182 = pneg %p70
      $region30: #{resnet_forward.20} parent=23 // pred_check_branch
        %184 = sbr.rel (%p182) target = $region32
      $region31: #{resnet_forward.20} parent=23 // pred_region
        %p185 = scmp.lt.s32.totalorder %s18, 8
        %s186 = scalar_select %p185, %s18, 8
        %s187 = smul.addr %s186, 32
        %s188 = smul.addr %s187, 4
        %s189 = scalar_lea.vmem %s1, %s188
      $region32: #{resnet_forward.20} parent=23 // pred_fallthru
        _
    $region24: #{resnet_forward.20} parent=5 // pred_fallthru
      _
    %p190 = scmp.le.s32.totalorder 1, %s10
    %p191 = scmp.lt.s32.totalorder %s10, 10
    %p192 = pnand %p190, %p191
    %p193 = pneg %p192
    // Predicated region
    $region33: #{resnet_forward.20} parent=5 // pred_check
      _
    $region34: #{resnet_forward.20} parent=5 // pred_check_branch
      %195 = sbr.rel (%p192) target = $region36
    $region35: #{resnet_forward.20} parent=5 // pred_region
      %s196 = ssub.s32 %s10, 1
      %s197 = smul.u32 4, %s19
      %p198 = scmp.lt.s32.totalorder %s20, 8
      %s199 = scalar_select %p198, %s20, 8
      %p200 = scmp.lt.s32.totalorder %s197, 3
      %s201 = scalar_select %p200, %s197, 3
      %s202 = smul.addr %s199, 4
      %s203 = sadd.s32 %s201, %s202
      %s204 = smul.addr %s203, 4
      %s205 = scalar_lea.vmem %s0, %s204
      %p206 = pneg %p50
      %p207 = pneg %p47
      %p208 = scmp.lt.s32.totalorder %s20, 8
      %s209 = scalar_select %p208, %s20, 8
      %s210 = smul.addr %s209, 32
      %s211 = smul.addr %s210, 4
      %s212 = scalar_lea.vmem %s1, %s211
      %p213 = pneg %p76
      %p214 = pneg %p73
      %p215 = pneg %p97
      %p216 = pneg %p94
      %p217 = pneg %p118
      %p218 = pneg %p115
      %p219 = pneg %p144
      %p220 = pneg %p141
      %s221 = smul.u32 4, %s19
      %p222 = scmp.lt.s32.totalorder %s221, 3
      %s223 = scalar_select %p222, %s221, 3
      %s224 = smul.addr %s223, 2
      %s225 = smul.addr %s224, 4
      %s226 = scalar_lea.vmem %s4, %s225
      %s227 = smul.u32 4, %s19
      %p228 = scmp.lt.s32.totalorder %s20, 8
      %s229 = scalar_select %p228, %s20, 8
      %p230 = scmp.lt.s32.totalorder %s227, 3
      %s231 = scalar_select %p230, %s227, 3
      %s232 = smul.addr %s229, 4
      %s233 = sadd.s32 %s231, %s232
      %s234 = smul.addr %s233, 4
      %s235 = scalar_lea.vmem %s0, %s234
      %s236 = smul.u32 4, %s19
      %p237 = scmp.lt.s32.totalorder %s20, 8
      %s238 = scalar_select %p237, %s20, 8
      %s239 = smul.addr %s238, 32
      %s240 = smul.addr %s239, 4
      %s241 = scalar_lea.vmem %s1, %s240
      %s242 = smul.u32 4, %s19
      %p243 = scmp.lt.s32.totalorder %s242, 3
      %s244 = scalar_select %p243, %s242, 3
      %s245 = smul.addr %s244, 2
      %s246 = smul.addr %s245, 4
      %s247 = scalar_lea.vmem %s4, %s246
      %s248 = smul.u32 4, %s19
      %p250 = scmp.eq.s32.totalorder %s20, 0
      // Predicated region
      $region37: #{resnet_forward.20} parent=35 // pred_check
        %p251 = pneg %p250
      $region38: #{resnet_forward.20} parent=35 // pred_check_branch
        %253 = sbr.rel (%p251) target = $region40
      $region39: #{resnet_forward.20} parent=35 // pred_region
        %254 = vst [vmem:[#allocation2] sm:$0xff] 0.0
        %255 = vst [vmem:[#allocation2 + $0x8] sm:$0xff] 0.0
        %256 = vst [vmem:[#allocation2 + $0x10] sm:$0xff] 0.0
        %257 = vst [vmem:[#allocation2 + $0x18] sm:$0xff] 0.0
        %258 = vst [vmem:[#allocation2 + $0x20] sm:$0xff] 0.0
        %259 = vst [vmem:[#allocation2 + $0x28] sm:$0xff] 0.0
        %260 = vst [vmem:[#allocation2 + $0x30] sm:$0xff] 0.0
        %261 = vst [vmem:[#allocation2 + $0x38] sm:$0xff] 0.0
      $region40: #{resnet_forward.20} parent=35 // pred_fallthru
        _
      %v262 = vld [vmem:[#allocation2] sm:$0xff]
      %v263 = vld [vmem:[#allocation2 + $0x8] sm:$0xff]
      %v264 = vld [vmem:[#allocation2 + $0x10] sm:$0xff]
      %v265 = vld [vmem:[#allocation2 + $0x18] sm:$0xff]
      %v266 = vld [vmem:[#allocation2 + $0x20] sm:$0xff]
      %v267 = vld [vmem:[#allocation2 + $0x28] sm:$0xff]
      %v268 = vld [vmem:[#allocation2 + $0x30] sm:$0xff]
      %v269 = vld [vmem:[#allocation2 + $0x38] sm:$0xff]
      %v270 = vld [vmem:[%s235] sm:$0xf]
      %v271 = vld [vmem:[%s235 + $0x4] sm:$0xf]
      %v272 = vld [vmem:[%s235 + $0x8] sm:$0xf]
      %v273 = vld [vmem:[%s235 + $0xc] sm:$0xf]
      %v274 = vld [vmem:[%s241] sm:$0xff]
      %v275 = vld [vmem:[%s241 + $0x8] sm:$0xff]
      %v276 = vld [vmem:[%s241 + $0x10] sm:$0xff]
      %v277 = vld [vmem:[%s241 + $0x18] sm:$0xff]
      %v278 = vld [vmem:[%s241 + $0x20] sm:$0xff]
      %v279 = vld [vmem:[%s241 + $0x28] sm:$0xff]
      %v280 = vld [vmem:[%s241 + $0x30] sm:$0xff]
      %v281 = vld [vmem:[%s241 + $0x38] sm:$0xff]
      %v282 = vld [vmem:[%s241 + $0x40] sm:$0xff]
      %v283 = vld [vmem:[%s241 + $0x48] sm:$0xff]
      %v284 = vld [vmem:[%s241 + $0x50] sm:$0xff]
      %v285 = vld [vmem:[%s241 + $0x58] sm:$0xff]
      %v286 = vld [vmem:[%s241 + $0x60] sm:$0xff]
      %v287 = vld [vmem:[%s241 + $0x68] sm:$0xff]
      %v288 = vld [vmem:[%s241 + $0x70] sm:$0xff]
      %v289 = vld [vmem:[%s241 + $0x78] sm:$0xff]
      %v294 = vunpack.c.l.b16 %v270
      %v295 = vunpack.c.l.b16 %v271
      %v296 = vunpack.c.l.b16 %v272
      %v297 = vunpack.c.l.b16 %v273
      %v298 = vpack.c.b16 %v295, %v294
      %v299 = vpack.c.b16 %v297, %v296
      %v318 = vunpack.c.l.b16 %v274
      %v319 = vunpack.c.h.b16 %v274
      %v320 = vunpack.c.l.b16 %v275
      %v321 = vunpack.c.h.b16 %v275
      %v322 = vunpack.c.l.b16 %v276
      %v323 = vunpack.c.h.b16 %v276
      %v324 = vunpack.c.l.b16 %v277
      %v325 = vunpack.c.h.b16 %v277
      %v326 = vunpack.c.l.b16 %v278
      %v327 = vunpack.c.h.b16 %v278
      %v328 = vunpack.c.l.b16 %v279
      %v329 = vunpack.c.h.b16 %v279
      %v330 = vunpack.c.l.b16 %v280
      %v331 = vunpack.c.h.b16 %v280
      %v332 = vunpack.c.l.b16 %v281
      %v333 = vunpack.c.h.b16 %v281
      %v334 = vunpack.c.l.b16 %v282
      %v335 = vunpack.c.h.b16 %v282
      %v336 = vunpack.c.l.b16 %v283
      %v337 = vunpack.c.h.b16 %v283
      %v338 = vunpack.c.l.b16 %v284
      %v339 = vunpack.c.h.b16 %v284
      %v340 = vunpack.c.l.b16 %v285
      %v341 = vunpack.c.h.b16 %v285
      %v342 = vunpack.c.l.b16 %v286
      %v343 = vunpack.c.h.b16 %v286
      %v344 = vunpack.c.l.b16 %v287
      %v345 = vunpack.c.h.b16 %v287
      %v346 = vunpack.c.l.b16 %v288
      %v347 = vunpack.c.h.b16 %v288
      %v348 = vunpack.c.l.b16 %v289
      %v349 = vunpack.c.h.b16 %v289
      %v350 = vpack.c.b16 %v320, %v318
      %v351 = vpack.c.b16 %v321, %v319
      %v352 = vpack.c.b16 %v324, %v322
      %v353 = vpack.c.b16 %v325, %v323
      %v354 = vpack.c.b16 %v328, %v326
      %v355 = vpack.c.b16 %v329, %v327
      %v356 = vpack.c.b16 %v332, %v330
      %v357 = vpack.c.b16 %v333, %v331
      %v358 = vpack.c.b16 %v336, %v334
      %v359 = vpack.c.b16 %v337, %v335
      %v360 = vpack.c.b16 %v340, %v338
      %v361 = vpack.c.b16 %v341, %v339
      %v362 = vpack.c.b16 %v344, %v342
      %v363 = vpack.c.b16 %v345, %v343
      %v364 = vpack.c.b16 %v348, %v346
      %v365 = vpack.c.b16 %v349, %v347
      %382 = vmatprep.subr.bf16.mxu0 %v351
      %383 = vmatpush1.bf16.msra.mxu0 %v350
      %384 = vmatprep.subr.bf16.mxu0 %v353
      %385 = vmatpush1.bf16.msra.mxu0 %v352
      %386 = vmatprep.subr.bf16.mxu0 %v355
      %387 = vmatpush1.bf16.msra.mxu0 %v354
      %388 = vmatprep.subr.bf16.mxu0 %v357
      %389 = vmatpush1.bf16.msra.mxu0 %v356
      %390 = vmatprep.subr.bf16.mxu0 %v359
      %391 = vmatpush1.bf16.msra.mxu0 %v358
      %392 = vmatprep.subr.bf16.mxu0 %v361
      %393 = vmatpush1.bf16.msra.mxu0 %v360
      %394 = vmatprep.subr.bf16.mxu0 %v363
      %395 = vmatpush1.bf16.msra.mxu0 %v362
      %396 = vmatprep.subr.bf16.mxu0 %v365
      %397 = vmatpush1.bf16.msra.mxu0 %v364
      %398 = vmatprep.subr.bf16.mxu0 0
      %399 = vmatpush1.bf16.msra.mxu0 0
      %400 = vmatprep.subr.bf16.mxu0 0
      %401 = vmatpush1.bf16.msra.mxu0 0
      %402 = vmatprep.subr.bf16.mxu0 0
      %403 = vmatpush1.bf16.msra.mxu0 0
      %404 = vmatprep.subr.bf16.mxu0 0
      %405 = vmatpush1.bf16.msra.mxu0 0
      %406 = vmatprep.subr.bf16.mxu0 0
      %407 = vmatpush1.bf16.msra.mxu0 0
      %408 = vmatprep.subr.bf16.mxu0 0
      %409 = vmatpush1.bf16.msra.mxu0 0
      %410 = vmatprep.subr.bf16.mxu0 0
      %411 = vmatpush1.bf16.msra.mxu0 0
      %412 = vmatprep.subr.bf16.mxu0 0
      %413 = vmatpush1.bf16.msra.mxu0 0
      %414 = vmatprep.mubr.bf16.mxu0 0
      %415 = vmatmul.mubr.bf16.gmra.mrb[0].mxu0 %v298
      %v416 = vpop.f32.mrb[0].mxu0
      %v417 = vadd.f32 0.0, %v416
      %v418 = vpop.f32.mrb[0].mxu0
      %v419 = vadd.f32 0.0, %v418
      %v420 = vpop.f32.mrb[0].mxu0
      %v421 = vadd.f32 0.0, %v420
      %v422 = vpop.f32.mrb[0].mxu0
      %v423 = vadd.f32 0.0, %v422
      %424 = vmatprep.mubr.bf16.mxu0 0
      %425 = vmatmul.mubr.bf16.gmra.mrb[0].mxu0 %v299
      %v426 = vpop.f32.mrb[0].mxu0
      %v427 = vadd.f32 0.0, %v426
      %v428 = vpop.f32.mrb[0].mxu0
      %v429 = vadd.f32 0.0, %v428
      %v430 = vpop.f32.mrb[0].mxu0
      %v431 = vadd.f32 0.0, %v430
      %v432 = vpop.f32.mrb[0].mxu0
      %v433 = vadd.f32 0.0, %v432
      %434 = vdwg.mxu0
      %v435 = vadd.f32 %v262, %v417
      %v436 = vadd.f32 %v263, %v419
      %v437 = vadd.f32 %v264, %v421
      %v438 = vadd.f32 %v265, %v423
      %v439 = vadd.f32 %v266, %v427
      %v440 = vadd.f32 %v267, %v429
      %v441 = vadd.f32 %v268, %v431
      %v442 = vadd.f32 %v269, %v433
      %443 = vst [vmem:[#allocation2] sm:$0xff] %v435
      %444 = vst [vmem:[#allocation2 + $0x8] sm:$0xff] %v436
      %445 = vst [vmem:[#allocation2 + $0x10] sm:$0xff] %v437
      %446 = vst [vmem:[#allocation2 + $0x18] sm:$0xff] %v438
      %447 = vst [vmem:[#allocation2 + $0x20] sm:$0xff] %v439
      %448 = vst [vmem:[#allocation2 + $0x28] sm:$0xff] %v440
      %449 = vst [vmem:[#allocation2 + $0x30] sm:$0xff] %v441
      %450 = vst [vmem:[#allocation2 + $0x38] sm:$0xff] %v442
      %p451 = scmp.eq.s32.totalorder %s20, 8
      // Predicated region
      $region41: #{resnet_forward.20} parent=35 // pred_check
        %p452 = pneg %p451
      $region42: #{resnet_forward.20} parent=35 // pred_check_branch
        %454 = sbr.rel (%p452) target = $region44
      $region43: #{resnet_forward.20} parent=35 // pred_region
        %v455 = vld [vmem:[#allocation2] sm:$0xff]
        %v456 = vld [vmem:[#allocation2 + $0x8] sm:$0xff]
        %v457 = vld [vmem:[#allocation2 + $0x10] sm:$0xff]
        %v458 = vld [vmem:[#allocation2 + $0x18] sm:$0xff]
        %v459 = vld [vmem:[#allocation2 + $0x20] sm:$0xff]
        %v460 = vld [vmem:[#allocation2 + $0x28] sm:$0xff]
        %v461 = vld [vmem:[#allocation2 + $0x30] sm:$0xff]
        %v462 = vld [vmem:[#allocation2 + $0x38] sm:$0xff]
        %v463 = vld [vmem:[%s2] sm:$0x3]
        %v465 = vlaneseq
        %v466 = vshrl.u32 %v465, 7
        %v467 = vsub.s32 0, %v466
        %v468 = vrot.slane %v463, %v467
        %v469 = vlaneseq
        %v470 = vshrl.u32 %v469, 7
        %v471 = vsub.s32 1, %v470
        %v472 = vrot.slane %v463, %v471
        %v475 = vmul.f32 %v455, %v468
        %v476 = vmul.f32 %v456, %v472
        %v477 = vmul.f32 %v457, %v468
        %v478 = vmul.f32 %v458, %v472
        %v479 = vmul.f32 %v459, %v468
        %v480 = vmul.f32 %v460, %v472
        %v481 = vmul.f32 %v461, %v468
        %v482 = vmul.f32 %v462, %v472
        %v483 = vld [vmem:[%s3] sm:$0x3]
        %v485 = vlaneseq
        %v486 = vshrl.u32 %v485, 7
        %v487 = vsub.s32 0, %v486
        %v488 = vrot.slane %v483, %v487
        %v489 = vlaneseq
        %v490 = vshrl.u32 %v489, 7
        %v491 = vsub.s32 1, %v490
        %v492 = vrot.slane %v483, %v491
        %v495 = vadd.f32 %v475, %v488
        %v496 = vadd.f32 %v476, %v492
        %v497 = vadd.f32 %v477, %v488
        %v498 = vadd.f32 %v478, %v492
        %v499 = vadd.f32 %v479, %v488
        %v500 = vadd.f32 %v480, %v492
        %v501 = vadd.f32 %v481, %v488
        %v502 = vadd.f32 %v482, %v492
        %v503 = vmax.f32 %v495, 0.0
        %v504 = vmax.f32 %v496, 0.0
        %v505 = vmax.f32 %v497, 0.0
        %v506 = vmax.f32 %v498, 0.0
        %v507 = vmax.f32 %v499, 0.0
        %v508 = vmax.f32 %v500, 0.0
        %v509 = vmax.f32 %v501, 0.0
        %v510 = vmax.f32 %v502, 0.0
        %v511 = vpack.c.bf16 %v505, %v503
        %v512 = vpack.c.bf16 %v506, %v504
        %v513 = vpack.c.bf16 %v509, %v507
        %v514 = vpack.c.bf16 %v510, %v508
        %v519 = vunpack.c.l.b16 %v511
        %v520 = vunpack.c.l.b16 %v512
        %v521 = vunpack.c.h.b16 %v511
        %v522 = vunpack.c.h.b16 %v512
        %v523 = vunpack.c.l.b16 %v513
        %v524 = vunpack.c.l.b16 %v514
        %v525 = vunpack.c.h.b16 %v513
        %v526 = vunpack.c.h.b16 %v514
        %v527 = vpack.c.b16 %v520, %v519
        %v528 = vpack.c.b16 %v522, %v521
        %v529 = vpack.c.b16 %v524, %v523
        %v530 = vpack.c.b16 %v526, %v525
        %535 = vst [vmem:[%s247] sm:$0xff] %v527
        %536 = vst [vmem:[%s247 + $0x8] sm:$0xff] %v528
        %537 = vst [vmem:[%s247 + $0x10] sm:$0xff] %v529
        %538 = vst [vmem:[%s247 + $0x18] sm:$0xff] %v530
      $region44: #{resnet_forward.20} parent=35 // pred_fallthru
        _
      %s539 = smul.u32 4, %s19
      %p540 = scmp.lt.s32.totalorder %s539, 3
      %s541 = scalar_select %p540, %s539, 3
      %s542 = smul.addr %s541, 2
      %s543 = smul.addr %s542, 4
      %s544 = scalar_lea.vmem %s4, %s543
      // Predicated region
      $region45: #{resnet_forward.20} parent=35 // pred_check
        %p545 = pneg %p141
      $region46: #{resnet_forward.20} parent=35 // pred_check_branch
        %547 = sbr.rel (%p545) target = $region48
      $region47: #{resnet_forward.20} parent=35 // pred_region
        %s548 = smul.u32 4, %s19
      $region48: #{resnet_forward.20} parent=35 // pred_fallthru
        _
      // Predicated region
      $region49: #{resnet_forward.20} parent=35 // pred_check
        %p549 = pneg %p141
      $region50: #{resnet_forward.20} parent=35 // pred_check_branch
        %551 = sbr.rel (%p549) target = $region52
      $region51: #{resnet_forward.20} parent=35 // pred_region
        %s552 = smul.u32 4, %s19
        %p553 = scmp.lt.s32.totalorder %s552, 3
        %s554 = scalar_select %p553, %s552, 3
        %s555 = smul.addr %s554, 2
        %s556 = smul.addr %s555, 4
        %s557 = scalar_lea.vmem %s4, %s556
      $region52: #{resnet_forward.20} parent=35 // pred_fallthru
        _
    $region36: #{resnet_forward.20} parent=5 // pred_fallthru
      _
    %p558 = scmp.le.s32.totalorder 2, %s10
    // Predicated region
    $region53: #{resnet_forward.20} parent=5 // pred_check
      %p559 = pneg %p558
    $region54: #{resnet_forward.20} parent=5 // pred_check_branch
      %561 = sbr.rel (%p559) target = $region56
    $region55: #{resnet_forward.20} parent=5 // pred_region
      %s562 = ssub.s32 %s10, 2
    $region56: #{resnet_forward.20} parent=5 // pred_fallthru
      _
  $region6: #{resnet_forward.20} parent=0 // loop_footer
    %s14 = sadd.s32 1, %s10
  $region7: #{resnet_forward.20} parent=0 // loop_footer_branch
    %9 = sbr.rel target = $region3
  $region8: #{resnet_forward.20} parent=0 // loop_exit
    _

// kernel: resnet_forward.21
$region0: #{resnet_forward.21}
  #allocation0 [shape = 'u32[]', space=smem, size = 0x4, offset = 0x4, fixed_abs, tag = 'smem constant byte address 0x4 - core index']
  #allocation1 [shape = 'u32[144,128]{1,0:T(1,128)}', space=vmem, size = 0x12000, scoped, tag = 'internal scratch']
  #allocation2 [shape = 'f32[32,256]{1,0:T(8,128)}', space=vmem, size = 0x8000, scoped, tag = 'scratch operand']
  %s0 = inlined_call_operand.vmem [shape: bf16[9,32,256], index: 0, kind: input, shape index: {}]
  %s1 = inlined_call_operand.vmem [shape: bf16[9,256,256], index: 1, kind: input, shape index: {}]
  %s2 = inlined_call_operand.vmem [shape: f32[1,256], index: 2, kind: input, shape index: {}]
  %s3 = inlined_call_operand.vmem [shape: f32[1,256], index: 3, kind: input, shape index: {}]
  %s4 = inlined_call_operand.vmem [shape: bf16[32,256], index: 4, kind: input, shape index: {}]
  %s5 = inlined_call_operand.vmem [shape: bf16[32,256], index: 5, kind: output, shape index: {}]
  %s6 = sld [smem:[#allocation0]]
  $region61: #{resnet_forward.21} parent=0
    _
  %s8 = ssub.s32 1, %s6
  %s9 = scalar_select 0, %s8, %s6
  loop: start=0, step=1, limit=11
  $region2: #{resnet_forward.21} parent=0 // loop_pre_header
    _
  $region3: #{resnet_forward.21} parent=0 // loop_header
    %s11 = sphi 0, %s15
    %p12 = scmp.ge.s32.totalorder %s11, 11
    %s18 = sphi 0, %s30
    %s19 = sphi 0, %s26
    %s20 = sphi 0, %s18
    %s21 = sphi 0, %s19
    %s22 = sphi 0, %s20
    %s23 = sphi 0, %s21
    %s35 = sphi 0, %s37
    %s38 = sphi 0, %s35
    %s39 = sphi 0, %s38
    %s55 = sphi 0, %s39
    %s61 = sphi 0, %s63
    %s64 = sphi 0, %s61
    %s65 = sphi 0, %s64
    %s81 = sphi 0, %s65
    %s85 = sphi 0, %s85
    %s87 = sphi 0, %s85
    %s88 = sphi 0, %s87
    %s102 = sphi 0, %s88
    %s106 = sphi 0, %s106
    %s108 = sphi 0, %s106
    %s109 = sphi 0, %s108
    %s123 = sphi 0, %s109
    %s129 = sphi 0, %s131
    %s132 = sphi 0, %s129
    %s133 = sphi 0, %s132
    %s149 = sphi 0, %s133
    %s155 = sphi 0, %s157
    %s158 = sphi 0, %s155
    %s159 = sphi 0, %s158
    %s175 = sphi 0, %s159
  $region4: #{resnet_forward.21} parent=0 // loop_header_branch
    %14 = sbr.rel (%p12) target = $region8
  $region5: #{resnet_forward.21} parent=0 // loop_body
    %s16 = ssub.s32 %s11, 1
    %s17 = ssub.s32 %s11, 2
    %s24 = sadd.s32 1, %s19
    %p25 = scmp.ge.s32.totalorder %s24, 9
    %s26 = scalar_select %p25, 0, %s24
    %s27 = sadd.s32 1, %s18
    %s28 = scalar_select %p25, %s27, %s18
    %p29 = scmp.ge.s32.totalorder %s28, 1
    %s30 = scalar_select %p29, 0, %s28
    %s31 = ssub.s32 %s19, %s26
    %s32 = ssub.s32 %s18, %s30
    %s33 = sor.u32 %s31, %s32
    %p34 = scmp.eq.s32.totalorder %s33, 0
    %s36 = sadd.s32 %s35, 1
    %s37 = scalar_select %p34, %s35, %s36
    %p40 = pneg %p34
    %p41 = scmp.eq.s32.totalorder %s11, 8
    %p42 = por %p40, %p41
    %p43 = scmp.ne.s32.totalorder %s35, %s38
    %p44 = scmp.eq.s32.totalorder %s11, 0
    %p45 = por %p43, %p44
    %p46 = scmp.ne.s32.totalorder %s35, %s38
    %p47 = scmp.eq.s32.totalorder %s16, 8
    %p48 = por %p46, %p47
    %p49 = scmp.ne.s32.totalorder %s38, %s39
    %p50 = scmp.eq.s32.totalorder %s16, 0
    %p51 = por %p49, %p50
    %p52 = scmp.ne.s32.totalorder %s38, %s39
    %p53 = scmp.eq.s32.totalorder %s17, 8
    %p54 = por %p52, %p53
    %p56 = scmp.ne.s32.totalorder %s39, %s55
    %p57 = scmp.eq.s32.totalorder %s17, 0
    %p58 = por %p56, %p57
    %s59 = ssub.s32 %s19, %s26
    %p60 = scmp.eq.s32.totalorder %s59, 0
    %s62 = sadd.s32 %s61, 1
    %s63 = scalar_select %p60, %s61, %s62
    %p66 = pneg %p60
    %p67 = scmp.eq.s32.totalorder %s11, 8
    %p68 = por %p66, %p67
    %p69 = scmp.ne.s32.totalorder %s61, %s64
    %p70 = scmp.eq.s32.totalorder %s11, 0
    %p71 = por %p69, %p70
    %p72 = scmp.ne.s32.totalorder %s61, %s64
    %p73 = scmp.eq.s32.totalorder %s16, 8
    %p74 = por %p72, %p73
    %p75 = scmp.ne.s32.totalorder %s64, %s65
    %p76 = scmp.eq.s32.totalorder %s16, 0
    %p77 = por %p75, %p76
    %p78 = scmp.ne.s32.totalorder %s64, %s65
    %p79 = scmp.eq.s32.totalorder %s17, 8
    %p80 = por %p78, %p79
    %p82 = scmp.ne.s32.totalorder %s65, %s81
    %p83 = scmp.eq.s32.totalorder %s17, 0
    %p84 = por %p82, %p83
    %s86 = sadd.s32 %s85, 1
    %p89 = scmp.eq.s32.totalorder %s11, 8
    %p90 = scmp.ne.s32.totalorder %s85, %s87
    %p91 = scmp.eq.s32.totalorder %s11, 0
    %p92 = por %p90, %p91
    %p93 = scmp.ne.s32.totalorder %s85, %s87
    %p94 = scmp.eq.s32.totalorder %s16, 8
    %p95 = por %p93, %p94
    %p96 = scmp.ne.s32.totalorder %s87, %s88
    %p97 = scmp.eq.s32.totalorder %s16, 0
    %p98 = por %p96, %p97
    %p99 = scmp.ne.s32.totalorder %s87, %s88
    %p100 = scmp.eq.s32.totalorder %s17, 8
    %p101 = por %p99, %p100
    %p103 = scmp.ne.s32.totalorder %s88, %s102
    %p104 = scmp.eq.s32.totalorder %s17, 0
    %p105 = por %p103, %p104
    %s107 = sadd.s32 %s106, 1
    %p110 = scmp.eq.s32.totalorder %s11, 8
    %p111 = scmp.ne.s32.totalorder %s106, %s108
    %p112 = scmp.eq.s32.totalorder %s11, 0
    %p113 = por %p111, %p112
    %p114 = scmp.ne.s32.totalorder %s106, %s108
    %p115 = scmp.eq.s32.totalorder %s16, 8
    %p116 = por %p114, %p115
    %p117 = scmp.ne.s32.totalorder %s108, %s109
    %p118 = scmp.eq.s32.totalorder %s16, 0
    %p119 = por %p117, %p118
    %p120 = scmp.ne.s32.totalorder %s108, %s109
    %p121 = scmp.eq.s32.totalorder %s17, 8
    %p122 = por %p120, %p121
    %p124 = scmp.ne.s32.totalorder %s109, %s123
    %p125 = scmp.eq.s32.totalorder %s17, 0
    %p126 = por %p124, %p125
    %s127 = ssub.s32 %s18, %s30
    %p128 = scmp.eq.s32.totalorder %s127, 0
    %s130 = sadd.s32 %s129, 1
    %s131 = scalar_select %p128, %s129, %s130
    %p134 = pneg %p128
    %p135 = scmp.eq.s32.totalorder %s11, 8
    %p136 = por %p134, %p135
    %p137 = scmp.ne.s32.totalorder %s129, %s132
    %p138 = scmp.eq.s32.totalorder %s11, 0
    %p139 = por %p137, %p138
    %p140 = scmp.ne.s32.totalorder %s129, %s132
    %p141 = scmp.eq.s32.totalorder %s16, 8
    %p142 = por %p140, %p141
    %p143 = scmp.ne.s32.totalorder %s132, %s133
    %p144 = scmp.eq.s32.totalorder %s16, 0
    %p145 = por %p143, %p144
    %p146 = scmp.ne.s32.totalorder %s132, %s133
    %p147 = scmp.eq.s32.totalorder %s17, 8
    %p148 = por %p146, %p147
    %p150 = scmp.ne.s32.totalorder %s133, %s149
    %p151 = scmp.eq.s32.totalorder %s17, 0
    %p152 = por %p150, %p151
    %s153 = ssub.s32 %s18, %s30
    %p154 = scmp.eq.s32.totalorder %s153, 0
    %s156 = sadd.s32 %s155, 1
    %s157 = scalar_select %p154, %s155, %s156
    %p160 = pneg %p154
    %p161 = scmp.eq.s32.totalorder %s11, 8
    %p162 = por %p160, %p161
    %p163 = scmp.ne.s32.totalorder %s155, %s158
    %p164 = scmp.eq.s32.totalorder %s11, 0
    %p165 = por %p163, %p164
    %p166 = scmp.ne.s32.totalorder %s155, %s158
    %p167 = scmp.eq.s32.totalorder %s16, 8
    %p168 = por %p166, %p167
    %p169 = scmp.ne.s32.totalorder %s158, %s159
    %p170 = scmp.eq.s32.totalorder %s16, 0
    %p171 = por %p169, %p170
    %p172 = scmp.ne.s32.totalorder %s158, %s159
    %p173 = scmp.eq.s32.totalorder %s17, 8
    %p174 = por %p172, %p173
    %p176 = scmp.ne.s32.totalorder %s159, %s175
    %p177 = scmp.eq.s32.totalorder %s17, 0
    %p178 = por %p176, %p177
    %p179 = scmp.le.s32.totalorder 1, %s11
    %p180 = scmp.lt.s32.totalorder %s11, 10
    %p181 = pnand %p179, %p180
    %p182 = pneg %p181
    // Predicated region
    $region9: #{resnet_forward.21} parent=5 // pred_check
      _
    $region10: #{resnet_forward.21} parent=5 // pred_check_branch
      %184 = sbr.rel (%p181) target = $region12
    $region11: #{resnet_forward.21} parent=5 // pred_region
      %s185 = ssub.s32 %s11, 1
      // Predicated region
      $region13: #{resnet_forward.21} parent=11 // pred_check
        %p186 = pneg %p98
      $region14: #{resnet_forward.21} parent=11 // pred_check_branch
        %188 = sbr.rel (%p186) target = $region16
      $region15: #{resnet_forward.21} parent=11 // pred_region
        _
      $region16: #{resnet_forward.21} parent=11 // pred_fallthru
        _
      // Predicated region
      $region17: #{resnet_forward.21} parent=11 // pred_check
        %p189 = pneg %p119
      $region18: #{resnet_forward.21} parent=11 // pred_check_branch
        %191 = sbr.rel (%p189) target = $region20
      $region19: #{resnet_forward.21} parent=11 // pred_region
        _
      $region20: #{resnet_forward.21} parent=11 // pred_fallthru
        _
      // Predicated region
      $region21: #{resnet_forward.21} parent=11 // pred_check
        %p192 = pneg %p145
      $region22: #{resnet_forward.21} parent=11 // pred_check_branch
        %194 = sbr.rel (%p192) target = $region24
      $region23: #{resnet_forward.21} parent=11 // pred_region
        %s195 = smul.u32 4, %s20
        %p196 = scmp.lt.s32.totalorder %s195, 3
        %s197 = scalar_select %p196, %s195, 3
        %s198 = smul.addr %s197, 2
        %s199 = smul.addr %s198, 4
        %s200 = scalar_lea.vmem %s4, %s199
        %s201 = smul.u32 4, %s20
      $region24: #{resnet_forward.21} parent=11 // pred_fallthru
        _
    $region12: #{resnet_forward.21} parent=5 // pred_fallthru
      _
    %p202 = scmp.lt.s32.totalorder %s11, 9
    // Predicated region
    $region25: #{resnet_forward.21} parent=5 // pred_check
      %p203 = pneg %p202
    $region26: #{resnet_forward.21} parent=5 // pred_check_branch
      %205 = sbr.rel (%p203) target = $region28
    $region27: #{resnet_forward.21} parent=5 // pred_region
      // Predicated region
      $region29: #{resnet_forward.21} parent=27 // pred_check
        %p206 = pneg %p45
      $region30: #{resnet_forward.21} parent=27 // pred_check_branch
        %208 = sbr.rel (%p206) target = $region32
      $region31: #{resnet_forward.21} parent=27 // pred_region
        %s209 = smul.u32 4, %s18
        %p210 = scmp.lt.s32.totalorder %s19, 8
        %s211 = scalar_select %p210, %s19, 8
        %p212 = scmp.lt.s32.totalorder %s209, 3
        %s213 = scalar_select %p212, %s209, 3
        %s214 = smul.addr %s213, 2
        %s215 = smul.addr %s211, 8
        %s216 = sadd.s32 %s214, %s215
        %s217 = smul.addr %s216, 4
        %s218 = scalar_lea.vmem %s0, %s217
        %s219 = smul.u32 4, %s18
      $region32: #{resnet_forward.21} parent=27 // pred_fallthru
        _
      // Predicated region
      $region33: #{resnet_forward.21} parent=27 // pred_check
        %p220 = pneg %p71
      $region34: #{resnet_forward.21} parent=27 // pred_check_branch
        %222 = sbr.rel (%p220) target = $region36
      $region35: #{resnet_forward.21} parent=27 // pred_region
        %p223 = scmp.lt.s32.totalorder %s19, 8
        %s224 = scalar_select %p223, %s19, 8
        %s225 = smul.addr %s224, 64
        %s226 = smul.addr %s225, 4
        %s227 = scalar_lea.vmem %s1, %s226
      $region36: #{resnet_forward.21} parent=27 // pred_fallthru
        _
    $region28: #{resnet_forward.21} parent=5 // pred_fallthru
      _
    %p228 = scmp.le.s32.totalorder 1, %s11
    %p229 = scmp.lt.s32.totalorder %s11, 10
    %p230 = pnand %p228, %p229
    %p231 = pneg %p230
    // Predicated region
    $region37: #{resnet_forward.21} parent=5 // pred_check
      _
    $region38: #{resnet_forward.21} parent=5 // pred_check_branch
      %233 = sbr.rel (%p230) target = $region40
    $region39: #{resnet_forward.21} parent=5 // pred_region
      %s234 = ssub.s32 %s11, 1
      %s235 = smul.u32 4, %s20
      %p236 = scmp.lt.s32.totalorder %s21, 8
      %s237 = scalar_select %p236, %s21, 8
      %p238 = scmp.lt.s32.totalorder %s235, 3
      %s239 = scalar_select %p238, %s235, 3
      %s240 = smul.addr %s239, 2
      %s241 = smul.addr %s237, 8
      %s242 = sadd.s32 %s240, %s241
      %s243 = smul.addr %s242, 4
      %s244 = scalar_lea.vmem %s0, %s243
      %p245 = pneg %p51
      %p246 = pneg %p48
      %p247 = scmp.lt.s32.totalorder %s21, 8
      %s248 = scalar_select %p247, %s21, 8
      %s249 = smul.addr %s248, 64
      %s250 = smul.addr %s249, 4
      %s251 = scalar_lea.vmem %s1, %s250
      %p252 = pneg %p77
      %p253 = pneg %p74
      %p254 = pneg %p98
      %p255 = pneg %p95
      %p256 = pneg %p119
      %p257 = pneg %p116
      %s258 = smul.u32 4, %s20
      %p259 = scmp.lt.s32.totalorder %s258, 3
      %s260 = scalar_select %p259, %s258, 3
      %s261 = smul.addr %s260, 2
      %s262 = smul.addr %s261, 4
      %s263 = scalar_lea.vmem %s4, %s262
      %p264 = pneg %p145
      %p265 = pneg %p142
      %p266 = pneg %p171
      %p267 = pneg %p168
      %s268 = smul.u32 4, %s20
      %p269 = scmp.lt.s32.totalorder %s268, 3
      %s270 = scalar_select %p269, %s268, 3
      %s271 = smul.addr %s270, 2
      %s272 = smul.addr %s271, 4
      %s273 = scalar_lea.vmem %s5, %s272
      %s274 = smul.u32 4, %s20
      %p275 = scmp.lt.s32.totalorder %s21, 8
      %s276 = scalar_select %p275, %s21, 8
      %p277 = scmp.lt.s32.totalorder %s274, 3
      %s278 = scalar_select %p277, %s274, 3
      %s279 = smul.addr %s278, 2
      %s280 = smul.addr %s276, 8
      %s281 = sadd.s32 %s279, %s280
      %s282 = smul.addr %s281, 4
      %s283 = scalar_lea.vmem %s0, %s282
      %s284 = smul.u32 4, %s20
      %p285 = scmp.lt.s32.totalorder %s21, 8
      %s286 = scalar_select %p285, %s21, 8
      %s287 = smul.addr %s286, 64
      %s288 = smul.addr %s287, 4
      %s289 = scalar_lea.vmem %s1, %s288
      %s290 = smul.u32 4, %s20
      %p291 = scmp.lt.s32.totalorder %s290, 3
      %s292 = scalar_select %p291, %s290, 3
      %s293 = smul.addr %s292, 2
      %s294 = smul.addr %s293, 4
      %s295 = scalar_lea.vmem %s4, %s294
      %s296 = smul.u32 4, %s20
      %s297 = smul.u32 4, %s20
      %p298 = scmp.lt.s32.totalorder %s297, 3
      %s299 = scalar_select %p298, %s297, 3
      %s300 = smul.addr %s299, 2
      %s301 = smul.addr %s300, 4
      %s302 = scalar_lea.vmem %s5, %s301
      %s303 = smul.u32 4, %s20
      %p304 = scmp.eq.s32.totalorder %s21, 0
      // Predicated region
      $region41: #{resnet_forward.21} parent=39 // pred_check
        %p305 = pneg %p304
      $region42: #{resnet_forward.21} parent=39 // pred_check_branch
        %307 = sbr.rel (%p305) target = $region44
      $region43: #{resnet_forward.21} parent=39 // pred_region
        %308 = vst [vmem:[#allocation2] sm:$0xff] 0.0
        %309 = vst [vmem:[#allocation2 + $0x8] sm:$0xff] 0.0
        %310 = vst [vmem:[#allocation2 + $0x10] sm:$0xff] 0.0
        %311 = vst [vmem:[#allocation2 + $0x18] sm:$0xff] 0.0
        %312 = vst [vmem:[#allocation2 + $0x20] sm:$0xff] 0.0
        %313 = vst [vmem:[#allocation2 + $0x28] sm:$0xff] 0.0
        %314 = vst [vmem:[#allocation2 + $0x30] sm:$0xff] 0.0
        %315 = vst [vmem:[#allocation2 + $0x38] sm:$0xff] 0.0
      $region44: #{resnet_forward.21} parent=39 // pred_fallthru
        _
      %v316 = vld [vmem:[#allocation2] sm:$0xff]
      %v317 = vld [vmem:[#allocation2 + $0x8] sm:$0xff]
      %v318 = vld [vmem:[#allocation2 + $0x10] sm:$0xff]
      %v319 = vld [vmem:[#allocation2 + $0x18] sm:$0xff]
      %v320 = vld [vmem:[#allocation2 + $0x20] sm:$0xff]
      %v321 = vld [vmem:[#allocation2 + $0x28] sm:$0xff]
      %v322 = vld [vmem:[#allocation2 + $0x30] sm:$0xff]
      %v323 = vld [vmem:[#allocation2 + $0x38] sm:$0xff]
      %v324 = vld [vmem:[%s283] sm:$0xff]
      %v325 = vld [vmem:[%s283 + $0x8] sm:$0xff]
      %v326 = vld [vmem:[%s283 + $0x10] sm:$0xff]
      %v327 = vld [vmem:[%s283 + $0x18] sm:$0xff]
      %v328 = vld [vmem:[%s289] sm:$0xff]
      %v329 = vld [vmem:[%s289 + $0x8] sm:$0xff]
      %v330 = vld [vmem:[%s289 + $0x10] sm:$0xff]
      %v331 = vld [vmem:[%s289 + $0x18] sm:$0xff]
      %v332 = vld [vmem:[%s289 + $0x20] sm:$0xff]
      %v333 = vld [vmem:[%s289 + $0x28] sm:$0xff]
      %v334 = vld [vmem:[%s289 + $0x30] sm:$0xff]
      %v335 = vld [vmem:[%s289 + $0x38] sm:$0xff]
      %v336 = vld [vmem:[%s289 + $0x40] sm:$0xff]
      %v337 = vld [vmem:[%s289 + $0x48] sm:$0xff]
      %v338 = vld [vmem:[%s289 + $0x50] sm:$0xff]
      %v339 = vld [vmem:[%s289 + $0x58] sm:$0xff]
      %v340 = vld [vmem:[%s289 + $0x60] sm:$0xff]
      %v341 = vld [vmem:[%s289 + $0x68] sm:$0xff]
      %v342 = vld [vmem:[%s289 + $0x70] sm:$0xff]
      %v343 = vld [vmem:[%s289 + $0x78] sm:$0xff]
      %v344 = vld [vmem:[%s289 + $0x80] sm:$0xff]
      %v345 = vld [vmem:[%s289 + $0x88] sm:$0xff]
      %v346 = vld [vmem:[%s289 + $0x90] sm:$0xff]
      %v347 = vld [vmem:[%s289 + $0x98] sm:$0xff]
      %v348 = vld [vmem:[%s289 + $0xa0] sm:$0xff]
      %v349 = vld [vmem:[%s289 + $0xa8] sm:$0xff]
      %v350 = vld [vmem:[%s289 + $0xb0] sm:$0xff]
      %v351 = vld [vmem:[%s289 + $0xb8] sm:$0xff]
      %v352 = vld [vmem:[%s289 + $0xc0] sm:$0xff]
      %v353 = vld [vmem:[%s289 + $0xc8] sm:$0xff]
      %v354 = vld [vmem:[%s289 + $0xd0] sm:$0xff]
      %v355 = vld [vmem:[%s289 + $0xd8] sm:$0xff]
      %v356 = vld [vmem:[%s289 + $0xe0] sm:$0xff]
      %v357 = vld [vmem:[%s289 + $0xe8] sm:$0xff]
      %v358 = vld [vmem:[%s289 + $0xf0] sm:$0xff]
      %v359 = vld [vmem:[%s289 + $0xf8] sm:$0xff]
      %v364 = vunpack.c.l.b16 %v324
      %v365 = vunpack.c.h.b16 %v324
      %v366 = vunpack.c.l.b16 %v325
      %v367 = vunpack.c.h.b16 %v325
      %v368 = vunpack.c.l.b16 %v326
      %v369 = vunpack.c.h.b16 %v326
      %v370 = vunpack.c.l.b16 %v327
      %v371 = vunpack.c.h.b16 %v327
      %v372 = vpack.c.b16 %v366, %v364
      %v373 = vpack.c.b16 %v367, %v365
      %v374 = vpack.c.b16 %v370, %v368
      %v375 = vpack.c.b16 %v371, %v369
      %v412 = vunpack.c.l.b16 %v328
      %v413 = vunpack.c.h.b16 %v328
      %v414 = vunpack.c.l.b16 %v329
      %v415 = vunpack.c.h.b16 %v329
      %v416 = vunpack.c.l.b16 %v330
      %v417 = vunpack.c.h.b16 %v330
      %v418 = vunpack.c.l.b16 %v331
      %v419 = vunpack.c.h.b16 %v331
      %v420 = vunpack.c.l.b16 %v332
      %v421 = vunpack.c.h.b16 %v332
      %v422 = vunpack.c.l.b16 %v333
      %v423 = vunpack.c.h.b16 %v333
      %v424 = vunpack.c.l.b16 %v334
      %v425 = vunpack.c.h.b16 %v334
      %v426 = vunpack.c.l.b16 %v335
      %v427 = vunpack.c.h.b16 %v335
      %v428 = vunpack.c.l.b16 %v336
      %v429 = vunpack.c.h.b16 %v336
      %v430 = vunpack.c.l.b16 %v337
      %v431 = vunpack.c.h.b16 %v337
      %v432 = vunpack.c.l.b16 %v338
      %v433 = vunpack.c.h.b16 %v338
      %v434 = vunpack.c.l.b16 %v339
      %v435 = vunpack.c.h.b16 %v339
      %v436 = vunpack.c.l.b16 %v340
      %v437 = vunpack.c.h.b16 %v340
      %v438 = vunpack.c.l.b16 %v341
      %v439 = vunpack.c.h.b16 %v341
      %v440 = vunpack.c.l.b16 %v342
      %v441 = vunpack.c.h.b16 %v342
      %v442 = vunpack.c.l.b16 %v343
      %v443 = vunpack.c.h.b16 %v343
      %v444 = vunpack.c.l.b16 %v344
      %v445 = vunpack.c.h.b16 %v344
      %v446 = vunpack.c.l.b16 %v345
      %v447 = vunpack.c.h.b16 %v345
      %v448 = vunpack.c.l.b16 %v346
      %v449 = vunpack.c.h.b16 %v346
      %v450 = vunpack.c.l.b16 %v347
      %v451 = vunpack.c.h.b16 %v347
      %v452 = vunpack.c.l.b16 %v348
      %v453 = vunpack.c.h.b16 %v348
      %v454 = vunpack.c.l.b16 %v349
      %v455 = vunpack.c.h.b16 %v349
      %v456 = vunpack.c.l.b16 %v350
      %v457 = vunpack.c.h.b16 %v350
      %v458 = vunpack.c.l.b16 %v351
      %v459 = vunpack.c.h.b16 %v351
      %v460 = vunpack.c.l.b16 %v352
      %v461 = vunpack.c.h.b16 %v352
      %v462 = vunpack.c.l.b16 %v353
      %v463 = vunpack.c.h.b16 %v353
      %v464 = vunpack.c.l.b16 %v354
      %v465 = vunpack.c.h.b16 %v354
      %v466 = vunpack.c.l.b16 %v355
      %v467 = vunpack.c.h.b16 %v355
      %v468 = vunpack.c.l.b16 %v356
      %v469 = vunpack.c.h.b16 %v356
      %v470 = vunpack.c.l.b16 %v357
      %v471 = vunpack.c.h.b16 %v357
      %v472 = vunpack.c.l.b16 %v358
      %v473 = vunpack.c.h.b16 %v358
      %v474 = vunpack.c.l.b16 %v359
      %v475 = vunpack.c.h.b16 %v359
      %v476 = vpack.c.b16 %v414, %v412
      %v477 = vpack.c.b16 %v415, %v413
      %v478 = vpack.c.b16 %v418, %v416
      %v479 = vpack.c.b16 %v419, %v417
      %v480 = vpack.c.b16 %v422, %v420
      %v481 = vpack.c.b16 %v423, %v421
      %v482 = vpack.c.b16 %v426, %v424
      %v483 = vpack.c.b16 %v427, %v425
      %v484 = vpack.c.b16 %v430, %v428
      %v485 = vpack.c.b16 %v431, %v429
      %v486 = vpack.c.b16 %v434, %v432
      %v487 = vpack.c.b16 %v435, %v433
      %v488 = vpack.c.b16 %v438, %v436
      %v489 = vpack.c.b16 %v439, %v437
      %v490 = vpack.c.b16 %v442, %v440
      %v491 = vpack.c.b16 %v443, %v441
      %v492 = vpack.c.b16 %v446, %v444
      %v493 = vpack.c.b16 %v447, %v445
      %v494 = vpack.c.b16 %v450, %v448
      %v495 = vpack.c.b16 %v451, %v449
      %v496 = vpack.c.b16 %v454, %v452
      %v497 = vpack.c.b16 %v455, %v453
      %v498 = vpack.c.b16 %v458, %v456
      %v499 = vpack.c.b16 %v459, %v457
      %v500 = vpack.c.b16 %v462, %v460
      %v501 = vpack.c.b16 %v463, %v461
      %v502 = vpack.c.b16 %v466, %v464
      %v503 = vpack.c.b16 %v467, %v465
      %v504 = vpack.c.b16 %v470, %v468
      %v505 = vpack.c.b16 %v471, %v469
      %v506 = vpack.c.b16 %v474, %v472
      %v507 = vpack.c.b16 %v475, %v473
      %540 = vmatprep.subr.bf16.mxu0 %v477
      %541 = vmatpush1.bf16.msra.mxu0 %v476
      %542 = vmatprep.subr.bf16.mxu0 %v479
      %543 = vmatpush1.bf16.msra.mxu0 %v478
      %544 = vmatprep.subr.bf16.mxu0 %v481
      %545 = vmatpush1.bf16.msra.mxu0 %v480
      %546 = vmatprep.subr.bf16.mxu0 %v483
      %547 = vmatpush1.bf16.msra.mxu0 %v482
      %548 = vmatprep.subr.bf16.mxu0 %v485
      %549 = vmatpush1.bf16.msra.mxu0 %v484
      %550 = vmatprep.subr.bf16.mxu0 %v487
      %551 = vmatpush1.bf16.msra.mxu0 %v486
      %552 = vmatprep.subr.bf16.mxu0 %v489
      %553 = vmatpush1.bf16.msra.mxu0 %v488
      %554 = vmatprep.subr.bf16.mxu0 %v491
      %555 = vmatpush1.bf16.msra.mxu0 %v490
      %556 = vmatprep.subr.bf16.mxu0 %v493
      %557 = vmatpush1.bf16.msra.mxu0 %v492
      %558 = vmatprep.subr.bf16.mxu0 %v495
      %559 = vmatpush1.bf16.msra.mxu0 %v494
      %560 = vmatprep.subr.bf16.mxu0 %v497
      %561 = vmatpush1.bf16.msra.mxu0 %v496
      %562 = vmatprep.subr.bf16.mxu0 %v499
      %563 = vmatpush1.bf16.msra.mxu0 %v498
      %564 = vmatprep.subr.bf16.mxu0 %v501
      %565 = vmatpush1.bf16.msra.mxu0 %v500
      %566 = vmatprep.subr.bf16.mxu0 %v503
      %567 = vmatpush1.bf16.msra.mxu0 %v502
      %568 = vmatprep.subr.bf16.mxu0 %v505
      %569 = vmatpush1.bf16.msra.mxu0 %v504
      %570 = vmatprep.subr.bf16.mxu0 %v507
      %571 = vmatpush1.bf16.msra.mxu0 %v506
      %572 = vmatprep.mubr.bf16.mxu0 %v373
      %573 = vmatmul.mubr.bf16.gmra.mrb[0].mxu0 %v372
      %v574 = vpop.f32.mrb[0].mxu0
      %v575 = vadd.f32 0.0, %v574
      %v576 = vpop.f32.mrb[0].mxu0
      %v577 = vadd.f32 0.0, %v576
      %v578 = vpop.f32.mrb[0].mxu0
      %v579 = vadd.f32 0.0, %v578
      %v580 = vpop.f32.mrb[0].mxu0
      %v581 = vadd.f32 0.0, %v580
      %582 = vmatprep.mubr.bf16.mxu0 %v375
      %583 = vmatmul.mubr.bf16.gmra.mrb[0].mxu0 %v374
      %v584 = vpop.f32.mrb[0].mxu0
      %v585 = vadd.f32 0.0, %v584
      %v586 = vpop.f32.mrb[0].mxu0
      %v587 = vadd.f32 0.0, %v586
      %v588 = vpop.f32.mrb[0].mxu0
      %v589 = vadd.f32 0.0, %v588
      %v590 = vpop.f32.mrb[0].mxu0
      %v591 = vadd.f32 0.0, %v590
      %592 = vdwg.mxu0
      %v593 = vadd.f32 %v316, %v575
      %v594 = vadd.f32 %v317, %v577
      %v595 = vadd.f32 %v318, %v579
      %v596 = vadd.f32 %v319, %v581
      %v597 = vadd.f32 %v320, %v585
      %v598 = vadd.f32 %v321, %v587
      %v599 = vadd.f32 %v322, %v589
      %v600 = vadd.f32 %v323, %v591
      %601 = vst [vmem:[#allocation2] sm:$0xff] %v593
      %602 = vst [vmem:[#allocation2 + $0x8] sm:$0xff] %v594
      %603 = vst [vmem:[#allocation2 + $0x10] sm:$0xff] %v595
      %604 = vst [vmem:[#allocation2 + $0x18] sm:$0xff] %v596
      %605 = vst [vmem:[#allocation2 + $0x20] sm:$0xff] %v597
      %606 = vst [vmem:[#allocation2 + $0x28] sm:$0xff] %v598
      %607 = vst [vmem:[#allocation2 + $0x30] sm:$0xff] %v599
      %608 = vst [vmem:[#allocation2 + $0x38] sm:$0xff] %v600
      %p609 = scmp.eq.s32.totalorder %s21, 8
      // Predicated region
      $region45: #{resnet_forward.21} parent=39 // pred_check
        %p610 = pneg %p609
      $region46: #{resnet_forward.21} parent=39 // pred_check_branch
        %612 = sbr.rel (%p610) target = $region48
      $region47: #{resnet_forward.21} parent=39 // pred_region
        %v613 = vld [vmem:[#allocation2] sm:$0xff]
        %v614 = vld [vmem:[#allocation2 + $0x8] sm:$0xff]
        %v615 = vld [vmem:[#allocation2 + $0x10] sm:$0xff]
        %v616 = vld [vmem:[#allocation2 + $0x18] sm:$0xff]
        %v617 = vld [vmem:[#allocation2 + $0x20] sm:$0xff]
        %v618 = vld [vmem:[#allocation2 + $0x28] sm:$0xff]
        %v619 = vld [vmem:[#allocation2 + $0x30] sm:$0xff]
        %v620 = vld [vmem:[#allocation2 + $0x38] sm:$0xff]
        %v621 = vld [vmem:[%s2] sm:$0x3]
        %v623 = vlaneseq
        %v624 = vshrl.u32 %v623, 7
        %v625 = vsub.s32 0, %v624
        %v626 = vrot.slane %v621, %v625
        %v627 = vlaneseq
        %v628 = vshrl.u32 %v627, 7
        %v629 = vsub.s32 1, %v628
        %v630 = vrot.slane %v621, %v629
        %v633 = vmul.f32 %v613, %v626
        %v634 = vmul.f32 %v614, %v630
        %v635 = vmul.f32 %v615, %v626
        %v636 = vmul.f32 %v616, %v630
        %v637 = vmul.f32 %v617, %v626
        %v638 = vmul.f32 %v618, %v630
        %v639 = vmul.f32 %v619, %v626
        %v640 = vmul.f32 %v620, %v630
        %v641 = vld [vmem:[%s3] sm:$0x3]
        %v643 = vlaneseq
        %v644 = vshrl.u32 %v643, 7
        %v645 = vsub.s32 0, %v644
        %v646 = vrot.slane %v641, %v645
        %v647 = vlaneseq
        %v648 = vshrl.u32 %v647, 7
        %v649 = vsub.s32 1, %v648
        %v650 = vrot.slane %v641, %v649
        %v653 = vadd.f32 %v633, %v646
        %v654 = vadd.f32 %v634, %v650
        %v655 = vadd.f32 %v635, %v646
        %v656 = vadd.f32 %v636, %v650
        %v657 = vadd.f32 %v637, %v646
        %v658 = vadd.f32 %v638, %v650
        %v659 = vadd.f32 %v639, %v646
        %v660 = vadd.f32 %v640, %v650
        %v661 = vld [vmem:[%s295] sm:$0xff]
        %v662 = vld [vmem:[%s295 + $0x8] sm:$0xff]
        %v663 = vld [vmem:[%s295 + $0x10] sm:$0xff]
        %v664 = vld [vmem:[%s295 + $0x18] sm:$0xff]
        %v665 = vunpack.c.l.bf16 %v661
        %v666 = vunpack.c.h.bf16 %v661
        %v667 = vunpack.c.l.bf16 %v662
        %v668 = vunpack.c.h.bf16 %v662
        %v669 = vunpack.c.l.bf16 %v663
        %v670 = vunpack.c.h.bf16 %v663
        %v671 = vunpack.c.l.bf16 %v664
        %v672 = vunpack.c.h.bf16 %v664
        %v673 = vadd.f32 %v653, %v665
        %v674 = vadd.f32 %v654, %v666
        %v675 = vadd.f32 %v655, %v667
        %v676 = vadd.f32 %v656, %v668
        %v677 = vadd.f32 %v657, %v669
        %v678 = vadd.f32 %v658, %v670
        %v679 = vadd.f32 %v659, %v671
        %v680 = vadd.f32 %v660, %v672
        %v681 = vmax.f32 %v673, 0.0
        %v682 = vmax.f32 %v674, 0.0
        %v683 = vmax.f32 %v675, 0.0
        %v684 = vmax.f32 %v676, 0.0
        %v685 = vmax.f32 %v677, 0.0
        %v686 = vmax.f32 %v678, 0.0
        %v687 = vmax.f32 %v679, 0.0
        %v688 = vmax.f32 %v680, 0.0
        %v689 = vpack.c.bf16 %v683, %v681
        %v690 = vpack.c.bf16 %v684, %v682
        %v691 = vpack.c.bf16 %v687, %v685
        %v692 = vpack.c.bf16 %v688, %v686
        %v697 = vunpack.c.l.b16 %v689
        %v698 = vunpack.c.l.b16 %v690
        %v699 = vunpack.c.h.b16 %v689
        %v700 = vunpack.c.h.b16 %v690
        %v701 = vunpack.c.l.b16 %v691
        %v702 = vunpack.c.l.b16 %v692
        %v703 = vunpack.c.h.b16 %v691
        %v704 = vunpack.c.h.b16 %v692
        %v705 = vpack.c.b16 %v698, %v697
        %v706 = vpack.c.b16 %v700, %v699
        %v707 = vpack.c.b16 %v702, %v701
        %v708 = vpack.c.b16 %v704, %v703
        %713 = vst [vmem:[%s302] sm:$0xff] %v705
        %714 = vst [vmem:[%s302 + $0x8] sm:$0xff] %v706
        %715 = vst [vmem:[%s302 + $0x10] sm:$0xff] %v707
        %716 = vst [vmem:[%s302 + $0x18] sm:$0xff] %v708
      $region48: #{resnet_forward.21} parent=39 // pred_fallthru
        _
      %s717 = smul.u32 4, %s20
      %p718 = scmp.lt.s32.totalorder %s717, 3
      %s719 = scalar_select %p718, %s717, 3
      %s720 = smul.addr %s719, 2
      %s721 = smul.addr %s720, 4
      %s722 = scalar_lea.vmem %s5, %s721
      // Predicated region
      $region49: #{resnet_forward.21} parent=39 // pred_check
        %p723 = pneg %p168
      $region50: #{resnet_forward.21} parent=39 // pred_check_branch
        %725 = sbr.rel (%p723) target = $region52
      $region51: #{resnet_forward.21} parent=39 // pred_region
        %s726 = smul.u32 4, %s20
      $region52: #{resnet_forward.21} parent=39 // pred_fallthru
        _
      // Predicated region
      $region53: #{resnet_forward.21} parent=39 // pred_check
        %p727 = pneg %p168
      $region54: #{resnet_forward.21} parent=39 // pred_check_branch
        %729 = sbr.rel (%p727) target = $region56
      $region55: #{resnet_forward.21} parent=39 // pred_region
        %s730 = smul.u32 4, %s20
        %p731 = scmp.lt.s32.totalorder %s730, 3
        %s732 = scalar_select %p731, %s730, 3
        %s733 = smul.addr %s732, 2
        %s734 = smul.addr %s733, 4
        %s735 = scalar_lea.vmem %s5, %s734
      $region56: #{resnet_forward.21} parent=39 // pred_fallthru
        _
    $region40: #{resnet_forward.21} parent=5 // pred_fallthru
      _
    %p736 = scmp.le.s32.totalorder 2, %s11
    // Predicated region
    $region57: #{resnet_forward.21} parent=5 // pred_check
      %p737 = pneg %p736
    $region58: #{resnet_forward.21} parent=5 // pred_check_branch
      %739 = sbr.rel (%p737) target = $region60
    $region59: #{resnet_forward.21} parent=5 // pred_region
      %s740 = ssub.s32 %s11, 2
    $region60: #{resnet_forward.21} parent=5 // pred_fallthru
      _
  $region6: #{resnet_forward.21} parent=0 // loop_footer
    %s15 = sadd.s32 1, %s11
  $region7: #{resnet_forward.21} parent=0 // loop_footer_branch
    %10 = sbr.rel target = $region3
  $region8: #{resnet_forward.21} parent=0 // loop_exit
    _

// kernel: resnet_forward.19
$region0: #{resnet_forward.19}
  #allocation0 [shape = 'u32[]', space=smem, size = 0x4, offset = 0x4, fixed_abs, tag = 'smem constant byte address 0x4 - core index']
  #allocation1 [shape = 'u32[144,128]{1,0:T(1,128)}', space=vmem, size = 0x12000, scoped, tag = 'internal scratch']
  #allocation2 [shape = 'f32[32,256]{1,0:T(8,128)}', space=vmem, size = 0x8000, scoped, tag = 'scratch operand']
  %s0 = inlined_call_operand.vmem [shape: bf16[1,32,128], index: 0, kind: input, shape index: {}]
  %s1 = inlined_call_operand.vmem [shape: bf16[1,128,256], index: 1, kind: input, shape index: {}]
  %s2 = inlined_call_operand.vmem [shape: f32[1,256], index: 2, kind: input, shape index: {}]
  %s3 = inlined_call_operand.vmem [shape: f32[1,256], index: 3, kind: input, shape index: {}]
  %s4 = inlined_call_operand.vmem [shape: bf16[32,256], index: 4, kind: output, shape index: {}]
  %s5 = sld [smem:[#allocation0]]
  $region34: #{resnet_forward.19} parent=0
    _
  %s7 = ssub.s32 1, %s5
  %s8 = scalar_select 0, %s7, %s5
  // Predicated region
  $region2: #{resnet_forward.19} parent=0 // pred_check
    _
  $region3: #{resnet_forward.19} parent=0 // pred_check_branch
    %10 = sbr.rel (0) target = $region5
  $region4: #{resnet_forward.19} parent=0 // pred_region
    _
  $region5: #{resnet_forward.19} parent=0 // pred_fallthru
    _
  // Predicated region
  $region6: #{resnet_forward.19} parent=0 // pred_check
    _
  $region7: #{resnet_forward.19} parent=0 // pred_check_branch
    %12 = sbr.rel (0) target = $region9
  $region8: #{resnet_forward.19} parent=0 // pred_region
    _
  $region9: #{resnet_forward.19} parent=0 // pred_fallthru
    _
  // Predicated region
  $region10: #{resnet_forward.19} parent=0 // pred_check
    _
  $region11: #{resnet_forward.19} parent=0 // pred_check_branch
    %14 = sbr.rel (0) target = $region13
  $region12: #{resnet_forward.19} parent=0 // pred_region
    _
  $region13: #{resnet_forward.19} parent=0 // pred_fallthru
    _
  // Predicated region
  $region14: #{resnet_forward.19} parent=0 // pred_check
    _
  $region15: #{resnet_forward.19} parent=0 // pred_check_branch
    %16 = sbr.rel (0) target = $region17
  $region16: #{resnet_forward.19} parent=0 // pred_region
    _
  $region17: #{resnet_forward.19} parent=0 // pred_fallthru
    _
  %p18 = scmp.eq.s32.totalorder 0, 0
  // Predicated region
  $region18: #{resnet_forward.19} parent=0 // pred_check
    %p19 = pneg %p18
  $region19: #{resnet_forward.19} parent=0 // pred_check_branch
    %21 = sbr.rel (%p19) target = $region21
  $region20: #{resnet_forward.19} parent=0 // pred_region
    %22 = vst [vmem:[#allocation2] sm:$0xff] 0.0
    %23 = vst [vmem:[#allocation2 + $0x8] sm:$0xff] 0.0
    %24 = vst [vmem:[#allocation2 + $0x10] sm:$0xff] 0.0
    %25 = vst [vmem:[#allocation2 + $0x18] sm:$0xff] 0.0
    %26 = vst [vmem:[#allocation2 + $0x20] sm:$0xff] 0.0
    %27 = vst [vmem:[#allocation2 + $0x28] sm:$0xff] 0.0
    %28 = vst [vmem:[#allocation2 + $0x30] sm:$0xff] 0.0
    %29 = vst [vmem:[#allocation2 + $0x38] sm:$0xff] 0.0
  $region21: #{resnet_forward.19} parent=0 // pred_fallthru
    _
  %v30 = vld [vmem:[#allocation2] sm:$0xff]
  %v31 = vld [vmem:[#allocation2 + $0x8] sm:$0xff]
  %v32 = vld [vmem:[#allocation2 + $0x10] sm:$0xff]
  %v33 = vld [vmem:[#allocation2 + $0x18] sm:$0xff]
  %v34 = vld [vmem:[#allocation2 + $0x20] sm:$0xff]
  %v35 = vld [vmem:[#allocation2 + $0x28] sm:$0xff]
  %v36 = vld [vmem:[#allocation2 + $0x30] sm:$0xff]
  %v37 = vld [vmem:[#allocation2 + $0x38] sm:$0xff]
  %v38 = vld [vmem:[%s0] sm:$0xf]
  %v39 = vld [vmem:[%s0 + $0x4] sm:$0xf]
  %v40 = vld [vmem:[%s0 + $0x8] sm:$0xf]
  %v41 = vld [vmem:[%s0 + $0xc] sm:$0xf]
  %v42 = vld [vmem:[%s1] sm:$0xff]
  %v43 = vld [vmem:[%s1 + $0x8] sm:$0xff]
  %v44 = vld [vmem:[%s1 + $0x10] sm:$0xff]
  %v45 = vld [vmem:[%s1 + $0x18] sm:$0xff]
  %v46 = vld [vmem:[%s1 + $0x20] sm:$0xff]
  %v47 = vld [vmem:[%s1 + $0x28] sm:$0xff]
  %v48 = vld [vmem:[%s1 + $0x30] sm:$0xff]
  %v49 = vld [vmem:[%s1 + $0x38] sm:$0xff]
  %v50 = vld [vmem:[%s1 + $0x40] sm:$0xff]
  %v51 = vld [vmem:[%s1 + $0x48] sm:$0xff]
  %v52 = vld [vmem:[%s1 + $0x50] sm:$0xff]
  %v53 = vld [vmem:[%s1 + $0x58] sm:$0xff]
  %v54 = vld [vmem:[%s1 + $0x60] sm:$0xff]
  %v55 = vld [vmem:[%s1 + $0x68] sm:$0xff]
  %v56 = vld [vmem:[%s1 + $0x70] sm:$0xff]
  %v57 = vld [vmem:[%s1 + $0x78] sm:$0xff]
  %v62 = vunpack.c.l.b16 %v38
  %v63 = vunpack.c.l.b16 %v39
  %v64 = vunpack.c.l.b16 %v40
  %v65 = vunpack.c.l.b16 %v41
  %v66 = vpack.c.b16 %v63, %v62
  %v67 = vpack.c.b16 %v65, %v64
  %v86 = vunpack.c.l.b16 %v42
  %v87 = vunpack.c.h.b16 %v42
  %v88 = vunpack.c.l.b16 %v43
  %v89 = vunpack.c.h.b16 %v43
  %v90 = vunpack.c.l.b16 %v44
  %v91 = vunpack.c.h.b16 %v44
  %v92 = vunpack.c.l.b16 %v45
  %v93 = vunpack.c.h.b16 %v45
  %v94 = vunpack.c.l.b16 %v46
  %v95 = vunpack.c.h.b16 %v46
  %v96 = vunpack.c.l.b16 %v47
  %v97 = vunpack.c.h.b16 %v47
  %v98 = vunpack.c.l.b16 %v48
  %v99 = vunpack.c.h.b16 %v48
  %v100 = vunpack.c.l.b16 %v49
  %v101 = vunpack.c.h.b16 %v49
  %v102 = vunpack.c.l.b16 %v50
  %v103 = vunpack.c.h.b16 %v50
  %v104 = vunpack.c.l.b16 %v51
  %v105 = vunpack.c.h.b16 %v51
  %v106 = vunpack.c.l.b16 %v52
  %v107 = vunpack.c.h.b16 %v52
  %v108 = vunpack.c.l.b16 %v53
  %v109 = vunpack.c.h.b16 %v53
  %v110 = vunpack.c.l.b16 %v54
  %v111 = vunpack.c.h.b16 %v54
  %v112 = vunpack.c.l.b16 %v55
  %v113 = vunpack.c.h.b16 %v55
  %v114 = vunpack.c.l.b16 %v56
  %v115 = vunpack.c.h.b16 %v56
  %v116 = vunpack.c.l.b16 %v57
  %v117 = vunpack.c.h.b16 %v57
  %v118 = vpack.c.b16 %v88, %v86
  %v119 = vpack.c.b16 %v89, %v87
  %v120 = vpack.c.b16 %v92, %v90
  %v121 = vpack.c.b16 %v93, %v91
  %v122 = vpack.c.b16 %v96, %v94
  %v123 = vpack.c.b16 %v97, %v95
  %v124 = vpack.c.b16 %v100, %v98
  %v125 = vpack.c.b16 %v101, %v99
  %v126 = vpack.c.b16 %v104, %v102
  %v127 = vpack.c.b16 %v105, %v103
  %v128 = vpack.c.b16 %v108, %v106
  %v129 = vpack.c.b16 %v109, %v107
  %v130 = vpack.c.b16 %v112, %v110
  %v131 = vpack.c.b16 %v113, %v111
  %v132 = vpack.c.b16 %v116, %v114
  %v133 = vpack.c.b16 %v117, %v115
  %150 = vmatprep.subr.bf16.mxu0 %v119
  %151 = vmatpush1.bf16.msra.mxu0 %v118
  %152 = vmatprep.subr.bf16.mxu0 %v121
  %153 = vmatpush1.bf16.msra.mxu0 %v120
  %154 = vmatprep.subr.bf16.mxu0 %v123
  %155 = vmatpush1.bf16.msra.mxu0 %v122
  %156 = vmatprep.subr.bf16.mxu0 %v125
  %157 = vmatpush1.bf16.msra.mxu0 %v124
  %158 = vmatprep.subr.bf16.mxu0 %v127
  %159 = vmatpush1.bf16.msra.mxu0 %v126
  %160 = vmatprep.subr.bf16.mxu0 %v129
  %161 = vmatpush1.bf16.msra.mxu0 %v128
  %162 = vmatprep.subr.bf16.mxu0 %v131
  %163 = vmatpush1.bf16.msra.mxu0 %v130
  %164 = vmatprep.subr.bf16.mxu0 %v133
  %165 = vmatpush1.bf16.msra.mxu0 %v132
  %166 = vmatprep.subr.bf16.mxu0 0
  %167 = vmatpush1.bf16.msra.mxu0 0
  %168 = vmatprep.subr.bf16.mxu0 0
  %169 = vmatpush1.bf16.msra.mxu0 0
  %170 = vmatprep.subr.bf16.mxu0 0
  %171 = vmatpush1.bf16.msra.mxu0 0
  %172 = vmatprep.subr.bf16.mxu0 0
  %173 = vmatpush1.bf16.msra.mxu0 0
  %174 = vmatprep.subr.bf16.mxu0 0
  %175 = vmatpush1.bf16.msra.mxu0 0
  %176 = vmatprep.subr.bf16.mxu0 0
  %177 = vmatpush1.bf16.msra.mxu0 0
  %178 = vmatprep.subr.bf16.mxu0 0
  %179 = vmatpush1.bf16.msra.mxu0 0
  %180 = vmatprep.subr.bf16.mxu0 0
  %181 = vmatpush1.bf16.msra.mxu0 0
  %182 = vmatprep.mubr.bf16.mxu0 0
  %183 = vmatmul.mubr.bf16.gmra.mrb[0].mxu0 %v66
  %v184 = vpop.f32.mrb[0].mxu0
  %v185 = vadd.f32 0.0, %v184
  %v186 = vpop.f32.mrb[0].mxu0
  %v187 = vadd.f32 0.0, %v186
  %v188 = vpop.f32.mrb[0].mxu0
  %v189 = vadd.f32 0.0, %v188
  %v190 = vpop.f32.mrb[0].mxu0
  %v191 = vadd.f32 0.0, %v190
  %192 = vmatprep.mubr.bf16.mxu0 0
  %193 = vmatmul.mubr.bf16.gmra.mrb[0].mxu0 %v67
  %v194 = vpop.f32.mrb[0].mxu0
  %v195 = vadd.f32 0.0, %v194
  %v196 = vpop.f32.mrb[0].mxu0
  %v197 = vadd.f32 0.0, %v196
  %v198 = vpop.f32.mrb[0].mxu0
  %v199 = vadd.f32 0.0, %v198
  %v200 = vpop.f32.mrb[0].mxu0
  %v201 = vadd.f32 0.0, %v200
  %202 = vdwg.mxu0
  %v203 = vadd.f32 %v30, %v185
  %v204 = vadd.f32 %v31, %v187
  %v205 = vadd.f32 %v32, %v189
  %v206 = vadd.f32 %v33, %v191
  %v207 = vadd.f32 %v34, %v195
  %v208 = vadd.f32 %v35, %v197
  %v209 = vadd.f32 %v36, %v199
  %v210 = vadd.f32 %v37, %v201
  %211 = vst [vmem:[#allocation2] sm:$0xff] %v203
  %212 = vst [vmem:[#allocation2 + $0x8] sm:$0xff] %v204
  %213 = vst [vmem:[#allocation2 + $0x10] sm:$0xff] %v205
  %214 = vst [vmem:[#allocation2 + $0x18] sm:$0xff] %v206
  %215 = vst [vmem:[#allocation2 + $0x20] sm:$0xff] %v207
  %216 = vst [vmem:[#allocation2 + $0x28] sm:$0xff] %v208
  %217 = vst [vmem:[#allocation2 + $0x30] sm:$0xff] %v209
  %218 = vst [vmem:[#allocation2 + $0x38] sm:$0xff] %v210
  // Predicated region
  $region22: #{resnet_forward.19} parent=0 // pred_check
    %p219 = pneg %p18
  $region23: #{resnet_forward.19} parent=0 // pred_check_branch
    %221 = sbr.rel (%p219) target = $region25
  $region24: #{resnet_forward.19} parent=0 // pred_region
    %v222 = vld [vmem:[#allocation2] sm:$0xff]
    %v223 = vld [vmem:[#allocation2 + $0x8] sm:$0xff]
    %v224 = vld [vmem:[#allocation2 + $0x10] sm:$0xff]
    %v225 = vld [vmem:[#allocation2 + $0x18] sm:$0xff]
    %v226 = vld [vmem:[#allocation2 + $0x20] sm:$0xff]
    %v227 = vld [vmem:[#allocation2 + $0x28] sm:$0xff]
    %v228 = vld [vmem:[#allocation2 + $0x30] sm:$0xff]
    %v229 = vld [vmem:[#allocation2 + $0x38] sm:$0xff]
    %v230 = vld [vmem:[%s2] sm:$0x3]
    %v232 = vlaneseq
    %v233 = vshrl.u32 %v232, 7
    %v234 = vsub.s32 0, %v233
    %v235 = vrot.slane %v230, %v234
    %v236 = vlaneseq
    %v237 = vshrl.u32 %v236, 7
    %v238 = vsub.s32 1, %v237
    %v239 = vrot.slane %v230, %v238
    %v242 = vmul.f32 %v222, %v235
    %v243 = vmul.f32 %v223, %v239
    %v244 = vmul.f32 %v224, %v235
    %v245 = vmul.f32 %v225, %v239
    %v246 = vmul.f32 %v226, %v235
    %v247 = vmul.f32 %v227, %v239
    %v248 = vmul.f32 %v228, %v235
    %v249 = vmul.f32 %v229, %v239
    %v250 = vld [vmem:[%s3] sm:$0x3]
    %v252 = vlaneseq
    %v253 = vshrl.u32 %v252, 7
    %v254 = vsub.s32 0, %v253
    %v255 = vrot.slane %v250, %v254
    %v256 = vlaneseq
    %v257 = vshrl.u32 %v256, 7
    %v258 = vsub.s32 1, %v257
    %v259 = vrot.slane %v250, %v258
    %v262 = vadd.f32 %v242, %v255
    %v263 = vadd.f32 %v243, %v259
    %v264 = vadd.f32 %v244, %v255
    %v265 = vadd.f32 %v245, %v259
    %v266 = vadd.f32 %v246, %v255
    %v267 = vadd.f32 %v247, %v259
    %v268 = vadd.f32 %v248, %v255
    %v269 = vadd.f32 %v249, %v259
    %v270 = vpack.c.bf16 %v264, %v262
    %v271 = vpack.c.bf16 %v265, %v263
    %v272 = vpack.c.bf16 %v268, %v266
    %v273 = vpack.c.bf16 %v269, %v267
    %v278 = vunpack.c.l.b16 %v270
    %v279 = vunpack.c.l.b16 %v271
    %v280 = vunpack.c.h.b16 %v270
    %v281 = vunpack.c.h.b16 %v271
    %v282 = vunpack.c.l.b16 %v272
    %v283 = vunpack.c.l.b16 %v273
    %v284 = vunpack.c.h.b16 %v272
    %v285 = vunpack.c.h.b16 %v273
    %v286 = vpack.c.b16 %v279, %v278
    %v287 = vpack.c.b16 %v281, %v280
    %v288 = vpack.c.b16 %v283, %v282
    %v289 = vpack.c.b16 %v285, %v284
    %294 = vst [vmem:[%s4] sm:$0xff] %v286
    %295 = vst [vmem:[%s4 + $0x8] sm:$0xff] %v287
    %296 = vst [vmem:[%s4 + $0x10] sm:$0xff] %v288
    %297 = vst [vmem:[%s4 + $0x18] sm:$0xff] %v289
  $region25: #{resnet_forward.19} parent=0 // pred_fallthru
    _
  // Predicated region
  $region26: #{resnet_forward.19} parent=0 // pred_check
    _
  $region27: #{resnet_forward.19} parent=0 // pred_check_branch
    %299 = sbr.rel (0) target = $region29
  $region28: #{resnet_forward.19} parent=0 // pred_region
    _
  $region29: #{resnet_forward.19} parent=0 // pred_fallthru
    _
  // Predicated region
  $region30: #{resnet_forward.19} parent=0 // pred_check
    _
  $region31: #{resnet_forward.19} parent=0 // pred_check_branch
    %301 = sbr.rel (0) target = $region33
  $region32: #{resnet_forward.19} parent=0 // pred_region
    _
  $region33: #{resnet_forward.19} parent=0 // pred_fallthru
    _

// kernel: resnet_forward.23
$region0: #{resnet_forward.23}
  #allocation0 [shape = 'u32[]', space=smem, size = 0x4, offset = 0x4, fixed_abs, tag = 'smem constant byte address 0x4 - core index']
  #allocation1 [shape = 'u32[144,128]{1,0:T(1,128)}', space=vmem, size = 0x12000, scoped, tag = 'internal scratch']
  #allocation2 [shape = 'f32[8,512]{1,0:T(8,128)}', space=vmem, size = 0x4000, scoped, tag = 'scratch operand']
  %s0 = inlined_call_operand.vmem [shape: bf16[9,8,256], index: 0, kind: input, shape index: {}]
  %s1 = inlined_call_operand.vmem [shape: bf16[9,256,512], index: 1, kind: input, shape index: {}]
  %s2 = inlined_call_operand.vmem [shape: f32[1,512], index: 2, kind: input, shape index: {}]
  %s3 = inlined_call_operand.vmem [shape: f32[1,512], index: 3, kind: input, shape index: {}]
  %s4 = inlined_call_operand.vmem [shape: bf16[8,512], index: 4, kind: output, shape index: {}]
  %s5 = sld [smem:[#allocation0]]
  $region57: #{resnet_forward.23} parent=0
    _
  %s7 = ssub.s32 1, %s5
  %s8 = scalar_select 0, %s7, %s5
  loop: start=0, step=1, limit=11
  $region2: #{resnet_forward.23} parent=0 // loop_pre_header
    _
  $region3: #{resnet_forward.23} parent=0 // loop_header
    %s10 = sphi 0, %s14
    %p11 = scmp.ge.s32.totalorder %s10, 11
    %s17 = sphi 0, %s29
    %s18 = sphi 0, %s25
    %s19 = sphi 0, %s17
    %s20 = sphi 0, %s18
    %s21 = sphi 0, %s19
    %s22 = sphi 0, %s20
    %s34 = sphi 0, %s36
    %s37 = sphi 0, %s34
    %s38 = sphi 0, %s37
    %s54 = sphi 0, %s38
    %s60 = sphi 0, %s62
    %s63 = sphi 0, %s60
    %s64 = sphi 0, %s63
    %s80 = sphi 0, %s64
    %s84 = sphi 0, %s84
    %s86 = sphi 0, %s84
    %s87 = sphi 0, %s86
    %s101 = sphi 0, %s87
    %s105 = sphi 0, %s105
    %s107 = sphi 0, %s105
    %s108 = sphi 0, %s107
    %s122 = sphi 0, %s108
    %s128 = sphi 0, %s130
    %s131 = sphi 0, %s128
    %s132 = sphi 0, %s131
    %s148 = sphi 0, %s132
  $region4: #{resnet_forward.23} parent=0 // loop_header_branch
    %13 = sbr.rel (%p11) target = $region8
  $region5: #{resnet_forward.23} parent=0 // loop_body
    %s15 = ssub.s32 %s10, 1
    %s16 = ssub.s32 %s10, 2
    %s23 = sadd.s32 1, %s18
    %p24 = scmp.ge.s32.totalorder %s23, 9
    %s25 = scalar_select %p24, 0, %s23
    %s26 = sadd.s32 1, %s17
    %s27 = scalar_select %p24, %s26, %s17
    %p28 = scmp.ge.s32.totalorder %s27, 1
    %s29 = scalar_select %p28, 0, %s27
    %s30 = ssub.s32 %s18, %s25
    %s31 = ssub.s32 %s17, %s29
    %s32 = sor.u32 %s30, %s31
    %p33 = scmp.eq.s32.totalorder %s32, 0
    %s35 = sadd.s32 %s34, 1
    %s36 = scalar_select %p33, %s34, %s35
    %p39 = pneg %p33
    %p40 = scmp.eq.s32.totalorder %s10, 8
    %p41 = por %p39, %p40
    %p42 = scmp.ne.s32.totalorder %s34, %s37
    %p43 = scmp.eq.s32.totalorder %s10, 0
    %p44 = por %p42, %p43
    %p45 = scmp.ne.s32.totalorder %s34, %s37
    %p46 = scmp.eq.s32.totalorder %s15, 8
    %p47 = por %p45, %p46
    %p48 = scmp.ne.s32.totalorder %s37, %s38
    %p49 = scmp.eq.s32.totalorder %s15, 0
    %p50 = por %p48, %p49
    %p51 = scmp.ne.s32.totalorder %s37, %s38
    %p52 = scmp.eq.s32.totalorder %s16, 8
    %p53 = por %p51, %p52
    %p55 = scmp.ne.s32.totalorder %s38, %s54
    %p56 = scmp.eq.s32.totalorder %s16, 0
    %p57 = por %p55, %p56
    %s58 = ssub.s32 %s18, %s25
    %p59 = scmp.eq.s32.totalorder %s58, 0
    %s61 = sadd.s32 %s60, 1
    %s62 = scalar_select %p59, %s60, %s61
    %p65 = pneg %p59
    %p66 = scmp.eq.s32.totalorder %s10, 8
    %p67 = por %p65, %p66
    %p68 = scmp.ne.s32.totalorder %s60, %s63
    %p69 = scmp.eq.s32.totalorder %s10, 0
    %p70 = por %p68, %p69
    %p71 = scmp.ne.s32.totalorder %s60, %s63
    %p72 = scmp.eq.s32.totalorder %s15, 8
    %p73 = por %p71, %p72
    %p74 = scmp.ne.s32.totalorder %s63, %s64
    %p75 = scmp.eq.s32.totalorder %s15, 0
    %p76 = por %p74, %p75
    %p77 = scmp.ne.s32.totalorder %s63, %s64
    %p78 = scmp.eq.s32.totalorder %s16, 8
    %p79 = por %p77, %p78
    %p81 = scmp.ne.s32.totalorder %s64, %s80
    %p82 = scmp.eq.s32.totalorder %s16, 0
    %p83 = por %p81, %p82
    %s85 = sadd.s32 %s84, 1
    %p88 = scmp.eq.s32.totalorder %s10, 8
    %p89 = scmp.ne.s32.totalorder %s84, %s86
    %p90 = scmp.eq.s32.totalorder %s10, 0
    %p91 = por %p89, %p90
    %p92 = scmp.ne.s32.totalorder %s84, %s86
    %p93 = scmp.eq.s32.totalorder %s15, 8
    %p94 = por %p92, %p93
    %p95 = scmp.ne.s32.totalorder %s86, %s87
    %p96 = scmp.eq.s32.totalorder %s15, 0
    %p97 = por %p95, %p96
    %p98 = scmp.ne.s32.totalorder %s86, %s87
    %p99 = scmp.eq.s32.totalorder %s16, 8
    %p100 = por %p98, %p99
    %p102 = scmp.ne.s32.totalorder %s87, %s101
    %p103 = scmp.eq.s32.totalorder %s16, 0
    %p104 = por %p102, %p103
    %s106 = sadd.s32 %s105, 1
    %p109 = scmp.eq.s32.totalorder %s10, 8
    %p110 = scmp.ne.s32.totalorder %s105, %s107
    %p111 = scmp.eq.s32.totalorder %s10, 0
    %p112 = por %p110, %p111
    %p113 = scmp.ne.s32.totalorder %s105, %s107
    %p114 = scmp.eq.s32.totalorder %s15, 8
    %p115 = por %p113, %p114
    %p116 = scmp.ne.s32.totalorder %s107, %s108
    %p117 = scmp.eq.s32.totalorder %s15, 0
    %p118 = por %p116, %p117
    %p119 = scmp.ne.s32.totalorder %s107, %s108
    %p120 = scmp.eq.s32.totalorder %s16, 8
    %p121 = por %p119, %p120
    %p123 = scmp.ne.s32.totalorder %s108, %s122
    %p124 = scmp.eq.s32.totalorder %s16, 0
    %p125 = por %p123, %p124
    %s126 = ssub.s32 %s17, %s29
    %p127 = scmp.eq.s32.totalorder %s126, 0
    %s129 = sadd.s32 %s128, 1
    %s130 = scalar_select %p127, %s128, %s129
    %p133 = pneg %p127
    %p134 = scmp.eq.s32.totalorder %s10, 8
    %p135 = por %p133, %p134
    %p136 = scmp.ne.s32.totalorder %s128, %s131
    %p137 = scmp.eq.s32.totalorder %s10, 0
    %p138 = por %p136, %p137
    %p139 = scmp.ne.s32.totalorder %s128, %s131
    %p140 = scmp.eq.s32.totalorder %s15, 8
    %p141 = por %p139, %p140
    %p142 = scmp.ne.s32.totalorder %s131, %s132
    %p143 = scmp.eq.s32.totalorder %s15, 0
    %p144 = por %p142, %p143
    %p145 = scmp.ne.s32.totalorder %s131, %s132
    %p146 = scmp.eq.s32.totalorder %s16, 8
    %p147 = por %p145, %p146
    %p149 = scmp.ne.s32.totalorder %s132, %s148
    %p150 = scmp.eq.s32.totalorder %s16, 0
    %p151 = por %p149, %p150
    %p152 = scmp.le.s32.totalorder 1, %s10
    %p153 = scmp.lt.s32.totalorder %s10, 10
    %p154 = pnand %p152, %p153
    %p155 = pneg %p154
    // Predicated region
    $region9: #{resnet_forward.23} parent=5 // pred_check
      _
    $region10: #{resnet_forward.23} parent=5 // pred_check_branch
      %157 = sbr.rel (%p154) target = $region12
    $region11: #{resnet_forward.23} parent=5 // pred_region
      %s158 = ssub.s32 %s10, 1
      // Predicated region
      $region13: #{resnet_forward.23} parent=11 // pred_check
        %p159 = pneg %p97
      $region14: #{resnet_forward.23} parent=11 // pred_check_branch
        %161 = sbr.rel (%p159) target = $region16
      $region15: #{resnet_forward.23} parent=11 // pred_region
        _
      $region16: #{resnet_forward.23} parent=11 // pred_fallthru
        _
      // Predicated region
      $region17: #{resnet_forward.23} parent=11 // pred_check
        %p162 = pneg %p118
      $region18: #{resnet_forward.23} parent=11 // pred_check_branch
        %164 = sbr.rel (%p162) target = $region20
      $region19: #{resnet_forward.23} parent=11 // pred_region
        _
      $region20: #{resnet_forward.23} parent=11 // pred_fallthru
        _
    $region12: #{resnet_forward.23} parent=5 // pred_fallthru
      _
    %p165 = scmp.lt.s32.totalorder %s10, 9
    // Predicated region
    $region21: #{resnet_forward.23} parent=5 // pred_check
      %p166 = pneg %p165
    $region22: #{resnet_forward.23} parent=5 // pred_check_branch
      %168 = sbr.rel (%p166) target = $region24
    $region23: #{resnet_forward.23} parent=5 // pred_region
      // Predicated region
      $region25: #{resnet_forward.23} parent=23 // pred_check
        %p169 = pneg %p44
      $region26: #{resnet_forward.23} parent=23 // pred_check_branch
        %171 = sbr.rel (%p169) target = $region28
      $region27: #{resnet_forward.23} parent=23 // pred_region
        %p172 = scmp.lt.s32.totalorder %s18, 8
        %s173 = scalar_select %p172, %s18, 8
        %p174 = scmp.lt.s32.totalorder %s17, 0
        %s175 = scalar_select %p174, %s17, 0
        %s176 = smul.addr %s175, 2
        %s177 = smul.addr %s173, 2
        %s178 = sadd.s32 %s176, %s177
        %s179 = smul.addr %s178, 4
        %s180 = scalar_lea.vmem %s0, %s179
      $region28: #{resnet_forward.23} parent=23 // pred_fallthru
        _
      // Predicated region
      $region29: #{resnet_forward.23} parent=23 // pred_check
        %p181 = pneg %p70
      $region30: #{resnet_forward.23} parent=23 // pred_check_branch
        %183 = sbr.rel (%p181) target = $region32
      $region31: #{resnet_forward.23} parent=23 // pred_region
        %p184 = scmp.lt.s32.totalorder %s18, 8
        %s185 = scalar_select %p184, %s18, 8
        %s186 = smul.addr %s185, 128
        %s187 = smul.addr %s186, 4
        %s188 = scalar_lea.vmem %s1, %s187
      $region32: #{resnet_forward.23} parent=23 // pred_fallthru
        _
    $region24: #{resnet_forward.23} parent=5 // pred_fallthru
      _
    %p189 = scmp.le.s32.totalorder 1, %s10
    %p190 = scmp.lt.s32.totalorder %s10, 10
    %p191 = pnand %p189, %p190
    %p192 = pneg %p191
    // Predicated region
    $region33: #{resnet_forward.23} parent=5 // pred_check
      _
    $region34: #{resnet_forward.23} parent=5 // pred_check_branch
      %194 = sbr.rel (%p191) target = $region36
    $region35: #{resnet_forward.23} parent=5 // pred_region
      %s195 = ssub.s32 %s10, 1
      %p196 = scmp.lt.s32.totalorder %s20, 8
      %s197 = scalar_select %p196, %s20, 8
      %p198 = scmp.lt.s32.totalorder %s19, 0
      %s199 = scalar_select %p198, %s19, 0
      %s200 = smul.addr %s199, 2
      %s201 = smul.addr %s197, 2
      %s202 = sadd.s32 %s200, %s201
      %s203 = smul.addr %s202, 4
      %s204 = scalar_lea.vmem %s0, %s203
      %p205 = pneg %p50
      %p206 = pneg %p47
      %p207 = scmp.lt.s32.totalorder %s20, 8
      %s208 = scalar_select %p207, %s20, 8
      %s209 = smul.addr %s208, 128
      %s210 = smul.addr %s209, 4
      %s211 = scalar_lea.vmem %s1, %s210
      %p212 = pneg %p76
      %p213 = pneg %p73
      %p214 = pneg %p97
      %p215 = pneg %p94
      %p216 = pneg %p118
      %p217 = pneg %p115
      %p218 = pneg %p144
      %p219 = pneg %p141
      %p220 = scmp.lt.s32.totalorder %s19, 0
      %s221 = scalar_select %p220, %s19, 0
      %s222 = smul.addr %s221, 4
      %s223 = smul.addr %s222, 4
      %s224 = scalar_lea.vmem %s4, %s223
      %p225 = scmp.lt.s32.totalorder %s20, 8
      %s226 = scalar_select %p225, %s20, 8
      %p227 = scmp.lt.s32.totalorder %s19, 0
      %s228 = scalar_select %p227, %s19, 0
      %s229 = smul.addr %s228, 2
      %s230 = smul.addr %s226, 2
      %s231 = sadd.s32 %s229, %s230
      %s232 = smul.addr %s231, 4
      %s233 = scalar_lea.vmem %s0, %s232
      %p234 = scmp.lt.s32.totalorder %s20, 8
      %s235 = scalar_select %p234, %s20, 8
      %s236 = smul.addr %s235, 128
      %s237 = smul.addr %s236, 4
      %s238 = scalar_lea.vmem %s1, %s237
      %p239 = scmp.lt.s32.totalorder %s19, 0
      %s240 = scalar_select %p239, %s19, 0
      %s241 = smul.addr %s240, 4
      %s242 = smul.addr %s241, 4
      %s243 = scalar_lea.vmem %s4, %s242
      %p244 = scmp.eq.s32.totalorder %s20, 0
      // Predicated region
      $region37: #{resnet_forward.23} parent=35 // pred_check
        %p245 = pneg %p244
      $region38: #{resnet_forward.23} parent=35 // pred_check_branch
        %247 = sbr.rel (%p245) target = $region40
      $region39: #{resnet_forward.23} parent=35 // pred_region
        %248 = vst [vmem:[#allocation2] sm:$0xff] 0.0
        %249 = vst [vmem:[#allocation2 + $0x8] sm:$0xff] 0.0
        %250 = vst [vmem:[#allocation2 + $0x10] sm:$0xff] 0.0
        %251 = vst [vmem:[#allocation2 + $0x18] sm:$0xff] 0.0
      $region40: #{resnet_forward.23} parent=35 // pred_fallthru
        _
      %v252 = vld [vmem:[#allocation2] sm:$0xff]
      %v253 = vld [vmem:[#allocation2 + $0x8] sm:$0xff]
      %v254 = vld [vmem:[#allocation2 + $0x10] sm:$0xff]
      %v255 = vld [vmem:[#allocation2 + $0x18] sm:$0xff]
      %v256 = vld [vmem:[%s233] sm:$0xff]
      %v257 = vld [vmem:[%s238] sm:$0xff]
      %v258 = vld [vmem:[%s238 + $0x8] sm:$0xff]
      %v259 = vld [vmem:[%s238 + $0x10] sm:$0xff]
      %v260 = vld [vmem:[%s238 + $0x18] sm:$0xff]
      %v261 = vld [vmem:[%s238 + $0x20] sm:$0xff]
      %v262 = vld [vmem:[%s238 + $0x28] sm:$0xff]
      %v263 = vld [vmem:[%s238 + $0x30] sm:$0xff]
      %v264 = vld [vmem:[%s238 + $0x38] sm:$0xff]
      %v265 = vld [vmem:[%s238 + $0x40] sm:$0xff]
      %v266 = vld [vmem:[%s238 + $0x48] sm:$0xff]
      %v267 = vld [vmem:[%s238 + $0x50] sm:$0xff]
      %v268 = vld [vmem:[%s238 + $0x58] sm:$0xff]
      %v269 = vld [vmem:[%s238 + $0x60] sm:$0xff]
      %v270 = vld [vmem:[%s238 + $0x68] sm:$0xff]
      %v271 = vld [vmem:[%s238 + $0x70] sm:$0xff]
      %v272 = vld [vmem:[%s238 + $0x78] sm:$0xff]
      %v273 = vld [vmem:[%s238 + $0x80] sm:$0xff]
      %v274 = vld [vmem:[%s238 + $0x88] sm:$0xff]
      %v275 = vld [vmem:[%s238 + $0x90] sm:$0xff]
      %v276 = vld [vmem:[%s238 + $0x98] sm:$0xff]
      %v277 = vld [vmem:[%s238 + $0xa0] sm:$0xff]
      %v278 = vld [vmem:[%s238 + $0xa8] sm:$0xff]
      %v279 = vld [vmem:[%s238 + $0xb0] sm:$0xff]
      %v280 = vld [vmem:[%s238 + $0xb8] sm:$0xff]
      %v281 = vld [vmem:[%s238 + $0xc0] sm:$0xff]
      %v282 = vld [vmem:[%s238 + $0xc8] sm:$0xff]
      %v283 = vld [vmem:[%s238 + $0xd0] sm:$0xff]
      %v284 = vld [vmem:[%s238 + $0xd8] sm:$0xff]
      %v285 = vld [vmem:[%s238 + $0xe0] sm:$0xff]
      %v286 = vld [vmem:[%s238 + $0xe8] sm:$0xff]
      %v287 = vld [vmem:[%s238 + $0xf0] sm:$0xff]
      %v288 = vld [vmem:[%s238 + $0xf8] sm:$0xff]
      %v289 = vld [vmem:[%s238 + $0x100] sm:$0xff]
      %v290 = vld [vmem:[%s238 + $0x108] sm:$0xff]
      %v291 = vld [vmem:[%s238 + $0x110] sm:$0xff]
      %v292 = vld [vmem:[%s238 + $0x118] sm:$0xff]
      %v293 = vld [vmem:[%s238 + $0x120] sm:$0xff]
      %v294 = vld [vmem:[%s238 + $0x128] sm:$0xff]
      %v295 = vld [vmem:[%s238 + $0x130] sm:$0xff]
      %v296 = vld [vmem:[%s238 + $0x138] sm:$0xff]
      %v297 = vld [vmem:[%s238 + $0x140] sm:$0xff]
      %v298 = vld [vmem:[%s238 + $0x148] sm:$0xff]
      %v299 = vld [vmem:[%s238 + $0x150] sm:$0xff]
      %v300 = vld [vmem:[%s238 + $0x158] sm:$0xff]
      %v301 = vld [vmem:[%s238 + $0x160] sm:$0xff]
      %v302 = vld [vmem:[%s238 + $0x168] sm:$0xff]
      %v303 = vld [vmem:[%s238 + $0x170] sm:$0xff]
      %v304 = vld [vmem:[%s238 + $0x178] sm:$0xff]
      %v305 = vld [vmem:[%s238 + $0x180] sm:$0xff]
      %v306 = vld [vmem:[%s238 + $0x188] sm:$0xff]
      %v307 = vld [vmem:[%s238 + $0x190] sm:$0xff]
      %v308 = vld [vmem:[%s238 + $0x198] sm:$0xff]
      %v309 = vld [vmem:[%s238 + $0x1a0] sm:$0xff]
      %v310 = vld [vmem:[%s238 + $0x1a8] sm:$0xff]
      %v311 = vld [vmem:[%s238 + $0x1b0] sm:$0xff]
      %v312 = vld [vmem:[%s238 + $0x1b8] sm:$0xff]
      %v313 = vld [vmem:[%s238 + $0x1c0] sm:$0xff]
      %v314 = vld [vmem:[%s238 + $0x1c8] sm:$0xff]
      %v315 = vld [vmem:[%s238 + $0x1d0] sm:$0xff]
      %v316 = vld [vmem:[%s238 + $0x1d8] sm:$0xff]
      %v317 = vld [vmem:[%s238 + $0x1e0] sm:$0xff]
      %v318 = vld [vmem:[%s238 + $0x1e8] sm:$0xff]
      %v319 = vld [vmem:[%s238 + $0x1f0] sm:$0xff]
      %v320 = vld [vmem:[%s238 + $0x1f8] sm:$0xff]
      %v322 = vunpack.c.l.b16 %v256
      %v323 = vunpack.c.h.b16 %v256
      %v324 = vpack.c.b16 %v322, %v322
      %v325 = vpack.c.b16 %v323, %v323
      %v392 = vunpack.c.l.b16 %v257
      %v393 = vunpack.c.h.b16 %v257
      %v394 = vunpack.c.l.b16 %v258
      %v395 = vunpack.c.h.b16 %v258
      %v396 = vunpack.c.l.b16 %v259
      %v397 = vunpack.c.h.b16 %v259
      %v398 = vunpack.c.l.b16 %v260
      %v399 = vunpack.c.h.b16 %v260
      %v400 = vunpack.c.l.b16 %v261
      %v401 = vunpack.c.h.b16 %v261
      %v402 = vunpack.c.l.b16 %v262
      %v403 = vunpack.c.h.b16 %v262
      %v404 = vunpack.c.l.b16 %v263
      %v405 = vunpack.c.h.b16 %v263
      %v406 = vunpack.c.l.b16 %v264
      %v407 = vunpack.c.h.b16 %v264
      %v408 = vunpack.c.l.b16 %v265
      %v409 = vunpack.c.h.b16 %v265
      %v410 = vunpack.c.l.b16 %v266
      %v411 = vunpack.c.h.b16 %v266
      %v412 = vunpack.c.l.b16 %v267
      %v413 = vunpack.c.h.b16 %v267
      %v414 = vunpack.c.l.b16 %v268
      %v415 = vunpack.c.h.b16 %v268
      %v416 = vunpack.c.l.b16 %v269
      %v417 = vunpack.c.h.b16 %v269
      %v418 = vunpack.c.l.b16 %v270
      %v419 = vunpack.c.h.b16 %v270
      %v420 = vunpack.c.l.b16 %v271
      %v421 = vunpack.c.h.b16 %v271
      %v422 = vunpack.c.l.b16 %v272
      %v423 = vunpack.c.h.b16 %v272
      %v424 = vunpack.c.l.b16 %v273
      %v425 = vunpack.c.h.b16 %v273
      %v426 = vunpack.c.l.b16 %v274
      %v427 = vunpack.c.h.b16 %v274
      %v428 = vunpack.c.l.b16 %v275
      %v429 = vunpack.c.h.b16 %v275
      %v430 = vunpack.c.l.b16 %v276
      %v431 = vunpack.c.h.b16 %v276
      %v432 = vunpack.c.l.b16 %v277
      %v433 = vunpack.c.h.b16 %v277
      %v434 = vunpack.c.l.b16 %v278
      %v435 = vunpack.c.h.b16 %v278
      %v436 = vunpack.c.l.b16 %v279
      %v437 = vunpack.c.h.b16 %v279
      %v438 = vunpack.c.l.b16 %v280
      %v439 = vunpack.c.h.b16 %v280
      %v440 = vunpack.c.l.b16 %v281
      %v441 = vunpack.c.h.b16 %v281
      %v442 = vunpack.c.l.b16 %v282
      %v443 = vunpack.c.h.b16 %v282
      %v444 = vunpack.c.l.b16 %v283
      %v445 = vunpack.c.h.b16 %v283
      %v446 = vunpack.c.l.b16 %v284
      %v447 = vunpack.c.h.b16 %v284
      %v448 = vunpack.c.l.b16 %v285
      %v449 = vunpack.c.h.b16 %v285
      %v450 = vunpack.c.l.b16 %v286
      %v451 = vunpack.c.h.b16 %v286
      %v452 = vunpack.c.l.b16 %v287
      %v453 = vunpack.c.h.b16 %v287
      %v454 = vunpack.c.l.b16 %v288
      %v455 = vunpack.c.h.b16 %v288
      %v456 = vunpack.c.l.b16 %v289
      %v457 = vunpack.c.h.b16 %v289
      %v458 = vunpack.c.l.b16 %v290
      %v459 = vunpack.c.h.b16 %v290
      %v460 = vunpack.c.l.b16 %v291
      %v461 = vunpack.c.h.b16 %v291
      %v462 = vunpack.c.l.b16 %v292
      %v463 = vunpack.c.h.b16 %v292
      %v464 = vunpack.c.l.b16 %v293
      %v465 = vunpack.c.h.b16 %v293
      %v466 = vunpack.c.l.b16 %v294
      %v467 = vunpack.c.h.b16 %v294
      %v468 = vunpack.c.l.b16 %v295
      %v469 = vunpack.c.h.b16 %v295
      %v470 = vunpack.c.l.b16 %v296
      %v471 = vunpack.c.h.b16 %v296
      %v472 = vunpack.c.l.b16 %v297
      %v473 = vunpack.c.h.b16 %v297
      %v474 = vunpack.c.l.b16 %v298
      %v475 = vunpack.c.h.b16 %v298
      %v476 = vunpack.c.l.b16 %v299
      %v477 = vunpack.c.h.b16 %v299
      %v478 = vunpack.c.l.b16 %v300
      %v479 = vunpack.c.h.b16 %v300
      %v480 = vunpack.c.l.b16 %v301
      %v481 = vunpack.c.h.b16 %v301
      %v482 = vunpack.c.l.b16 %v302
      %v483 = vunpack.c.h.b16 %v302
      %v484 = vunpack.c.l.b16 %v303
      %v485 = vunpack.c.h.b16 %v303
      %v486 = vunpack.c.l.b16 %v304
      %v487 = vunpack.c.h.b16 %v304
      %v488 = vunpack.c.l.b16 %v305
      %v489 = vunpack.c.h.b16 %v305
      %v490 = vunpack.c.l.b16 %v306
      %v491 = vunpack.c.h.b16 %v306
      %v492 = vunpack.c.l.b16 %v307
      %v493 = vunpack.c.h.b16 %v307
      %v494 = vunpack.c.l.b16 %v308
      %v495 = vunpack.c.h.b16 %v308
      %v496 = vunpack.c.l.b16 %v309
      %v497 = vunpack.c.h.b16 %v309
      %v498 = vunpack.c.l.b16 %v310
      %v499 = vunpack.c.h.b16 %v310
      %v500 = vunpack.c.l.b16 %v311
      %v501 = vunpack.c.h.b16 %v311
      %v502 = vunpack.c.l.b16 %v312
      %v503 = vunpack.c.h.b16 %v312
      %v504 = vunpack.c.l.b16 %v313
      %v505 = vunpack.c.h.b16 %v313
      %v506 = vunpack.c.l.b16 %v314
      %v507 = vunpack.c.h.b16 %v314
      %v508 = vunpack.c.l.b16 %v315
      %v509 = vunpack.c.h.b16 %v315
      %v510 = vunpack.c.l.b16 %v316
      %v511 = vunpack.c.h.b16 %v316
      %v512 = vunpack.c.l.b16 %v317
      %v513 = vunpack.c.h.b16 %v317
      %v514 = vunpack.c.l.b16 %v318
      %v515 = vunpack.c.h.b16 %v318
      %v516 = vunpack.c.l.b16 %v319
      %v517 = vunpack.c.h.b16 %v319
      %v518 = vunpack.c.l.b16 %v320
      %v519 = vunpack.c.h.b16 %v320
      %v520 = vpack.c.b16 %v396, %v392
      %v521 = vpack.c.b16 %v397, %v393
      %v522 = vpack.c.b16 %v398, %v394
      %v523 = vpack.c.b16 %v399, %v395
      %v524 = vpack.c.b16 %v404, %v400
      %v525 = vpack.c.b16 %v405, %v401
      %v526 = vpack.c.b16 %v406, %v402
      %v527 = vpack.c.b16 %v407, %v403
      %v528 = vpack.c.b16 %v412, %v408
      %v529 = vpack.c.b16 %v413, %v409
      %v530 = vpack.c.b16 %v414, %v410
      %v531 = vpack.c.b16 %v415, %v411
      %v532 = vpack.c.b16 %v420, %v416
      %v533 = vpack.c.b16 %v421, %v417
      %v534 = vpack.c.b16 %v422, %v418
      %v535 = vpack.c.b16 %v423, %v419
      %v536 = vpack.c.b16 %v428, %v424
      %v537 = vpack.c.b16 %v429, %v425
      %v538 = vpack.c.b16 %v430, %v426
      %v539 = vpack.c.b16 %v431, %v427
      %v540 = vpack.c.b16 %v436, %v432
      %v541 = vpack.c.b16 %v437, %v433
      %v542 = vpack.c.b16 %v438, %v434
      %v543 = vpack.c.b16 %v439, %v435
      %v544 = vpack.c.b16 %v444, %v440
      %v545 = vpack.c.b16 %v445, %v441
      %v546 = vpack.c.b16 %v446, %v442
      %v547 = vpack.c.b16 %v447, %v443
      %v548 = vpack.c.b16 %v452, %v448
      %v549 = vpack.c.b16 %v453, %v449
      %v550 = vpack.c.b16 %v454, %v450
      %v551 = vpack.c.b16 %v455, %v451
      %v552 = vpack.c.b16 %v460, %v456
      %v553 = vpack.c.b16 %v461, %v457
      %v554 = vpack.c.b16 %v462, %v458
      %v555 = vpack.c.b16 %v463, %v459
      %v556 = vpack.c.b16 %v468, %v464
      %v557 = vpack.c.b16 %v469, %v465
      %v558 = vpack.c.b16 %v470, %v466
      %v559 = vpack.c.b16 %v471, %v467
      %v560 = vpack.c.b16 %v476, %v472
      %v561 = vpack.c.b16 %v477, %v473
      %v562 = vpack.c.b16 %v478, %v474
      %v563 = vpack.c.b16 %v479, %v475
      %v564 = vpack.c.b16 %v484, %v480
      %v565 = vpack.c.b16 %v485, %v481
      %v566 = vpack.c.b16 %v486, %v482
      %v567 = vpack.c.b16 %v487, %v483
      %v568 = vpack.c.b16 %v492, %v488
      %v569 = vpack.c.b16 %v493, %v489
      %v570 = vpack.c.b16 %v494, %v490
      %v571 = vpack.c.b16 %v495, %v491
      %v572 = vpack.c.b16 %v500, %v496
      %v573 = vpack.c.b16 %v501, %v497
      %v574 = vpack.c.b16 %v502, %v498
      %v575 = vpack.c.b16 %v503, %v499
      %v576 = vpack.c.b16 %v508, %v504
      %v577 = vpack.c.b16 %v509, %v505
      %v578 = vpack.c.b16 %v510, %v506
      %v579 = vpack.c.b16 %v511, %v507
      %v580 = vpack.c.b16 %v516, %v512
      %v581 = vpack.c.b16 %v517, %v513
      %v582 = vpack.c.b16 %v518, %v514
      %v583 = vpack.c.b16 %v519, %v515
      %648 = vmatprep.subr.bf16.mxu0 %v521
      %649 = vmatpush1.bf16.msra.mxu0 %v520
      %650 = vmatprep.subr.bf16.mxu0 %v525
      %651 = vmatpush1.bf16.msra.mxu0 %v524
      %652 = vmatprep.subr.bf16.mxu0 %v529
      %653 = vmatpush1.bf16.msra.mxu0 %v528
      %654 = vmatprep.subr.bf16.mxu0 %v533
      %655 = vmatpush1.bf16.msra.mxu0 %v532
      %656 = vmatprep.subr.bf16.mxu0 %v537
      %657 = vmatpush1.bf16.msra.mxu0 %v536
      %658 = vmatprep.subr.bf16.mxu0 %v541
      %659 = vmatpush1.bf16.msra.mxu0 %v540
      %660 = vmatprep.subr.bf16.mxu0 %v545
      %661 = vmatpush1.bf16.msra.mxu0 %v544
      %662 = vmatprep.subr.bf16.mxu0 %v549
      %663 = vmatpush1.bf16.msra.mxu0 %v548
      %664 = vmatprep.subr.bf16.mxu0 %v553
      %665 = vmatpush1.bf16.msra.mxu0 %v552
      %666 = vmatprep.subr.bf16.mxu0 %v557
      %667 = vmatpush1.bf16.msra.mxu0 %v556
      %668 = vmatprep.subr.bf16.mxu0 %v561
      %669 = vmatpush1.bf16.msra.mxu0 %v560
      %670 = vmatprep.subr.bf16.mxu0 %v565
      %671 = vmatpush1.bf16.msra.mxu0 %v564
      %672 = vmatprep.subr.bf16.mxu0 %v569
      %673 = vmatpush1.bf16.msra.mxu0 %v568
      %674 = vmatprep.subr.bf16.mxu0 %v573
      %675 = vmatpush1.bf16.msra.mxu0 %v572
      %676 = vmatprep.subr.bf16.mxu0 %v577
      %677 = vmatpush1.bf16.msra.mxu0 %v576
      %678 = vmatprep.subr.bf16.mxu0 %v581
      %679 = vmatpush1.bf16.msra.mxu0 %v580
      %680 = vmatprep.mubr.bf16.mxu0 %v325
      %681 = vmatmul.mubr.bf16.gmra.mrb[0].mxu0 %v324
      %v682 = vpop.f32.mrb[0].mxu0
      %v683 = vadd.f32 0.0, %v682
      %v684 = vpop.f32.mrb[0].mxu0
      %v685 = vadd.f32 0.0, %v684
      %v686 = vpop.f32.mrb[0].mxu0
      %v687 = vpop.f32.mrb[0].mxu0
      %688 = vdwg.mxu0
      %689 = vmatprep.subr.bf16.mxu0 %v523
      %690 = vmatpush1.bf16.msra.mxu0 %v522
      %691 = vmatprep.subr.bf16.mxu0 %v527
      %692 = vmatpush1.bf16.msra.mxu0 %v526
      %693 = vmatprep.subr.bf16.mxu0 %v531
      %694 = vmatpush1.bf16.msra.mxu0 %v530
      %695 = vmatprep.subr.bf16.mxu0 %v535
      %696 = vmatpush1.bf16.msra.mxu0 %v534
      %697 = vmatprep.subr.bf16.mxu0 %v539
      %698 = vmatpush1.bf16.msra.mxu0 %v538
      %699 = vmatprep.subr.bf16.mxu0 %v543
      %700 = vmatpush1.bf16.msra.mxu0 %v542
      %701 = vmatprep.subr.bf16.mxu0 %v547
      %702 = vmatpush1.bf16.msra.mxu0 %v546
      %703 = vmatprep.subr.bf16.mxu0 %v551
      %704 = vmatpush1.bf16.msra.mxu0 %v550
      %705 = vmatprep.subr.bf16.mxu0 %v555
      %706 = vmatpush1.bf16.msra.mxu0 %v554
      %707 = vmatprep.subr.bf16.mxu0 %v559
      %708 = vmatpush1.bf16.msra.mxu0 %v558
      %709 = vmatprep.subr.bf16.mxu0 %v563
      %710 = vmatpush1.bf16.msra.mxu0 %v562
      %711 = vmatprep.subr.bf16.mxu0 %v567
      %712 = vmatpush1.bf16.msra.mxu0 %v566
      %713 = vmatprep.subr.bf16.mxu0 %v571
      %714 = vmatpush1.bf16.msra.mxu0 %v570
      %715 = vmatprep.subr.bf16.mxu0 %v575
      %716 = vmatpush1.bf16.msra.mxu0 %v574
      %717 = vmatprep.subr.bf16.mxu0 %v579
      %718 = vmatpush1.bf16.msra.mxu0 %v578
      %719 = vmatprep.subr.bf16.mxu0 %v583
      %720 = vmatpush1.bf16.msra.mxu0 %v582
      %721 = vmatprep.mubr.bf16.mxu0 %v325
      %722 = vmatmul.mubr.bf16.gmra.mrb[0].mxu0 %v324
      %v723 = vpop.f32.mrb[0].mxu0
      %v724 = vadd.f32 0.0, %v723
      %v725 = vpop.f32.mrb[0].mxu0
      %v726 = vadd.f32 0.0, %v725
      %v727 = vpop.f32.mrb[0].mxu0
      %v728 = vpop.f32.mrb[0].mxu0
      %729 = vdwg.mxu0
      %v730 = vadd.f32 %v252, %v683
      %v731 = vadd.f32 %v253, %v685
      %v732 = vadd.f32 %v254, %v724
      %v733 = vadd.f32 %v255, %v726
      %734 = vst [vmem:[#allocation2] sm:$0xff] %v730
      %735 = vst [vmem:[#allocation2 + $0x8] sm:$0xff] %v731
      %736 = vst [vmem:[#allocation2 + $0x10] sm:$0xff] %v732
      %737 = vst [vmem:[#allocation2 + $0x18] sm:$0xff] %v733
      %p738 = scmp.eq.s32.totalorder %s20, 8
      // Predicated region
      $region41: #{resnet_forward.23} parent=35 // pred_check
        %p739 = pneg %p738
      $region42: #{resnet_forward.23} parent=35 // pred_check_branch
        %741 = sbr.rel (%p739) target = $region44
      $region43: #{resnet_forward.23} parent=35 // pred_region
        %v742 = vld [vmem:[#allocation2] sm:$0xff]
        %v743 = vld [vmem:[#allocation2 + $0x8] sm:$0xff]
        %v744 = vld [vmem:[#allocation2 + $0x10] sm:$0xff]
        %v745 = vld [vmem:[#allocation2 + $0x18] sm:$0xff]
        %v746 = vld [vmem:[%s2] sm:$0xf]
        %v748 = vlaneseq
        %v749 = vshrl.u32 %v748, 7
        %v750 = vsub.s32 0, %v749
        %v751 = vrot.slane %v746, %v750
        %v752 = vlaneseq
        %v753 = vshrl.u32 %v752, 7
        %v754 = vsub.s32 1, %v753
        %v755 = vrot.slane %v746, %v754
        %v756 = vlaneseq
        %v757 = vshrl.u32 %v756, 7
        %v758 = vsub.s32 2, %v757
        %v759 = vrot.slane %v746, %v758
        %v760 = vlaneseq
        %v761 = vshrl.u32 %v760, 7
        %v762 = vsub.s32 3, %v761
        %v763 = vrot.slane %v746, %v762
        %v768 = vmul.f32 %v742, %v751
        %v769 = vmul.f32 %v743, %v755
        %v770 = vmul.f32 %v744, %v759
        %v771 = vmul.f32 %v745, %v763
        %v772 = vld [vmem:[%s3] sm:$0xf]
        %v774 = vlaneseq
        %v775 = vshrl.u32 %v774, 7
        %v776 = vsub.s32 0, %v775
        %v777 = vrot.slane %v772, %v776
        %v778 = vlaneseq
        %v779 = vshrl.u32 %v778, 7
        %v780 = vsub.s32 1, %v779
        %v781 = vrot.slane %v772, %v780
        %v782 = vlaneseq
        %v783 = vshrl.u32 %v782, 7
        %v784 = vsub.s32 2, %v783
        %v785 = vrot.slane %v772, %v784
        %v786 = vlaneseq
        %v787 = vshrl.u32 %v786, 7
        %v788 = vsub.s32 3, %v787
        %v789 = vrot.slane %v772, %v788
        %v794 = vadd.f32 %v768, %v777
        %v795 = vadd.f32 %v769, %v781
        %v796 = vadd.f32 %v770, %v785
        %v797 = vadd.f32 %v771, %v789
        %v798 = vmax.f32 %v794, 0.0
        %v799 = vmax.f32 %v795, 0.0
        %v800 = vmax.f32 %v796, 0.0
        %v801 = vmax.f32 %v797, 0.0
        %v802 = vpack.c.bf16 %v798, %v798
        %v803 = vpack.c.bf16 %v799, %v799
        %v804 = vpack.c.bf16 %v800, %v800
        %v805 = vpack.c.bf16 %v801, %v801
        %v810 = vunpack.c.l.b16 %v802
        %v811 = vunpack.c.l.b16 %v803
        %v812 = vunpack.c.l.b16 %v804
        %v813 = vunpack.c.l.b16 %v805
        %v814 = vpack.c.b16 %v811, %v810
        %v815 = vpack.c.b16 %v813, %v812
        %818 = vst [vmem:[%s243] sm:$0xff] %v814
        %819 = vst [vmem:[%s243 + $0x8] sm:$0xff] %v815
      $region44: #{resnet_forward.23} parent=35 // pred_fallthru
        _
      %p820 = scmp.lt.s32.totalorder %s19, 0
      %s821 = scalar_select %p820, %s19, 0
      %s822 = smul.addr %s821, 4
      %s823 = smul.addr %s822, 4
      %s824 = scalar_lea.vmem %s4, %s823
      // Predicated region
      $region45: #{resnet_forward.23} parent=35 // pred_check
        %p825 = pneg %p141
      $region46: #{resnet_forward.23} parent=35 // pred_check_branch
        %827 = sbr.rel (%p825) target = $region48
      $region47: #{resnet_forward.23} parent=35 // pred_region
        _
      $region48: #{resnet_forward.23} parent=35 // pred_fallthru
        _
      // Predicated region
      $region49: #{resnet_forward.23} parent=35 // pred_check
        %p828 = pneg %p141
      $region50: #{resnet_forward.23} parent=35 // pred_check_branch
        %830 = sbr.rel (%p828) target = $region52
      $region51: #{resnet_forward.23} parent=35 // pred_region
        %p831 = scmp.lt.s32.totalorder %s19, 0
        %s832 = scalar_select %p831, %s19, 0
        %s833 = smul.addr %s832, 4
        %s834 = smul.addr %s833, 4
        %s835 = scalar_lea.vmem %s4, %s834
      $region52: #{resnet_forward.23} parent=35 // pred_fallthru
        _
    $region36: #{resnet_forward.23} parent=5 // pred_fallthru
      _
    %p836 = scmp.le.s32.totalorder 2, %s10
    // Predicated region
    $region53: #{resnet_forward.23} parent=5 // pred_check
      %p837 = pneg %p836
    $region54: #{resnet_forward.23} parent=5 // pred_check_branch
      %839 = sbr.rel (%p837) target = $region56
    $region55: #{resnet_forward.23} parent=5 // pred_region
      %s840 = ssub.s32 %s10, 2
    $region56: #{resnet_forward.23} parent=5 // pred_fallthru
      _
  $region6: #{resnet_forward.23} parent=0 // loop_footer
    %s14 = sadd.s32 1, %s10
  $region7: #{resnet_forward.23} parent=0 // loop_footer_branch
    %9 = sbr.rel target = $region3
  $region8: #{resnet_forward.23} parent=0 // loop_exit
    _

// kernel: resnet_forward.25
$region0: #{resnet_forward.25}
  #allocation0 [shape = 'u32[]', space=smem, size = 0x4, offset = 0x4, fixed_abs, tag = 'smem constant byte address 0x4 - core index']
  #allocation1 [shape = 'u32[144,128]{1,0:T(1,128)}', space=vmem, size = 0x12000, scoped, tag = 'internal scratch']
  %s0 = inlined_call_operand.vmem [shape: bf16[2,4,512], index: 0, kind: input, shape index: {}]
  %s1 = inlined_call_operand.vmem [shape: f32[512,10], index: 1, kind: input, shape index: {}]
  %s2 = inlined_call_operand.vmem [shape: f32[1,10], index: 2, kind: input, shape index: {}]
  %s3 = inlined_call_operand.hbm [shape: f32[2,10], index: 3, kind: output, shape index: {}]
  %s4 = sld [smem:[#allocation0]]
  $region22: #{resnet_forward.25} parent=0
    _
  %s6 = ssub.s32 1, %s4
  %s7 = scalar_select 0, %s6, %s4
  $region1: #{resnet_forward.25} parent=0
    #allocation2 [shape = 'u8[1024]{0}', space=vmem, size = 0x400, scoped, tag = 'output window, operand 0, single buffered']
    #allocation3 [shape = 's32[1]{0}', space=sflag, size = 0x4, scoped, tag = 'scoped memory for resnet_forward.25']
    %8 = vsyncpa [#allocation3], 0
    // Predicated region
    $region2: #{resnet_forward.25} parent=1 // pred_check
      _
    $region3: #{resnet_forward.25} parent=1 // pred_check_branch
      %10 = sbr.rel (0) target = $region5
    $region4: #{resnet_forward.25} parent=1 // pred_region
      _
    $region5: #{resnet_forward.25} parent=1 // pred_fallthru
      _
    // Predicated region
    $region6: #{resnet_forward.25} parent=1 // pred_check
      _
    $region7: #{resnet_forward.25} parent=1 // pred_check_branch
      %12 = sbr.rel (0) target = $region9
    $region8: #{resnet_forward.25} parent=1 // pred_region
      _
    $region9: #{resnet_forward.25} parent=1 // pred_fallthru
      _
    // Predicated region
    $region10: #{resnet_forward.25} parent=1 // pred_check
      _
    $region11: #{resnet_forward.25} parent=1 // pred_check_branch
      %14 = sbr.rel (0) target = $region13
    $region12: #{resnet_forward.25} parent=1 // pred_region
      _
    $region13: #{resnet_forward.25} parent=1 // pred_fallthru
      _
    %v15 = vld [vmem:[%s0] sm:$0xff]
    %v16 = vld [vmem:[%s0 + $0x8] sm:$0xff]
    %v17 = vunpack.c.l.bf16 %v15
    %v18 = vunpack.c.h.bf16 %v15
    %v19 = vunpack.c.l.bf16 %v16
    %v20 = vunpack.c.h.bf16 %v16
    %v25 = vcombine.high %v17, %v17
    %v26 = vcombine.high %v18, %v18
    %v27 = vcombine.high %v19, %v19
    %v28 = vcombine.high %v20, %v20
    %vm33 = vcmask 1043456
    %v34 = vsel %vm33, %v17, 0.0
    %v35 = vrot.slane %v34, 4
    %v36 = vadd.f32 %v34, %v35
    %v37 = vrot.slane %v36, 2
    %v38 = vadd.f32 %v36, %v37
    %v39 = vrot.slane %v38, 1
    %v40 = vadd.f32 %v38, %v39
    %v41 = vsel %vm33, %v25, 0.0
    %v42 = vrot.slane %v41, 4
    %v43 = vadd.f32 %v41, %v42
    %v44 = vrot.slane %v43, 2
    %v45 = vadd.f32 %v43, %v44
    %v46 = vrot.slane %v45, 1
    %v47 = vadd.f32 %v45, %v46
    %v48 = vsel %vm33, %v18, 0.0
    %v49 = vrot.slane %v48, 4
    %v50 = vadd.f32 %v48, %v49
    %v51 = vrot.slane %v50, 2
    %v52 = vadd.f32 %v50, %v51
    %v53 = vrot.slane %v52, 1
    %v54 = vadd.f32 %v52, %v53
    %v55 = vsel %vm33, %v26, 0.0
    %v56 = vrot.slane %v55, 4
    %v57 = vadd.f32 %v55, %v56
    %v58 = vrot.slane %v57, 2
    %v59 = vadd.f32 %v57, %v58
    %v60 = vrot.slane %v59, 1
    %v61 = vadd.f32 %v59, %v60
    %v62 = vsel %vm33, %v19, 0.0
    %v63 = vrot.slane %v62, 4
    %v64 = vadd.f32 %v62, %v63
    %v65 = vrot.slane %v64, 2
    %v66 = vadd.f32 %v64, %v65
    %v67 = vrot.slane %v66, 1
    %v68 = vadd.f32 %v66, %v67
    %v69 = vsel %vm33, %v27, 0.0
    %v70 = vrot.slane %v69, 4
    %v71 = vadd.f32 %v69, %v70
    %v72 = vrot.slane %v71, 2
    %v73 = vadd.f32 %v71, %v72
    %v74 = vrot.slane %v73, 1
    %v75 = vadd.f32 %v73, %v74
    %v76 = vsel %vm33, %v20, 0.0
    %v77 = vrot.slane %v76, 4
    %v78 = vadd.f32 %v76, %v77
    %v79 = vrot.slane %v78, 2
    %v80 = vadd.f32 %v78, %v79
    %v81 = vrot.slane %v80, 1
    %v82 = vadd.f32 %v80, %v81
    %v83 = vsel %vm33, %v28, 0.0
    %v84 = vrot.slane %v83, 4
    %v85 = vadd.f32 %v83, %v84
    %v86 = vrot.slane %v85, 2
    %v87 = vadd.f32 %v85, %v86
    %v88 = vrot.slane %v87, 1
    %v89 = vadd.f32 %v87, %v88
    %v90 = vrcp.pop 4.0
    %v91 = vmul.f32 %v40, %v90
    %v92 = vmul.f32 %v47, %v90
    %v93 = vmul.f32 %v54, %v90
    %v94 = vmul.f32 %v61, %v90
    %v95 = vmul.f32 %v68, %v90
    %v96 = vmul.f32 %v75, %v90
    %v97 = vmul.f32 %v82, %v90
    %v98 = vmul.f32 %v89, %v90
    %v99 = vld [vmem:[%s1] sm:$0xff]
    %v100 = vld [vmem:[%s1 + $0x8] sm:$0xff]
    %v101 = vld [vmem:[%s1 + $0x10] sm:$0xff]
    %v102 = vld [vmem:[%s1 + $0x18] sm:$0xff]
    %v103 = vld [vmem:[%s1 + $0x20] sm:$0xff]
    %v104 = vld [vmem:[%s1 + $0x28] sm:$0xff]
    %v105 = vld [vmem:[%s1 + $0x30] sm:$0xff]
    %v106 = vld [vmem:[%s1 + $0x38] sm:$0xff]
    %v107 = vld [vmem:[%s1 + $0x40] sm:$0xff]
    %v108 = vld [vmem:[%s1 + $0x48] sm:$0xff]
    %v109 = vld [vmem:[%s1 + $0x50] sm:$0xff]
    %v110 = vld [vmem:[%s1 + $0x58] sm:$0xff]
    %v111 = vld [vmem:[%s1 + $0x60] sm:$0xff]
    %v112 = vld [vmem:[%s1 + $0x68] sm:$0xff]
    %v113 = vld [vmem:[%s1 + $0x70] sm:$0xff]
    %v114 = vld [vmem:[%s1 + $0x78] sm:$0xff]
    %v115 = vld [vmem:[%s1 + $0x80] sm:$0xff]
    %v116 = vld [vmem:[%s1 + $0x88] sm:$0xff]
    %v117 = vld [vmem:[%s1 + $0x90] sm:$0xff]
    %v118 = vld [vmem:[%s1 + $0x98] sm:$0xff]
    %v119 = vld [vmem:[%s1 + $0xa0] sm:$0xff]
    %v120 = vld [vmem:[%s1 + $0xa8] sm:$0xff]
    %v121 = vld [vmem:[%s1 + $0xb0] sm:$0xff]
    %v122 = vld [vmem:[%s1 + $0xb8] sm:$0xff]
    %v123 = vld [vmem:[%s1 + $0xc0] sm:$0xff]
    %v124 = vld [vmem:[%s1 + $0xc8] sm:$0xff]
    %v125 = vld [vmem:[%s1 + $0xd0] sm:$0xff]
    %v126 = vld [vmem:[%s1 + $0xd8] sm:$0xff]
    %v127 = vld [vmem:[%s1 + $0xe0] sm:$0xff]
    %v128 = vld [vmem:[%s1 + $0xe8] sm:$0xff]
    %v129 = vld [vmem:[%s1 + $0xf0] sm:$0xff]
    %v130 = vld [vmem:[%s1 + $0xf8] sm:$0xff]
    %v131 = vld [vmem:[%s1 + $0x100] sm:$0xff]
    %v132 = vld [vmem:[%s1 + $0x108] sm:$0xff]
    %v133 = vld [vmem:[%s1 + $0x110] sm:$0xff]
    %v134 = vld [vmem:[%s1 + $0x118] sm:$0xff]
    %v135 = vld [vmem:[%s1 + $0x120] sm:$0xff]
    %v136 = vld [vmem:[%s1 + $0x128] sm:$0xff]
    %v137 = vld [vmem:[%s1 + $0x130] sm:$0xff]
    %v138 = vld [vmem:[%s1 + $0x138] sm:$0xff]
    %v139 = vld [vmem:[%s1 + $0x140] sm:$0xff]
    %v140 = vld [vmem:[%s1 + $0x148] sm:$0xff]
    %v141 = vld [vmem:[%s1 + $0x150] sm:$0xff]
    %v142 = vld [vmem:[%s1 + $0x158] sm:$0xff]
    %v143 = vld [vmem:[%s1 + $0x160] sm:$0xff]
    %v144 = vld [vmem:[%s1 + $0x168] sm:$0xff]
    %v145 = vld [vmem:[%s1 + $0x170] sm:$0xff]
    %v146 = vld [vmem:[%s1 + $0x178] sm:$0xff]
    %v147 = vld [vmem:[%s1 + $0x180] sm:$0xff]
    %v148 = vld [vmem:[%s1 + $0x188] sm:$0xff]
    %v149 = vld [vmem:[%s1 + $0x190] sm:$0xff]
    %v150 = vld [vmem:[%s1 + $0x198] sm:$0xff]
    %v151 = vld [vmem:[%s1 + $0x1a0] sm:$0xff]
    %v152 = vld [vmem:[%s1 + $0x1a8] sm:$0xff]
    %v153 = vld [vmem:[%s1 + $0x1b0] sm:$0xff]
    %v154 = vld [vmem:[%s1 + $0x1b8] sm:$0xff]
    %v155 = vld [vmem:[%s1 + $0x1c0] sm:$0xff]
    %v156 = vld [vmem:[%s1 + $0x1c8] sm:$0xff]
    %v157 = vld [vmem:[%s1 + $0x1d0] sm:$0xff]
    %v158 = vld [vmem:[%s1 + $0x1d8] sm:$0xff]
    %v159 = vld [vmem:[%s1 + $0x1e0] sm:$0xff]
    %v160 = vld [vmem:[%s1 + $0x1e8] sm:$0xff]
    %v161 = vld [vmem:[%s1 + $0x1f0] sm:$0xff]
    %v162 = vld [vmem:[%s1 + $0x1f8] sm:$0xff]
    %v163 = vld [vmem:[%s2] sm:$0x1]
    %v165 = vlaneseq
    %v166 = vshrl.u32 %v165, 7
    %v167 = vsub.s32 0, %v166
    %v168 = vrot.slane %v163, %v167
    %vm178 = vcmask 1041409
    %v179 = vsel %vm178, %v95, %v91
    %v180 = vsel %vm178, %v96, %v92
    %v181 = vsel %vm178, %v97, %v93
    %v182 = vsel %vm178, %v98, %v94
    %187 = vmatprep.subr.mxu0 0.0
    %188 = vmatpush1.msra.mxu0 %v99
    %189 = vmatprep.subr.mxu0 0.0
    %190 = vmatpush1.msra.mxu0 %v100
    %191 = vmatprep.subr.mxu0 0.0
    %192 = vmatpush1.msra.mxu0 %v101
    %193 = vmatprep.subr.mxu0 0.0
    %194 = vmatpush1.msra.mxu0 %v102
    %195 = vmatprep.subr.mxu0 0.0
    %196 = vmatpush1.msra.mxu0 %v103
    %197 = vmatprep.subr.mxu0 0.0
    %198 = vmatpush1.msra.mxu0 %v104
    %199 = vmatprep.subr.mxu0 0.0
    %200 = vmatpush1.msra.mxu0 %v105
    %201 = vmatprep.subr.mxu0 0.0
    %202 = vmatpush1.msra.mxu0 %v106
    %203 = vmatprep.subr.mxu0 0.0
    %204 = vmatpush1.msra.mxu0 %v107
    %205 = vmatprep.subr.mxu0 0.0
    %206 = vmatpush1.msra.mxu0 %v108
    %207 = vmatprep.subr.mxu0 0.0
    %208 = vmatpush1.msra.mxu0 %v109
    %209 = vmatprep.subr.mxu0 0.0
    %210 = vmatpush1.msra.mxu0 %v110
    %211 = vmatprep.subr.mxu0 0.0
    %212 = vmatpush1.msra.mxu0 %v111
    %213 = vmatprep.subr.mxu0 0.0
    %214 = vmatpush1.msra.mxu0 %v112
    %215 = vmatprep.subr.mxu0 0.0
    %216 = vmatpush1.msra.mxu0 %v113
    %217 = vmatprep.subr.mxu0 0.0
    %218 = vmatpush1.msra.mxu0 %v114
    %219 = vmatprep.subr.mxu0 0.0
    %220 = vmatpush1.msra.mxu0 %v115
    %221 = vmatprep.subr.mxu0 0.0
    %222 = vmatpush1.msra.mxu0 %v116
    %223 = vmatprep.subr.mxu0 0.0
    %224 = vmatpush1.msra.mxu0 %v117
    %225 = vmatprep.subr.mxu0 0.0
    %226 = vmatpush1.msra.mxu0 %v118
    %227 = vmatprep.subr.mxu0 0.0
    %228 = vmatpush1.msra.mxu0 %v119
    %229 = vmatprep.subr.mxu0 0.0
    %230 = vmatpush1.msra.mxu0 %v120
    %231 = vmatprep.subr.mxu0 0.0
    %232 = vmatpush1.msra.mxu0 %v121
    %233 = vmatprep.subr.mxu0 0.0
    %234 = vmatpush1.msra.mxu0 %v122
    %235 = vmatprep.subr.mxu0 0.0
    %236 = vmatpush1.msra.mxu0 %v123
    %237 = vmatprep.subr.mxu0 0.0
    %238 = vmatpush1.msra.mxu0 %v124
    %239 = vmatprep.subr.mxu0 0.0
    %240 = vmatpush1.msra.mxu0 %v125
    %241 = vmatprep.subr.mxu0 0.0
    %242 = vmatpush1.msra.mxu0 %v126
    %243 = vmatprep.subr.mxu0 0.0
    %244 = vmatpush1.msra.mxu0 %v127
    %245 = vmatprep.subr.mxu0 0.0
    %246 = vmatpush1.msra.mxu0 %v128
    %247 = vmatprep.subr.mxu0 0.0
    %248 = vmatpush1.msra.mxu0 %v129
    %249 = vmatprep.subr.mxu0 0.0
    %250 = vmatpush1.msra.mxu0 %v130
    %251 = vmatprep.mubr.f32.mxu0 %v180
    %252 = vmatmul.mubr.f32.gmra.mrb[0].mxu0 %v179
    %v253 = vpop.f32.mrb[0].mxu0
    %v254 = vadd.f32 %v168, %v253
    %v255 = vpop.f32.mrb[0].mxu0
    %256 = vdwg.mxu0
    %257 = vmatprep.subr.mxu0 0.0
    %258 = vmatpush1.msra.mxu0 %v131
    %259 = vmatprep.subr.mxu0 0.0
    %260 = vmatpush1.msra.mxu0 %v132
    %261 = vmatprep.subr.mxu0 0.0
    %262 = vmatpush1.msra.mxu0 %v133
    %263 = vmatprep.subr.mxu0 0.0
    %264 = vmatpush1.msra.mxu0 %v134
    %265 = vmatprep.subr.mxu0 0.0
    %266 = vmatpush1.msra.mxu0 %v135
    %267 = vmatprep.subr.mxu0 0.0
    %268 = vmatpush1.msra.mxu0 %v136
    %269 = vmatprep.subr.mxu0 0.0
    %270 = vmatpush1.msra.mxu0 %v137
    %271 = vmatprep.subr.mxu0 0.0
    %272 = vmatpush1.msra.mxu0 %v138
    %273 = vmatprep.subr.mxu0 0.0
    %274 = vmatpush1.msra.mxu0 %v139
    %275 = vmatprep.subr.mxu0 0.0
    %276 = vmatpush1.msra.mxu0 %v140
    %277 = vmatprep.subr.mxu0 0.0
    %278 = vmatpush1.msra.mxu0 %v141
    %279 = vmatprep.subr.mxu0 0.0
    %280 = vmatpush1.msra.mxu0 %v142
    %281 = vmatprep.subr.mxu0 0.0
    %282 = vmatpush1.msra.mxu0 %v143
    %283 = vmatprep.subr.mxu0 0.0
    %284 = vmatpush1.msra.mxu0 %v144
    %285 = vmatprep.subr.mxu0 0.0
    %286 = vmatpush1.msra.mxu0 %v145
    %287 = vmatprep.subr.mxu0 0.0
    %288 = vmatpush1.msra.mxu0 %v146
    %289 = vmatprep.subr.mxu0 0.0
    %290 = vmatpush1.msra.mxu0 %v147
    %291 = vmatprep.subr.mxu0 0.0
    %292 = vmatpush1.msra.mxu0 %v148
    %293 = vmatprep.subr.mxu0 0.0
    %294 = vmatpush1.msra.mxu0 %v149
    %295 = vmatprep.subr.mxu0 0.0
    %296 = vmatpush1.msra.mxu0 %v150
    %297 = vmatprep.subr.mxu0 0.0
    %298 = vmatpush1.msra.mxu0 %v151
    %299 = vmatprep.subr.mxu0 0.0
    %300 = vmatpush1.msra.mxu0 %v152
    %301 = vmatprep.subr.mxu0 0.0
    %302 = vmatpush1.msra.mxu0 %v153
    %303 = vmatprep.subr.mxu0 0.0
    %304 = vmatpush1.msra.mxu0 %v154
    %305 = vmatprep.subr.mxu0 0.0
    %306 = vmatpush1.msra.mxu0 %v155
    %307 = vmatprep.subr.mxu0 0.0
    %308 = vmatpush1.msra.mxu0 %v156
    %309 = vmatprep.subr.mxu0 0.0
    %310 = vmatpush1.msra.mxu0 %v157
    %311 = vmatprep.subr.mxu0 0.0
    %312 = vmatpush1.msra.mxu0 %v158
    %313 = vmatprep.subr.mxu0 0.0
    %314 = vmatpush1.msra.mxu0 %v159
    %315 = vmatprep.subr.mxu0 0.0
    %316 = vmatpush1.msra.mxu0 %v160
    %317 = vmatprep.subr.mxu0 0.0
    %318 = vmatpush1.msra.mxu0 %v161
    %319 = vmatprep.subr.mxu0 0.0
    %320 = vmatpush1.msra.mxu0 %v162
    %321 = vmatprep.mubr.f32.mxu0 %v182
    %322 = vmatmul.mubr.f32.gmra.mrb[0].mxu0 %v181
    %v323 = vpop.f32.mrb[0].mxu0
    %v324 = vadd.f32 %v254, %v323
    %v325 = vpop.f32.mrb[0].mxu0
    %326 = vdwg.mxu0
    %vm327 = vcmask 74752
    %328 = vst.msk [vmem:[#allocation2] sm:$0x3] %vm327, %v324
    // Predicated region
    $region14: #{resnet_forward.25} parent=1 // pred_check
      _
    $region15: #{resnet_forward.25} parent=1 // pred_check_branch
      %330 = sbr.rel (0) target = $region17
    $region16: #{resnet_forward.25} parent=1 // pred_region
      %s332 = ssub.s32 32, 32
      %333 = vsyncadd [#allocation3], %s332
      %s335 = sshll.u32 [#allocation2], 4
      %s336 = int_to_ptr.vmem [resolvable:$true] %s335
      %338 = dma.vmem_to_hbm [thread:$0]  %s336, 32, %s3, [#allocation3]
    $region17: #{resnet_forward.25} parent=1 // pred_fallthru
      _
    // Predicated region
    $region18: #{resnet_forward.25} parent=1 // pred_check
      _
    $region19: #{resnet_forward.25} parent=1 // pred_check_branch
      %340 = sbr.rel (0) target = $region21
    $region20: #{resnet_forward.25} parent=1 // pred_region
      %341 = dma.done [#allocation3], 32
    $region21: #{resnet_forward.25} parent=1 // pred_fallthru
      _
    %342 = vsyncpa [#allocation3], 1

// kernel: resnet_forward.22
$region0: #{resnet_forward.22}
  #allocation0 [shape = 'u32[]', space=smem, size = 0x4, offset = 0x4, fixed_abs, tag = 'smem constant byte address 0x4 - core index']
  #allocation1 [shape = 'u32[144,128]{1,0:T(1,128)}', space=vmem, size = 0x12000, scoped, tag = 'internal scratch']
  #allocation2 [shape = 'f32[8,512]{1,0:T(8,128)}', space=vmem, size = 0x4000, scoped, tag = 'scratch operand']
  %s0 = inlined_call_operand.vmem [shape: bf16[1,8,256], index: 0, kind: input, shape index: {}]
  %s1 = inlined_call_operand.vmem [shape: bf16[1,256,512], index: 1, kind: input, shape index: {}]
  %s2 = inlined_call_operand.vmem [shape: f32[1,512], index: 2, kind: input, shape index: {}]
  %s3 = inlined_call_operand.vmem [shape: f32[1,512], index: 3, kind: input, shape index: {}]
  %s4 = inlined_call_operand.vmem [shape: bf16[8,512], index: 4, kind: output, shape index: {}]
  %s5 = sld [smem:[#allocation0]]
  $region34: #{resnet_forward.22} parent=0
    _
  %s7 = ssub.s32 1, %s5
  %s8 = scalar_select 0, %s7, %s5
  // Predicated region
  $region2: #{resnet_forward.22} parent=0 // pred_check
    _
  $region3: #{resnet_forward.22} parent=0 // pred_check_branch
    %10 = sbr.rel (0) target = $region5
  $region4: #{resnet_forward.22} parent=0 // pred_region
    _
  $region5: #{resnet_forward.22} parent=0 // pred_fallthru
    _
  // Predicated region
  $region6: #{resnet_forward.22} parent=0 // pred_check
    _
  $region7: #{resnet_forward.22} parent=0 // pred_check_branch
    %12 = sbr.rel (0) target = $region9
  $region8: #{resnet_forward.22} parent=0 // pred_region
    _
  $region9: #{resnet_forward.22} parent=0 // pred_fallthru
    _
  // Predicated region
  $region10: #{resnet_forward.22} parent=0 // pred_check
    _
  $region11: #{resnet_forward.22} parent=0 // pred_check_branch
    %14 = sbr.rel (0) target = $region13
  $region12: #{resnet_forward.22} parent=0 // pred_region
    _
  $region13: #{resnet_forward.22} parent=0 // pred_fallthru
    _
  // Predicated region
  $region14: #{resnet_forward.22} parent=0 // pred_check
    _
  $region15: #{resnet_forward.22} parent=0 // pred_check_branch
    %16 = sbr.rel (0) target = $region17
  $region16: #{resnet_forward.22} parent=0 // pred_region
    _
  $region17: #{resnet_forward.22} parent=0 // pred_fallthru
    _
  %p17 = scmp.eq.s32.totalorder 0, 0
  // Predicated region
  $region18: #{resnet_forward.22} parent=0 // pred_check
    %p18 = pneg %p17
  $region19: #{resnet_forward.22} parent=0 // pred_check_branch
    %20 = sbr.rel (%p18) target = $region21
  $region20: #{resnet_forward.22} parent=0 // pred_region
    %21 = vst [vmem:[#allocation2] sm:$0xff] 0.0
    %22 = vst [vmem:[#allocation2 + $0x8] sm:$0xff] 0.0
    %23 = vst [vmem:[#allocation2 + $0x10] sm:$0xff] 0.0
    %24 = vst [vmem:[#allocation2 + $0x18] sm:$0xff] 0.0
  $region21: #{resnet_forward.22} parent=0 // pred_fallthru
    _
  %v25 = vld [vmem:[#allocation2] sm:$0xff]
  %v26 = vld [vmem:[#allocation2 + $0x8] sm:$0xff]
  %v27 = vld [vmem:[#allocation2 + $0x10] sm:$0xff]
  %v28 = vld [vmem:[#allocation2 + $0x18] sm:$0xff]
  %v29 = vld [vmem:[%s0] sm:$0xff]
  %v30 = vld [vmem:[%s1] sm:$0xff]
  %v31 = vld [vmem:[%s1 + $0x8] sm:$0xff]
  %v32 = vld [vmem:[%s1 + $0x10] sm:$0xff]
  %v33 = vld [vmem:[%s1 + $0x18] sm:$0xff]
  %v34 = vld [vmem:[%s1 + $0x20] sm:$0xff]
  %v35 = vld [vmem:[%s1 + $0x28] sm:$0xff]
  %v36 = vld [vmem:[%s1 + $0x30] sm:$0xff]
  %v37 = vld [vmem:[%s1 + $0x38] sm:$0xff]
  %v38 = vld [vmem:[%s1 + $0x40] sm:$0xff]
  %v39 = vld [vmem:[%s1 + $0x48] sm:$0xff]
  %v40 = vld [vmem:[%s1 + $0x50] sm:$0xff]
  %v41 = vld [vmem:[%s1 + $0x58] sm:$0xff]
  %v42 = vld [vmem:[%s1 + $0x60] sm:$0xff]
  %v43 = vld [vmem:[%s1 + $0x68] sm:$0xff]
  %v44 = vld [vmem:[%s1 + $0x70] sm:$0xff]
  %v45 = vld [vmem:[%s1 + $0x78] sm:$0xff]
  %v46 = vld [vmem:[%s1 + $0x80] sm:$0xff]
  %v47 = vld [vmem:[%s1 + $0x88] sm:$0xff]
  %v48 = vld [vmem:[%s1 + $0x90] sm:$0xff]
  %v49 = vld [vmem:[%s1 + $0x98] sm:$0xff]
  %v50 = vld [vmem:[%s1 + $0xa0] sm:$0xff]
  %v51 = vld [vmem:[%s1 + $0xa8] sm:$0xff]
  %v52 = vld [vmem:[%s1 + $0xb0] sm:$0xff]
  %v53 = vld [vmem:[%s1 + $0xb8] sm:$0xff]
  %v54 = vld [vmem:[%s1 + $0xc0] sm:$0xff]
  %v55 = vld [vmem:[%s1 + $0xc8] sm:$0xff]
  %v56 = vld [vmem:[%s1 + $0xd0] sm:$0xff]
  %v57 = vld [vmem:[%s1 + $0xd8] sm:$0xff]
  %v58 = vld [vmem:[%s1 + $0xe0] sm:$0xff]
  %v59 = vld [vmem:[%s1 + $0xe8] sm:$0xff]
  %v60 = vld [vmem:[%s1 + $0xf0] sm:$0xff]
  %v61 = vld [vmem:[%s1 + $0xf8] sm:$0xff]
  %v62 = vld [vmem:[%s1 + $0x100] sm:$0xff]
  %v63 = vld [vmem:[%s1 + $0x108] sm:$0xff]
  %v64 = vld [vmem:[%s1 + $0x110] sm:$0xff]
  %v65 = vld [vmem:[%s1 + $0x118] sm:$0xff]
  %v66 = vld [vmem:[%s1 + $0x120] sm:$0xff]
  %v67 = vld [vmem:[%s1 + $0x128] sm:$0xff]
  %v68 = vld [vmem:[%s1 + $0x130] sm:$0xff]
  %v69 = vld [vmem:[%s1 + $0x138] sm:$0xff]
  %v70 = vld [vmem:[%s1 + $0x140] sm:$0xff]
  %v71 = vld [vmem:[%s1 + $0x148] sm:$0xff]
  %v72 = vld [vmem:[%s1 + $0x150] sm:$0xff]
  %v73 = vld [vmem:[%s1 + $0x158] sm:$0xff]
  %v74 = vld [vmem:[%s1 + $0x160] sm:$0xff]
  %v75 = vld [vmem:[%s1 + $0x168] sm:$0xff]
  %v76 = vld [vmem:[%s1 + $0x170] sm:$0xff]
  %v77 = vld [vmem:[%s1 + $0x178] sm:$0xff]
  %v78 = vld [vmem:[%s1 + $0x180] sm:$0xff]
  %v79 = vld [vmem:[%s1 + $0x188] sm:$0xff]
  %v80 = vld [vmem:[%s1 + $0x190] sm:$0xff]
  %v81 = vld [vmem:[%s1 + $0x198] sm:$0xff]
  %v82 = vld [vmem:[%s1 + $0x1a0] sm:$0xff]
  %v83 = vld [vmem:[%s1 + $0x1a8] sm:$0xff]
  %v84 = vld [vmem:[%s1 + $0x1b0] sm:$0xff]
  %v85 = vld [vmem:[%s1 + $0x1b8] sm:$0xff]
  %v86 = vld [vmem:[%s1 + $0x1c0] sm:$0xff]
  %v87 = vld [vmem:[%s1 + $0x1c8] sm:$0xff]
  %v88 = vld [vmem:[%s1 + $0x1d0] sm:$0xff]
  %v89 = vld [vmem:[%s1 + $0x1d8] sm:$0xff]
  %v90 = vld [vmem:[%s1 + $0x1e0] sm:$0xff]
  %v91 = vld [vmem:[%s1 + $0x1e8] sm:$0xff]
  %v92 = vld [vmem:[%s1 + $0x1f0] sm:$0xff]
  %v93 = vld [vmem:[%s1 + $0x1f8] sm:$0xff]
  %v95 = vunpack.c.l.b16 %v29
  %v96 = vunpack.c.h.b16 %v29
  %v97 = vpack.c.b16 %v95, %v95
  %v98 = vpack.c.b16 %v96, %v96
  %v165 = vunpack.c.l.b16 %v30
  %v166 = vunpack.c.h.b16 %v30
  %v167 = vunpack.c.l.b16 %v31
  %v168 = vunpack.c.h.b16 %v31
  %v169 = vunpack.c.l.b16 %v32
  %v170 = vunpack.c.h.b16 %v32
  %v171 = vunpack.c.l.b16 %v33
  %v172 = vunpack.c.h.b16 %v33
  %v173 = vunpack.c.l.b16 %v34
  %v174 = vunpack.c.h.b16 %v34
  %v175 = vunpack.c.l.b16 %v35
  %v176 = vunpack.c.h.b16 %v35
  %v177 = vunpack.c.l.b16 %v36
  %v178 = vunpack.c.h.b16 %v36
  %v179 = vunpack.c.l.b16 %v37
  %v180 = vunpack.c.h.b16 %v37
  %v181 = vunpack.c.l.b16 %v38
  %v182 = vunpack.c.h.b16 %v38
  %v183 = vunpack.c.l.b16 %v39
  %v184 = vunpack.c.h.b16 %v39
  %v185 = vunpack.c.l.b16 %v40
  %v186 = vunpack.c.h.b16 %v40
  %v187 = vunpack.c.l.b16 %v41
  %v188 = vunpack.c.h.b16 %v41
  %v189 = vunpack.c.l.b16 %v42
  %v190 = vunpack.c.h.b16 %v42
  %v191 = vunpack.c.l.b16 %v43
  %v192 = vunpack.c.h.b16 %v43
  %v193 = vunpack.c.l.b16 %v44
  %v194 = vunpack.c.h.b16 %v44
  %v195 = vunpack.c.l.b16 %v45
  %v196 = vunpack.c.h.b16 %v45
  %v197 = vunpack.c.l.b16 %v46
  %v198 = vunpack.c.h.b16 %v46
  %v199 = vunpack.c.l.b16 %v47
  %v200 = vunpack.c.h.b16 %v47
  %v201 = vunpack.c.l.b16 %v48
  %v202 = vunpack.c.h.b16 %v48
  %v203 = vunpack.c.l.b16 %v49
  %v204 = vunpack.c.h.b16 %v49
  %v205 = vunpack.c.l.b16 %v50
  %v206 = vunpack.c.h.b16 %v50
  %v207 = vunpack.c.l.b16 %v51
  %v208 = vunpack.c.h.b16 %v51
  %v209 = vunpack.c.l.b16 %v52
  %v210 = vunpack.c.h.b16 %v52
  %v211 = vunpack.c.l.b16 %v53
  %v212 = vunpack.c.h.b16 %v53
  %v213 = vunpack.c.l.b16 %v54
  %v214 = vunpack.c.h.b16 %v54
  %v215 = vunpack.c.l.b16 %v55
  %v216 = vunpack.c.h.b16 %v55
  %v217 = vunpack.c.l.b16 %v56
  %v218 = vunpack.c.h.b16 %v56
  %v219 = vunpack.c.l.b16 %v57
  %v220 = vunpack.c.h.b16 %v57
  %v221 = vunpack.c.l.b16 %v58
  %v222 = vunpack.c.h.b16 %v58
  %v223 = vunpack.c.l.b16 %v59
  %v224 = vunpack.c.h.b16 %v59
  %v225 = vunpack.c.l.b16 %v60
  %v226 = vunpack.c.h.b16 %v60
  %v227 = vunpack.c.l.b16 %v61
  %v228 = vunpack.c.h.b16 %v61
  %v229 = vunpack.c.l.b16 %v62
  %v230 = vunpack.c.h.b16 %v62
  %v231 = vunpack.c.l.b16 %v63
  %v232 = vunpack.c.h.b16 %v63
  %v233 = vunpack.c.l.b16 %v64
  %v234 = vunpack.c.h.b16 %v64
  %v235 = vunpack.c.l.b16 %v65
  %v236 = vunpack.c.h.b16 %v65
  %v237 = vunpack.c.l.b16 %v66
  %v238 = vunpack.c.h.b16 %v66
  %v239 = vunpack.c.l.b16 %v67
  %v240 = vunpack.c.h.b16 %v67
  %v241 = vunpack.c.l.b16 %v68
  %v242 = vunpack.c.h.b16 %v68
  %v243 = vunpack.c.l.b16 %v69
  %v244 = vunpack.c.h.b16 %v69
  %v245 = vunpack.c.l.b16 %v70
  %v246 = vunpack.c.h.b16 %v70
  %v247 = vunpack.c.l.b16 %v71
  %v248 = vunpack.c.h.b16 %v71
  %v249 = vunpack.c.l.b16 %v72
  %v250 = vunpack.c.h.b16 %v72
  %v251 = vunpack.c.l.b16 %v73
  %v252 = vunpack.c.h.b16 %v73
  %v253 = vunpack.c.l.b16 %v74
  %v254 = vunpack.c.h.b16 %v74
  %v255 = vunpack.c.l.b16 %v75
  %v256 = vunpack.c.h.b16 %v75
  %v257 = vunpack.c.l.b16 %v76
  %v258 = vunpack.c.h.b16 %v76
  %v259 = vunpack.c.l.b16 %v77
  %v260 = vunpack.c.h.b16 %v77
  %v261 = vunpack.c.l.b16 %v78
  %v262 = vunpack.c.h.b16 %v78
  %v263 = vunpack.c.l.b16 %v79
  %v264 = vunpack.c.h.b16 %v79
  %v265 = vunpack.c.l.b16 %v80
  %v266 = vunpack.c.h.b16 %v80
  %v267 = vunpack.c.l.b16 %v81
  %v268 = vunpack.c.h.b16 %v81
  %v269 = vunpack.c.l.b16 %v82
  %v270 = vunpack.c.h.b16 %v82
  %v271 = vunpack.c.l.b16 %v83
  %v272 = vunpack.c.h.b16 %v83
  %v273 = vunpack.c.l.b16 %v84
  %v274 = vunpack.c.h.b16 %v84
  %v275 = vunpack.c.l.b16 %v85
  %v276 = vunpack.c.h.b16 %v85
  %v277 = vunpack.c.l.b16 %v86
  %v278 = vunpack.c.h.b16 %v86
  %v279 = vunpack.c.l.b16 %v87
  %v280 = vunpack.c.h.b16 %v87
  %v281 = vunpack.c.l.b16 %v88
  %v282 = vunpack.c.h.b16 %v88
  %v283 = vunpack.c.l.b16 %v89
  %v284 = vunpack.c.h.b16 %v89
  %v285 = vunpack.c.l.b16 %v90
  %v286 = vunpack.c.h.b16 %v90
  %v287 = vunpack.c.l.b16 %v91
  %v288 = vunpack.c.h.b16 %v91
  %v289 = vunpack.c.l.b16 %v92
  %v290 = vunpack.c.h.b16 %v92
  %v291 = vunpack.c.l.b16 %v93
  %v292 = vunpack.c.h.b16 %v93
  %v293 = vpack.c.b16 %v169, %v165
  %v294 = vpack.c.b16 %v170, %v166
  %v295 = vpack.c.b16 %v171, %v167
  %v296 = vpack.c.b16 %v172, %v168
  %v297 = vpack.c.b16 %v177, %v173
  %v298 = vpack.c.b16 %v178, %v174
  %v299 = vpack.c.b16 %v179, %v175
  %v300 = vpack.c.b16 %v180, %v176
  %v301 = vpack.c.b16 %v185, %v181
  %v302 = vpack.c.b16 %v186, %v182
  %v303 = vpack.c.b16 %v187, %v183
  %v304 = vpack.c.b16 %v188, %v184
  %v305 = vpack.c.b16 %v193, %v189
  %v306 = vpack.c.b16 %v194, %v190
  %v307 = vpack.c.b16 %v195, %v191
  %v308 = vpack.c.b16 %v196, %v192
  %v309 = vpack.c.b16 %v201, %v197
  %v310 = vpack.c.b16 %v202, %v198
  %v311 = vpack.c.b16 %v203, %v199
  %v312 = vpack.c.b16 %v204, %v200
  %v313 = vpack.c.b16 %v209, %v205
  %v314 = vpack.c.b16 %v210, %v206
  %v315 = vpack.c.b16 %v211, %v207
  %v316 = vpack.c.b16 %v212, %v208
  %v317 = vpack.c.b16 %v217, %v213
  %v318 = vpack.c.b16 %v218, %v214
  %v319 = vpack.c.b16 %v219, %v215
  %v320 = vpack.c.b16 %v220, %v216
  %v321 = vpack.c.b16 %v225, %v221
  %v322 = vpack.c.b16 %v226, %v222
  %v323 = vpack.c.b16 %v227, %v223
  %v324 = vpack.c.b16 %v228, %v224
  %v325 = vpack.c.b16 %v233, %v229
  %v326 = vpack.c.b16 %v234, %v230
  %v327 = vpack.c.b16 %v235, %v231
  %v328 = vpack.c.b16 %v236, %v232
  %v329 = vpack.c.b16 %v241, %v237
  %v330 = vpack.c.b16 %v242, %v238
  %v331 = vpack.c.b16 %v243, %v239
  %v332 = vpack.c.b16 %v244, %v240
  %v333 = vpack.c.b16 %v249, %v245
  %v334 = vpack.c.b16 %v250, %v246
  %v335 = vpack.c.b16 %v251, %v247
  %v336 = vpack.c.b16 %v252, %v248
  %v337 = vpack.c.b16 %v257, %v253
  %v338 = vpack.c.b16 %v258, %v254
  %v339 = vpack.c.b16 %v259, %v255
  %v340 = vpack.c.b16 %v260, %v256
  %v341 = vpack.c.b16 %v265, %v261
  %v342 = vpack.c.b16 %v266, %v262
  %v343 = vpack.c.b16 %v267, %v263
  %v344 = vpack.c.b16 %v268, %v264
  %v345 = vpack.c.b16 %v273, %v269
  %v346 = vpack.c.b16 %v274, %v270
  %v347 = vpack.c.b16 %v275, %v271
  %v348 = vpack.c.b16 %v276, %v272
  %v349 = vpack.c.b16 %v281, %v277
  %v350 = vpack.c.b16 %v282, %v278
  %v351 = vpack.c.b16 %v283, %v279
  %v352 = vpack.c.b16 %v284, %v280
  %v353 = vpack.c.b16 %v289, %v285
  %v354 = vpack.c.b16 %v290, %v286
  %v355 = vpack.c.b16 %v291, %v287
  %v356 = vpack.c.b16 %v292, %v288
  %421 = vmatprep.subr.bf16.mxu0 %v294
  %422 = vmatpush1.bf16.msra.mxu0 %v293
  %423 = vmatprep.subr.bf16.mxu0 %v298
  %424 = vmatpush1.bf16.msra.mxu0 %v297
  %425 = vmatprep.subr.bf16.mxu0 %v302
  %426 = vmatpush1.bf16.msra.mxu0 %v301
  %427 = vmatprep.subr.bf16.mxu0 %v306
  %428 = vmatpush1.bf16.msra.mxu0 %v305
  %429 = vmatprep.subr.bf16.mxu0 %v310
  %430 = vmatpush1.bf16.msra.mxu0 %v309
  %431 = vmatprep.subr.bf16.mxu0 %v314
  %432 = vmatpush1.bf16.msra.mxu0 %v313
  %433 = vmatprep.subr.bf16.mxu0 %v318
  %434 = vmatpush1.bf16.msra.mxu0 %v317
  %435 = vmatprep.subr.bf16.mxu0 %v322
  %436 = vmatpush1.bf16.msra.mxu0 %v321
  %437 = vmatprep.subr.bf16.mxu0 %v326
  %438 = vmatpush1.bf16.msra.mxu0 %v325
  %439 = vmatprep.subr.bf16.mxu0 %v330
  %440 = vmatpush1.bf16.msra.mxu0 %v329
  %441 = vmatprep.subr.bf16.mxu0 %v334
  %442 = vmatpush1.bf16.msra.mxu0 %v333
  %443 = vmatprep.subr.bf16.mxu0 %v338
  %444 = vmatpush1.bf16.msra.mxu0 %v337
  %445 = vmatprep.subr.bf16.mxu0 %v342
  %446 = vmatpush1.bf16.msra.mxu0 %v341
  %447 = vmatprep.subr.bf16.mxu0 %v346
  %448 = vmatpush1.bf16.msra.mxu0 %v345
  %449 = vmatprep.subr.bf16.mxu0 %v350
  %450 = vmatpush1.bf16.msra.mxu0 %v349
  %451 = vmatprep.subr.bf16.mxu0 %v354
  %452 = vmatpush1.bf16.msra.mxu0 %v353
  %453 = vmatprep.mubr.bf16.mxu0 %v98
  %454 = vmatmul.mubr.bf16.gmra.mrb[0].mxu0 %v97
  %v455 = vpop.f32.mrb[0].mxu0
  %v456 = vadd.f32 0.0, %v455
  %v457 = vpop.f32.mrb[0].mxu0
  %v458 = vadd.f32 0.0, %v457
  %v459 = vpop.f32.mrb[0].mxu0
  %v460 = vpop.f32.mrb[0].mxu0
  %461 = vdwg.mxu0
  %462 = vmatprep.subr.bf16.mxu0 %v296
  %463 = vmatpush1.bf16.msra.mxu0 %v295
  %464 = vmatprep.subr.bf16.mxu0 %v300
  %465 = vmatpush1.bf16.msra.mxu0 %v299
  %466 = vmatprep.subr.bf16.mxu0 %v304
  %467 = vmatpush1.bf16.msra.mxu0 %v303
  %468 = vmatprep.subr.bf16.mxu0 %v308
  %469 = vmatpush1.bf16.msra.mxu0 %v307
  %470 = vmatprep.subr.bf16.mxu0 %v312
  %471 = vmatpush1.bf16.msra.mxu0 %v311
  %472 = vmatprep.subr.bf16.mxu0 %v316
  %473 = vmatpush1.bf16.msra.mxu0 %v315
  %474 = vmatprep.subr.bf16.mxu0 %v320
  %475 = vmatpush1.bf16.msra.mxu0 %v319
  %476 = vmatprep.subr.bf16.mxu0 %v324
  %477 = vmatpush1.bf16.msra.mxu0 %v323
  %478 = vmatprep.subr.bf16.mxu0 %v328
  %479 = vmatpush1.bf16.msra.mxu0 %v327
  %480 = vmatprep.subr.bf16.mxu0 %v332
  %481 = vmatpush1.bf16.msra.mxu0 %v331
  %482 = vmatprep.subr.bf16.mxu0 %v336
  %483 = vmatpush1.bf16.msra.mxu0 %v335
  %484 = vmatprep.subr.bf16.mxu0 %v340
  %485 = vmatpush1.bf16.msra.mxu0 %v339
  %486 = vmatprep.subr.bf16.mxu0 %v344
  %487 = vmatpush1.bf16.msra.mxu0 %v343
  %488 = vmatprep.subr.bf16.mxu0 %v348
  %489 = vmatpush1.bf16.msra.mxu0 %v347
  %490 = vmatprep.subr.bf16.mxu0 %v352
  %491 = vmatpush1.bf16.msra.mxu0 %v351
  %492 = vmatprep.subr.bf16.mxu0 %v356
  %493 = vmatpush1.bf16.msra.mxu0 %v355
  %494 = vmatprep.mubr.bf16.mxu0 %v98
  %495 = vmatmul.mubr.bf16.gmra.mrb[0].mxu0 %v97
  %v496 = vpop.f32.mrb[0].mxu0
  %v497 = vadd.f32 0.0, %v496
  %v498 = vpop.f32.mrb[0].mxu0
  %v499 = vadd.f32 0.0, %v498
  %v500 = vpop.f32.mrb[0].mxu0
  %v501 = vpop.f32.mrb[0].mxu0
  %502 = vdwg.mxu0
  %v503 = vadd.f32 %v25, %v456
  %v504 = vadd.f32 %v26, %v458
  %v505 = vadd.f32 %v27, %v497
  %v506 = vadd.f32 %v28, %v499
  %507 = vst [vmem:[#allocation2] sm:$0xff] %v503
  %508 = vst [vmem:[#allocation2 + $0x8] sm:$0xff] %v504
  %509 = vst [vmem:[#allocation2 + $0x10] sm:$0xff] %v505
  %510 = vst [vmem:[#allocation2 + $0x18] sm:$0xff] %v506
  // Predicated region
  $region22: #{resnet_forward.22} parent=0 // pred_check
    %p511 = pneg %p17
  $region23: #{resnet_forward.22} parent=0 // pred_check_branch
    %513 = sbr.rel (%p511) target = $region25
  $region24: #{resnet_forward.22} parent=0 // pred_region
    %v514 = vld [vmem:[#allocation2] sm:$0xff]
    %v515 = vld [vmem:[#allocation2 + $0x8] sm:$0xff]
    %v516 = vld [vmem:[#allocation2 + $0x10] sm:$0xff]
    %v517 = vld [vmem:[#allocation2 + $0x18] sm:$0xff]
    %v518 = vld [vmem:[%s2] sm:$0xf]
    %v520 = vlaneseq
    %v521 = vshrl.u32 %v520, 7
    %v522 = vsub.s32 0, %v521
    %v523 = vrot.slane %v518, %v522
    %v524 = vlaneseq
    %v525 = vshrl.u32 %v524, 7
    %v526 = vsub.s32 1, %v525
    %v527 = vrot.slane %v518, %v526
    %v528 = vlaneseq
    %v529 = vshrl.u32 %v528, 7
    %v530 = vsub.s32 2, %v529
    %v531 = vrot.slane %v518, %v530
    %v532 = vlaneseq
    %v533 = vshrl.u32 %v532, 7
    %v534 = vsub.s32 3, %v533
    %v535 = vrot.slane %v518, %v534
    %v540 = vmul.f32 %v514, %v523
    %v541 = vmul.f32 %v515, %v527
    %v542 = vmul.f32 %v516, %v531
    %v543 = vmul.f32 %v517, %v535
    %v544 = vld [vmem:[%s3] sm:$0xf]
    %v546 = vlaneseq
    %v547 = vshrl.u32 %v546, 7
    %v548 = vsub.s32 0, %v547
    %v549 = vrot.slane %v544, %v548
    %v550 = vlaneseq
    %v551 = vshrl.u32 %v550, 7
    %v552 = vsub.s32 1, %v551
    %v553 = vrot.slane %v544, %v552
    %v554 = vlaneseq
    %v555 = vshrl.u32 %v554, 7
    %v556 = vsub.s32 2, %v555
    %v557 = vrot.slane %v544, %v556
    %v558 = vlaneseq
    %v559 = vshrl.u32 %v558, 7
    %v560 = vsub.s32 3, %v559
    %v561 = vrot.slane %v544, %v560
    %v566 = vadd.f32 %v540, %v549
    %v567 = vadd.f32 %v541, %v553
    %v568 = vadd.f32 %v542, %v557
    %v569 = vadd.f32 %v543, %v561
    %v570 = vpack.c.bf16 %v566, %v566
    %v571 = vpack.c.bf16 %v567, %v567
    %v572 = vpack.c.bf16 %v568, %v568
    %v573 = vpack.c.bf16 %v569, %v569
    %v578 = vunpack.c.l.b16 %v570
    %v579 = vunpack.c.l.b16 %v571
    %v580 = vunpack.c.l.b16 %v572
    %v581 = vunpack.c.l.b16 %v573
    %v582 = vpack.c.b16 %v579, %v578
    %v583 = vpack.c.b16 %v581, %v580
    %586 = vst [vmem:[%s4] sm:$0xff] %v582
    %587 = vst [vmem:[%s4 + $0x8] sm:$0xff] %v583
  $region25: #{resnet_forward.22} parent=0 // pred_fallthru
    _
  // Predicated region
  $region26: #{resnet_forward.22} parent=0 // pred_check
    _
  $region27: #{resnet_forward.22} parent=0 // pred_check_branch
    %589 = sbr.rel (0) target = $region29
  $region28: #{resnet_forward.22} parent=0 // pred_region
    _
  $region29: #{resnet_forward.22} parent=0 // pred_fallthru
    _
  // Predicated region
  $region30: #{resnet_forward.22} parent=0 // pred_check
    _
  $region31: #{resnet_forward.22} parent=0 // pred_check_branch
    %591 = sbr.rel (0) target = $region33
  $region32: #{resnet_forward.22} parent=0 // pred_region
    _
  $region33: #{resnet_forward.22} parent=0 // pred_fallthru
    _

// kernel: resnet_forward.24
$region0: #{resnet_forward.24}
  #allocation0 [shape = 'u32[]', space=smem, size = 0x4, offset = 0x4, fixed_abs, tag = 'smem constant byte address 0x4 - core index']
  #allocation1 [shape = 'u32[144,128]{1,0:T(1,128)}', space=vmem, size = 0x12000, scoped, tag = 'internal scratch']
  #allocation2 [shape = 'f32[8,512]{1,0:T(8,128)}', space=vmem, size = 0x4000, scoped, tag = 'scratch operand']
  %s0 = inlined_call_operand.vmem [shape: bf16[9,8,512], index: 0, kind: input, shape index: {}]
  %s1 = inlined_call_operand.vmem [shape: bf16[9,512,512], index: 1, kind: input, shape index: {}]
  %s2 = inlined_call_operand.vmem [shape: f32[1,512], index: 2, kind: input, shape index: {}]
  %s3 = inlined_call_operand.vmem [shape: f32[1,512], index: 3, kind: input, shape index: {}]
  %s4 = inlined_call_operand.vmem [shape: bf16[8,512], index: 4, kind: input, shape index: {}]
  %s5 = inlined_call_operand.vmem [shape: bf16[8,512], index: 5, kind: output, shape index: {}]
  %s6 = sld [smem:[#allocation0]]
  $region61: #{resnet_forward.24} parent=0
    _
  %s8 = ssub.s32 1, %s6
  %s9 = scalar_select 0, %s8, %s6
  loop: start=0, step=1, limit=11
  $region2: #{resnet_forward.24} parent=0 // loop_pre_header
    _
  $region3: #{resnet_forward.24} parent=0 // loop_header
    %s11 = sphi 0, %s15
    %p12 = scmp.ge.s32.totalorder %s11, 11
    %s18 = sphi 0, %s30
    %s19 = sphi 0, %s26
    %s20 = sphi 0, %s18
    %s21 = sphi 0, %s19
    %s22 = sphi 0, %s20
    %s23 = sphi 0, %s21
    %s35 = sphi 0, %s37
    %s38 = sphi 0, %s35
    %s39 = sphi 0, %s38
    %s55 = sphi 0, %s39
    %s61 = sphi 0, %s63
    %s64 = sphi 0, %s61
    %s65 = sphi 0, %s64
    %s81 = sphi 0, %s65
    %s85 = sphi 0, %s85
    %s87 = sphi 0, %s85
    %s88 = sphi 0, %s87
    %s102 = sphi 0, %s88
    %s106 = sphi 0, %s106
    %s108 = sphi 0, %s106
    %s109 = sphi 0, %s108
    %s123 = sphi 0, %s109
    %s129 = sphi 0, %s131
    %s132 = sphi 0, %s129
    %s133 = sphi 0, %s132
    %s149 = sphi 0, %s133
    %s155 = sphi 0, %s157
    %s158 = sphi 0, %s155
    %s159 = sphi 0, %s158
    %s175 = sphi 0, %s159
  $region4: #{resnet_forward.24} parent=0 // loop_header_branch
    %14 = sbr.rel (%p12) target = $region8
  $region5: #{resnet_forward.24} parent=0 // loop_body
    %s16 = ssub.s32 %s11, 1
    %s17 = ssub.s32 %s11, 2
    %s24 = sadd.s32 1, %s19
    %p25 = scmp.ge.s32.totalorder %s24, 9
    %s26 = scalar_select %p25, 0, %s24
    %s27 = sadd.s32 1, %s18
    %s28 = scalar_select %p25, %s27, %s18
    %p29 = scmp.ge.s32.totalorder %s28, 1
    %s30 = scalar_select %p29, 0, %s28
    %s31 = ssub.s32 %s19, %s26
    %s32 = ssub.s32 %s18, %s30
    %s33 = sor.u32 %s31, %s32
    %p34 = scmp.eq.s32.totalorder %s33, 0
    %s36 = sadd.s32 %s35, 1
    %s37 = scalar_select %p34, %s35, %s36
    %p40 = pneg %p34
    %p41 = scmp.eq.s32.totalorder %s11, 8
    %p42 = por %p40, %p41
    %p43 = scmp.ne.s32.totalorder %s35, %s38
    %p44 = scmp.eq.s32.totalorder %s11, 0
    %p45 = por %p43, %p44
    %p46 = scmp.ne.s32.totalorder %s35, %s38
    %p47 = scmp.eq.s32.totalorder %s16, 8
    %p48 = por %p46, %p47
    %p49 = scmp.ne.s32.totalorder %s38, %s39
    %p50 = scmp.eq.s32.totalorder %s16, 0
    %p51 = por %p49, %p50
    %p52 = scmp.ne.s32.totalorder %s38, %s39
    %p53 = scmp.eq.s32.totalorder %s17, 8
    %p54 = por %p52, %p53
    %p56 = scmp.ne.s32.totalorder %s39, %s55
    %p57 = scmp.eq.s32.totalorder %s17, 0
    %p58 = por %p56, %p57
    %s59 = ssub.s32 %s19, %s26
    %p60 = scmp.eq.s32.totalorder %s59, 0
    %s62 = sadd.s32 %s61, 1
    %s63 = scalar_select %p60, %s61, %s62
    %p66 = pneg %p60
    %p67 = scmp.eq.s32.totalorder %s11, 8
    %p68 = por %p66, %p67
    %p69 = scmp.ne.s32.totalorder %s61, %s64
    %p70 = scmp.eq.s32.totalorder %s11, 0
    %p71 = por %p69, %p70
    %p72 = scmp.ne.s32.totalorder %s61, %s64
    %p73 = scmp.eq.s32.totalorder %s16, 8
    %p74 = por %p72, %p73
    %p75 = scmp.ne.s32.totalorder %s64, %s65
    %p76 = scmp.eq.s32.totalorder %s16, 0
    %p77 = por %p75, %p76
    %p78 = scmp.ne.s32.totalorder %s64, %s65
    %p79 = scmp.eq.s32.totalorder %s17, 8
    %p80 = por %p78, %p79
    %p82 = scmp.ne.s32.totalorder %s65, %s81
    %p83 = scmp.eq.s32.totalorder %s17, 0
    %p84 = por %p82, %p83
    %s86 = sadd.s32 %s85, 1
    %p89 = scmp.eq.s32.totalorder %s11, 8
    %p90 = scmp.ne.s32.totalorder %s85, %s87
    %p91 = scmp.eq.s32.totalorder %s11, 0
    %p92 = por %p90, %p91
    %p93 = scmp.ne.s32.totalorder %s85, %s87
    %p94 = scmp.eq.s32.totalorder %s16, 8
    %p95 = por %p93, %p94
    %p96 = scmp.ne.s32.totalorder %s87, %s88
    %p97 = scmp.eq.s32.totalorder %s16, 0
    %p98 = por %p96, %p97
    %p99 = scmp.ne.s32.totalorder %s87, %s88
    %p100 = scmp.eq.s32.totalorder %s17, 8
    %p101 = por %p99, %p100
    %p103 = scmp.ne.s32.totalorder %s88, %s102
    %p104 = scmp.eq.s32.totalorder %s17, 0
    %p105 = por %p103, %p104
    %s107 = sadd.s32 %s106, 1
    %p110 = scmp.eq.s32.totalorder %s11, 8
    %p111 = scmp.ne.s32.totalorder %s106, %s108
    %p112 = scmp.eq.s32.totalorder %s11, 0
    %p113 = por %p111, %p112
    %p114 = scmp.ne.s32.totalorder %s106, %s108
    %p115 = scmp.eq.s32.totalorder %s16, 8
    %p116 = por %p114, %p115
    %p117 = scmp.ne.s32.totalorder %s108, %s109
    %p118 = scmp.eq.s32.totalorder %s16, 0
    %p119 = por %p117, %p118
    %p120 = scmp.ne.s32.totalorder %s108, %s109
    %p121 = scmp.eq.s32.totalorder %s17, 8
    %p122 = por %p120, %p121
    %p124 = scmp.ne.s32.totalorder %s109, %s123
    %p125 = scmp.eq.s32.totalorder %s17, 0
    %p126 = por %p124, %p125
    %s127 = ssub.s32 %s18, %s30
    %p128 = scmp.eq.s32.totalorder %s127, 0
    %s130 = sadd.s32 %s129, 1
    %s131 = scalar_select %p128, %s129, %s130
    %p134 = pneg %p128
    %p135 = scmp.eq.s32.totalorder %s11, 8
    %p136 = por %p134, %p135
    %p137 = scmp.ne.s32.totalorder %s129, %s132
    %p138 = scmp.eq.s32.totalorder %s11, 0
    %p139 = por %p137, %p138
    %p140 = scmp.ne.s32.totalorder %s129, %s132
    %p141 = scmp.eq.s32.totalorder %s16, 8
    %p142 = por %p140, %p141
    %p143 = scmp.ne.s32.totalorder %s132, %s133
    %p144 = scmp.eq.s32.totalorder %s16, 0
    %p145 = por %p143, %p144
    %p146 = scmp.ne.s32.totalorder %s132, %s133
    %p147 = scmp.eq.s32.totalorder %s17, 8
    %p148 = por %p146, %p147
    %p150 = scmp.ne.s32.totalorder %s133, %s149
    %p151 = scmp.eq.s32.totalorder %s17, 0
    %p152 = por %p150, %p151
    %s153 = ssub.s32 %s18, %s30
    %p154 = scmp.eq.s32.totalorder %s153, 0
    %s156 = sadd.s32 %s155, 1
    %s157 = scalar_select %p154, %s155, %s156
    %p160 = pneg %p154
    %p161 = scmp.eq.s32.totalorder %s11, 8
    %p162 = por %p160, %p161
    %p163 = scmp.ne.s32.totalorder %s155, %s158
    %p164 = scmp.eq.s32.totalorder %s11, 0
    %p165 = por %p163, %p164
    %p166 = scmp.ne.s32.totalorder %s155, %s158
    %p167 = scmp.eq.s32.totalorder %s16, 8
    %p168 = por %p166, %p167
    %p169 = scmp.ne.s32.totalorder %s158, %s159
    %p170 = scmp.eq.s32.totalorder %s16, 0
    %p171 = por %p169, %p170
    %p172 = scmp.ne.s32.totalorder %s158, %s159
    %p173 = scmp.eq.s32.totalorder %s17, 8
    %p174 = por %p172, %p173
    %p176 = scmp.ne.s32.totalorder %s159, %s175
    %p177 = scmp.eq.s32.totalorder %s17, 0
    %p178 = por %p176, %p177
    %p179 = scmp.le.s32.totalorder 1, %s11
    %p180 = scmp.lt.s32.totalorder %s11, 10
    %p181 = pnand %p179, %p180
    %p182 = pneg %p181
    // Predicated region
    $region9: #{resnet_forward.24} parent=5 // pred_check
      _
    $region10: #{resnet_forward.24} parent=5 // pred_check_branch
      %184 = sbr.rel (%p181) target = $region12
    $region11: #{resnet_forward.24} parent=5 // pred_region
      %s185 = ssub.s32 %s11, 1
      // Predicated region
      $region13: #{resnet_forward.24} parent=11 // pred_check
        %p186 = pneg %p98
      $region14: #{resnet_forward.24} parent=11 // pred_check_branch
        %188 = sbr.rel (%p186) target = $region16
      $region15: #{resnet_forward.24} parent=11 // pred_region
        _
      $region16: #{resnet_forward.24} parent=11 // pred_fallthru
        _
      // Predicated region
      $region17: #{resnet_forward.24} parent=11 // pred_check
        %p189 = pneg %p119
      $region18: #{resnet_forward.24} parent=11 // pred_check_branch
        %191 = sbr.rel (%p189) target = $region20
      $region19: #{resnet_forward.24} parent=11 // pred_region
        _
      $region20: #{resnet_forward.24} parent=11 // pred_fallthru
        _
      // Predicated region
      $region21: #{resnet_forward.24} parent=11 // pred_check
        %p192 = pneg %p145
      $region22: #{resnet_forward.24} parent=11 // pred_check_branch
        %194 = sbr.rel (%p192) target = $region24
      $region23: #{resnet_forward.24} parent=11 // pred_region
        %p195 = scmp.lt.s32.totalorder %s20, 0
        %s196 = scalar_select %p195, %s20, 0
        %s197 = smul.addr %s196, 4
        %s198 = smul.addr %s197, 4
        %s199 = scalar_lea.vmem %s4, %s198
      $region24: #{resnet_forward.24} parent=11 // pred_fallthru
        _
    $region12: #{resnet_forward.24} parent=5 // pred_fallthru
      _
    %p200 = scmp.lt.s32.totalorder %s11, 9
    // Predicated region
    $region25: #{resnet_forward.24} parent=5 // pred_check
      %p201 = pneg %p200
    $region26: #{resnet_forward.24} parent=5 // pred_check_branch
      %203 = sbr.rel (%p201) target = $region28
    $region27: #{resnet_forward.24} parent=5 // pred_region
      // Predicated region
      $region29: #{resnet_forward.24} parent=27 // pred_check
        %p204 = pneg %p45
      $region30: #{resnet_forward.24} parent=27 // pred_check_branch
        %206 = sbr.rel (%p204) target = $region32
      $region31: #{resnet_forward.24} parent=27 // pred_region
        %p207 = scmp.lt.s32.totalorder %s19, 8
        %s208 = scalar_select %p207, %s19, 8
        %p209 = scmp.lt.s32.totalorder %s18, 0
        %s210 = scalar_select %p209, %s18, 0
        %s211 = smul.addr %s210, 4
        %s212 = smul.addr %s208, 4
        %s213 = sadd.s32 %s211, %s212
        %s214 = smul.addr %s213, 4
        %s215 = scalar_lea.vmem %s0, %s214
      $region32: #{resnet_forward.24} parent=27 // pred_fallthru
        _
      // Predicated region
      $region33: #{resnet_forward.24} parent=27 // pred_check
        %p216 = pneg %p71
      $region34: #{resnet_forward.24} parent=27 // pred_check_branch
        %218 = sbr.rel (%p216) target = $region36
      $region35: #{resnet_forward.24} parent=27 // pred_region
        %p219 = scmp.lt.s32.totalorder %s19, 8
        %s220 = scalar_select %p219, %s19, 8
        %s221 = smul.addr %s220, 256
        %s222 = smul.addr %s221, 4
        %s223 = scalar_lea.vmem %s1, %s222
      $region36: #{resnet_forward.24} parent=27 // pred_fallthru
        _
    $region28: #{resnet_forward.24} parent=5 // pred_fallthru
      _
    %p224 = scmp.le.s32.totalorder 1, %s11
    %p225 = scmp.lt.s32.totalorder %s11, 10
    %p226 = pnand %p224, %p225
    %p227 = pneg %p226
    // Predicated region
    $region37: #{resnet_forward.24} parent=5 // pred_check
      _
    $region38: #{resnet_forward.24} parent=5 // pred_check_branch
      %229 = sbr.rel (%p226) target = $region40
    $region39: #{resnet_forward.24} parent=5 // pred_region
      %s230 = ssub.s32 %s11, 1
      %p231 = scmp.lt.s32.totalorder %s21, 8
      %s232 = scalar_select %p231, %s21, 8
      %p233 = scmp.lt.s32.totalorder %s20, 0
      %s234 = scalar_select %p233, %s20, 0
      %s235 = smul.addr %s234, 4
      %s236 = smul.addr %s232, 4
      %s237 = sadd.s32 %s235, %s236
      %s238 = smul.addr %s237, 4
      %s239 = scalar_lea.vmem %s0, %s238
      %p240 = pneg %p51
      %p241 = pneg %p48
      %p242 = scmp.lt.s32.totalorder %s21, 8
      %s243 = scalar_select %p242, %s21, 8
      %s244 = smul.addr %s243, 256
      %s245 = smul.addr %s244, 4
      %s246 = scalar_lea.vmem %s1, %s245
      %p247 = pneg %p77
      %p248 = pneg %p74
      %p249 = pneg %p98
      %p250 = pneg %p95
      %p251 = pneg %p119
      %p252 = pneg %p116
      %p253 = scmp.lt.s32.totalorder %s20, 0
      %s254 = scalar_select %p253, %s20, 0
      %s255 = smul.addr %s254, 4
      %s256 = smul.addr %s255, 4
      %s257 = scalar_lea.vmem %s4, %s256
      %p258 = pneg %p145
      %p259 = pneg %p142
      %p260 = pneg %p171
      %p261 = pneg %p168
      %p262 = scmp.lt.s32.totalorder %s20, 0
      %s263 = scalar_select %p262, %s20, 0
      %s264 = smul.addr %s263, 4
      %s265 = smul.addr %s264, 4
      %s266 = scalar_lea.vmem %s5, %s265
      %p267 = scmp.lt.s32.totalorder %s21, 8
      %s268 = scalar_select %p267, %s21, 8
      %p269 = scmp.lt.s32.totalorder %s20, 0
      %s270 = scalar_select %p269, %s20, 0
      %s271 = smul.addr %s270, 4
      %s272 = smul.addr %s268, 4
      %s273 = sadd.s32 %s271, %s272
      %s274 = smul.addr %s273, 4
      %s275 = scalar_lea.vmem %s0, %s274
      %p276 = scmp.lt.s32.totalorder %s21, 8
      %s277 = scalar_select %p276, %s21, 8
      %s278 = smul.addr %s277, 256
      %s279 = smul.addr %s278, 4
      %s280 = scalar_lea.vmem %s1, %s279
      %p281 = scmp.lt.s32.totalorder %s20, 0
      %s282 = scalar_select %p281, %s20, 0
      %s283 = smul.addr %s282, 4
      %s284 = smul.addr %s283, 4
      %s285 = scalar_lea.vmem %s4, %s284
      %p286 = scmp.lt.s32.totalorder %s20, 0
      %s287 = scalar_select %p286, %s20, 0
      %s288 = smul.addr %s287, 4
      %s289 = smul.addr %s288, 4
      %s290 = scalar_lea.vmem %s5, %s289
      %p291 = scmp.eq.s32.totalorder %s21, 0
      // Predicated region
      $region41: #{resnet_forward.24} parent=39 // pred_check
        %p292 = pneg %p291
      $region42: #{resnet_forward.24} parent=39 // pred_check_branch
        %294 = sbr.rel (%p292) target = $region44
      $region43: #{resnet_forward.24} parent=39 // pred_region
        %295 = vst [vmem:[#allocation2] sm:$0xff] 0.0
        %296 = vst [vmem:[#allocation2 + $0x8] sm:$0xff] 0.0
        %297 = vst [vmem:[#allocation2 + $0x10] sm:$0xff] 0.0
        %298 = vst [vmem:[#allocation2 + $0x18] sm:$0xff] 0.0
      $region44: #{resnet_forward.24} parent=39 // pred_fallthru
        _
      %v299 = vld [vmem:[#allocation2] sm:$0xff]
      %v300 = vld [vmem:[#allocation2 + $0x8] sm:$0xff]
      %v301 = vld [vmem:[#allocation2 + $0x10] sm:$0xff]
      %v302 = vld [vmem:[#allocation2 + $0x18] sm:$0xff]
      %v303 = vld [vmem:[%s275] sm:$0xff]
      %v304 = vld [vmem:[%s275 + $0x8] sm:$0xff]
      %v305 = vld [vmem:[%s280] sm:$0xff]
      %v306 = vld [vmem:[%s280 + $0x8] sm:$0xff]
      %v307 = vld [vmem:[%s280 + $0x10] sm:$0xff]
      %v308 = vld [vmem:[%s280 + $0x18] sm:$0xff]
      %v309 = vld [vmem:[%s280 + $0x20] sm:$0xff]
      %v310 = vld [vmem:[%s280 + $0x28] sm:$0xff]
      %v311 = vld [vmem:[%s280 + $0x30] sm:$0xff]
      %v312 = vld [vmem:[%s280 + $0x38] sm:$0xff]
      %v313 = vld [vmem:[%s280 + $0x40] sm:$0xff]
      %v314 = vld [vmem:[%s280 + $0x48] sm:$0xff]
      %v315 = vld [vmem:[%s280 + $0x50] sm:$0xff]
      %v316 = vld [vmem:[%s280 + $0x58] sm:$0xff]
      %v317 = vld [vmem:[%s280 + $0x60] sm:$0xff]
      %v318 = vld [vmem:[%s280 + $0x68] sm:$0xff]
      %v319 = vld [vmem:[%s280 + $0x70] sm:$0xff]
      %v320 = vld [vmem:[%s280 + $0x78] sm:$0xff]
      %v321 = vld [vmem:[%s280 + $0x80] sm:$0xff]
      %v322 = vld [vmem:[%s280 + $0x88] sm:$0xff]
      %v323 = vld [vmem:[%s280 + $0x90] sm:$0xff]
      %v324 = vld [vmem:[%s280 + $0x98] sm:$0xff]
      %v325 = vld [vmem:[%s280 + $0xa0] sm:$0xff]
      %v326 = vld [vmem:[%s280 + $0xa8] sm:$0xff]
      %v327 = vld [vmem:[%s280 + $0xb0] sm:$0xff]
      %v328 = vld [vmem:[%s280 + $0xb8] sm:$0xff]
      %v329 = vld [vmem:[%s280 + $0xc0] sm:$0xff]
      %v330 = vld [vmem:[%s280 + $0xc8] sm:$0xff]
      %v331 = vld [vmem:[%s280 + $0xd0] sm:$0xff]
      %v332 = vld [vmem:[%s280 + $0xd8] sm:$0xff]
      %v333 = vld [vmem:[%s280 + $0xe0] sm:$0xff]
      %v334 = vld [vmem:[%s280 + $0xe8] sm:$0xff]
      %v335 = vld [vmem:[%s280 + $0xf0] sm:$0xff]
      %v336 = vld [vmem:[%s280 + $0xf8] sm:$0xff]
      %v337 = vld [vmem:[%s280 + $0x100] sm:$0xff]
      %v338 = vld [vmem:[%s280 + $0x108] sm:$0xff]
      %v339 = vld [vmem:[%s280 + $0x110] sm:$0xff]
      %v340 = vld [vmem:[%s280 + $0x118] sm:$0xff]
      %v341 = vld [vmem:[%s280 + $0x120] sm:$0xff]
      %v342 = vld [vmem:[%s280 + $0x128] sm:$0xff]
      %v343 = vld [vmem:[%s280 + $0x130] sm:$0xff]
      %v344 = vld [vmem:[%s280 + $0x138] sm:$0xff]
      %v345 = vld [vmem:[%s280 + $0x140] sm:$0xff]
      %v346 = vld [vmem:[%s280 + $0x148] sm:$0xff]
      %v347 = vld [vmem:[%s280 + $0x150] sm:$0xff]
      %v348 = vld [vmem:[%s280 + $0x158] sm:$0xff]
      %v349 = vld [vmem:[%s280 + $0x160] sm:$0xff]
      %v350 = vld [vmem:[%s280 + $0x168] sm:$0xff]
      %v351 = vld [vmem:[%s280 + $0x170] sm:$0xff]
      %v352 = vld [vmem:[%s280 + $0x178] sm:$0xff]
      %v353 = vld [vmem:[%s280 + $0x180] sm:$0xff]
      %v354 = vld [vmem:[%s280 + $0x188] sm:$0xff]
      %v355 = vld [vmem:[%s280 + $0x190] sm:$0xff]
      %v356 = vld [vmem:[%s280 + $0x198] sm:$0xff]
      %v357 = vld [vmem:[%s280 + $0x1a0] sm:$0xff]
      %v358 = vld [vmem:[%s280 + $0x1a8] sm:$0xff]
      %v359 = vld [vmem:[%s280 + $0x1b0] sm:$0xff]
      %v360 = vld [vmem:[%s280 + $0x1b8] sm:$0xff]
      %v361 = vld [vmem:[%s280 + $0x1c0] sm:$0xff]
      %v362 = vld [vmem:[%s280 + $0x1c8] sm:$0xff]
      %v363 = vld [vmem:[%s280 + $0x1d0] sm:$0xff]
      %v364 = vld [vmem:[%s280 + $0x1d8] sm:$0xff]
      %v365 = vld [vmem:[%s280 + $0x1e0] sm:$0xff]
      %v366 = vld [vmem:[%s280 + $0x1e8] sm:$0xff]
      %v367 = vld [vmem:[%s280 + $0x1f0] sm:$0xff]
      %v368 = vld [vmem:[%s280 + $0x1f8] sm:$0xff]
      %v369 = vld [vmem:[%s280 + $0x200] sm:$0xff]
      %v370 = vld [vmem:[%s280 + $0x208] sm:$0xff]
      %v371 = vld [vmem:[%s280 + $0x210] sm:$0xff]
      %v372 = vld [vmem:[%s280 + $0x218] sm:$0xff]
      %v373 = vld [vmem:[%s280 + $0x220] sm:$0xff]
      %v374 = vld [vmem:[%s280 + $0x228] sm:$0xff]
      %v375 = vld [vmem:[%s280 + $0x230] sm:$0xff]
      %v376 = vld [vmem:[%s280 + $0x238] sm:$0xff]
      %v377 = vld [vmem:[%s280 + $0x240] sm:$0xff]
      %v378 = vld [vmem:[%s280 + $0x248] sm:$0xff]
      %v379 = vld [vmem:[%s280 + $0x250] sm:$0xff]
      %v380 = vld [vmem:[%s280 + $0x258] sm:$0xff]
      %v381 = vld [vmem:[%s280 + $0x260] sm:$0xff]
      %v382 = vld [vmem:[%s280 + $0x268] sm:$0xff]
      %v383 = vld [vmem:[%s280 + $0x270] sm:$0xff]
      %v384 = vld [vmem:[%s280 + $0x278] sm:$0xff]
      %v385 = vld [vmem:[%s280 + $0x280] sm:$0xff]
      %v386 = vld [vmem:[%s280 + $0x288] sm:$0xff]
      %v387 = vld [vmem:[%s280 + $0x290] sm:$0xff]
      %v388 = vld [vmem:[%s280 + $0x298] sm:$0xff]
      %v389 = vld [vmem:[%s280 + $0x2a0] sm:$0xff]
      %v390 = vld [vmem:[%s280 + $0x2a8] sm:$0xff]
      %v391 = vld [vmem:[%s280 + $0x2b0] sm:$0xff]
      %v392 = vld [vmem:[%s280 + $0x2b8] sm:$0xff]
      %v393 = vld [vmem:[%s280 + $0x2c0] sm:$0xff]
      %v394 = vld [vmem:[%s280 + $0x2c8] sm:$0xff]
      %v395 = vld [vmem:[%s280 + $0x2d0] sm:$0xff]
      %v396 = vld [vmem:[%s280 + $0x2d8] sm:$0xff]
      %v397 = vld [vmem:[%s280 + $0x2e0] sm:$0xff]
      %v398 = vld [vmem:[%s280 + $0x2e8] sm:$0xff]
      %v399 = vld [vmem:[%s280 + $0x2f0] sm:$0xff]
      %v400 = vld [vmem:[%s280 + $0x2f8] sm:$0xff]
      %v401 = vld [vmem:[%s280 + $0x300] sm:$0xff]
      %v402 = vld [vmem:[%s280 + $0x308] sm:$0xff]
      %v403 = vld [vmem:[%s280 + $0x310] sm:$0xff]
      %v404 = vld [vmem:[%s280 + $0x318] sm:$0xff]
      %v405 = vld [vmem:[%s280 + $0x320] sm:$0xff]
      %v406 = vld [vmem:[%s280 + $0x328] sm:$0xff]
      %v407 = vld [vmem:[%s280 + $0x330] sm:$0xff]
      %v408 = vld [vmem:[%s280 + $0x338] sm:$0xff]
      %v409 = vld [vmem:[%s280 + $0x340] sm:$0xff]
      %v410 = vld [vmem:[%s280 + $0x348] sm:$0xff]
      %v411 = vld [vmem:[%s280 + $0x350] sm:$0xff]
      %v412 = vld [vmem:[%s280 + $0x358] sm:$0xff]
      %v413 = vld [vmem:[%s280 + $0x360] sm:$0xff]
      %v414 = vld [vmem:[%s280 + $0x368] sm:$0xff]
      %v415 = vld [vmem:[%s280 + $0x370] sm:$0xff]
      %v416 = vld [vmem:[%s280 + $0x378] sm:$0xff]
      %v417 = vld [vmem:[%s280 + $0x380] sm:$0xff]
      %v418 = vld [vmem:[%s280 + $0x388] sm:$0xff]
      %v419 = vld [vmem:[%s280 + $0x390] sm:$0xff]
      %v420 = vld [vmem:[%s280 + $0x398] sm:$0xff]
      %v421 = vld [vmem:[%s280 + $0x3a0] sm:$0xff]
      %v422 = vld [vmem:[%s280 + $0x3a8] sm:$0xff]
      %v423 = vld [vmem:[%s280 + $0x3b0] sm:$0xff]
      %v424 = vld [vmem:[%s280 + $0x3b8] sm:$0xff]
      %v425 = vld [vmem:[%s280 + $0x3c0] sm:$0xff]
      %v426 = vld [vmem:[%s280 + $0x3c8] sm:$0xff]
      %v427 = vld [vmem:[%s280 + $0x3d0] sm:$0xff]
      %v428 = vld [vmem:[%s280 + $0x3d8] sm:$0xff]
      %v429 = vld [vmem:[%s280 + $0x3e0] sm:$0xff]
      %v430 = vld [vmem:[%s280 + $0x3e8] sm:$0xff]
      %v431 = vld [vmem:[%s280 + $0x3f0] sm:$0xff]
      %v432 = vld [vmem:[%s280 + $0x3f8] sm:$0xff]
      %v435 = vunpack.c.l.b16 %v303
      %v436 = vunpack.c.h.b16 %v303
      %v437 = vunpack.c.l.b16 %v304
      %v438 = vunpack.c.h.b16 %v304
      %v439 = vpack.c.b16 %v435, %v435
      %v440 = vpack.c.b16 %v436, %v436
      %v441 = vpack.c.b16 %v437, %v437
      %v442 = vpack.c.b16 %v438, %v438
      %v575 = vunpack.c.l.b16 %v305
      %v576 = vunpack.c.h.b16 %v305
      %v577 = vunpack.c.l.b16 %v306
      %v578 = vunpack.c.h.b16 %v306
      %v579 = vunpack.c.l.b16 %v307
      %v580 = vunpack.c.h.b16 %v307
      %v581 = vunpack.c.l.b16 %v308
      %v582 = vunpack.c.h.b16 %v308
      %v583 = vunpack.c.l.b16 %v309
      %v584 = vunpack.c.h.b16 %v309
      %v585 = vunpack.c.l.b16 %v310
      %v586 = vunpack.c.h.b16 %v310
      %v587 = vunpack.c.l.b16 %v311
      %v588 = vunpack.c.h.b16 %v311
      %v589 = vunpack.c.l.b16 %v312
      %v590 = vunpack.c.h.b16 %v312
      %v591 = vunpack.c.l.b16 %v313
      %v592 = vunpack.c.h.b16 %v313
      %v593 = vunpack.c.l.b16 %v314
      %v594 = vunpack.c.h.b16 %v314
      %v595 = vunpack.c.l.b16 %v315
      %v596 = vunpack.c.h.b16 %v315
      %v597 = vunpack.c.l.b16 %v316
      %v598 = vunpack.c.h.b16 %v316
      %v599 = vunpack.c.l.b16 %v317
      %v600 = vunpack.c.h.b16 %v317
      %v601 = vunpack.c.l.b16 %v318
      %v602 = vunpack.c.h.b16 %v318
      %v603 = vunpack.c.l.b16 %v319
      %v604 = vunpack.c.h.b16 %v319
      %v605 = vunpack.c.l.b16 %v320
      %v606 = vunpack.c.h.b16 %v320
      %v607 = vunpack.c.l.b16 %v321
      %v608 = vunpack.c.h.b16 %v321
      %v609 = vunpack.c.l.b16 %v322
      %v610 = vunpack.c.h.b16 %v322
      %v611 = vunpack.c.l.b16 %v323
      %v612 = vunpack.c.h.b16 %v323
      %v613 = vunpack.c.l.b16 %v324
      %v614 = vunpack.c.h.b16 %v324
      %v615 = vunpack.c.l.b16 %v325
      %v616 = vunpack.c.h.b16 %v325
      %v617 = vunpack.c.l.b16 %v326
      %v618 = vunpack.c.h.b16 %v326
      %v619 = vunpack.c.l.b16 %v327
      %v620 = vunpack.c.h.b16 %v327
      %v621 = vunpack.c.l.b16 %v328
      %v622 = vunpack.c.h.b16 %v328
      %v623 = vunpack.c.l.b16 %v329
      %v624 = vunpack.c.h.b16 %v329
      %v625 = vunpack.c.l.b16 %v330
      %v626 = vunpack.c.h.b16 %v330
      %v627 = vunpack.c.l.b16 %v331
      %v628 = vunpack.c.h.b16 %v331
      %v629 = vunpack.c.l.b16 %v332
      %v630 = vunpack.c.h.b16 %v332
      %v631 = vunpack.c.l.b16 %v333
      %v632 = vunpack.c.h.b16 %v333
      %v633 = vunpack.c.l.b16 %v334
      %v634 = vunpack.c.h.b16 %v334
      %v635 = vunpack.c.l.b16 %v335
      %v636 = vunpack.c.h.b16 %v335
      %v637 = vunpack.c.l.b16 %v336
      %v638 = vunpack.c.h.b16 %v336
      %v639 = vunpack.c.l.b16 %v337
      %v640 = vunpack.c.h.b16 %v337
      %v641 = vunpack.c.l.b16 %v338
      %v642 = vunpack.c.h.b16 %v338
      %v643 = vunpack.c.l.b16 %v339
      %v644 = vunpack.c.h.b16 %v339
      %v645 = vunpack.c.l.b16 %v340
      %v646 = vunpack.c.h.b16 %v340
      %v647 = vunpack.c.l.b16 %v341
      %v648 = vunpack.c.h.b16 %v341
      %v649 = vunpack.c.l.b16 %v342
      %v650 = vunpack.c.h.b16 %v342
      %v651 = vunpack.c.l.b16 %v343
      %v652 = vunpack.c.h.b16 %v343
      %v653 = vunpack.c.l.b16 %v344
      %v654 = vunpack.c.h.b16 %v344
      %v655 = vunpack.c.l.b16 %v345
      %v656 = vunpack.c.h.b16 %v345
      %v657 = vunpack.c.l.b16 %v346
      %v658 = vunpack.c.h.b16 %v346
      %v659 = vunpack.c.l.b16 %v347
      %v660 = vunpack.c.h.b16 %v347
      %v661 = vunpack.c.l.b16 %v348
      %v662 = vunpack.c.h.b16 %v348
      %v663 = vunpack.c.l.b16 %v349
      %v664 = vunpack.c.h.b16 %v349
      %v665 = vunpack.c.l.b16 %v350
      %v666 = vunpack.c.h.b16 %v350
      %v667 = vunpack.c.l.b16 %v351
      %v668 = vunpack.c.h.b16 %v351
      %v669 = vunpack.c.l.b16 %v352
      %v670 = vunpack.c.h.b16 %v352
      %v671 = vunpack.c.l.b16 %v353
      %v672 = vunpack.c.h.b16 %v353
      %v673 = vunpack.c.l.b16 %v354
      %v674 = vunpack.c.h.b16 %v354
      %v675 = vunpack.c.l.b16 %v355
      %v676 = vunpack.c.h.b16 %v355
      %v677 = vunpack.c.l.b16 %v356
      %v678 = vunpack.c.h.b16 %v356
      %v679 = vunpack.c.l.b16 %v357
      %v680 = vunpack.c.h.b16 %v357
      %v681 = vunpack.c.l.b16 %v358
      %v682 = vunpack.c.h.b16 %v358
      %v683 = vunpack.c.l.b16 %v359
      %v684 = vunpack.c.h.b16 %v359
      %v685 = vunpack.c.l.b16 %v360
      %v686 = vunpack.c.h.b16 %v360
      %v687 = vunpack.c.l.b16 %v361
      %v688 = vunpack.c.h.b16 %v361
      %v689 = vunpack.c.l.b16 %v362
      %v690 = vunpack.c.h.b16 %v362
      %v691 = vunpack.c.l.b16 %v363
      %v692 = vunpack.c.h.b16 %v363
      %v693 = vunpack.c.l.b16 %v364
      %v694 = vunpack.c.h.b16 %v364
      %v695 = vunpack.c.l.b16 %v365
      %v696 = vunpack.c.h.b16 %v365
      %v697 = vunpack.c.l.b16 %v366
      %v698 = vunpack.c.h.b16 %v366
      %v699 = vunpack.c.l.b16 %v367
      %v700 = vunpack.c.h.b16 %v367
      %v701 = vunpack.c.l.b16 %v368
      %v702 = vunpack.c.h.b16 %v368
      %v703 = vunpack.c.l.b16 %v369
      %v704 = vunpack.c.h.b16 %v369
      %v705 = vunpack.c.l.b16 %v370
      %v706 = vunpack.c.h.b16 %v370
      %v707 = vunpack.c.l.b16 %v371
      %v708 = vunpack.c.h.b16 %v371
      %v709 = vunpack.c.l.b16 %v372
      %v710 = vunpack.c.h.b16 %v372
      %v711 = vunpack.c.l.b16 %v373
      %v712 = vunpack.c.h.b16 %v373
      %v713 = vunpack.c.l.b16 %v374
      %v714 = vunpack.c.h.b16 %v374
      %v715 = vunpack.c.l.b16 %v375
      %v716 = vunpack.c.h.b16 %v375
      %v717 = vunpack.c.l.b16 %v376
      %v718 = vunpack.c.h.b16 %v376
      %v719 = vunpack.c.l.b16 %v377
      %v720 = vunpack.c.h.b16 %v377
      %v721 = vunpack.c.l.b16 %v378
      %v722 = vunpack.c.h.b16 %v378
      %v723 = vunpack.c.l.b16 %v379
      %v724 = vunpack.c.h.b16 %v379
      %v725 = vunpack.c.l.b16 %v380
      %v726 = vunpack.c.h.b16 %v380
      %v727 = vunpack.c.l.b16 %v381
      %v728 = vunpack.c.h.b16 %v381
      %v729 = vunpack.c.l.b16 %v382
      %v730 = vunpack.c.h.b16 %v382
      %v731 = vunpack.c.l.b16 %v383
      %v732 = vunpack.c.h.b16 %v383
      %v733 = vunpack.c.l.b16 %v384
      %v734 = vunpack.c.h.b16 %v384
      %v735 = vunpack.c.l.b16 %v385
      %v736 = vunpack.c.h.b16 %v385
      %v737 = vunpack.c.l.b16 %v386
      %v738 = vunpack.c.h.b16 %v386
      %v739 = vunpack.c.l.b16 %v387
      %v740 = vunpack.c.h.b16 %v387
      %v741 = vunpack.c.l.b16 %v388
      %v742 = vunpack.c.h.b16 %v388
      %v743 = vunpack.c.l.b16 %v389
      %v744 = vunpack.c.h.b16 %v389
      %v745 = vunpack.c.l.b16 %v390
      %v746 = vunpack.c.h.b16 %v390
      %v747 = vunpack.c.l.b16 %v391
      %v748 = vunpack.c.h.b16 %v391
      %v749 = vunpack.c.l.b16 %v392
      %v750 = vunpack.c.h.b16 %v392
      %v751 = vunpack.c.l.b16 %v393
      %v752 = vunpack.c.h.b16 %v393
      %v753 = vunpack.c.l.b16 %v394
      %v754 = vunpack.c.h.b16 %v394
      %v755 = vunpack.c.l.b16 %v395
      %v756 = vunpack.c.h.b16 %v395
      %v757 = vunpack.c.l.b16 %v396
      %v758 = vunpack.c.h.b16 %v396
      %v759 = vunpack.c.l.b16 %v397
      %v760 = vunpack.c.h.b16 %v397
      %v761 = vunpack.c.l.b16 %v398
      %v762 = vunpack.c.h.b16 %v398
      %v763 = vunpack.c.l.b16 %v399
      %v764 = vunpack.c.h.b16 %v399
      %v765 = vunpack.c.l.b16 %v400
      %v766 = vunpack.c.h.b16 %v400
      %v767 = vunpack.c.l.b16 %v401
      %v768 = vunpack.c.h.b16 %v401
      %v769 = vunpack.c.l.b16 %v402
      %v770 = vunpack.c.h.b16 %v402
      %v771 = vunpack.c.l.b16 %v403
      %v772 = vunpack.c.h.b16 %v403
      %v773 = vunpack.c.l.b16 %v404
      %v774 = vunpack.c.h.b16 %v404
      %v775 = vunpack.c.l.b16 %v405
      %v776 = vunpack.c.h.b16 %v405
      %v777 = vunpack.c.l.b16 %v406
      %v778 = vunpack.c.h.b16 %v406
      %v779 = vunpack.c.l.b16 %v407
      %v780 = vunpack.c.h.b16 %v407
      %v781 = vunpack.c.l.b16 %v408
      %v782 = vunpack.c.h.b16 %v408
      %v783 = vunpack.c.l.b16 %v409
      %v784 = vunpack.c.h.b16 %v409
      %v785 = vunpack.c.l.b16 %v410
      %v786 = vunpack.c.h.b16 %v410
      %v787 = vunpack.c.l.b16 %v411
      %v788 = vunpack.c.h.b16 %v411
      %v789 = vunpack.c.l.b16 %v412
      %v790 = vunpack.c.h.b16 %v412
      %v791 = vunpack.c.l.b16 %v413
      %v792 = vunpack.c.h.b16 %v413
      %v793 = vunpack.c.l.b16 %v414
      %v794 = vunpack.c.h.b16 %v414
      %v795 = vunpack.c.l.b16 %v415
      %v796 = vunpack.c.h.b16 %v415
      %v797 = vunpack.c.l.b16 %v416
      %v798 = vunpack.c.h.b16 %v416
      %v799 = vunpack.c.l.b16 %v417
      %v800 = vunpack.c.h.b16 %v417
      %v801 = vunpack.c.l.b16 %v418
      %v802 = vunpack.c.h.b16 %v418
      %v803 = vunpack.c.l.b16 %v419
      %v804 = vunpack.c.h.b16 %v419
      %v805 = vunpack.c.l.b16 %v420
      %v806 = vunpack.c.h.b16 %v420
      %v807 = vunpack.c.l.b16 %v421
      %v808 = vunpack.c.h.b16 %v421
      %v809 = vunpack.c.l.b16 %v422
      %v810 = vunpack.c.h.b16 %v422
      %v811 = vunpack.c.l.b16 %v423
      %v812 = vunpack.c.h.b16 %v423
      %v813 = vunpack.c.l.b16 %v424
      %v814 = vunpack.c.h.b16 %v424
      %v815 = vunpack.c.l.b16 %v425
      %v816 = vunpack.c.h.b16 %v425
      %v817 = vunpack.c.l.b16 %v426
      %v818 = vunpack.c.h.b16 %v426
      %v819 = vunpack.c.l.b16 %v427
      %v820 = vunpack.c.h.b16 %v427
      %v821 = vunpack.c.l.b16 %v428
      %v822 = vunpack.c.h.b16 %v428
      %v823 = vunpack.c.l.b16 %v429
      %v824 = vunpack.c.h.b16 %v429
      %v825 = vunpack.c.l.b16 %v430
      %v826 = vunpack.c.h.b16 %v430
      %v827 = vunpack.c.l.b16 %v431
      %v828 = vunpack.c.h.b16 %v431
      %v829 = vunpack.c.l.b16 %v432
      %v830 = vunpack.c.h.b16 %v432
      %v831 = vpack.c.b16 %v579, %v575
      %v832 = vpack.c.b16 %v580, %v576
      %v833 = vpack.c.b16 %v581, %v577
      %v834 = vpack.c.b16 %v582, %v578
      %v835 = vpack.c.b16 %v587, %v583
      %v836 = vpack.c.b16 %v588, %v584
      %v837 = vpack.c.b16 %v589, %v585
      %v838 = vpack.c.b16 %v590, %v586
      %v839 = vpack.c.b16 %v595, %v591
      %v840 = vpack.c.b16 %v596, %v592
      %v841 = vpack.c.b16 %v597, %v593
      %v842 = vpack.c.b16 %v598, %v594
      %v843 = vpack.c.b16 %v603, %v599
      %v844 = vpack.c.b16 %v604, %v600
      %v845 = vpack.c.b16 %v605, %v601
      %v846 = vpack.c.b16 %v606, %v602
      %v847 = vpack.c.b16 %v611, %v607
      %v848 = vpack.c.b16 %v612, %v608
      %v849 = vpack.c.b16 %v613, %v609
      %v850 = vpack.c.b16 %v614, %v610
      %v851 = vpack.c.b16 %v619, %v615
      %v852 = vpack.c.b16 %v620, %v616
      %v853 = vpack.c.b16 %v621, %v617
      %v854 = vpack.c.b16 %v622, %v618
      %v855 = vpack.c.b16 %v627, %v623
      %v856 = vpack.c.b16 %v628, %v624
      %v857 = vpack.c.b16 %v629, %v625
      %v858 = vpack.c.b16 %v630, %v626
      %v859 = vpack.c.b16 %v635, %v631
      %v860 = vpack.c.b16 %v636, %v632
      %v861 = vpack.c.b16 %v637, %v633
      %v862 = vpack.c.b16 %v638, %v634
      %v863 = vpack.c.b16 %v643, %v639
      %v864 = vpack.c.b16 %v644, %v640
      %v865 = vpack.c.b16 %v645, %v641
      %v866 = vpack.c.b16 %v646, %v642
      %v867 = vpack.c.b16 %v651, %v647
      %v868 = vpack.c.b16 %v652, %v648
      %v869 = vpack.c.b16 %v653, %v649
      %v870 = vpack.c.b16 %v654, %v650
      %v871 = vpack.c.b16 %v659, %v655
      %v872 = vpack.c.b16 %v660, %v656
      %v873 = vpack.c.b16 %v661, %v657
      %v874 = vpack.c.b16 %v662, %v658
      %v875 = vpack.c.b16 %v667, %v663
      %v876 = vpack.c.b16 %v668, %v664
      %v877 = vpack.c.b16 %v669, %v665
      %v878 = vpack.c.b16 %v670, %v666
      %v879 = vpack.c.b16 %v675, %v671
      %v880 = vpack.c.b16 %v676, %v672
      %v881 = vpack.c.b16 %v677, %v673
      %v882 = vpack.c.b16 %v678, %v674
      %v883 = vpack.c.b16 %v683, %v679
      %v884 = vpack.c.b16 %v684, %v680
      %v885 = vpack.c.b16 %v685, %v681
      %v886 = vpack.c.b16 %v686, %v682
      %v887 = vpack.c.b16 %v691, %v687
      %v888 = vpack.c.b16 %v692, %v688
      %v889 = vpack.c.b16 %v693, %v689
      %v890 = vpack.c.b16 %v694, %v690
      %v891 = vpack.c.b16 %v699, %v695
      %v892 = vpack.c.b16 %v700, %v696
      %v893 = vpack.c.b16 %v701, %v697
      %v894 = vpack.c.b16 %v702, %v698
      %v895 = vpack.c.b16 %v707, %v703
      %v896 = vpack.c.b16 %v708, %v704
      %v897 = vpack.c.b16 %v709, %v705
      %v898 = vpack.c.b16 %v710, %v706
      %v899 = vpack.c.b16 %v715, %v711
      %v900 = vpack.c.b16 %v716, %v712
      %v901 = vpack.c.b16 %v717, %v713
      %v902 = vpack.c.b16 %v718, %v714
      %v903 = vpack.c.b16 %v723, %v719
      %v904 = vpack.c.b16 %v724, %v720
      %v905 = vpack.c.b16 %v725, %v721
      %v906 = vpack.c.b16 %v726, %v722
      %v907 = vpack.c.b16 %v731, %v727
      %v908 = vpack.c.b16 %v732, %v728
      %v909 = vpack.c.b16 %v733, %v729
      %v910 = vpack.c.b16 %v734, %v730
      %v911 = vpack.c.b16 %v739, %v735
      %v912 = vpack.c.b16 %v740, %v736
      %v913 = vpack.c.b16 %v741, %v737
      %v914 = vpack.c.b16 %v742, %v738
      %v915 = vpack.c.b16 %v747, %v743
      %v916 = vpack.c.b16 %v748, %v744
      %v917 = vpack.c.b16 %v749, %v745
      %v918 = vpack.c.b16 %v750, %v746
      %v919 = vpack.c.b16 %v755, %v751
      %v920 = vpack.c.b16 %v756, %v752
      %v921 = vpack.c.b16 %v757, %v753
      %v922 = vpack.c.b16 %v758, %v754
      %v923 = vpack.c.b16 %v763, %v759
      %v924 = vpack.c.b16 %v764, %v760
      %v925 = vpack.c.b16 %v765, %v761
      %v926 = vpack.c.b16 %v766, %v762
      %v927 = vpack.c.b16 %v771, %v767
      %v928 = vpack.c.b16 %v772, %v768
      %v929 = vpack.c.b16 %v773, %v769
      %v930 = vpack.c.b16 %v774, %v770
      %v931 = vpack.c.b16 %v779, %v775
      %v932 = vpack.c.b16 %v780, %v776
      %v933 = vpack.c.b16 %v781, %v777
      %v934 = vpack.c.b16 %v782, %v778
      %v935 = vpack.c.b16 %v787, %v783
      %v936 = vpack.c.b16 %v788, %v784
      %v937 = vpack.c.b16 %v789, %v785
      %v938 = vpack.c.b16 %v790, %v786
      %v939 = vpack.c.b16 %v795, %v791
      %v940 = vpack.c.b16 %v796, %v792
      %v941 = vpack.c.b16 %v797, %v793
      %v942 = vpack.c.b16 %v798, %v794
      %v943 = vpack.c.b16 %v803, %v799
      %v944 = vpack.c.b16 %v804, %v800
      %v945 = vpack.c.b16 %v805, %v801
      %v946 = vpack.c.b16 %v806, %v802
      %v947 = vpack.c.b16 %v811, %v807
      %v948 = vpack.c.b16 %v812, %v808
      %v949 = vpack.c.b16 %v813, %v809
      %v950 = vpack.c.b16 %v814, %v810
      %v951 = vpack.c.b16 %v819, %v815
      %v952 = vpack.c.b16 %v820, %v816
      %v953 = vpack.c.b16 %v821, %v817
      %v954 = vpack.c.b16 %v822, %v818
      %v955 = vpack.c.b16 %v827, %v823
      %v956 = vpack.c.b16 %v828, %v824
      %v957 = vpack.c.b16 %v829, %v825
      %v958 = vpack.c.b16 %v830, %v826
      %1087 = vmatprep.subr.bf16.mxu0 %v832
      %1088 = vmatpush1.bf16.msra.mxu0 %v831
      %1089 = vmatprep.subr.bf16.mxu0 %v836
      %1090 = vmatpush1.bf16.msra.mxu0 %v835
      %1091 = vmatprep.subr.bf16.mxu0 %v840
      %1092 = vmatpush1.bf16.msra.mxu0 %v839
      %1093 = vmatprep.subr.bf16.mxu0 %v844
      %1094 = vmatpush1.bf16.msra.mxu0 %v843
      %1095 = vmatprep.subr.bf16.mxu0 %v848
      %1096 = vmatpush1.bf16.msra.mxu0 %v847
      %1097 = vmatprep.subr.bf16.mxu0 %v852
      %1098 = vmatpush1.bf16.msra.mxu0 %v851
      %1099 = vmatprep.subr.bf16.mxu0 %v856
      %1100 = vmatpush1.bf16.msra.mxu0 %v855
      %1101 = vmatprep.subr.bf16.mxu0 %v860
      %1102 = vmatpush1.bf16.msra.mxu0 %v859
      %1103 = vmatprep.subr.bf16.mxu0 %v864
      %1104 = vmatpush1.bf16.msra.mxu0 %v863
      %1105 = vmatprep.subr.bf16.mxu0 %v868
      %1106 = vmatpush1.bf16.msra.mxu0 %v867
      %1107 = vmatprep.subr.bf16.mxu0 %v872
      %1108 = vmatpush1.bf16.msra.mxu0 %v871
      %1109 = vmatprep.subr.bf16.mxu0 %v876
      %1110 = vmatpush1.bf16.msra.mxu0 %v875
      %1111 = vmatprep.subr.bf16.mxu0 %v880
      %1112 = vmatpush1.bf16.msra.mxu0 %v879
      %1113 = vmatprep.subr.bf16.mxu0 %v884
      %1114 = vmatpush1.bf16.msra.mxu0 %v883
      %1115 = vmatprep.subr.bf16.mxu0 %v888
      %1116 = vmatpush1.bf16.msra.mxu0 %v887
      %1117 = vmatprep.subr.bf16.mxu0 %v892
      %1118 = vmatpush1.bf16.msra.mxu0 %v891
      %1119 = vmatprep.mubr.bf16.mxu0 %v440
      %1120 = vmatmul.mubr.bf16.gmra.mrb[0].mxu0 %v439
      %v1121 = vpop.f32.mrb[0].mxu0
      %v1122 = vadd.f32 0.0, %v1121
      %v1123 = vpop.f32.mrb[0].mxu0
      %v1124 = vadd.f32 0.0, %v1123
      %v1125 = vpop.f32.mrb[0].mxu0
      %v1126 = vpop.f32.mrb[0].mxu0
      %1127 = vdwg.mxu0
      %1128 = vmatprep.subr.bf16.mxu0 %v896
      %1129 = vmatpush1.bf16.msra.mxu0 %v895
      %1130 = vmatprep.subr.bf16.mxu0 %v900
      %1131 = vmatpush1.bf16.msra.mxu0 %v899
      %1132 = vmatprep.subr.bf16.mxu0 %v904
      %1133 = vmatpush1.bf16.msra.mxu0 %v903
      %1134 = vmatprep.subr.bf16.mxu0 %v908
      %1135 = vmatpush1.bf16.msra.mxu0 %v907
      %1136 = vmatprep.subr.bf16.mxu0 %v912
      %1137 = vmatpush1.bf16.msra.mxu0 %v911
      %1138 = vmatprep.subr.bf16.mxu0 %v916
      %1139 = vmatpush1.bf16.msra.mxu0 %v915
      %1140 = vmatprep.subr.bf16.mxu0 %v920
      %1141 = vmatpush1.bf16.msra.mxu0 %v919
      %1142 = vmatprep.subr.bf16.mxu0 %v924
      %1143 = vmatpush1.bf16.msra.mxu0 %v923
      %1144 = vmatprep.subr.bf16.mxu0 %v928
      %1145 = vmatpush1.bf16.msra.mxu0 %v927
      %1146 = vmatprep.subr.bf16.mxu0 %v932
      %1147 = vmatpush1.bf16.msra.mxu0 %v931
      %1148 = vmatprep.subr.bf16.mxu0 %v936
      %1149 = vmatpush1.bf16.msra.mxu0 %v935
      %1150 = vmatprep.subr.bf16.mxu0 %v940
      %1151 = vmatpush1.bf16.msra.mxu0 %v939
      %1152 = vmatprep.subr.bf16.mxu0 %v944
      %1153 = vmatpush1.bf16.msra.mxu0 %v943
      %1154 = vmatprep.subr.bf16.mxu0 %v948
      %1155 = vmatpush1.bf16.msra.mxu0 %v947
      %1156 = vmatprep.subr.bf16.mxu0 %v952
      %1157 = vmatpush1.bf16.msra.mxu0 %v951
      %1158 = vmatprep.subr.bf16.mxu0 %v956
      %1159 = vmatpush1.bf16.msra.mxu0 %v955
      %1160 = vmatprep.mubr.bf16.mxu0 %v442
      %1161 = vmatmul.mubr.bf16.gmra.mrb[0].mxu0 %v441
      %v1162 = vpop.f32.mrb[0].mxu0
      %v1163 = vadd.f32 %v1122, %v1162
      %v1164 = vpop.f32.mrb[0].mxu0
      %v1165 = vadd.f32 %v1124, %v1164
      %v1166 = vpop.f32.mrb[0].mxu0
      %v1167 = vpop.f32.mrb[0].mxu0
      %1168 = vdwg.mxu0
      %1169 = vmatprep.subr.bf16.mxu0 %v834
      %1170 = vmatpush1.bf16.msra.mxu0 %v833
      %1171 = vmatprep.subr.bf16.mxu0 %v838
      %1172 = vmatpush1.bf16.msra.mxu0 %v837
      %1173 = vmatprep.subr.bf16.mxu0 %v842
      %1174 = vmatpush1.bf16.msra.mxu0 %v841
      %1175 = vmatprep.subr.bf16.mxu0 %v846
      %1176 = vmatpush1.bf16.msra.mxu0 %v845
      %1177 = vmatprep.subr.bf16.mxu0 %v850
      %1178 = vmatpush1.bf16.msra.mxu0 %v849
      %1179 = vmatprep.subr.bf16.mxu0 %v854
      %1180 = vmatpush1.bf16.msra.mxu0 %v853
      %1181 = vmatprep.subr.bf16.mxu0 %v858
      %1182 = vmatpush1.bf16.msra.mxu0 %v857
      %1183 = vmatprep.subr.bf16.mxu0 %v862
      %1184 = vmatpush1.bf16.msra.mxu0 %v861
      %1185 = vmatprep.subr.bf16.mxu0 %v866
      %1186 = vmatpush1.bf16.msra.mxu0 %v865
      %1187 = vmatprep.subr.bf16.mxu0 %v870
      %1188 = vmatpush1.bf16.msra.mxu0 %v869
      %1189 = vmatprep.subr.bf16.mxu0 %v874
      %1190 = vmatpush1.bf16.msra.mxu0 %v873
      %1191 = vmatprep.subr.bf16.mxu0 %v878
      %1192 = vmatpush1.bf16.msra.mxu0 %v877
      %1193 = vmatprep.subr.bf16.mxu0 %v882
      %1194 = vmatpush1.bf16.msra.mxu0 %v881
      %1195 = vmatprep.subr.bf16.mxu0 %v886
      %1196 = vmatpush1.bf16.msra.mxu0 %v885
      %1197 = vmatprep.subr.bf16.mxu0 %v890
      %1198 = vmatpush1.bf16.msra.mxu0 %v889
      %1199 = vmatprep.subr.bf16.mxu0 %v894
      %1200 = vmatpush1.bf16.msra.mxu0 %v893
      %1201 = vmatprep.mubr.bf16.mxu0 %v440
      %1202 = vmatmul.mubr.bf16.gmra.mrb[0].mxu0 %v439
      %v1203 = vpop.f32.mrb[0].mxu0
      %v1204 = vadd.f32 0.0, %v1203
      %v1205 = vpop.f32.mrb[0].mxu0
      %v1206 = vadd.f32 0.0, %v1205
      %v1207 = vpop.f32.mrb[0].mxu0
      %v1208 = vpop.f32.mrb[0].mxu0
      %1209 = vdwg.mxu0
      %1210 = vmatprep.subr.bf16.mxu0 %v898
      %1211 = vmatpush1.bf16.msra.mxu0 %v897
      %1212 = vmatprep.subr.bf16.mxu0 %v902
      %1213 = vmatpush1.bf16.msra.mxu0 %v901
      %1214 = vmatprep.subr.bf16.mxu0 %v906
      %1215 = vmatpush1.bf16.msra.mxu0 %v905
      %1216 = vmatprep.subr.bf16.mxu0 %v910
      %1217 = vmatpush1.bf16.msra.mxu0 %v909
      %1218 = vmatprep.subr.bf16.mxu0 %v914
      %1219 = vmatpush1.bf16.msra.mxu0 %v913
      %1220 = vmatprep.subr.bf16.mxu0 %v918
      %1221 = vmatpush1.bf16.msra.mxu0 %v917
      %1222 = vmatprep.subr.bf16.mxu0 %v922
      %1223 = vmatpush1.bf16.msra.mxu0 %v921
      %1224 = vmatprep.subr.bf16.mxu0 %v926
      %1225 = vmatpush1.bf16.msra.mxu0 %v925
      %1226 = vmatprep.subr.bf16.mxu0 %v930
      %1227 = vmatpush1.bf16.msra.mxu0 %v929
      %1228 = vmatprep.subr.bf16.mxu0 %v934
      %1229 = vmatpush1.bf16.msra.mxu0 %v933
      %1230 = vmatprep.subr.bf16.mxu0 %v938
      %1231 = vmatpush1.bf16.msra.mxu0 %v937
      %1232 = vmatprep.subr.bf16.mxu0 %v942
      %1233 = vmatpush1.bf16.msra.mxu0 %v941
      %1234 = vmatprep.subr.bf16.mxu0 %v946
      %1235 = vmatpush1.bf16.msra.mxu0 %v945
      %1236 = vmatprep.subr.bf16.mxu0 %v950
      %1237 = vmatpush1.bf16.msra.mxu0 %v949
      %1238 = vmatprep.subr.bf16.mxu0 %v954
      %1239 = vmatpush1.bf16.msra.mxu0 %v953
      %1240 = vmatprep.subr.bf16.mxu0 %v958
      %1241 = vmatpush1.bf16.msra.mxu0 %v957
      %1242 = vmatprep.mubr.bf16.mxu0 %v442
      %1243 = vmatmul.mubr.bf16.gmra.mrb[0].mxu0 %v441
      %v1244 = vpop.f32.mrb[0].mxu0
      %v1245 = vadd.f32 %v1204, %v1244
      %v1246 = vpop.f32.mrb[0].mxu0
      %v1247 = vadd.f32 %v1206, %v1246
      %v1248 = vpop.f32.mrb[0].mxu0
      %v1249 = vpop.f32.mrb[0].mxu0
      %1250 = vdwg.mxu0
      %v1251 = vadd.f32 %v299, %v1163
      %v1252 = vadd.f32 %v300, %v1165
      %v1253 = vadd.f32 %v301, %v1245
      %v1254 = vadd.f32 %v302, %v1247
      %1255 = vst [vmem:[#allocation2] sm:$0xff] %v1251
      %1256 = vst [vmem:[#allocation2 + $0x8] sm:$0xff] %v1252
      %1257 = vst [vmem:[#allocation2 + $0x10] sm:$0xff] %v1253
      %1258 = vst [vmem:[#allocation2 + $0x18] sm:$0xff] %v1254
      %p1259 = scmp.eq.s32.totalorder %s21, 8
      // Predicated region
      $region45: #{resnet_forward.24} parent=39 // pred_check
        %p1260 = pneg %p1259
      $region46: #{resnet_forward.24} parent=39 // pred_check_branch
        %1262 = sbr.rel (%p1260) target = $region48
      $region47: #{resnet_forward.24} parent=39 // pred_region
        %v1263 = vld [vmem:[#allocation2] sm:$0xff]
        %v1264 = vld [vmem:[#allocation2 + $0x8] sm:$0xff]
        %v1265 = vld [vmem:[#allocation2 + $0x10] sm:$0xff]
        %v1266 = vld [vmem:[#allocation2 + $0x18] sm:$0xff]
        %v1267 = vld [vmem:[%s2] sm:$0xf]
        %v1269 = vlaneseq
        %v1270 = vshrl.u32 %v1269, 7
        %v1271 = vsub.s32 0, %v1270
        %v1272 = vrot.slane %v1267, %v1271
        %v1273 = vlaneseq
        %v1274 = vshrl.u32 %v1273, 7
        %v1275 = vsub.s32 1, %v1274
        %v1276 = vrot.slane %v1267, %v1275
        %v1277 = vlaneseq
        %v1278 = vshrl.u32 %v1277, 7
        %v1279 = vsub.s32 2, %v1278
        %v1280 = vrot.slane %v1267, %v1279
        %v1281 = vlaneseq
        %v1282 = vshrl.u32 %v1281, 7
        %v1283 = vsub.s32 3, %v1282
        %v1284 = vrot.slane %v1267, %v1283
        %v1289 = vmul.f32 %v1263, %v1272
        %v1290 = vmul.f32 %v1264, %v1276
        %v1291 = vmul.f32 %v1265, %v1280
        %v1292 = vmul.f32 %v1266, %v1284
        %v1293 = vld [vmem:[%s3] sm:$0xf]
        %v1295 = vlaneseq
        %v1296 = vshrl.u32 %v1295, 7
        %v1297 = vsub.s32 0, %v1296
        %v1298 = vrot.slane %v1293, %v1297
        %v1299 = vlaneseq
        %v1300 = vshrl.u32 %v1299, 7
        %v1301 = vsub.s32 1, %v1300
        %v1302 = vrot.slane %v1293, %v1301
        %v1303 = vlaneseq
        %v1304 = vshrl.u32 %v1303, 7
        %v1305 = vsub.s32 2, %v1304
        %v1306 = vrot.slane %v1293, %v1305
        %v1307 = vlaneseq
        %v1308 = vshrl.u32 %v1307, 7
        %v1309 = vsub.s32 3, %v1308
        %v1310 = vrot.slane %v1293, %v1309
        %v1315 = vadd.f32 %v1289, %v1298
        %v1316 = vadd.f32 %v1290, %v1302
        %v1317 = vadd.f32 %v1291, %v1306
        %v1318 = vadd.f32 %v1292, %v1310
        %v1319 = vld [vmem:[%s285] sm:$0xff]
        %v1320 = vld [vmem:[%s285 + $0x8] sm:$0xff]
        %v1321 = vunpack.c.l.bf16 %v1319
        %v1322 = vunpack.c.h.bf16 %v1319
        %v1323 = vunpack.c.l.bf16 %v1320
        %v1324 = vunpack.c.h.bf16 %v1320
        %v1325 = vadd.f32 %v1315, %v1321
        %v1326 = vadd.f32 %v1316, %v1322
        %v1327 = vadd.f32 %v1317, %v1323
        %v1328 = vadd.f32 %v1318, %v1324
        %v1329 = vmax.f32 %v1325, 0.0
        %v1330 = vmax.f32 %v1326, 0.0
        %v1331 = vmax.f32 %v1327, 0.0
        %v1332 = vmax.f32 %v1328, 0.0
        %v1333 = vpack.c.bf16 %v1329, %v1329
        %v1334 = vpack.c.bf16 %v1330, %v1330
        %v1335 = vpack.c.bf16 %v1331, %v1331
        %v1336 = vpack.c.bf16 %v1332, %v1332
        %v1341 = vunpack.c.l.b16 %v1333
        %v1342 = vunpack.c.l.b16 %v1334
        %v1343 = vunpack.c.l.b16 %v1335
        %v1344 = vunpack.c.l.b16 %v1336
        %v1345 = vpack.c.b16 %v1342, %v1341
        %v1346 = vpack.c.b16 %v1344, %v1343
        %1349 = vst [vmem:[%s290] sm:$0xff] %v1345
        %1350 = vst [vmem:[%s290 + $0x8] sm:$0xff] %v1346
      $region48: #{resnet_forward.24} parent=39 // pred_fallthru
        _
      %p1351 = scmp.lt.s32.totalorder %s20, 0
      %s1352 = scalar_select %p1351, %s20, 0
      %s1353 = smul.addr %s1352, 4
      %s1354 = smul.addr %s1353, 4
      %s1355 = scalar_lea.vmem %s5, %s1354
      // Predicated region
      $region49: #{resnet_forward.24} parent=39 // pred_check
        %p1356 = pneg %p168
      $region50: #{resnet_forward.24} parent=39 // pred_check_branch
        %1358 = sbr.rel (%p1356) target = $region52
      $region51: #{resnet_forward.24} parent=39 // pred_region
        _
      $region52: #{resnet_forward.24} parent=39 // pred_fallthru
        _
      // Predicated region
      $region53: #{resnet_forward.24} parent=39 // pred_check
        %p1359 = pneg %p168
      $region54: #{resnet_forward.24} parent=39 // pred_check_branch
        %1361 = sbr.rel (%p1359) target = $region56
      $region55: #{resnet_forward.24} parent=39 // pred_region
        %p1362 = scmp.lt.s32.totalorder %s20, 0
        %s1363 = scalar_select %p1362, %s20, 0
        %s1364 = smul.addr %s1363, 4
        %s1365 = smul.addr %s1364, 4
        %s1366 = scalar_lea.vmem %s5, %s1365
      $region56: #{resnet_forward.24} parent=39 // pred_fallthru
        _
    $region40: #{resnet_forward.24} parent=5 // pred_fallthru
      _
    %p1367 = scmp.le.s32.totalorder 2, %s11
    // Predicated region
    $region57: #{resnet_forward.24} parent=5 // pred_check
      %p1368 = pneg %p1367
    $region58: #{resnet_forward.24} parent=5 // pred_check_branch
      %1370 = sbr.rel (%p1368) target = $region60
    $region59: #{resnet_forward.24} parent=5 // pred_region
      %s1371 = ssub.s32 %s11, 2
    $region60: #{resnet_forward.24} parent=5 // pred_fallthru
      _
  $region6: #{resnet_forward.24} parent=0 // loop_footer
    %s15 = sadd.s32 1, %s11
  $region7: #{resnet_forward.24} parent=0 // loop_footer_branch
    %10 = sbr.rel target = $region3
  $region8: #{resnet_forward.24} parent=0 // loop_exit
    _

</llo_original>
